<compile_context>
chip_gen: v5e
topology: v5e:2x2
jax: 0.10.0
libtpu: 0.0.40
codegen_flags: <defaults>
</compile_context>

<pallas_src>
import functools

import jax
import jax.numpy as jnp
import numpy as np
from jax import lax
from jax.experimental import pallas as pl
from jax.experimental.pallas import tpu as pltpu

SEQ_LEN = 1200  # hardcoded in the PyTorch forward: x.view(b, c, 1200, -1)


# ---------------------------------------------------------------------------
# Fused Pallas kernel: 2-layer LSTM recurrence + fc + softmax(T)
# ---------------------------------------------------------------------------
def _lstm2_fc_softmax_kernel(x0_ref, xs_ref, wih1_ref, b1_ref, wbig_ref,
                             b2_ref, wfc_ref, bfc_ref, out_ref,
                             gx_ref, h2_ref, *, batch, unroll, hidden, seq):
    # x0_ref:   (B, F)        input at timestep 0
    # xs_ref:   (T*B, F)      time-major input shifted by one step (row t*B+b = x_{t+1,b};
    #                         last timestep rows are zeros -> bogus, discarded)
    # wih1_ref: (F, 4H)       layer-1 input->gates weights
    # b1_ref:   (1, 4H)       layer-1 bias (bih+bhh)
    # wbig_ref: (2H, 8H)      combined recurrent weights:
    #                           [:H, :4H] = Whh1, [:H, 4H:] = Wih2, [H:, 4H:] = Whh2
    # b2_ref:   (1, 4H)       layer-2 bias (bih+bhh)
    # wfc_ref:  (C, H)        fc weight, b fc_ref: (C, 1) fc bias
    # out_ref:  (B*C, T)      softmax probabilities (softmax over T, the lane axis)
    # gx_ref:   (T*B, 4H)     scratch: layer-1 input gate term for step t+1 at row t*B+b
    # h2_ref:   (B*T, H)      scratch: layer-2 hidden sequence, batch-major (row b*T+t)
    H = hidden
    B = batch
    U = unroll
    T = seq
    G4 = 4 * H
    chunk = U * B

    # ---- Prologue A: layer-1 input->gates, one batched MXU matmul ----------
    # gx_ref row t*B+b = x_{t+1} @ Wih1 + b1 (input already shifted by wrapper),
    # so the recurrence loop reads gx at aligned chunk offsets.
    gx_ref[...] = (jnp.dot(xs_ref[...], wih1_ref[...],
                           preferred_element_type=jnp.float32)
                   + b1_ref[...])

    wbig = wbig_ref[...]          # hoisted combined recurrent weight (2H, 8H)
    b2 = b2_ref[...]              # (1, 4H)
    # TODO(synk): keep wbig resident in the MXU across the recurrence via
    # pltpu.matmul_push_rhs / matmul_acc_lhs / matmul_pop (needs a bundle-dump
    # check that jnp.dot currently re-pushes the RHS every tick).
    # TODO(synk): pin matmul precision (lax.Precision.HIGHEST) on the recurrent
    # dot once confirmed supported by the Mosaic lowering, for tolerance margin.

    def lstm_cell(gates, c_prev):
        # Selective activations: one EUP vreg-pass per lane-aligned gate slice.
        i_g = jax.nn.sigmoid(gates[:, 0 * H:1 * H])
        f_g = jax.nn.sigmoid(gates[:, 1 * H:2 * H])
        g_g = jnp.tanh(gates[:, 2 * H:3 * H])
        o_g = jax.nn.sigmoid(gates[:, 3 * H:4 * H])
        c = f_g * c_prev + i_g * g_g
        h = o_g * jnp.tanh(c)
        return h, c

    # ---- Prologue B: layer-1 step 0 (h1_{-1}=0 => gates = x_0 @ Wih1 + b1) --
    zeros_bh = jnp.zeros((B, H), jnp.float32)
    g0 = (jnp.dot(x0_ref[...], wih1_ref[...],
                  preferred_element_type=jnp.float32) + b1_ref[...])
    h1, c1 = lstm_cell(g0, zeros_bh)
    h2, c2 = zeros_bh, zeros_bh

    # ---- Fused, skewed 2-layer recurrence -----------------------------------
    # Carry entering tick t: (h1_t, c1_t, h2_{t-1}, c2_{t-1}).
    # One combined matmul [h1_t | h2_{t-1}] @ wbig feeds BOTH layers:
    #   cols [0, 4H)  -> h1_t @ Whh1                       (layer-1 step t+1)
    #   cols [4H, 8H) -> h1_t @ Wih2 + h2_{t-1} @ Whh2     (layer-2 step t)
    # The last tick's layer-1 "step T" uses the zero-padded xs rows; its
    # result is discarded.
    def chunk_body(j, carry):
        h1, c1, h2, c2 = carry
        base = pl.multiple_of(j * chunk, chunk)
        t0 = pl.multiple_of(j * U, U)
        gx_chunk = gx_ref[pl.ds(base, chunk), :]           # (U*B, 4H), aligned load
        h2_steps = []
        for u in range(U):                                 # manual 8-step unroll
            lhs = jnp.concatenate([h1, h2], axis=1)        # (B, 2H) lane concat
            mm = jnp.dot(lhs, wbig,
                         preferred_element_type=jnp.float32)   # (B, 8H)
            h2, c2 = lstm_cell(mm[:, G4:] + b2, c2)                        # layer-2 step t
            h1, c1 = lstm_cell(mm[:, :G4] + gx_chunk[u * B:(u + 1) * B, :], c1)  # layer-1 step t+1
            h2_steps.append(h2)
        # Batch-major (row = b*T + t) full-(8,128)-tile stores of the layer-2
        # hidden states for output steps t0 .. t0+U-1 (consumed contiguously
        # by the fc epilogue -- no strided reads needed).
        for b in range(B):
            tile = jnp.concatenate([h2_steps[u][b:b + 1, :] for u in range(U)],
                                   axis=0)                 # (U, H) sublane pack
            h2_ref[pl.ds(b * T + t0, U), :] = tile
        return (h1, c1, h2, c2)

    lax.fori_loop(0, T // U, chunk_body, (h1, c1, h2, c2))

    # ---- Epilogue: fc + softmax over the sequence axis ----------------------
    # Per-batch logits are (C, T) with T on the lane axis; stacked to a
    # sublane-dense (B*C, T) block -> lane-dense softmax + one dense store.
    logit_rows = []
    for b in range(B):
        h_b = h2_ref[pl.ds(b * T, T), :]                   # (T, H) contiguous
        lg = lax.dot_general(wfc_ref[...], h_b,
                             dimension_numbers=(((1,), (1,)), ((), ())),
                             preferred_element_type=jnp.float32)   # (C, T)
        logit_rows.append(lg + bfc_ref[...])
    logits = jnp.concatenate(logit_rows, axis=0)           # (B*C, T)
    m = jnp.max(logits, axis=-1, keepdims=True)
    e = jnp.exp(logits - m)
    out_ref[...] = (e / jnp.sum(e, axis=-1, keepdims=True)).astype(out_ref.dtype)


def _pick_unroll(T, desired=8):
    u = desired
    while u > 1 and T % u != 0:
        u //= 2
    return u


def lstm2_fc_softmax(x0, x_shift, wih1, b1, wbig, b2, w_fc, b_fc,
                     *, batch, seq, hidden):
    C = w_fc.shape[0]
    U = _pick_unroll(seq)
    kernel = functools.partial(_lstm2_fc_softmax_kernel, batch=batch,
                               unroll=U, hidden=hidden, seq=seq)
    # TODO(synk): on v7x (2 TensorCores), shard the independent batch sequences
    # across cores (batch-parallel grid / core_map); single-TC on v5e/v6e.
    # TODO(synk): if batch grows, tile the gx prologue over time chunks or
    # store gx in bf16 (gx scales linearly with B; v7x VMEM is 64 MiB).
    return pl.pallas_call(
        kernel,
        out_shape=jax.ShapeDtypeStruct((batch * C, seq), jnp.float32),
        in_specs=[pl.BlockSpec(memory_space=pltpu.MemorySpace.VMEM)] * 8,
        out_specs=pl.BlockSpec(memory_space=pltpu.MemorySpace.VMEM),
        scratch_shapes=[pltpu.VMEM((seq * batch, 4 * hidden), jnp.float32),
                        pltpu.VMEM((batch * seq, hidden), jnp.float32)],
        compiler_params=pltpu.CompilerParams(vmem_limit_bytes=32 * 1024 * 1024),
    )(x0, x_shift, wih1, b1, wbig, b2, w_fc, b_fc)


# ---------------------------------------------------------------------------
# Parameters (deterministic, PyTorch-style uniform init)
# ---------------------------------------------------------------------------
def init_params(key, input_features, hidden_dim, num_layers, num_classes):
    keys = jax.random.split(key, num_layers * 4 + 2)
    k = 1.0 / np.sqrt(hidden_dim)
    params = {"lstm": []}
    idx = 0
    in_dim = input_features
    for _ in range(num_layers):
        wih = jax.random.uniform(keys[idx], (in_dim, 4 * hidden_dim), jnp.float32, -k, k); idx += 1
        whh = jax.random.uniform(keys[idx], (hidden_dim, 4 * hidden_dim), jnp.float32, -k, k); idx += 1
        bih = jax.random.uniform(keys[idx], (4 * hidden_dim,), jnp.float32, -k, k); idx += 1
        bhh = jax.random.uniform(keys[idx], (4 * hidden_dim,), jnp.float32, -k, k); idx += 1
        params["lstm"].append((wih, whh, (bih + bhh).reshape(1, -1)))
        in_dim = hidden_dim
    params["fc_w"] = jax.random.uniform(keys[idx], (hidden_dim, num_classes), jnp.float32, -k, k); idx += 1
    params["fc_b"] = jax.random.uniform(keys[idx], (1, num_classes), jnp.float32, -k, k)
    return params


# ---------------------------------------------------------------------------
# Forward pass (layout glue in JAX, the whole hot path in ONE Pallas kernel)
# ---------------------------------------------------------------------------
@jax.jit
def lstm_forward(params, x):
    B, C, L = x.shape
    Fp = L // SEQ_LEN
    F = C * Fp
    T = SEQ_LEN
    # PyTorch: view -> permute -> view -> transpose  (pure layout glue)
    xr = x.reshape(B, C, T, Fp)
    xr = jnp.transpose(xr, (0, 1, 3, 2))        # (B, C, Fp, T)
    xr = xr.reshape(B, F, T)                    # (B, F, T)
    xr = jnp.transpose(xr, (2, 0, 1))           # time-major (T, B, F)
    x_tm = xr.reshape(T * B, F)                 # flattened, row = t*B + b

    # Shift by one timestep so the kernel's recurrence loop reads gx at
    # aligned chunk offsets (row t*B+b holds x_{t+1}); last step padded with
    # zeros -> the final tick's speculative layer-1 step T is discarded.
    x0 = x_tm[:B]                                           # (B, F)
    x_shift = jnp.concatenate(
        [x_tm[B:], jnp.zeros((B, F), x_tm.dtype)], axis=0)  # (T*B, F)

    assert len(params["lstm"]) == 2, "fused kernel is specialised for num_layers=2"
    (wih1, whh1, b1), (wih2, whh2, b2) = params["lstm"]
    H = whh1.shape[0]

    # Combined recurrent weight for the skewed fused step:
    #   [h1_t | h2_{t-1}] @ wbig = [ h1_t@Whh1 | h1_t@Wih2 + h2_{t-1}@Whh2 ]
    wbig = jnp.zeros((2 * H, 8 * H), jnp.float32)
    wbig = wbig.at[:H, :4 * H].set(whh1)
    wbig = wbig.at[:H, 4 * H:].set(wih2)
    wbig = wbig.at[H:, 4 * H:].set(whh2)

    w_fc = params["fc_w"].T                     # (num_classes, H)
    b_fc = params["fc_b"].reshape(-1, 1)        # (num_classes, 1)
    NC = w_fc.shape[0]

    probs = lstm2_fc_softmax(x0, x_shift, wih1, b1, wbig, b2, w_fc, b_fc,
                             batch=B, seq=T, hidden=H)      # (B*NC, T)
    return probs.reshape(B, NC, T)


# ---------------------------------------------------------------------------
# Pure-JAX reference for verification
# ---------------------------------------------------------------------------
def lstm_ref(params, x):
    B, C, L = x.shape
    Fp = L // SEQ_LEN
    xr = x.reshape(B, C, SEQ_LEN, Fp)
    xr = jnp.transpose(xr, (0, 1, 3, 2)).reshape(B, C * Fp, SEQ_LEN)
    xr = jnp.transpose(xr, (2, 0, 1))           # (T, B, F)

    def layer(x_tbf, wih, whh, b):
        Hd = whh.shape[0]

        def step(carry, x_t):
            h, c = carry
            gates = x_t @ wih + h @ whh + b
            i_g, f_g, g_g, o_g = jnp.split(gates, 4, axis=-1)
            i_g = jax.nn.sigmoid(i_g); f_g = jax.nn.sigmoid(f_g)
            g_g = jnp.tanh(g_g); o_g = jax.nn.sigmoid(o_g)
            c = f_g * c + i_g * g_g
            h = o_g * jnp.tanh(c)
            return (h, c), h

        h0 = jnp.zeros((x_tbf.shape[1], Hd), jnp.float32)
        _, hs = lax.scan(step, (h0, h0), x_tbf)
        return hs

    h = xr
    for (wih, whh, b) in params["lstm"]:
        h = layer(h, wih, whh, b)
    h = jnp.transpose(h, (1, 0, 2))                       # (B, T, H)
    logits = h @ params["fc_w"] + params["fc_b"]          # (B, T, C)
    logits = jnp.transpose(logits, (0, 2, 1))             # (B, C, T)
    return jax.nn.softmax(logits, axis=-1)


if __name__ == "__main__":
    B, C = 2, 4
    Fp = 8
    INPUT_FEATURES = C * Fp        # 32 = channels * (L // 1200)
    HIDDEN_DIM = 128               # matches the PyTorch module default (lane-aligned gates)
    NUM_LAYERS = 2
    NUM_CLASSES = 4
    L = SEQ_LEN * Fp               # 9600

    key = jax.random.PRNGKey(0)
    k_param, k_x = jax.random.split(key)
    params = init_params(k_param, INPUT_FEATURES, HIDDEN_DIM, NUM_LAYERS, NUM_CLASSES)
    x = jax.random.normal(k_x, (B, C, L), jnp.float32)

    out = jax.block_until_ready(lstm_forward(params, x))
    assert out.shape == (B, NUM_CLASSES, SEQ_LEN), out.shape

    with jax.default_matmul_precision("float32"):
        ref = jax.block_until_ready(lstm_ref(params, x))
    np.testing.assert_allclose(np.asarray(out), np.asarray(ref), rtol=1e-3, atol=1e-4)

    print("KERNEL_OK")
</pallas_src>

<mosaic_0001>
module attributes {stable_mosaic.version = 11 : i64} {
  func.func @_lstm2_fc_softmax_kernel(%arg0: memref<2x32xf32, #tpu.memory_space<vmem>>, %arg1: memref<2400x32xf32, #tpu.memory_space<vmem>>, %arg2: memref<32x512xf32, #tpu.memory_space<vmem>>, %arg3: memref<1x512xf32, #tpu.memory_space<vmem>>, %arg4: memref<256x1024xf32, #tpu.memory_space<vmem>>, %arg5: memref<1x512xf32, #tpu.memory_space<vmem>>, %arg6: memref<4x128xf32, #tpu.memory_space<vmem>>, %arg7: memref<4x1xf32, #tpu.memory_space<vmem>>, %arg8: memref<8x1200xf32, #tpu.memory_space<vmem>>, %arg9: memref<2400x512xf32, #tpu.memory_space<vmem>>, %arg10: memref<2400x128xf32, #tpu.memory_space<vmem>>) attributes {dimension_semantics = [], scalar_prefetch = 0 : i64, scratch_operands = 2 : i64, tpu.core_type = #tpu.core_type<tc>} {
    %c0 = arith.constant 0 : index
    %c0_0 = arith.constant 0 : index
    %0 = vector.load %arg1[%c0, %c0_0] : memref<2400x32xf32, #tpu.memory_space<vmem>>, vector<2400x32xf32>
    %c0_1 = arith.constant 0 : index
    %c0_2 = arith.constant 0 : index
    %1 = vector.load %arg2[%c0_1, %c0_2] : memref<32x512xf32, #tpu.memory_space<vmem>>, vector<32x512xf32>
    %cst = arith.constant dense<0.000000e+00> : vector<2400x512xf32>
    %2 = tpu.matmul %0, %1, %cst {dimension_numbers = #tpu.dot_dimension_numbers<[1], [0], [0], [1], [0, 0, 1, 1], [], []>} : vector<2400x32xf32>, vector<32x512xf32>, vector<2400x512xf32> -> vector<2400x512xf32>
    %c0_3 = arith.constant 0 : index
    %c0_4 = arith.constant 0 : index
    %3 = vector.load %arg3[%c0_3, %c0_4] : memref<1x512xf32, #tpu.memory_space<vmem>>, vector<1x512xf32>
    %4 = vector.broadcast %3 : vector<1x512xf32> to vector<2400x512xf32>
    %5 = arith.addf %2, %4 : vector<2400x512xf32>
    %c0_5 = arith.constant 0 : index
    %c0_6 = arith.constant 0 : index
    %6 = vector.load %arg9[%c0_5, %c0_6] : memref<2400x512xf32, #tpu.memory_space<vmem>>, vector<2400x512xf32>
    tpu.vector_store %arg9[%c0_5, %c0_6], %5 {strides = array<i32>} : memref<2400x512xf32, #tpu.memory_space<vmem>>, vector<2400x512xf32>,
    %c0_7 = arith.constant 0 : index
    %c0_8 = arith.constant 0 : index
    %7 = vector.load %arg4[%c0_7, %c0_8] : memref<256x1024xf32, #tpu.memory_space<vmem>>, vector<256x1024xf32>
    %c0_9 = arith.constant 0 : index
    %c0_10 = arith.constant 0 : index
    %8 = vector.load %arg5[%c0_9, %c0_10] : memref<1x512xf32, #tpu.memory_space<vmem>>, vector<1x512xf32>
    %cst_11 = arith.constant 0.000000e+00 : f32
    %9 = vector.broadcast %cst_11 : f32 to vector<2x128xf32>
    %c0_12 = arith.constant 0 : index
    %c0_13 = arith.constant 0 : index
    %10 = vector.load %arg0[%c0_12, %c0_13] : memref<2x32xf32, #tpu.memory_space<vmem>>, vector<2x32xf32>
    %c0_14 = arith.constant 0 : index
    %c0_15 = arith.constant 0 : index
    %11 = vector.load %arg2[%c0_14, %c0_15] : memref<32x512xf32, #tpu.memory_space<vmem>>, vector<32x512xf32>
    %cst_16 = arith.constant dense<0.000000e+00> : vector<2x512xf32>
    %12 = tpu.matmul %10, %11, %cst_16 {dimension_numbers = #tpu.dot_dimension_numbers<[1], [0], [0], [1], [0, 0, 1, 1], [], []>} : vector<2x32xf32>, vector<32x512xf32>, vector<2x512xf32> -> vector<2x512xf32>
    %c0_17 = arith.constant 0 : index
    %c0_18 = arith.constant 0 : index
    %13 = vector.load %arg3[%c0_17, %c0_18] : memref<1x512xf32, #tpu.memory_space<vmem>>, vector<1x512xf32>
    %14 = vector.broadcast %13 : vector<1x512xf32> to vector<2x512xf32>
    %15 = arith.addf %12, %14 : vector<2x512xf32>
    %16 = vector.extract_strided_slice %15 {offsets = [0, 0], sizes = [2, 128], strides = [1, 1]} : vector<2x512xf32> to vector<2x128xf32>
    %17 = arith.negf %16 : vector<2x128xf32>
    %18 = math.exp %17 : vector<2x128xf32>
    %cst_19 = arith.constant 1.000000e+00 : f32
    %19 = vector.broadcast %cst_19 : f32 to vector<2x128xf32>
    %20 = arith.addf %19, %18 : vector<2x128xf32>
    %21 = arith.divf %19, %20 : vector<2x128xf32>
    %22 = vector.extract_strided_slice %15 {offsets = [0, 128], sizes = [2, 128], strides = [1, 1]} : vector<2x512xf32> to vector<2x128xf32>
    %23 = arith.negf %22 : vector<2x128xf32>
    %24 = math.exp %23 : vector<2x128xf32>
    %cst_20 = arith.constant 1.000000e+00 : f32
    %25 = vector.broadcast %cst_20 : f32 to vector<2x128xf32>
    %26 = arith.addf %25, %24 : vector<2x128xf32>
    %27 = arith.divf %25, %26 : vector<2x128xf32>
    %28 = vector.extract_strided_slice %15 {offsets = [0, 256], sizes = [2, 128], strides = [1, 1]} : vector<2x512xf32> to vector<2x128xf32>
    %29 = math.tanh %28 : vector<2x128xf32>
    %30 = vector.extract_strided_slice %15 {offsets = [0, 384], sizes = [2, 128], strides = [1, 1]} : vector<2x512xf32> to vector<2x128xf32>
    %31 = arith.negf %30 : vector<2x128xf32>
    %32 = math.exp %31 : vector<2x128xf32>
    %cst_21 = arith.constant 1.000000e+00 : f32
    %33 = vector.broadcast %cst_21 : f32 to vector<2x128xf32>
    %34 = arith.addf %33, %32 : vector<2x128xf32>
    %35 = arith.divf %33, %34 : vector<2x128xf32>
    %36 = arith.mulf %27, %9 : vector<2x128xf32>
    %37 = arith.mulf %21, %29 : vector<2x128xf32>
    %38 = arith.addf %36, %37 : vector<2x128xf32>
    %39 = math.tanh %38 : vector<2x128xf32>
    %40 = arith.mulf %35, %39 : vector<2x128xf32>
    %c0_i32 = arith.constant 0 : i32
    %c150_i32 = arith.constant 150 : i32
    %41 = arith.addi %c0_i32, %c150_i32 : i32
    %c1_i32 = arith.constant 1 : i32
    %42:4 = scf.for %arg11 = %c0_i32 to %41 step %c1_i32 iter_args(%arg12 = %40, %arg13 = %38, %arg14 = %9, %arg15 = %9) -> (vector<2x128xf32>, vector<2x128xf32>, vector<2x128xf32>, vector<2x128xf32>)  : i32 {
      %c16_i32 = arith.constant 16 : i32
      %66 = arith.muli %arg11, %c16_i32 : i32
      %67 = tpu.assume_multiple %66, 16 : i32
      %c8_i32 = arith.constant 8 : i32
      %68 = arith.muli %arg11, %c8_i32 : i32
      %69 = tpu.assume_multiple %68, 8 : i32
      %70 = arith.index_cast %67 : i32 to index
      %c0_40 = arith.constant 0 : index
      %71 = vector.load %arg9[%70, %c0_40] : memref<2400x512xf32, #tpu.memory_space<vmem>>, vector<16x512xf32>
      %72 = tpu.concatenate %arg12, %arg14 in 1 : vector<2x128xf32>, vector<2x128xf32> -> vector<2x256xf32>
      %cst_41 = arith.constant dense<0.000000e+00> : vector<2x1024xf32>
      %73 = tpu.matmul %72, %7, %cst_41 {dimension_numbers = #tpu.dot_dimension_numbers<[1], [0], [0], [1], [0, 0, 1, 1], [], []>} : vector<2x256xf32>, vector<256x1024xf32>, vector<2x1024xf32> -> vector<2x1024xf32>
      %74 = vector.extract_strided_slice %73 {offsets = [0, 512], sizes = [2, 512], strides = [1, 1]} : vector<2x1024xf32> to vector<2x512xf32>
      %75 = vector.broadcast %8 : vector<1x512xf32> to vector<2x512xf32>
      %76 = arith.addf %74, %75 : vector<2x512xf32>
      %77 = vector.extract_strided_slice %76 {offsets = [0, 0], sizes = [2, 128], strides = [1, 1]} : vector<2x512xf32> to vector<2x128xf32>
      %78 = arith.negf %77 : vector<2x128xf32>
      %79 = math.exp %78 : vector<2x128xf32>
      %cst_42 = arith.constant 1.000000e+00 : f32
      %80 = vector.broadcast %cst_42 : f32 to vector<2x128xf32>
      %81 = arith.addf %80, %79 : vector<2x128xf32>
      %82 = arith.divf %80, %81 : vector<2x128xf32>
      %83 = vector.extract_strided_slice %76 {offsets = [0, 128], sizes = [2, 128], strides = [1, 1]} : vector<2x512xf32> to vector<2x128xf32>
      %84 = arith.negf %83 : vector<2x128xf32>
      %85 = math.exp %84 : vector<2x128xf32>
      %cst_43 = arith.constant 1.000000e+00 : f32
      %86 = vector.broadcast %cst_43 : f32 to vector<2x128xf32>
      %87 = arith.addf %86, %85 : vector<2x128xf32>
      %88 = arith.divf %86, %87 : vector<2x128xf32>
      %89 = vector.extract_strided_slice %76 {offsets = [0, 256], sizes = [2, 128], strides = [1, 1]} : vector<2x512xf32> to vector<2x128xf32>
      %90 = math.tanh %89 : vector<2x128xf32>
      %91 = vector.extract_strided_slice %76 {offsets = [0, 384], sizes = [2, 128], strides = [1, 1]} : vector<2x512xf32> to vector<2x128xf32>
      %92 = arith.negf %91 : vector<2x128xf32>
      %93 = math.exp %92 : vector<2x128xf32>
      %cst_44 = arith.constant 1.000000e+00 : f32
      %94 = vector.broadcast %cst_44 : f32 to vector<2x128xf32>
      %95 = arith.addf %94, %93 : vector<2x128xf32>
      %96 = arith.divf %94, %95 : vector<2x128xf32>
      %97 = arith.mulf %88, %arg15 : vector<2x128xf32>
      %98 = arith.mulf %82, %90 : vector<2x128xf32>
      %99 = arith.addf %97, %98 : vector<2x128xf32>
      %100 = math.tanh %99 : vector<2x128xf32>
      %101 = arith.mulf %96, %100 : vector<2x128xf32>
      %102 = vector.extract_strided_slice %73 {offsets = [0, 0], sizes = [2, 512], strides = [1, 1]} : vector<2x1024xf32> to vector<2x512xf32>
      %103 = vector.extract_strided_slice %71 {offsets = [0, 0], sizes = [2, 512], strides = [1, 1]} : vector<16x512xf32> to vector<2x512xf32>
      %104 = arith.addf %102, %103 : vector<2x512xf32>
      %105 = vector.extract_strided_slice %104 {offsets = [0, 0], sizes = [2, 128], strides = [1, 1]} : vector<2x512xf32> to vector<2x128xf32>
      %106 = arith.negf %105 : vector<2x128xf32>
      %107 = math.exp %106 : vector<2x128xf32>
      %cst_45 = arith.constant 1.000000e+00 : f32
      %108 = vector.broadcast %cst_45 : f32 to vector<2x128xf32>
      %109 = arith.addf %108, %107 : vector<2x128xf32>
      %110 = arith.divf %108, %109 : vector<2x128xf32>
      %111 = vector.extract_strided_slice %104 {offsets = [0, 128], sizes = [2, 128], strides = [1, 1]} : vector<2x512xf32> to vector<2x128xf32>
      %112 = arith.negf %111 : vector<2x128xf32>
      %113 = math.exp %112 : vector<2x128xf32>
      %cst_46 = arith.constant 1.000000e+00 : f32
      %114 = vector.broadcast %cst_46 : f32 to vector<2x128xf32>
      %115 = arith.addf %114, %113 : vector<2x128xf32>
      %116 = arith.divf %114, %115 : vector<2x128xf32>
      %117 = vector.extract_strided_slice %104 {offsets = [0, 256], sizes = [2, 128], strides = [1, 1]} : vector<2x512xf32> to vector<2x128xf32>
      %118 = math.tanh %117 : vector<2x128xf32>
      %119 = vector.extract_strided_slice %104 {offsets = [0, 384], sizes = [2, 128], strides = [1, 1]} : vector<2x512xf32> to vector<2x128xf32>
      %120 = arith.negf %119 : vector<2x128xf32>
      %121 = math.exp %120 : vector<2x128xf32>
      %cst_47 = arith.constant 1.000000e+00 : f32
      %122 = vector.broadcast %cst_47 : f32 to vector<2x128xf32>
      %123 = arith.addf %122, %121 : vector<2x128xf32>
      %124 = arith.divf %122, %123 : vector<2x128xf32>
      %125 = arith.mulf %116, %arg13 : vector<2x128xf32>
      %126 = arith.mulf %110, %118 : vector<2x128xf32>
      %127 = arith.addf %125, %126 : vector<2x128xf32>
      %128 = math.tanh %127 : vector<2x128xf32>
      %129 = arith.mulf %124, %128 : vector<2x128xf32>
      %130 = tpu.concatenate %129, %101 in 1 : vector<2x128xf32>, vector<2x128xf32> -> vector<2x256xf32>
      %cst_48 = arith.constant dense<0.000000e+00> : vector<2x1024xf32>
      %131 = tpu.matmul %130, %7, %cst_48 {dimension_numbers = #tpu.dot_dimension_numbers<[1], [0], [0], [1], [0, 0, 1, 1], [], []>} : vector<2x256xf32>, vector<256x1024xf32>, vector<2x1024xf32> -> vector<2x1024xf32>
      %132 = vector.extract_strided_slice %131 {offsets = [0, 512], sizes = [2, 512], strides = [1, 1]} : vector<2x1024xf32> to vector<2x512xf32>
      %133 = vector.broadcast %8 : vector<1x512xf32> to vector<2x512xf32>
      %134 = arith.addf %132, %133 : vector<2x512xf32>
      %135 = vector.extract_strided_slice %134 {offsets = [0, 0], sizes = [2, 128], strides = [1, 1]} : vector<2x512xf32> to vector<2x128xf32>
      %136 = arith.negf %135 : vector<2x128xf32>
      %137 = math.exp %136 : vector<2x128xf32>
      %cst_49 = arith.constant 1.000000e+00 : f32
      %138 = vector.broadcast %cst_49 : f32 to vector<2x128xf32>
      %139 = arith.addf %138, %137 : vector<2x128xf32>
      %140 = arith.divf %138, %139 : vector<2x128xf32>
      %141 = vector.extract_strided_slice %134 {offsets = [0, 128], sizes = [2, 128], strides = [1, 1]} : vector<2x512xf32> to vector<2x128xf32>
      %142 = arith.negf %141 : vector<2x128xf32>
      %143 = math.exp %142 : vector<2x128xf32>
      %cst_50 = arith.constant 1.000000e+00 : f32
      %144 = vector.broadcast %cst_50 : f32 to vector<2x128xf32>
      %145 = arith.addf %144, %143 : vector<2x128xf32>
      %146 = arith.divf %144, %145 : vector<2x128xf32>
      %147 = vector.extract_strided_slice %134 {offsets = [0, 256], sizes = [2, 128], strides = [1, 1]} : vector<2x512xf32> to vector<2x128xf32>
      %148 = math.tanh %147 : vector<2x128xf32>
      %149 = vector.extract_strided_slice %134 {offsets = [0, 384], sizes = [2, 128], strides = [1, 1]} : vector<2x512xf32> to vector<2x128xf32>
      %150 = arith.negf %149 : vector<2x128xf32>
      %151 = math.exp %150 : vector<2x128xf32>
      %cst_51 = arith.constant 1.000000e+00 : f32
      %152 = vector.broadcast %cst_51 : f32 to vector<2x128xf32>
      %153 = arith.addf %152, %151 : vector<2x128xf32>
      %154 = arith.divf %152, %153 : vector<2x128xf32>
      %155 = arith.mulf %146, %99 : vector<2x128xf32>
      %156 = arith.mulf %140, %148 : vector<2x128xf32>
      %157 = arith.addf %155, %156 : vector<2x128xf32>
      %158 = math.tanh %157 : vector<2x128xf32>
      %159 = arith.mulf %154, %158 : vector<2x128xf32>
      %160 = vector.extract_strided_slice %131 {offsets = [0, 0], sizes = [2, 512], strides = [1, 1]} : vector<2x1024xf32> to vector<2x512xf32>
      %161 = vector.extract_strided_slice %71 {offsets = [2, 0], sizes = [2, 512], strides = [1, 1]} : vector<16x512xf32> to vector<2x512xf32>
      %162 = arith.addf %160, %161 : vector<2x512xf32>
      %163 = vector.extract_strided_slice %162 {offsets = [0, 0], sizes = [2, 128], strides = [1, 1]} : vector<2x512xf32> to vector<2x128xf32>
      %164 = arith.negf %163 : vector<2x128xf32>
      %165 = math.exp %164 : vector<2x128xf32>
      %cst_52 = arith.constant 1.000000e+00 : f32
      %166 = vector.broadcast %cst_52 : f32 to vector<2x128xf32>
      %167 = arith.addf %166, %165 : vector<2x128xf32>
      %168 = arith.divf %166, %167 : vector<2x128xf32>
      %169 = vector.extract_strided_slice %162 {offsets = [0, 128], sizes = [2, 128], strides = [1, 1]} : vector<2x512xf32> to vector<2x128xf32>
      %170 = arith.negf %169 : vector<2x128xf32>
      %171 = math.exp %170 : vector<2x128xf32>
      %cst_53 = arith.constant 1.000000e+00 : f32
      %172 = vector.broadcast %cst_53 : f32 to vector<2x128xf32>
      %173 = arith.addf %172, %171 : vector<2x128xf32>
      %174 = arith.divf %172, %173 : vector<2x128xf32>
      %175 = vector.extract_strided_slice %162 {offsets = [0, 256], sizes = [2, 128], strides = [1, 1]} : vector<2x512xf32> to vector<2x128xf32>
      %176 = math.tanh %175 : vector<2x128xf32>
      %177 = vector.extract_strided_slice %162 {offsets = [0, 384], sizes = [2, 128], strides = [1, 1]} : vector<2x512xf32> to vector<2x128xf32>
      %178 = arith.negf %177 : vector<2x128xf32>
      %179 = math.exp %178 : vector<2x128xf32>
      %cst_54 = arith.constant 1.000000e+00 : f32
      %180 = vector.broadcast %cst_54 : f32 to vector<2x128xf32>
      %181 = arith.addf %180, %179 : vector<2x128xf32>
      %182 = arith.divf %180, %181 : vector<2x128xf32>
      %183 = arith.mulf %174, %127 : vector<2x128xf32>
      %184 = arith.mulf %168, %176 : vector<2x128xf32>
      %185 = arith.addf %183, %184 : vector<2x128xf32>
      %186 = math.tanh %185 : vector<2x128xf32>
      %187 = arith.mulf %182, %186 : vector<2x128xf32>
      %188 = tpu.concatenate %187, %159 in 1 : vector<2x128xf32>, vector<2x128xf32> -> vector<2x256xf32>
      %cst_55 = arith.constant dense<0.000000e+00> : vector<2x1024xf32>
      %189 = tpu.matmul %188, %7, %cst_55 {dimension_numbers = #tpu.dot_dimension_numbers<[1], [0], [0], [1], [0, 0, 1, 1], [], []>} : vector<2x256xf32>, vector<256x1024xf32>, vector<2x1024xf32> -> vector<2x1024xf32>
      %190 = vector.extract_strided_slice %189 {offsets = [0, 512], sizes = [2, 512], strides = [1, 1]} : vector<2x1024xf32> to vector<2x512xf32>
      %191 = vector.broadcast %8 : vector<1x512xf32> to vector<2x512xf32>
      %192 = arith.addf %190, %191 : vector<2x512xf32>
      %193 = vector.extract_strided_slice %192 {offsets = [0, 0], sizes = [2, 128], strides = [1, 1]} : vector<2x512xf32> to vector<2x128xf32>
      %194 = arith.negf %193 : vector<2x128xf32>
      %195 = math.exp %194 : vector<2x128xf32>
      %cst_56 = arith.constant 1.000000e+00 : f32
      %196 = vector.broadcast %cst_56 : f32 to vector<2x128xf32>
      %197 = arith.addf %196, %195 : vector<2x128xf32>
      %198 = arith.divf %196, %197 : vector<2x128xf32>
      %199 = vector.extract_strided_slice %192 {offsets = [0, 128], sizes = [2, 128], strides = [1, 1]} : vector<2x512xf32> to vector<2x128xf32>
      %200 = arith.negf %199 : vector<2x128xf32>
      %201 = math.exp %200 : vector<2x128xf32>
      %cst_57 = arith.constant 1.000000e+00 : f32
      %202 = vector.broadcast %cst_57 : f32 to vector<2x128xf32>
      %203 = arith.addf %202, %201 : vector<2x128xf32>
      %204 = arith.divf %202, %203 : vector<2x128xf32>
      %205 = vector.extract_strided_slice %192 {offsets = [0, 256], sizes = [2, 128], strides = [1, 1]} : vector<2x512xf32> to vector<2x128xf32>
      %206 = math.tanh %205 : vector<2x128xf32>
      %207 = vector.extract_strided_slice %192 {offsets = [0, 384], sizes = [2, 128], strides = [1, 1]} : vector<2x512xf32> to vector<2x128xf32>
      %208 = arith.negf %207 : vector<2x128xf32>
      %209 = math.exp %208 : vector<2x128xf32>
      %cst_58 = arith.constant 1.000000e+00 : f32
      %210 = vector.broadcast %cst_58 : f32 to vector<2x128xf32>
      %211 = arith.addf %210, %209 : vector<2x128xf32>
      %212 = arith.divf %210, %211 : vector<2x128xf32>
      %213 = arith.mulf %204, %157 : vector<2x128xf32>
      %214 = arith.mulf %198, %206 : vector<2x128xf32>
      %215 = arith.addf %213, %214 : vector<2x128xf32>
      %216 = math.tanh %215 : vector<2x128xf32>
      %217 = arith.mulf %212, %216 : vector<2x128xf32>
      %218 = vector.extract_strided_slice %189 {offsets = [0, 0], sizes = [2, 512], strides = [1, 1]} : vector<2x1024xf32> to vector<2x512xf32>
      %219 = vector.extract_strided_slice %71 {offsets = [4, 0], sizes = [2, 512], strides = [1, 1]} : vector<16x512xf32> to vector<2x512xf32>
      %220 = arith.addf %218, %219 : vector<2x512xf32>
      %221 = vector.extract_strided_slice %220 {offsets = [0, 0], sizes = [2, 128], strides = [1, 1]} : vector<2x512xf32> to vector<2x128xf32>
      %222 = arith.negf %221 : vector<2x128xf32>
      %223 = math.exp %222 : vector<2x128xf32>
      %cst_59 = arith.constant 1.000000e+00 : f32
      %224 = vector.broadcast %cst_59 : f32 to vector<2x128xf32>
      %225 = arith.addf %224, %223 : vector<2x128xf32>
      %226 = arith.divf %224, %225 : vector<2x128xf32>
      %227 = vector.extract_strided_slice %220 {offsets = [0, 128], sizes = [2, 128], strides = [1, 1]} : vector<2x512xf32> to vector<2x128xf32>
      %228 = arith.negf %227 : vector<2x128xf32>
      %229 = math.exp %228 : vector<2x128xf32>
      %cst_60 = arith.constant 1.000000e+00 : f32
      %230 = vector.broadcast %cst_60 : f32 to vector<2x128xf32>
      %231 = arith.addf %230, %229 : vector<2x128xf32>
      %232 = arith.divf %230, %231 : vector<2x128xf32>
      %233 = vector.extract_strided_slice %220 {offsets = [0, 256], sizes = [2, 128], strides = [1, 1]} : vector<2x512xf32> to vector<2x128xf32>
      %234 = math.tanh %233 : vector<2x128xf32>
      %235 = vector.extract_strided_slice %220 {offsets = [0, 384], sizes = [2, 128], strides = [1, 1]} : vector<2x512xf32> to vector<2x128xf32>
      %236 = arith.negf %235 : vector<2x128xf32>
      %237 = math.exp %236 : vector<2x128xf32>
      %cst_61 = arith.constant 1.000000e+00 : f32
      %238 = vector.broadcast %cst_61 : f32 to vector<2x128xf32>
      %239 = arith.addf %238, %237 : vector<2x128xf32>
      %240 = arith.divf %238, %239 : vector<2x128xf32>
      %241 = arith.mulf %232, %185 : vector<2x128xf32>
      %242 = arith.mulf %226, %234 : vector<2x128xf32>
      %243 = arith.addf %241, %242 : vector<2x128xf32>
      %244 = math.tanh %243 : vector<2x128xf32>
      %245 = arith.mulf %240, %244 : vector<2x128xf32>
      %246 = tpu.concatenate %245, %217 in 1 : vector<2x128xf32>, vector<2x128xf32> -> vector<2x256xf32>
      %cst_62 = arith.constant dense<0.000000e+00> : vector<2x1024xf32>
      %247 = tpu.matmul %246, %7, %cst_62 {dimension_numbers = #tpu.dot_dimension_numbers<[1], [0], [0], [1], [0, 0, 1, 1], [], []>} : vector<2x256xf32>, vector<256x1024xf32>, vector<2x1024xf32> -> vector<2x1024xf32>
      %248 = vector.extract_strided_slice %247 {offsets = [0, 512], sizes = [2, 512], strides = [1, 1]} : vector<2x1024xf32> to vector<2x512xf32>
      %249 = vector.broadcast %8 : vector<1x512xf32> to vector<2x512xf32>
      %250 = arith.addf %248, %249 : vector<2x512xf32>
      %251 = vector.extract_strided_slice %250 {offsets = [0, 0], sizes = [2, 128], strides = [1, 1]} : vector<2x512xf32> to vector<2x128xf32>
      %252 = arith.negf %251 : vector<2x128xf32>
      %253 = math.exp %252 : vector<2x128xf32>
      %cst_63 = arith.constant 1.000000e+00 : f32
      %254 = vector.broadcast %cst_63 : f32 to vector<2x128xf32>
      %255 = arith.addf %254, %253 : vector<2x128xf32>
      %256 = arith.divf %254, %255 : vector<2x128xf32>
      %257 = vector.extract_strided_slice %250 {offsets = [0, 128], sizes = [2, 128], strides = [1, 1]} : vector<2x512xf32> to vector<2x128xf32>
      %258 = arith.negf %257 : vector<2x128xf32>
      %259 = math.exp %258 : vector<2x128xf32>
      %cst_64 = arith.constant 1.000000e+00 : f32
      %260 = vector.broadcast %cst_64 : f32 to vector<2x128xf32>
      %261 = arith.addf %260, %259 : vector<2x128xf32>
      %262 = arith.divf %260, %261 : vector<2x128xf32>
      %263 = vector.extract_strided_slice %250 {offsets = [0, 256], sizes = [2, 128], strides = [1, 1]} : vector<2x512xf32> to vector<2x128xf32>
      %264 = math.tanh %263 : vector<2x128xf32>
      %265 = vector.extract_strided_slice %250 {offsets = [0, 384], sizes = [2, 128], strides = [1, 1]} : vector<2x512xf32> to vector<2x128xf32>
      %266 = arith.negf %265 : vector<2x128xf32>
      %267 = math.exp %266 : vector<2x128xf32>
      %cst_65 = arith.constant 1.000000e+00 : f32
      %268 = vector.broadcast %cst_65 : f32 to vector<2x128xf32>
      %269 = arith.addf %268, %267 : vector<2x128xf32>
      %270 = arith.divf %268, %269 : vector<2x128xf32>
      %271 = arith.mulf %262, %215 : vector<2x128xf32>
      %272 = arith.mulf %256, %264 : vector<2x128xf32>
      %273 = arith.addf %271, %272 : vector<2x128xf32>
      %274 = math.tanh %273 : vector<2x128xf32>
      %275 = arith.mulf %270, %274 : vector<2x128xf32>
      %276 = vector.extract_strided_slice %247 {offsets = [0, 0], sizes = [2, 512], strides = [1, 1]} : vector<2x1024xf32> to vector<2x512xf32>
      %277 = vector.extract_strided_slice %71 {offsets = [6, 0], sizes = [2, 512], strides = [1, 1]} : vector<16x512xf32> to vector<2x512xf32>
      %278 = arith.addf %276, %277 : vector<2x512xf32>
      %279 = vector.extract_strided_slice %278 {offsets = [0, 0], sizes = [2, 128], strides = [1, 1]} : vector<2x512xf32> to vector<2x128xf32>
      %280 = arith.negf %279 : vector<2x128xf32>
      %281 = math.exp %280 : vector<2x128xf32>
      %cst_66 = arith.constant 1.000000e+00 : f32
      %282 = vector.broadcast %cst_66 : f32 to vector<2x128xf32>
      %283 = arith.addf %282, %281 : vector<2x128xf32>
      %284 = arith.divf %282, %283 : vector<2x128xf32>
      %285 = vector.extract_strided_slice %278 {offsets = [0, 128], sizes = [2, 128], strides = [1, 1]} : vector<2x512xf32> to vector<2x128xf32>
      %286 = arith.negf %285 : vector<2x128xf32>
      %287 = math.exp %286 : vector<2x128xf32>
      %cst_67 = arith.constant 1.000000e+00 : f32
      %288 = vector.broadcast %cst_67 : f32 to vector<2x128xf32>
      %289 = arith.addf %288, %287 : vector<2x128xf32>
      %290 = arith.divf %288, %289 : vector<2x128xf32>
      %291 = vector.extract_strided_slice %278 {offsets = [0, 256], sizes = [2, 128], strides = [1, 1]} : vector<2x512xf32> to vector<2x128xf32>
      %292 = math.tanh %291 : vector<2x128xf32>
      %293 = vector.extract_strided_slice %278 {offsets = [0, 384], sizes = [2, 128], strides = [1, 1]} : vector<2x512xf32> to vector<2x128xf32>
      %294 = arith.negf %293 : vector<2x128xf32>
      %295 = math.exp %294 : vector<2x128xf32>
      %cst_68 = arith.constant 1.000000e+00 : f32
      %296 = vector.broadcast %cst_68 : f32 to vector<2x128xf32>
      %297 = arith.addf %296, %295 : vector<2x128xf32>
      %298 = arith.divf %296, %297 : vector<2x128xf32>
      %299 = arith.mulf %290, %243 : vector<2x128xf32>
      %300 = arith.mulf %284, %292 : vector<2x128xf32>
      %301 = arith.addf %299, %300 : vector<2x128xf32>
      %302 = math.tanh %301 : vector<2x128xf32>
      %303 = arith.mulf %298, %302 : vector<2x128xf32>
      %304 = tpu.concatenate %303, %275 in 1 : vector<2x128xf32>, vector<2x128xf32> -> vector<2x256xf32>
      %cst_69 = arith.constant dense<0.000000e+00> : vector<2x1024xf32>
      %305 = tpu.matmul %304, %7, %cst_69 {dimension_numbers = #tpu.dot_dimension_numbers<[1], [0], [0], [1], [0, 0, 1, 1], [], []>} : vector<2x256xf32>, vector<256x1024xf32>, vector<2x1024xf32> -> vector<2x1024xf32>
      %306 = vector.extract_strided_slice %305 {offsets = [0, 512], sizes = [2, 512], strides = [1, 1]} : vector<2x1024xf32> to vector<2x512xf32>
      %307 = vector.broadcast %8 : vector<1x512xf32> to vector<2x512xf32>
      %308 = arith.addf %306, %307 : vector<2x512xf32>
      %309 = vector.extract_strided_slice %308 {offsets = [0, 0], sizes = [2, 128], strides = [1, 1]} : vector<2x512xf32> to vector<2x128xf32>
      %310 = arith.negf %309 : vector<2x128xf32>
      %311 = math.exp %310 : vector<2x128xf32>
      %cst_70 = arith.constant 1.000000e+00 : f32
      %312 = vector.broadcast %cst_70 : f32 to vector<2x128xf32>
      %313 = arith.addf %312, %311 : vector<2x128xf32>
      %314 = arith.divf %312, %313 : vector<2x128xf32>
      %315 = vector.extract_strided_slice %308 {offsets = [0, 128], sizes = [2, 128], strides = [1, 1]} : vector<2x512xf32> to vector<2x128xf32>
      %316 = arith.negf %315 : vector<2x128xf32>
      %317 = math.exp %316 : vector<2x128xf32>
      %cst_71 = arith.constant 1.000000e+00 : f32
      %318 = vector.broadcast %cst_71 : f32 to vector<2x128xf32>
      %319 = arith.addf %318, %317 : vector<2x128xf32>
      %320 = arith.divf %318, %319 : vector<2x128xf32>
      %321 = vector.extract_strided_slice %308 {offsets = [0, 256], sizes = [2, 128], strides = [1, 1]} : vector<2x512xf32> to vector<2x128xf32>
      %322 = math.tanh %321 : vector<2x128xf32>
      %323 = vector.extract_strided_slice %308 {offsets = [0, 384], sizes = [2, 128], strides = [1, 1]} : vector<2x512xf32> to vector<2x128xf32>
      %324 = arith.negf %323 : vector<2x128xf32>
      %325 = math.exp %324 : vector<2x128xf32>
      %cst_72 = arith.constant 1.000000e+00 : f32
      %326 = vector.broadcast %cst_72 : f32 to vector<2x128xf32>
      %327 = arith.addf %326, %325 : vector<2x128xf32>
      %328 = arith.divf %326, %327 : vector<2x128xf32>
      %329 = arith.mulf %320, %273 : vector<2x128xf32>
      %330 = arith.mulf %314, %322 : vector<2x128xf32>
      %331 = arith.addf %329, %330 : vector<2x128xf32>
      %332 = math.tanh %331 : vector<2x128xf32>
      %333 = arith.mulf %328, %332 : vector<2x128xf32>
      %334 = vector.extract_strided_slice %305 {offsets = [0, 0], sizes = [2, 512], strides = [1, 1]} : vector<2x1024xf32> to vector<2x512xf32>
      %335 = vector.extract_strided_slice %71 {offsets = [8, 0], sizes = [2, 512], strides = [1, 1]} : vector<16x512xf32> to vector<2x512xf32>
      %336 = arith.addf %334, %335 : vector<2x512xf32>
      %337 = vector.extract_strided_slice %336 {offsets = [0, 0], sizes = [2, 128], strides = [1, 1]} : vector<2x512xf32> to vector<2x128xf32>
      %338 = arith.negf %337 : vector<2x128xf32>
      %339 = math.exp %338 : vector<2x128xf32>
      %cst_73 = arith.constant 1.000000e+00 : f32
      %340 = vector.broadcast %cst_73 : f32 to vector<2x128xf32>
      %341 = arith.addf %340, %339 : vector<2x128xf32>
      %342 = arith.divf %340, %341 : vector<2x128xf32>
      %343 = vector.extract_strided_slice %336 {offsets = [0, 128], sizes = [2, 128], strides = [1, 1]} : vector<2x512xf32> to vector<2x128xf32>
      %344 = arith.negf %343 : vector<2x128xf32>
      %345 = math.exp %344 : vector<2x128xf32>
      %cst_74 = arith.constant 1.000000e+00 : f32
      %346 = vector.broadcast %cst_74 : f32 to vector<2x128xf32>
      %347 = arith.addf %346, %345 : vector<2x128xf32>
      %348 = arith.divf %346, %347 : vector<2x128xf32>
      %349 = vector.extract_strided_slice %336 {offsets = [0, 256], sizes = [2, 128], strides = [1, 1]} : vector<2x512xf32> to vector<2x128xf32>
      %350 = math.tanh %349 : vector<2x128xf32>
      %351 = vector.extract_strided_slice %336 {offsets = [0, 384], sizes = [2, 128], strides = [1, 1]} : vector<2x512xf32> to vector<2x128xf32>
      %352 = arith.negf %351 : vector<2x128xf32>
      %353 = math.exp %352 : vector<2x128xf32>
      %cst_75 = arith.constant 1.000000e+00 : f32
      %354 = vector.broadcast %cst_75 : f32 to vector<2x128xf32>
      %355 = arith.addf %354, %353 : vector<2x128xf32>
      %356 = arith.divf %354, %355 : vector<2x128xf32>
      %357 = arith.mulf %348, %301 : vector<2x128xf32>
      %358 = arith.mulf %342, %350 : vector<2x128xf32>
      %359 = arith.addf %357, %358 : vector<2x128xf32>
      %360 = math.tanh %359 : vector<2x128xf32>
      %361 = arith.mulf %356, %360 : vector<2x128xf32>
      %362 = tpu.concatenate %361, %333 in 1 : vector<2x128xf32>, vector<2x128xf32> -> vector<2x256xf32>
      %cst_76 = arith.constant dense<0.000000e+00> : vector<2x1024xf32>
      %363 = tpu.matmul %362, %7, %cst_76 {dimension_numbers = #tpu.dot_dimension_numbers<[1], [0], [0], [1], [0, 0, 1, 1], [], []>} : vector<2x256xf32>, vector<256x1024xf32>, vector<2x1024xf32> -> vector<2x1024xf32>
      %364 = vector.extract_strided_slice %363 {offsets = [0, 512], sizes = [2, 512], strides = [1, 1]} : vector<2x1024xf32> to vector<2x512xf32>
      %365 = vector.broadcast %8 : vector<1x512xf32> to vector<2x512xf32>
      %366 = arith.addf %364, %365 : vector<2x512xf32>
      %367 = vector.extract_strided_slice %366 {offsets = [0, 0], sizes = [2, 128], strides = [1, 1]} : vector<2x512xf32> to vector<2x128xf32>
      %368 = arith.negf %367 : vector<2x128xf32>
      %369 = math.exp %368 : vector<2x128xf32>
      %cst_77 = arith.constant 1.000000e+00 : f32
      %370 = vector.broadcast %cst_77 : f32 to vector<2x128xf32>
      %371 = arith.addf %370, %369 : vector<2x128xf32>
      %372 = arith.divf %370, %371 : vector<2x128xf32>
      %373 = vector.extract_strided_slice %366 {offsets = [0, 128], sizes = [2, 128], strides = [1, 1]} : vector<2x512xf32> to vector<2x128xf32>
      %374 = arith.negf %373 : vector<2x128xf32>
      %375 = math.exp %374 : vector<2x128xf32>
      %cst_78 = arith.constant 1.000000e+00 : f32
      %376 = vector.broadcast %cst_78 : f32 to vector<2x128xf32>
      %377 = arith.addf %376, %375 : vector<2x128xf32>
      %378 = arith.divf %376, %377 : vector<2x128xf32>
      %379 = vector.extract_strided_slice %366 {offsets = [0, 256], sizes = [2, 128], strides = [1, 1]} : vector<2x512xf32> to vector<2x128xf32>
      %380 = math.tanh %379 : vector<2x128xf32>
      %381 = vector.extract_strided_slice %366 {offsets = [0, 384], sizes = [2, 128], strides = [1, 1]} : vector<2x512xf32> to vector<2x128xf32>
      %382 = arith.negf %381 : vector<2x128xf32>
      %383 = math.exp %382 : vector<2x128xf32>
      %cst_79 = arith.constant 1.000000e+00 : f32
      %384 = vector.broadcast %cst_79 : f32 to vector<2x128xf32>
      %385 = arith.addf %384, %383 : vector<2x128xf32>
      %386 = arith.divf %384, %385 : vector<2x128xf32>
      %387 = arith.mulf %378, %331 : vector<2x128xf32>
      %388 = arith.mulf %372, %380 : vector<2x128xf32>
      %389 = arith.addf %387, %388 : vector<2x128xf32>
      %390 = math.tanh %389 : vector<2x128xf32>
      %391 = arith.mulf %386, %390 : vector<2x128xf32>
      %392 = vector.extract_strided_slice %363 {offsets = [0, 0], sizes = [2, 512], strides = [1, 1]} : vector<2x1024xf32> to vector<2x512xf32>
      %393 = vector.extract_strided_slice %71 {offsets = [10, 0], sizes = [2, 512], strides = [1, 1]} : vector<16x512xf32> to vector<2x512xf32>
      %394 = arith.addf %392, %393 : vector<2x512xf32>
      %395 = vector.extract_strided_slice %394 {offsets = [0, 0], sizes = [2, 128], strides = [1, 1]} : vector<2x512xf32> to vector<2x128xf32>
      %396 = arith.negf %395 : vector<2x128xf32>
      %397 = math.exp %396 : vector<2x128xf32>
      %cst_80 = arith.constant 1.000000e+00 : f32
      %398 = vector.broadcast %cst_80 : f32 to vector<2x128xf32>
      %399 = arith.addf %398, %397 : vector<2x128xf32>
      %400 = arith.divf %398, %399 : vector<2x128xf32>
      %401 = vector.extract_strided_slice %394 {offsets = [0, 128], sizes = [2, 128], strides = [1, 1]} : vector<2x512xf32> to vector<2x128xf32>
      %402 = arith.negf %401 : vector<2x128xf32>
      %403 = math.exp %402 : vector<2x128xf32>
      %cst_81 = arith.constant 1.000000e+00 : f32
      %404 = vector.broadcast %cst_81 : f32 to vector<2x128xf32>
      %405 = arith.addf %404, %403 : vector<2x128xf32>
      %406 = arith.divf %404, %405 : vector<2x128xf32>
      %407 = vector.extract_strided_slice %394 {offsets = [0, 256], sizes = [2, 128], strides = [1, 1]} : vector<2x512xf32> to vector<2x128xf32>
      %408 = math.tanh %407 : vector<2x128xf32>
      %409 = vector.extract_strided_slice %394 {offsets = [0, 384], sizes = [2, 128], strides = [1, 1]} : vector<2x512xf32> to vector<2x128xf32>
      %410 = arith.negf %409 : vector<2x128xf32>
      %411 = math.exp %410 : vector<2x128xf32>
      %cst_82 = arith.constant 1.000000e+00 : f32
      %412 = vector.broadcast %cst_82 : f32 to vector<2x128xf32>
      %413 = arith.addf %412, %411 : vector<2x128xf32>
      %414 = arith.divf %412, %413 : vector<2x128xf32>
      %415 = arith.mulf %406, %359 : vector<2x128xf32>
      %416 = arith.mulf %400, %408 : vector<2x128xf32>
      %417 = arith.addf %415, %416 : vector<2x128xf32>
      %418 = math.tanh %417 : vector<2x128xf32>
      %419 = arith.mulf %414, %418 : vector<2x128xf32>
      %420 = tpu.concatenate %419, %391 in 1 : vector<2x128xf32>, vector<2x128xf32> -> vector<2x256xf32>
      %cst_83 = arith.constant dense<0.000000e+00> : vector<2x1024xf32>
      %421 = tpu.matmul %420, %7, %cst_83 {dimension_numbers = #tpu.dot_dimension_numbers<[1], [0], [0], [1], [0, 0, 1, 1], [], []>} : vector<2x256xf32>, vector<256x1024xf32>, vector<2x1024xf32> -> vector<2x1024xf32>
      %422 = vector.extract_strided_slice %421 {offsets = [0, 512], sizes = [2, 512], strides = [1, 1]} : vector<2x1024xf32> to vector<2x512xf32>
      %423 = vector.broadcast %8 : vector<1x512xf32> to vector<2x512xf32>
      %424 = arith.addf %422, %423 : vector<2x512xf32>
      %425 = vector.extract_strided_slice %424 {offsets = [0, 0], sizes = [2, 128], strides = [1, 1]} : vector<2x512xf32> to vector<2x128xf32>
      %426 = arith.negf %425 : vector<2x128xf32>
      %427 = math.exp %426 : vector<2x128xf32>
      %cst_84 = arith.constant 1.000000e+00 : f32
      %428 = vector.broadcast %cst_84 : f32 to vector<2x128xf32>
      %429 = arith.addf %428, %427 : vector<2x128xf32>
      %430 = arith.divf %428, %429 : vector<2x128xf32>
      %431 = vector.extract_strided_slice %424 {offsets = [0, 128], sizes = [2, 128], strides = [1, 1]} : vector<2x512xf32> to vector<2x128xf32>
      %432 = arith.negf %431 : vector<2x128xf32>
      %433 = math.exp %432 : vector<2x128xf32>
      %cst_85 = arith.constant 1.000000e+00 : f32
      %434 = vector.broadcast %cst_85 : f32 to vector<2x128xf32>
      %435 = arith.addf %434, %433 : vector<2x128xf32>
      %436 = arith.divf %434, %435 : vector<2x128xf32>
      %437 = vector.extract_strided_slice %424 {offsets = [0, 256], sizes = [2, 128], strides = [1, 1]} : vector<2x512xf32> to vector<2x128xf32>
      %438 = math.tanh %437 : vector<2x128xf32>
      %439 = vector.extract_strided_slice %424 {offsets = [0, 384], sizes = [2, 128], strides = [1, 1]} : vector<2x512xf32> to vector<2x128xf32>
      %440 = arith.negf %439 : vector<2x128xf32>
      %441 = math.exp %440 : vector<2x128xf32>
      %cst_86 = arith.constant 1.000000e+00 : f32
      %442 = vector.broadcast %cst_86 : f32 to vector<2x128xf32>
      %443 = arith.addf %442, %441 : vector<2x128xf32>
      %444 = arith.divf %442, %443 : vector<2x128xf32>
      %445 = arith.mulf %436, %389 : vector<2x128xf32>
      %446 = arith.mulf %430, %438 : vector<2x128xf32>
      %447 = arith.addf %445, %446 : vector<2x128xf32>
      %448 = math.tanh %447 : vector<2x128xf32>
      %449 = arith.mulf %444, %448 : vector<2x128xf32>
      %450 = vector.extract_strided_slice %421 {offsets = [0, 0], sizes = [2, 512], strides = [1, 1]} : vector<2x1024xf32> to vector<2x512xf32>
      %451 = vector.extract_strided_slice %71 {offsets = [12, 0], sizes = [2, 512], strides = [1, 1]} : vector<16x512xf32> to vector<2x512xf32>
      %452 = arith.addf %450, %451 : vector<2x512xf32>
      %453 = vector.extract_strided_slice %452 {offsets = [0, 0], sizes = [2, 128], strides = [1, 1]} : vector<2x512xf32> to vector<2x128xf32>
      %454 = arith.negf %453 : vector<2x128xf32>
      %455 = math.exp %454 : vector<2x128xf32>
      %cst_87 = arith.constant 1.000000e+00 : f32
      %456 = vector.broadcast %cst_87 : f32 to vector<2x128xf32>
      %457 = arith.addf %456, %455 : vector<2x128xf32>
      %458 = arith.divf %456, %457 : vector<2x128xf32>
      %459 = vector.extract_strided_slice %452 {offsets = [0, 128], sizes = [2, 128], strides = [1, 1]} : vector<2x512xf32> to vector<2x128xf32>
      %460 = arith.negf %459 : vector<2x128xf32>
      %461 = math.exp %460 : vector<2x128xf32>
      %cst_88 = arith.constant 1.000000e+00 : f32
      %462 = vector.broadcast %cst_88 : f32 to vector<2x128xf32>
      %463 = arith.addf %462, %461 : vector<2x128xf32>
      %464 = arith.divf %462, %463 : vector<2x128xf32>
      %465 = vector.extract_strided_slice %452 {offsets = [0, 256], sizes = [2, 128], strides = [1, 1]} : vector<2x512xf32> to vector<2x128xf32>
      %466 = math.tanh %465 : vector<2x128xf32>
      %467 = vector.extract_strided_slice %452 {offsets = [0, 384], sizes = [2, 128], strides = [1, 1]} : vector<2x512xf32> to vector<2x128xf32>
      %468 = arith.negf %467 : vector<2x128xf32>
      %469 = math.exp %468 : vector<2x128xf32>
      %cst_89 = arith.constant 1.000000e+00 : f32
      %470 = vector.broadcast %cst_89 : f32 to vector<2x128xf32>
      %471 = arith.addf %470, %469 : vector<2x128xf32>
      %472 = arith.divf %470, %471 : vector<2x128xf32>
      %473 = arith.mulf %464, %417 : vector<2x128xf32>
      %474 = arith.mulf %458, %466 : vector<2x128xf32>
      %475 = arith.addf %473, %474 : vector<2x128xf32>
      %476 = math.tanh %475 : vector<2x128xf32>
      %477 = arith.mulf %472, %476 : vector<2x128xf32>
      %478 = tpu.concatenate %477, %449 in 1 : vector<2x128xf32>, vector<2x128xf32> -> vector<2x256xf32>
      %cst_90 = arith.constant dense<0.000000e+00> : vector<2x1024xf32>
      %479 = tpu.matmul %478, %7, %cst_90 {dimension_numbers = #tpu.dot_dimension_numbers<[1], [0], [0], [1], [0, 0, 1, 1], [], []>} : vector<2x256xf32>, vector<256x1024xf32>, vector<2x1024xf32> -> vector<2x1024xf32>
      %480 = vector.extract_strided_slice %479 {offsets = [0, 512], sizes = [2, 512], strides = [1, 1]} : vector<2x1024xf32> to vector<2x512xf32>
      %481 = vector.broadcast %8 : vector<1x512xf32> to vector<2x512xf32>
      %482 = arith.addf %480, %481 : vector<2x512xf32>
      %483 = vector.extract_strided_slice %482 {offsets = [0, 0], sizes = [2, 128], strides = [1, 1]} : vector<2x512xf32> to vector<2x128xf32>
      %484 = arith.negf %483 : vector<2x128xf32>
      %485 = math.exp %484 : vector<2x128xf32>
      %cst_91 = arith.constant 1.000000e+00 : f32
      %486 = vector.broadcast %cst_91 : f32 to vector<2x128xf32>
      %487 = arith.addf %486, %485 : vector<2x128xf32>
      %488 = arith.divf %486, %487 : vector<2x128xf32>
      %489 = vector.extract_strided_slice %482 {offsets = [0, 128], sizes = [2, 128], strides = [1, 1]} : vector<2x512xf32> to vector<2x128xf32>
      %490 = arith.negf %489 : vector<2x128xf32>
      %491 = math.exp %490 : vector<2x128xf32>
      %cst_92 = arith.constant 1.000000e+00 : f32
      %492 = vector.broadcast %cst_92 : f32 to vector<2x128xf32>
      %493 = arith.addf %492, %491 : vector<2x128xf32>
      %494 = arith.divf %492, %493 : vector<2x128xf32>
      %495 = vector.extract_strided_slice %482 {offsets = [0, 256], sizes = [2, 128], strides = [1, 1]} : vector<2x512xf32> to vector<2x128xf32>
      %496 = math.tanh %495 : vector<2x128xf32>
      %497 = vector.extract_strided_slice %482 {offsets = [0, 384], sizes = [2, 128], strides = [1, 1]} : vector<2x512xf32> to vector<2x128xf32>
      %498 = arith.negf %497 : vector<2x128xf32>
      %499 = math.exp %498 : vector<2x128xf32>
      %cst_93 = arith.constant 1.000000e+00 : f32
      %500 = vector.broadcast %cst_93 : f32 to vector<2x128xf32>
      %501 = arith.addf %500, %499 : vector<2x128xf32>
      %502 = arith.divf %500, %501 : vector<2x128xf32>
      %503 = arith.mulf %494, %447 : vector<2x128xf32>
      %504 = arith.mulf %488, %496 : vector<2x128xf32>
      %505 = arith.addf %503, %504 : vector<2x128xf32>
      %506 = math.tanh %505 : vector<2x128xf32>
      %507 = arith.mulf %502, %506 : vector<2x128xf32>
      %508 = vector.extract_strided_slice %479 {offsets = [0, 0], sizes = [2, 512], strides = [1, 1]} : vector<2x1024xf32> to vector<2x512xf32>
      %509 = vector.extract_strided_slice %71 {offsets = [14, 0], sizes = [2, 512], strides = [1, 1]} : vector<16x512xf32> to vector<2x512xf32>
      %510 = arith.addf %508, %509 : vector<2x512xf32>
      %511 = vector.extract_strided_slice %510 {offsets = [0, 0], sizes = [2, 128], strides = [1, 1]} : vector<2x512xf32> to vector<2x128xf32>
      %512 = arith.negf %511 : vector<2x128xf32>
      %513 = math.exp %512 : vector<2x128xf32>
      %cst_94 = arith.constant 1.000000e+00 : f32
      %514 = vector.broadcast %cst_94 : f32 to vector<2x128xf32>
      %515 = arith.addf %514, %513 : vector<2x128xf32>
      %516 = arith.divf %514, %515 : vector<2x128xf32>
      %517 = vector.extract_strided_slice %510 {offsets = [0, 128], sizes = [2, 128], strides = [1, 1]} : vector<2x512xf32> to vector<2x128xf32>
      %518 = arith.negf %517 : vector<2x128xf32>
      %519 = math.exp %518 : vector<2x128xf32>
      %cst_95 = arith.constant 1.000000e+00 : f32
      %520 = vector.broadcast %cst_95 : f32 to vector<2x128xf32>
      %521 = arith.addf %520, %519 : vector<2x128xf32>
      %522 = arith.divf %520, %521 : vector<2x128xf32>
      %523 = vector.extract_strided_slice %510 {offsets = [0, 256], sizes = [2, 128], strides = [1, 1]} : vector<2x512xf32> to vector<2x128xf32>
      %524 = math.tanh %523 : vector<2x128xf32>
      %525 = vector.extract_strided_slice %510 {offsets = [0, 384], sizes = [2, 128], strides = [1, 1]} : vector<2x512xf32> to vector<2x128xf32>
      %526 = arith.negf %525 : vector<2x128xf32>
      %527 = math.exp %526 : vector<2x128xf32>
      %cst_96 = arith.constant 1.000000e+00 : f32
      %528 = vector.broadcast %cst_96 : f32 to vector<2x128xf32>
      %529 = arith.addf %528, %527 : vector<2x128xf32>
      %530 = arith.divf %528, %529 : vector<2x128xf32>
      %531 = arith.mulf %522, %475 : vector<2x128xf32>
      %532 = arith.mulf %516, %524 : vector<2x128xf32>
      %533 = arith.addf %531, %532 : vector<2x128xf32>
      %534 = math.tanh %533 : vector<2x128xf32>
      %535 = arith.mulf %530, %534 : vector<2x128xf32>
      %536 = vector.extract_strided_slice %101 {offsets = [0, 0], sizes = [1, 128], strides = [1, 1]} : vector<2x128xf32> to vector<1x128xf32>
      %537 = vector.extract_strided_slice %159 {offsets = [0, 0], sizes = [1, 128], strides = [1, 1]} : vector<2x128xf32> to vector<1x128xf32>
      %538 = vector.extract_strided_slice %217 {offsets = [0, 0], sizes = [1, 128], strides = [1, 1]} : vector<2x128xf32> to vector<1x128xf32>
      %539 = vector.extract_strided_slice %275 {offsets = [0, 0], sizes = [1, 128], strides = [1, 1]} : vector<2x128xf32> to vector<1x128xf32>
      %540 = vector.extract_strided_slice %333 {offsets = [0, 0], sizes = [1, 128], strides = [1, 1]} : vector<2x128xf32> to vector<1x128xf32>
      %541 = vector.extract_strided_slice %391 {offsets = [0, 0], sizes = [1, 128], strides = [1, 1]} : vector<2x128xf32> to vector<1x128xf32>
      %542 = vector.extract_strided_slice %449 {offsets = [0, 0], sizes = [1, 128], strides = [1, 1]} : vector<2x128xf32> to vector<1x128xf32>
      %543 = vector.extract_strided_slice %507 {offsets = [0, 0], sizes = [1, 128], strides = [1, 1]} : vector<2x128xf32> to vector<1x128xf32>
      %544 = tpu.concatenate %536, %537, %538, %539, %540, %541, %542, %543 in 0 : vector<1x128xf32>, vector<1x128xf32>, vector<1x128xf32>, vector<1x128xf32>, vector<1x128xf32>, vector<1x128xf32>, vector<1x128xf32>, vector<1x128xf32> -> vector<8x128xf32>
      %c0_i32_97 = arith.constant 0 : i32
      %545 = arith.addi %c0_i32_97, %69 : i32
      %546 = arith.index_cast %545 : i32 to index
      %c0_98 = arith.constant 0 : index
      %547 = vector.load %arg10[%546, %c0_98] : memref<2400x128xf32, #tpu.memory_space<vmem>>, vector<8x128xf32>
      tpu.vector_store %arg10[%546, %c0_98], %544 {strides = array<i32>} : memref<2400x128xf32, #tpu.memory_space<vmem>>, vector<8x128xf32>,
      %548 = vector.extract_strided_slice %101 {offsets = [1, 0], sizes = [1, 128], strides = [1, 1]} : vector<2x128xf32> to vector<1x128xf32>
      %549 = vector.extract_strided_slice %159 {offsets = [1, 0], sizes = [1, 128], strides = [1, 1]} : vector<2x128xf32> to vector<1x128xf32>
      %550 = vector.extract_strided_slice %217 {offsets = [1, 0], sizes = [1, 128], strides = [1, 1]} : vector<2x128xf32> to vector<1x128xf32>
      %551 = vector.extract_strided_slice %275 {offsets = [1, 0], sizes = [1, 128], strides = [1, 1]} : vector<2x128xf32> to vector<1x128xf32>
      %552 = vector.extract_strided_slice %333 {offsets = [1, 0], sizes = [1, 128], strides = [1, 1]} : vector<2x128xf32> to vector<1x128xf32>
      %553 = vector.extract_strided_slice %391 {offsets = [1, 0], sizes = [1, 128], strides = [1, 1]} : vector<2x128xf32> to vector<1x128xf32>
      %554 = vector.extract_strided_slice %449 {offsets = [1, 0], sizes = [1, 128], strides = [1, 1]} : vector<2x128xf32> to vector<1x128xf32>
      %555 = vector.extract_strided_slice %507 {offsets = [1, 0], sizes = [1, 128], strides = [1, 1]} : vector<2x128xf32> to vector<1x128xf32>
      %556 = tpu.concatenate %548, %549, %550, %551, %552, %553, %554, %555 in 0 : vector<1x128xf32>, vector<1x128xf32>, vector<1x128xf32>, vector<1x128xf32>, vector<1x128xf32>, vector<1x128xf32>, vector<1x128xf32>, vector<1x128xf32> -> vector<8x128xf32>
      %c1200_i32 = arith.constant 1200 : i32
      %557 = arith.addi %c1200_i32, %69 : i32
      %558 = arith.index_cast %557 : i32 to index
      %c0_99 = arith.constant 0 : index
      %559 = vector.load %arg10[%558, %c0_99] : memref<2400x128xf32, #tpu.memory_space<vmem>>, vector<8x128xf32>
      tpu.vector_store %arg10[%558, %c0_99], %556 {strides = array<i32>} : memref<2400x128xf32, #tpu.memory_space<vmem>>, vector<8x128xf32>,
      scf.yield %535, %533, %507, %505 : vector<2x128xf32>, vector<2x128xf32>, vector<2x128xf32>, vector<2x128xf32>
    }
    %c150_i32_22 = arith.constant 150 : i32
    %c0_23 = arith.constant 0 : index
    %c0_24 = arith.constant 0 : index
    %43 = vector.load %arg10[%c0_23, %c0_24] : memref<2400x128xf32, #tpu.memory_space<vmem>>, vector<1200x128xf32>
    %c0_25 = arith.constant 0 : index
    %c0_26 = arith.constant 0 : index
    %44 = vector.load %arg6[%c0_25, %c0_26] : memref<4x128xf32, #tpu.memory_space<vmem>>, vector<4x128xf32>
    %cst_27 = arith.constant dense<0.000000e+00> : vector<4x1200xf32>
    %45 = tpu.matmul %44, %43, %cst_27 {dimension_numbers = #tpu.dot_dimension_numbers<[1], [1], [0], [0], [0, 0, 1, 0], [], []>} : vector<4x128xf32>, vector<1200x128xf32>, vector<4x1200xf32> -> vector<4x1200xf32>
    %c0_28 = arith.constant 0 : index
    %c0_29 = arith.constant 0 : index
    %46 = vector.load %arg7[%c0_28, %c0_29] : memref<4x1xf32, #tpu.memory_space<vmem>>, vector<4x1xf32>
    %47 = vector.broadcast %46 : vector<4x1xf32> to vector<4x1200xf32>
    %48 = arith.addf %45, %47 : vector<4x1200xf32>
    %c1200 = arith.constant 1200 : index
    %c0_30 = arith.constant 0 : index
    %49 = vector.load %arg10[%c1200, %c0_30] : memref<2400x128xf32, #tpu.memory_space<vmem>>, vector<1200x128xf32>
    %c0_31 = arith.constant 0 : index
    %c0_32 = arith.constant 0 : index
    %50 = vector.load %arg6[%c0_31, %c0_32] : memref<4x128xf32, #tpu.memory_space<vmem>>, vector<4x128xf32>
    %cst_33 = arith.constant dense<0.000000e+00> : vector<4x1200xf32>
    %51 = tpu.matmul %50, %49, %cst_33 {dimension_numbers = #tpu.dot_dimension_numbers<[1], [1], [0], [0], [0, 0, 1, 0], [], []>} : vector<4x128xf32>, vector<1200x128xf32>, vector<4x1200xf32> -> vector<4x1200xf32>
    %c0_34 = arith.constant 0 : index
    %c0_35 = arith.constant 0 : index
    %52 = vector.load %arg7[%c0_34, %c0_35] : memref<4x1xf32, #tpu.memory_space<vmem>>, vector<4x1xf32>
    %53 = vector.broadcast %52 : vector<4x1xf32> to vector<4x1200xf32>
    %54 = arith.addf %51, %53 : vector<4x1200xf32>
    %55 = tpu.concatenate %48, %54 in 0 : vector<4x1200xf32>, vector<4x1200xf32> -> vector<8x1200xf32>
    %cst_36 = arith.constant dense<0xFF800000> : vector<8xf32>
    %56 = vector.multi_reduction <maximumf>, %55, %cst_36 [1] : vector<8x1200xf32> to vector<8xf32>
    %57 = vector.shape_cast %56 : vector<8xf32> to vector<8x1xf32>
    %58 = vector.broadcast %57 : vector<8x1xf32> to vector<8x1200xf32>
    %59 = arith.subf %55, %58 : vector<8x1200xf32>
    %60 = math.exp %59 : vector<8x1200xf32>
    %cst_37 = arith.constant dense<0.000000e+00> : vector<8xf32>
    %61 = vector.multi_reduction <add>, %60, %cst_37 [1] : vector<8x1200xf32> to vector<8xf32>
    %62 = vector.shape_cast %61 : vector<8xf32> to vector<8x1xf32>
    %63 = vector.broadcast %62 : vector<8x1xf32> to vector<8x1200xf32>
    %64 = arith.divf %60, %63 : vector<8x1200xf32>
    %c0_38 = arith.constant 0 : index
    %c0_39 = arith.constant 0 : index
    %65 = vector.load %arg8[%c0_38, %c0_39] : memref<8x1200xf32, #tpu.memory_space<vmem>>, vector<8x1200xf32>
    tpu.vector_store %arg8[%c0_38, %c0_39], %64 {strides = array<i32>} : memref<8x1200xf32, #tpu.memory_space<vmem>>, vector<8x1200xf32>,
    return
  }
}

</mosaic_0001>

<llo_original>
// kernel: lstm_forward.1
$region0: #{lstm_forward.1}
  #allocation0 [shape = 'u32[]', space=smem, size = 0x4, offset = 0x4, fixed_abs, tag = 'smem constant byte address 0x4 - core index']
  #allocation1 [shape = 'u32[72,128]{1,0:T(1,128)}', space=vmem, size = 0x9000, scoped, tag = 'internal scratch']
  #allocation2 [shape = 'f32[2400,512]{1,0:T(8,128)}', space=vmem, size = 0x4b0000, scoped, tag = 'scratch operand']
  #allocation3 [shape = 'f32[2400,128]{1,0:T(8,128)}', space=vmem, size = 0x12c000, scoped, tag = 'scratch operand']
  %s0 = inlined_call_operand.vmem [shape: f32[2,32], index: 0, kind: input, shape index: {}]
  %s1 = inlined_call_operand.vmem [shape: f32[2400,32], index: 1, kind: input, shape index: {}]
  %s2 = inlined_call_operand.vmem [shape: f32[32,512], index: 2, kind: input, shape index: {}]
  %s3 = inlined_call_operand.vmem [shape: f32[1,512], index: 3, kind: input, shape index: {}]
  %s4 = inlined_call_operand.vmem [shape: f32[256,1024], index: 4, kind: input, shape index: {}]
  %s5 = inlined_call_operand.vmem [shape: f32[1,512], index: 5, kind: input, shape index: {}]
  %s6 = inlined_call_operand.vmem [shape: f32[4,128], index: 6, kind: input, shape index: {}]
  %s7 = inlined_call_operand.vmem [shape: f32[4,1], index: 7, kind: input, shape index: {}]
  %s8 = inlined_call_operand.vmem [shape: f32[8,1200], index: 8, kind: output, shape index: {}]
  %s9 = sld [smem:[#allocation0]]
  $region49: #{lstm_forward.1} parent=0
    _
  %s11 = ssub.s32 1, %s9
  %s12 = scalar_select 0, %s11, %s9
  // Predicated region
  $region2: #{lstm_forward.1} parent=0 // pred_check
    _
  $region3: #{lstm_forward.1} parent=0 // pred_check_branch
    %14 = sbr.rel (0) target = $region5
  $region4: #{lstm_forward.1} parent=0 // pred_region
    _
  $region5: #{lstm_forward.1} parent=0 // pred_fallthru
    _
  // Predicated region
  $region6: #{lstm_forward.1} parent=0 // pred_check
    _
  $region7: #{lstm_forward.1} parent=0 // pred_check_branch
    %16 = sbr.rel (0) target = $region9
  $region8: #{lstm_forward.1} parent=0 // pred_region
    _
  $region9: #{lstm_forward.1} parent=0 // pred_fallthru
    _
  // Predicated region
  $region10: #{lstm_forward.1} parent=0 // pred_check
    _
  $region11: #{lstm_forward.1} parent=0 // pred_check_branch
    %18 = sbr.rel (0) target = $region13
  $region12: #{lstm_forward.1} parent=0 // pred_region
    _
  $region13: #{lstm_forward.1} parent=0 // pred_fallthru
    _
  // Predicated region
  $region14: #{lstm_forward.1} parent=0 // pred_check
    _
  $region15: #{lstm_forward.1} parent=0 // pred_check_branch
    %20 = sbr.rel (0) target = $region17
  $region16: #{lstm_forward.1} parent=0 // pred_region
    _
  $region17: #{lstm_forward.1} parent=0 // pred_fallthru
    _
  // Predicated region
  $region18: #{lstm_forward.1} parent=0 // pred_check
    _
  $region19: #{lstm_forward.1} parent=0 // pred_check_branch
    %22 = sbr.rel (0) target = $region21
  $region20: #{lstm_forward.1} parent=0 // pred_region
    _
  $region21: #{lstm_forward.1} parent=0 // pred_fallthru
    _
  // Predicated region
  $region22: #{lstm_forward.1} parent=0 // pred_check
    _
  $region23: #{lstm_forward.1} parent=0 // pred_check_branch
    %24 = sbr.rel (0) target = $region25
  $region24: #{lstm_forward.1} parent=0 // pred_region
    _
  $region25: #{lstm_forward.1} parent=0 // pred_fallthru
    _
  // Predicated region
  $region26: #{lstm_forward.1} parent=0 // pred_check
    _
  $region27: #{lstm_forward.1} parent=0 // pred_check_branch
    %26 = sbr.rel (0) target = $region29
  $region28: #{lstm_forward.1} parent=0 // pred_region
    _
  $region29: #{lstm_forward.1} parent=0 // pred_fallthru
    _
  // Predicated region
  $region30: #{lstm_forward.1} parent=0 // pred_check
    _
  $region31: #{lstm_forward.1} parent=0 // pred_check_branch
    %28 = sbr.rel (0) target = $region33
  $region32: #{lstm_forward.1} parent=0 // pred_region
    _
  $region33: #{lstm_forward.1} parent=0 // pred_fallthru
    _
  %v29 = vld [vmem:[%s1] sm:$0xff]
  %v30 = vld [vmem:[%s1 + $0x8] sm:$0xff]
  %v31 = vld [vmem:[%s1 + $0x10] sm:$0xff]
  %v32 = vld [vmem:[%s1 + $0x18] sm:$0xff]
  %v33 = vld [vmem:[%s1 + $0x20] sm:$0xff]
  %v34 = vld [vmem:[%s1 + $0x28] sm:$0xff]
  %v35 = vld [vmem:[%s1 + $0x30] sm:$0xff]
  %v36 = vld [vmem:[%s1 + $0x38] sm:$0xff]
  %v37 = vld [vmem:[%s1 + $0x40] sm:$0xff]
  %v38 = vld [vmem:[%s1 + $0x48] sm:$0xff]
  %v39 = vld [vmem:[%s1 + $0x50] sm:$0xff]
  %v40 = vld [vmem:[%s1 + $0x58] sm:$0xff]
  %v41 = vld [vmem:[%s1 + $0x60] sm:$0xff]
  %v42 = vld [vmem:[%s1 + $0x68] sm:$0xff]
  %v43 = vld [vmem:[%s1 + $0x70] sm:$0xff]
  %v44 = vld [vmem:[%s1 + $0x78] sm:$0xff]
  %v45 = vld [vmem:[%s1 + $0x80] sm:$0xff]
  %v46 = vld [vmem:[%s1 + $0x88] sm:$0xff]
  %v47 = vld [vmem:[%s1 + $0x90] sm:$0xff]
  %v48 = vld [vmem:[%s1 + $0x98] sm:$0xff]
  %v49 = vld [vmem:[%s1 + $0xa0] sm:$0xff]
  %v50 = vld [vmem:[%s1 + $0xa8] sm:$0xff]
  %v51 = vld [vmem:[%s1 + $0xb0] sm:$0xff]
  %v52 = vld [vmem:[%s1 + $0xb8] sm:$0xff]
  %v53 = vld [vmem:[%s1 + $0xc0] sm:$0xff]
  %v54 = vld [vmem:[%s1 + $0xc8] sm:$0xff]
  %v55 = vld [vmem:[%s1 + $0xd0] sm:$0xff]
  %v56 = vld [vmem:[%s1 + $0xd8] sm:$0xff]
  %v57 = vld [vmem:[%s1 + $0xe0] sm:$0xff]
  %v58 = vld [vmem:[%s1 + $0xe8] sm:$0xff]
  %v59 = vld [vmem:[%s1 + $0xf0] sm:$0xff]
  %v60 = vld [vmem:[%s1 + $0xf8] sm:$0xff]
  %v61 = vld [vmem:[%s1 + $0x100] sm:$0xff]
  %v62 = vld [vmem:[%s1 + $0x108] sm:$0xff]
  %v63 = vld [vmem:[%s1 + $0x110] sm:$0xff]
  %v64 = vld [vmem:[%s1 + $0x118] sm:$0xff]
  %v65 = vld [vmem:[%s1 + $0x120] sm:$0xff]
  %v66 = vld [vmem:[%s1 + $0x128] sm:$0xff]
  %v67 = vld [vmem:[%s1 + $0x130] sm:$0xff]
  %v68 = vld [vmem:[%s1 + $0x138] sm:$0xff]
  %v69 = vld [vmem:[%s1 + $0x140] sm:$0xff]
  %v70 = vld [vmem:[%s1 + $0x148] sm:$0xff]
  %v71 = vld [vmem:[%s1 + $0x150] sm:$0xff]
  %v72 = vld [vmem:[%s1 + $0x158] sm:$0xff]
  %v73 = vld [vmem:[%s1 + $0x160] sm:$0xff]
  %v74 = vld [vmem:[%s1 + $0x168] sm:$0xff]
  %v75 = vld [vmem:[%s1 + $0x170] sm:$0xff]
  %v76 = vld [vmem:[%s1 + $0x178] sm:$0xff]
  %v77 = vld [vmem:[%s1 + $0x180] sm:$0xff]
  %v78 = vld [vmem:[%s1 + $0x188] sm:$0xff]
  %v79 = vld [vmem:[%s1 + $0x190] sm:$0xff]
  %v80 = vld [vmem:[%s1 + $0x198] sm:$0xff]
  %v81 = vld [vmem:[%s1 + $0x1a0] sm:$0xff]
  %v82 = vld [vmem:[%s1 + $0x1a8] sm:$0xff]
  %v83 = vld [vmem:[%s1 + $0x1b0] sm:$0xff]
  %v84 = vld [vmem:[%s1 + $0x1b8] sm:$0xff]
  %v85 = vld [vmem:[%s1 + $0x1c0] sm:$0xff]
  %v86 = vld [vmem:[%s1 + $0x1c8] sm:$0xff]
  %v87 = vld [vmem:[%s1 + $0x1d0] sm:$0xff]
  %v88 = vld [vmem:[%s1 + $0x1d8] sm:$0xff]
  %v89 = vld [vmem:[%s1 + $0x1e0] sm:$0xff]
  %v90 = vld [vmem:[%s1 + $0x1e8] sm:$0xff]
  %v91 = vld [vmem:[%s1 + $0x1f0] sm:$0xff]
  %v92 = vld [vmem:[%s1 + $0x1f8] sm:$0xff]
  %v93 = vld [vmem:[%s1 + $0x200] sm:$0xff]
  %v94 = vld [vmem:[%s1 + $0x208] sm:$0xff]
  %v95 = vld [vmem:[%s1 + $0x210] sm:$0xff]
  %v96 = vld [vmem:[%s1 + $0x218] sm:$0xff]
  %v97 = vld [vmem:[%s1 + $0x220] sm:$0xff]
  %v98 = vld [vmem:[%s1 + $0x228] sm:$0xff]
  %v99 = vld [vmem:[%s1 + $0x230] sm:$0xff]
  %v100 = vld [vmem:[%s1 + $0x238] sm:$0xff]
  %v101 = vld [vmem:[%s1 + $0x240] sm:$0xff]
  %v102 = vld [vmem:[%s1 + $0x248] sm:$0xff]
  %v103 = vld [vmem:[%s1 + $0x250] sm:$0xff]
  %v104 = vld [vmem:[%s1 + $0x258] sm:$0xff]
  %v105 = vld [vmem:[%s1 + $0x260] sm:$0xff]
  %v106 = vld [vmem:[%s1 + $0x268] sm:$0xff]
  %v107 = vld [vmem:[%s1 + $0x270] sm:$0xff]
  %v108 = vld [vmem:[%s1 + $0x278] sm:$0xff]
  %v109 = vld [vmem:[%s1 + $0x280] sm:$0xff]
  %v110 = vld [vmem:[%s1 + $0x288] sm:$0xff]
  %v111 = vld [vmem:[%s1 + $0x290] sm:$0xff]
  %v112 = vld [vmem:[%s1 + $0x298] sm:$0xff]
  %v113 = vld [vmem:[%s1 + $0x2a0] sm:$0xff]
  %v114 = vld [vmem:[%s1 + $0x2a8] sm:$0xff]
  %v115 = vld [vmem:[%s1 + $0x2b0] sm:$0xff]
  %v116 = vld [vmem:[%s1 + $0x2b8] sm:$0xff]
  %v117 = vld [vmem:[%s1 + $0x2c0] sm:$0xff]
  %v118 = vld [vmem:[%s1 + $0x2c8] sm:$0xff]
  %v119 = vld [vmem:[%s1 + $0x2d0] sm:$0xff]
  %v120 = vld [vmem:[%s1 + $0x2d8] sm:$0xff]
  %v121 = vld [vmem:[%s1 + $0x2e0] sm:$0xff]
  %v122 = vld [vmem:[%s1 + $0x2e8] sm:$0xff]
  %v123 = vld [vmem:[%s1 + $0x2f0] sm:$0xff]
  %v124 = vld [vmem:[%s1 + $0x2f8] sm:$0xff]
  %v125 = vld [vmem:[%s1 + $0x300] sm:$0xff]
  %v126 = vld [vmem:[%s1 + $0x308] sm:$0xff]
  %v127 = vld [vmem:[%s1 + $0x310] sm:$0xff]
  %v128 = vld [vmem:[%s1 + $0x318] sm:$0xff]
  %v129 = vld [vmem:[%s1 + $0x320] sm:$0xff]
  %v130 = vld [vmem:[%s1 + $0x328] sm:$0xff]
  %v131 = vld [vmem:[%s1 + $0x330] sm:$0xff]
  %v132 = vld [vmem:[%s1 + $0x338] sm:$0xff]
  %v133 = vld [vmem:[%s1 + $0x340] sm:$0xff]
  %v134 = vld [vmem:[%s1 + $0x348] sm:$0xff]
  %v135 = vld [vmem:[%s1 + $0x350] sm:$0xff]
  %v136 = vld [vmem:[%s1 + $0x358] sm:$0xff]
  %v137 = vld [vmem:[%s1 + $0x360] sm:$0xff]
  %v138 = vld [vmem:[%s1 + $0x368] sm:$0xff]
  %v139 = vld [vmem:[%s1 + $0x370] sm:$0xff]
  %v140 = vld [vmem:[%s1 + $0x378] sm:$0xff]
  %v141 = vld [vmem:[%s1 + $0x380] sm:$0xff]
  %v142 = vld [vmem:[%s1 + $0x388] sm:$0xff]
  %v143 = vld [vmem:[%s1 + $0x390] sm:$0xff]
  %v144 = vld [vmem:[%s1 + $0x398] sm:$0xff]
  %v145 = vld [vmem:[%s1 + $0x3a0] sm:$0xff]
  %v146 = vld [vmem:[%s1 + $0x3a8] sm:$0xff]
  %v147 = vld [vmem:[%s1 + $0x3b0] sm:$0xff]
  %v148 = vld [vmem:[%s1 + $0x3b8] sm:$0xff]
  %v149 = vld [vmem:[%s1 + $0x3c0] sm:$0xff]
  %v150 = vld [vmem:[%s1 + $0x3c8] sm:$0xff]
  %v151 = vld [vmem:[%s1 + $0x3d0] sm:$0xff]
  %v152 = vld [vmem:[%s1 + $0x3d8] sm:$0xff]
  %v153 = vld [vmem:[%s1 + $0x3e0] sm:$0xff]
  %v154 = vld [vmem:[%s1 + $0x3e8] sm:$0xff]
  %v155 = vld [vmem:[%s1 + $0x3f0] sm:$0xff]
  %v156 = vld [vmem:[%s1 + $0x3f8] sm:$0xff]
  %v157 = vld [vmem:[%s1 + $0x400] sm:$0xff]
  %v158 = vld [vmem:[%s1 + $0x408] sm:$0xff]
  %v159 = vld [vmem:[%s1 + $0x410] sm:$0xff]
  %v160 = vld [vmem:[%s1 + $0x418] sm:$0xff]
  %v161 = vld [vmem:[%s1 + $0x420] sm:$0xff]
  %v162 = vld [vmem:[%s1 + $0x428] sm:$0xff]
  %v163 = vld [vmem:[%s1 + $0x430] sm:$0xff]
  %v164 = vld [vmem:[%s1 + $0x438] sm:$0xff]
  %v165 = vld [vmem:[%s1 + $0x440] sm:$0xff]
  %v166 = vld [vmem:[%s1 + $0x448] sm:$0xff]
  %v167 = vld [vmem:[%s1 + $0x450] sm:$0xff]
  %v168 = vld [vmem:[%s1 + $0x458] sm:$0xff]
  %v169 = vld [vmem:[%s1 + $0x460] sm:$0xff]
  %v170 = vld [vmem:[%s1 + $0x468] sm:$0xff]
  %v171 = vld [vmem:[%s1 + $0x470] sm:$0xff]
  %v172 = vld [vmem:[%s1 + $0x478] sm:$0xff]
  %v173 = vld [vmem:[%s1 + $0x480] sm:$0xff]
  %v174 = vld [vmem:[%s1 + $0x488] sm:$0xff]
  %v175 = vld [vmem:[%s1 + $0x490] sm:$0xff]
  %v176 = vld [vmem:[%s1 + $0x498] sm:$0xff]
  %v177 = vld [vmem:[%s1 + $0x4a0] sm:$0xff]
  %v178 = vld [vmem:[%s1 + $0x4a8] sm:$0xff]
  %v179 = vld [vmem:[%s1 + $0x4b0] sm:$0xff]
  %v180 = vld [vmem:[%s1 + $0x4b8] sm:$0xff]
  %v181 = vld [vmem:[%s1 + $0x4c0] sm:$0xff]
  %v182 = vld [vmem:[%s1 + $0x4c8] sm:$0xff]
  %v183 = vld [vmem:[%s1 + $0x4d0] sm:$0xff]
  %v184 = vld [vmem:[%s1 + $0x4d8] sm:$0xff]
  %v185 = vld [vmem:[%s1 + $0x4e0] sm:$0xff]
  %v186 = vld [vmem:[%s1 + $0x4e8] sm:$0xff]
  %v187 = vld [vmem:[%s1 + $0x4f0] sm:$0xff]
  %v188 = vld [vmem:[%s1 + $0x4f8] sm:$0xff]
  %v189 = vld [vmem:[%s1 + $0x500] sm:$0xff]
  %v190 = vld [vmem:[%s1 + $0x508] sm:$0xff]
  %v191 = vld [vmem:[%s1 + $0x510] sm:$0xff]
  %v192 = vld [vmem:[%s1 + $0x518] sm:$0xff]
  %v193 = vld [vmem:[%s1 + $0x520] sm:$0xff]
  %v194 = vld [vmem:[%s1 + $0x528] sm:$0xff]
  %v195 = vld [vmem:[%s1 + $0x530] sm:$0xff]
  %v196 = vld [vmem:[%s1 + $0x538] sm:$0xff]
  %v197 = vld [vmem:[%s1 + $0x540] sm:$0xff]
  %v198 = vld [vmem:[%s1 + $0x548] sm:$0xff]
  %v199 = vld [vmem:[%s1 + $0x550] sm:$0xff]
  %v200 = vld [vmem:[%s1 + $0x558] sm:$0xff]
  %v201 = vld [vmem:[%s1 + $0x560] sm:$0xff]
  %v202 = vld [vmem:[%s1 + $0x568] sm:$0xff]
  %v203 = vld [vmem:[%s1 + $0x570] sm:$0xff]
  %v204 = vld [vmem:[%s1 + $0x578] sm:$0xff]
  %v205 = vld [vmem:[%s1 + $0x580] sm:$0xff]
  %v206 = vld [vmem:[%s1 + $0x588] sm:$0xff]
  %v207 = vld [vmem:[%s1 + $0x590] sm:$0xff]
  %v208 = vld [vmem:[%s1 + $0x598] sm:$0xff]
  %v209 = vld [vmem:[%s1 + $0x5a0] sm:$0xff]
  %v210 = vld [vmem:[%s1 + $0x5a8] sm:$0xff]
  %v211 = vld [vmem:[%s1 + $0x5b0] sm:$0xff]
  %v212 = vld [vmem:[%s1 + $0x5b8] sm:$0xff]
  %v213 = vld [vmem:[%s1 + $0x5c0] sm:$0xff]
  %v214 = vld [vmem:[%s1 + $0x5c8] sm:$0xff]
  %v215 = vld [vmem:[%s1 + $0x5d0] sm:$0xff]
  %v216 = vld [vmem:[%s1 + $0x5d8] sm:$0xff]
  %v217 = vld [vmem:[%s1 + $0x5e0] sm:$0xff]
  %v218 = vld [vmem:[%s1 + $0x5e8] sm:$0xff]
  %v219 = vld [vmem:[%s1 + $0x5f0] sm:$0xff]
  %v220 = vld [vmem:[%s1 + $0x5f8] sm:$0xff]
  %v221 = vld [vmem:[%s1 + $0x600] sm:$0xff]
  %v222 = vld [vmem:[%s1 + $0x608] sm:$0xff]
  %v223 = vld [vmem:[%s1 + $0x610] sm:$0xff]
  %v224 = vld [vmem:[%s1 + $0x618] sm:$0xff]
  %v225 = vld [vmem:[%s1 + $0x620] sm:$0xff]
  %v226 = vld [vmem:[%s1 + $0x628] sm:$0xff]
  %v227 = vld [vmem:[%s1 + $0x630] sm:$0xff]
  %v228 = vld [vmem:[%s1 + $0x638] sm:$0xff]
  %v229 = vld [vmem:[%s1 + $0x640] sm:$0xff]
  %v230 = vld [vmem:[%s1 + $0x648] sm:$0xff]
  %v231 = vld [vmem:[%s1 + $0x650] sm:$0xff]
  %v232 = vld [vmem:[%s1 + $0x658] sm:$0xff]
  %v233 = vld [vmem:[%s1 + $0x660] sm:$0xff]
  %v234 = vld [vmem:[%s1 + $0x668] sm:$0xff]
  %v235 = vld [vmem:[%s1 + $0x670] sm:$0xff]
  %v236 = vld [vmem:[%s1 + $0x678] sm:$0xff]
  %v237 = vld [vmem:[%s1 + $0x680] sm:$0xff]
  %v238 = vld [vmem:[%s1 + $0x688] sm:$0xff]
  %v239 = vld [vmem:[%s1 + $0x690] sm:$0xff]
  %v240 = vld [vmem:[%s1 + $0x698] sm:$0xff]
  %v241 = vld [vmem:[%s1 + $0x6a0] sm:$0xff]
  %v242 = vld [vmem:[%s1 + $0x6a8] sm:$0xff]
  %v243 = vld [vmem:[%s1 + $0x6b0] sm:$0xff]
  %v244 = vld [vmem:[%s1 + $0x6b8] sm:$0xff]
  %v245 = vld [vmem:[%s1 + $0x6c0] sm:$0xff]
  %v246 = vld [vmem:[%s1 + $0x6c8] sm:$0xff]
  %v247 = vld [vmem:[%s1 + $0x6d0] sm:$0xff]
  %v248 = vld [vmem:[%s1 + $0x6d8] sm:$0xff]
  %v249 = vld [vmem:[%s1 + $0x6e0] sm:$0xff]
  %v250 = vld [vmem:[%s1 + $0x6e8] sm:$0xff]
  %v251 = vld [vmem:[%s1 + $0x6f0] sm:$0xff]
  %v252 = vld [vmem:[%s1 + $0x6f8] sm:$0xff]
  %v253 = vld [vmem:[%s1 + $0x700] sm:$0xff]
  %v254 = vld [vmem:[%s1 + $0x708] sm:$0xff]
  %v255 = vld [vmem:[%s1 + $0x710] sm:$0xff]
  %v256 = vld [vmem:[%s1 + $0x718] sm:$0xff]
  %v257 = vld [vmem:[%s1 + $0x720] sm:$0xff]
  %v258 = vld [vmem:[%s1 + $0x728] sm:$0xff]
  %v259 = vld [vmem:[%s1 + $0x730] sm:$0xff]
  %v260 = vld [vmem:[%s1 + $0x738] sm:$0xff]
  %v261 = vld [vmem:[%s1 + $0x740] sm:$0xff]
  %v262 = vld [vmem:[%s1 + $0x748] sm:$0xff]
  %v263 = vld [vmem:[%s1 + $0x750] sm:$0xff]
  %v264 = vld [vmem:[%s1 + $0x758] sm:$0xff]
  %v265 = vld [vmem:[%s1 + $0x760] sm:$0xff]
  %v266 = vld [vmem:[%s1 + $0x768] sm:$0xff]
  %v267 = vld [vmem:[%s1 + $0x770] sm:$0xff]
  %v268 = vld [vmem:[%s1 + $0x778] sm:$0xff]
  %v269 = vld [vmem:[%s1 + $0x780] sm:$0xff]
  %v270 = vld [vmem:[%s1 + $0x788] sm:$0xff]
  %v271 = vld [vmem:[%s1 + $0x790] sm:$0xff]
  %v272 = vld [vmem:[%s1 + $0x798] sm:$0xff]
  %v273 = vld [vmem:[%s1 + $0x7a0] sm:$0xff]
  %v274 = vld [vmem:[%s1 + $0x7a8] sm:$0xff]
  %v275 = vld [vmem:[%s1 + $0x7b0] sm:$0xff]
  %v276 = vld [vmem:[%s1 + $0x7b8] sm:$0xff]
  %v277 = vld [vmem:[%s1 + $0x7c0] sm:$0xff]
  %v278 = vld [vmem:[%s1 + $0x7c8] sm:$0xff]
  %v279 = vld [vmem:[%s1 + $0x7d0] sm:$0xff]
  %v280 = vld [vmem:[%s1 + $0x7d8] sm:$0xff]
  %v281 = vld [vmem:[%s1 + $0x7e0] sm:$0xff]
  %v282 = vld [vmem:[%s1 + $0x7e8] sm:$0xff]
  %v283 = vld [vmem:[%s1 + $0x7f0] sm:$0xff]
  %v284 = vld [vmem:[%s1 + $0x7f8] sm:$0xff]
  %v285 = vld [vmem:[%s1 + $0x800] sm:$0xff]
  %v286 = vld [vmem:[%s1 + $0x808] sm:$0xff]
  %v287 = vld [vmem:[%s1 + $0x810] sm:$0xff]
  %v288 = vld [vmem:[%s1 + $0x818] sm:$0xff]
  %v289 = vld [vmem:[%s1 + $0x820] sm:$0xff]
  %v290 = vld [vmem:[%s1 + $0x828] sm:$0xff]
  %v291 = vld [vmem:[%s1 + $0x830] sm:$0xff]
  %v292 = vld [vmem:[%s1 + $0x838] sm:$0xff]
  %v293 = vld [vmem:[%s1 + $0x840] sm:$0xff]
  %v294 = vld [vmem:[%s1 + $0x848] sm:$0xff]
  %v295 = vld [vmem:[%s1 + $0x850] sm:$0xff]
  %v296 = vld [vmem:[%s1 + $0x858] sm:$0xff]
  %v297 = vld [vmem:[%s1 + $0x860] sm:$0xff]
  %v298 = vld [vmem:[%s1 + $0x868] sm:$0xff]
  %v299 = vld [vmem:[%s1 + $0x870] sm:$0xff]
  %v300 = vld [vmem:[%s1 + $0x878] sm:$0xff]
  %v301 = vld [vmem:[%s1 + $0x880] sm:$0xff]
  %v302 = vld [vmem:[%s1 + $0x888] sm:$0xff]
  %v303 = vld [vmem:[%s1 + $0x890] sm:$0xff]
  %v304 = vld [vmem:[%s1 + $0x898] sm:$0xff]
  %v305 = vld [vmem:[%s1 + $0x8a0] sm:$0xff]
  %v306 = vld [vmem:[%s1 + $0x8a8] sm:$0xff]
  %v307 = vld [vmem:[%s1 + $0x8b0] sm:$0xff]
  %v308 = vld [vmem:[%s1 + $0x8b8] sm:$0xff]
  %v309 = vld [vmem:[%s1 + $0x8c0] sm:$0xff]
  %v310 = vld [vmem:[%s1 + $0x8c8] sm:$0xff]
  %v311 = vld [vmem:[%s1 + $0x8d0] sm:$0xff]
  %v312 = vld [vmem:[%s1 + $0x8d8] sm:$0xff]
  %v313 = vld [vmem:[%s1 + $0x8e0] sm:$0xff]
  %v314 = vld [vmem:[%s1 + $0x8e8] sm:$0xff]
  %v315 = vld [vmem:[%s1 + $0x8f0] sm:$0xff]
  %v316 = vld [vmem:[%s1 + $0x8f8] sm:$0xff]
  %v317 = vld [vmem:[%s1 + $0x900] sm:$0xff]
  %v318 = vld [vmem:[%s1 + $0x908] sm:$0xff]
  %v319 = vld [vmem:[%s1 + $0x910] sm:$0xff]
  %v320 = vld [vmem:[%s1 + $0x918] sm:$0xff]
  %v321 = vld [vmem:[%s1 + $0x920] sm:$0xff]
  %v322 = vld [vmem:[%s1 + $0x928] sm:$0xff]
  %v323 = vld [vmem:[%s1 + $0x930] sm:$0xff]
  %v324 = vld [vmem:[%s1 + $0x938] sm:$0xff]
  %v325 = vld [vmem:[%s1 + $0x940] sm:$0xff]
  %v326 = vld [vmem:[%s1 + $0x948] sm:$0xff]
  %v327 = vld [vmem:[%s1 + $0x950] sm:$0xff]
  %v328 = vld [vmem:[%s1 + $0x958] sm:$0xff]
  %v329 = vld [vmem:[%s2] sm:$0xff]
  %v330 = vld [vmem:[%s2 + $0x8] sm:$0xff]
  %v331 = vld [vmem:[%s2 + $0x10] sm:$0xff]
  %v332 = vld [vmem:[%s2 + $0x18] sm:$0xff]
  %v333 = vld [vmem:[%s2 + $0x20] sm:$0xff]
  %v334 = vld [vmem:[%s2 + $0x28] sm:$0xff]
  %v335 = vld [vmem:[%s2 + $0x30] sm:$0xff]
  %v336 = vld [vmem:[%s2 + $0x38] sm:$0xff]
  %v337 = vld [vmem:[%s2 + $0x40] sm:$0xff]
  %v338 = vld [vmem:[%s2 + $0x48] sm:$0xff]
  %v339 = vld [vmem:[%s2 + $0x50] sm:$0xff]
  %v340 = vld [vmem:[%s2 + $0x58] sm:$0xff]
  %v341 = vld [vmem:[%s2 + $0x60] sm:$0xff]
  %v342 = vld [vmem:[%s2 + $0x68] sm:$0xff]
  %v343 = vld [vmem:[%s2 + $0x70] sm:$0xff]
  %v344 = vld [vmem:[%s2 + $0x78] sm:$0xff]
  %v345 = vld [vmem:[%s3] sm:$0xf]
  %v347 = vperm.slane %v345, 0
  %v348 = vperm.slane %v345, 1
  %v349 = vperm.slane %v345, 2
  %v350 = vperm.slane %v345, 3
  %vm355 = vcmask 261120
  %v357 = vsel %vm355, %v29, 0
  %v360 = vsel %vm355, %v30, 0
  %v363 = vsel %vm355, %v31, 0
  %v366 = vsel %vm355, %v32, 0
  %v369 = vsel %vm355, %v33, 0
  %v372 = vsel %vm355, %v34, 0
  %v375 = vsel %vm355, %v35, 0
  %v378 = vsel %vm355, %v36, 0
  %v381 = vsel %vm355, %v37, 0
  %v384 = vsel %vm355, %v38, 0
  %v387 = vsel %vm355, %v39, 0
  %v390 = vsel %vm355, %v40, 0
  %v393 = vsel %vm355, %v41, 0
  %v396 = vsel %vm355, %v42, 0
  %v399 = vsel %vm355, %v43, 0
  %v402 = vsel %vm355, %v44, 0
  %v405 = vsel %vm355, %v45, 0
  %v408 = vsel %vm355, %v46, 0
  %v411 = vsel %vm355, %v47, 0
  %v414 = vsel %vm355, %v48, 0
  %v417 = vsel %vm355, %v49, 0
  %v420 = vsel %vm355, %v50, 0
  %v423 = vsel %vm355, %v51, 0
  %v426 = vsel %vm355, %v52, 0
  %v429 = vsel %vm355, %v53, 0
  %v432 = vsel %vm355, %v54, 0
  %v435 = vsel %vm355, %v55, 0
  %v438 = vsel %vm355, %v56, 0
  %v441 = vsel %vm355, %v57, 0
  %v444 = vsel %vm355, %v58, 0
  %v447 = vsel %vm355, %v59, 0
  %v450 = vsel %vm355, %v60, 0
  %v453 = vsel %vm355, %v61, 0
  %v456 = vsel %vm355, %v62, 0
  %v459 = vsel %vm355, %v63, 0
  %v462 = vsel %vm355, %v64, 0
  %v465 = vsel %vm355, %v65, 0
  %v468 = vsel %vm355, %v66, 0
  %v471 = vsel %vm355, %v67, 0
  %v474 = vsel %vm355, %v68, 0
  %v477 = vsel %vm355, %v69, 0
  %v480 = vsel %vm355, %v70, 0
  %v483 = vsel %vm355, %v71, 0
  %v486 = vsel %vm355, %v72, 0
  %v489 = vsel %vm355, %v73, 0
  %v492 = vsel %vm355, %v74, 0
  %v495 = vsel %vm355, %v75, 0
  %v498 = vsel %vm355, %v76, 0
  %v501 = vsel %vm355, %v77, 0
  %v504 = vsel %vm355, %v78, 0
  %v507 = vsel %vm355, %v79, 0
  %v510 = vsel %vm355, %v80, 0
  %v513 = vsel %vm355, %v81, 0
  %v516 = vsel %vm355, %v82, 0
  %v519 = vsel %vm355, %v83, 0
  %v522 = vsel %vm355, %v84, 0
  %v525 = vsel %vm355, %v85, 0
  %v528 = vsel %vm355, %v86, 0
  %v531 = vsel %vm355, %v87, 0
  %v534 = vsel %vm355, %v88, 0
  %v537 = vsel %vm355, %v89, 0
  %v540 = vsel %vm355, %v90, 0
  %v543 = vsel %vm355, %v91, 0
  %v546 = vsel %vm355, %v92, 0
  %v549 = vsel %vm355, %v93, 0
  %v552 = vsel %vm355, %v94, 0
  %v555 = vsel %vm355, %v95, 0
  %v558 = vsel %vm355, %v96, 0
  %v561 = vsel %vm355, %v97, 0
  %v564 = vsel %vm355, %v98, 0
  %v567 = vsel %vm355, %v99, 0
  %v570 = vsel %vm355, %v100, 0
  %v573 = vsel %vm355, %v101, 0
  %v576 = vsel %vm355, %v102, 0
  %v579 = vsel %vm355, %v103, 0
  %v582 = vsel %vm355, %v104, 0
  %v585 = vsel %vm355, %v105, 0
  %v588 = vsel %vm355, %v106, 0
  %v591 = vsel %vm355, %v107, 0
  %v594 = vsel %vm355, %v108, 0
  %v597 = vsel %vm355, %v109, 0
  %v600 = vsel %vm355, %v110, 0
  %v603 = vsel %vm355, %v111, 0
  %v606 = vsel %vm355, %v112, 0
  %v609 = vsel %vm355, %v113, 0
  %v612 = vsel %vm355, %v114, 0
  %v615 = vsel %vm355, %v115, 0
  %v618 = vsel %vm355, %v116, 0
  %v621 = vsel %vm355, %v117, 0
  %v624 = vsel %vm355, %v118, 0
  %v627 = vsel %vm355, %v119, 0
  %v630 = vsel %vm355, %v120, 0
  %v633 = vsel %vm355, %v121, 0
  %v636 = vsel %vm355, %v122, 0
  %v639 = vsel %vm355, %v123, 0
  %v642 = vsel %vm355, %v124, 0
  %v645 = vsel %vm355, %v125, 0
  %v648 = vsel %vm355, %v126, 0
  %v651 = vsel %vm355, %v127, 0
  %v654 = vsel %vm355, %v128, 0
  %v657 = vsel %vm355, %v129, 0
  %v660 = vsel %vm355, %v130, 0
  %v663 = vsel %vm355, %v131, 0
  %v666 = vsel %vm355, %v132, 0
  %v669 = vsel %vm355, %v133, 0
  %v672 = vsel %vm355, %v134, 0
  %v675 = vsel %vm355, %v135, 0
  %v678 = vsel %vm355, %v136, 0
  %v681 = vsel %vm355, %v137, 0
  %v684 = vsel %vm355, %v138, 0
  %v687 = vsel %vm355, %v139, 0
  %v690 = vsel %vm355, %v140, 0
  %v693 = vsel %vm355, %v141, 0
  %v696 = vsel %vm355, %v142, 0
  %v699 = vsel %vm355, %v143, 0
  %v702 = vsel %vm355, %v144, 0
  %v705 = vsel %vm355, %v145, 0
  %v708 = vsel %vm355, %v146, 0
  %v711 = vsel %vm355, %v147, 0
  %v714 = vsel %vm355, %v148, 0
  %v717 = vsel %vm355, %v149, 0
  %v720 = vsel %vm355, %v150, 0
  %v723 = vsel %vm355, %v151, 0
  %v726 = vsel %vm355, %v152, 0
  %v729 = vsel %vm355, %v153, 0
  %v732 = vsel %vm355, %v154, 0
  %v735 = vsel %vm355, %v155, 0
  %v738 = vsel %vm355, %v156, 0
  %v741 = vsel %vm355, %v157, 0
  %v744 = vsel %vm355, %v158, 0
  %v747 = vsel %vm355, %v159, 0
  %v750 = vsel %vm355, %v160, 0
  %v753 = vsel %vm355, %v161, 0
  %v756 = vsel %vm355, %v162, 0
  %v759 = vsel %vm355, %v163, 0
  %v762 = vsel %vm355, %v164, 0
  %v765 = vsel %vm355, %v165, 0
  %v768 = vsel %vm355, %v166, 0
  %v771 = vsel %vm355, %v167, 0
  %v774 = vsel %vm355, %v168, 0
  %v777 = vsel %vm355, %v169, 0
  %v780 = vsel %vm355, %v170, 0
  %v783 = vsel %vm355, %v171, 0
  %v786 = vsel %vm355, %v172, 0
  %v789 = vsel %vm355, %v173, 0
  %v792 = vsel %vm355, %v174, 0
  %v795 = vsel %vm355, %v175, 0
  %v798 = vsel %vm355, %v176, 0
  %v801 = vsel %vm355, %v177, 0
  %v804 = vsel %vm355, %v178, 0
  %v807 = vsel %vm355, %v179, 0
  %v810 = vsel %vm355, %v180, 0
  %v813 = vsel %vm355, %v181, 0
  %v816 = vsel %vm355, %v182, 0
  %v819 = vsel %vm355, %v183, 0
  %v822 = vsel %vm355, %v184, 0
  %v825 = vsel %vm355, %v185, 0
  %v828 = vsel %vm355, %v186, 0
  %v831 = vsel %vm355, %v187, 0
  %v834 = vsel %vm355, %v188, 0
  %v837 = vsel %vm355, %v189, 0
  %v840 = vsel %vm355, %v190, 0
  %v843 = vsel %vm355, %v191, 0
  %v846 = vsel %vm355, %v192, 0
  %v849 = vsel %vm355, %v193, 0
  %v852 = vsel %vm355, %v194, 0
  %v855 = vsel %vm355, %v195, 0
  %v858 = vsel %vm355, %v196, 0
  %v861 = vsel %vm355, %v197, 0
  %v864 = vsel %vm355, %v198, 0
  %v867 = vsel %vm355, %v199, 0
  %v870 = vsel %vm355, %v200, 0
  %v873 = vsel %vm355, %v201, 0
  %v876 = vsel %vm355, %v202, 0
  %v879 = vsel %vm355, %v203, 0
  %v882 = vsel %vm355, %v204, 0
  %v885 = vsel %vm355, %v205, 0
  %v888 = vsel %vm355, %v206, 0
  %v891 = vsel %vm355, %v207, 0
  %v894 = vsel %vm355, %v208, 0
  %v897 = vsel %vm355, %v209, 0
  %v900 = vsel %vm355, %v210, 0
  %v903 = vsel %vm355, %v211, 0
  %v906 = vsel %vm355, %v212, 0
  %v909 = vsel %vm355, %v213, 0
  %v912 = vsel %vm355, %v214, 0
  %v915 = vsel %vm355, %v215, 0
  %v918 = vsel %vm355, %v216, 0
  %v921 = vsel %vm355, %v217, 0
  %v924 = vsel %vm355, %v218, 0
  %v927 = vsel %vm355, %v219, 0
  %v930 = vsel %vm355, %v220, 0
  %v933 = vsel %vm355, %v221, 0
  %v936 = vsel %vm355, %v222, 0
  %v939 = vsel %vm355, %v223, 0
  %v942 = vsel %vm355, %v224, 0
  %v945 = vsel %vm355, %v225, 0
  %v948 = vsel %vm355, %v226, 0
  %v951 = vsel %vm355, %v227, 0
  %v954 = vsel %vm355, %v228, 0
  %v957 = vsel %vm355, %v229, 0
  %v960 = vsel %vm355, %v230, 0
  %v963 = vsel %vm355, %v231, 0
  %v966 = vsel %vm355, %v232, 0
  %v969 = vsel %vm355, %v233, 0
  %v972 = vsel %vm355, %v234, 0
  %v975 = vsel %vm355, %v235, 0
  %v978 = vsel %vm355, %v236, 0
  %v981 = vsel %vm355, %v237, 0
  %v984 = vsel %vm355, %v238, 0
  %v987 = vsel %vm355, %v239, 0
  %v990 = vsel %vm355, %v240, 0
  %v993 = vsel %vm355, %v241, 0
  %v996 = vsel %vm355, %v242, 0
  %v999 = vsel %vm355, %v243, 0
  %v1002 = vsel %vm355, %v244, 0
  %v1005 = vsel %vm355, %v245, 0
  %v1008 = vsel %vm355, %v246, 0
  %v1011 = vsel %vm355, %v247, 0
  %v1014 = vsel %vm355, %v248, 0
  %v1017 = vsel %vm355, %v249, 0
  %v1020 = vsel %vm355, %v250, 0
  %v1023 = vsel %vm355, %v251, 0
  %v1026 = vsel %vm355, %v252, 0
  %v1029 = vsel %vm355, %v253, 0
  %v1032 = vsel %vm355, %v254, 0
  %v1035 = vsel %vm355, %v255, 0
  %v1038 = vsel %vm355, %v256, 0
  %v1041 = vsel %vm355, %v257, 0
  %v1044 = vsel %vm355, %v258, 0
  %v1047 = vsel %vm355, %v259, 0
  %v1050 = vsel %vm355, %v260, 0
  %v1053 = vsel %vm355, %v261, 0
  %v1056 = vsel %vm355, %v262, 0
  %v1059 = vsel %vm355, %v263, 0
  %v1062 = vsel %vm355, %v264, 0
  %v1065 = vsel %vm355, %v265, 0
  %v1068 = vsel %vm355, %v266, 0
  %v1071 = vsel %vm355, %v267, 0
  %v1074 = vsel %vm355, %v268, 0
  %v1077 = vsel %vm355, %v269, 0
  %v1080 = vsel %vm355, %v270, 0
  %v1083 = vsel %vm355, %v271, 0
  %v1086 = vsel %vm355, %v272, 0
  %v1089 = vsel %vm355, %v273, 0
  %v1092 = vsel %vm355, %v274, 0
  %v1095 = vsel %vm355, %v275, 0
  %v1098 = vsel %vm355, %v276, 0
  %v1101 = vsel %vm355, %v277, 0
  %v1104 = vsel %vm355, %v278, 0
  %v1107 = vsel %vm355, %v279, 0
  %v1110 = vsel %vm355, %v280, 0
  %v1113 = vsel %vm355, %v281, 0
  %v1116 = vsel %vm355, %v282, 0
  %v1119 = vsel %vm355, %v283, 0
  %v1122 = vsel %vm355, %v284, 0
  %v1125 = vsel %vm355, %v285, 0
  %v1128 = vsel %vm355, %v286, 0
  %v1131 = vsel %vm355, %v287, 0
  %v1134 = vsel %vm355, %v288, 0
  %v1137 = vsel %vm355, %v289, 0
  %v1140 = vsel %vm355, %v290, 0
  %v1143 = vsel %vm355, %v291, 0
  %v1146 = vsel %vm355, %v292, 0
  %v1149 = vsel %vm355, %v293, 0
  %v1152 = vsel %vm355, %v294, 0
  %v1155 = vsel %vm355, %v295, 0
  %v1158 = vsel %vm355, %v296, 0
  %v1161 = vsel %vm355, %v297, 0
  %v1164 = vsel %vm355, %v298, 0
  %v1167 = vsel %vm355, %v299, 0
  %v1170 = vsel %vm355, %v300, 0
  %v1173 = vsel %vm355, %v301, 0
  %v1176 = vsel %vm355, %v302, 0
  %v1179 = vsel %vm355, %v303, 0
  %v1182 = vsel %vm355, %v304, 0
  %v1185 = vsel %vm355, %v305, 0
  %v1188 = vsel %vm355, %v306, 0
  %v1191 = vsel %vm355, %v307, 0
  %v1194 = vsel %vm355, %v308, 0
  %v1197 = vsel %vm355, %v309, 0
  %v1200 = vsel %vm355, %v310, 0
  %v1203 = vsel %vm355, %v311, 0
  %v1206 = vsel %vm355, %v312, 0
  %v1209 = vsel %vm355, %v313, 0
  %v1212 = vsel %vm355, %v314, 0
  %v1215 = vsel %vm355, %v315, 0
  %v1218 = vsel %vm355, %v316, 0
  %v1221 = vsel %vm355, %v317, 0
  %v1224 = vsel %vm355, %v318, 0
  %v1227 = vsel %vm355, %v319, 0
  %v1230 = vsel %vm355, %v320, 0
  %v1233 = vsel %vm355, %v321, 0
  %v1236 = vsel %vm355, %v322, 0
  %v1239 = vsel %vm355, %v323, 0
  %v1242 = vsel %vm355, %v324, 0
  %v1245 = vsel %vm355, %v325, 0
  %v1248 = vsel %vm355, %v326, 0
  %v1251 = vsel %vm355, %v327, 0
  %v1254 = vsel %vm355, %v328, 0
  %1256 = vmatpush.msra.mxu0 0.0
  %1257 = vmatpush.msra.mxu0 0.0
  %1258 = vmatpush.msra.mxu0 0.0
  %1259 = vmatpush.msra.mxu0 0.0
  %1260 = vmatpush.msra.mxu0 0.0
  %1261 = vmatpush.msra.mxu0 0.0
  %1262 = vmatpush.msra.mxu0 0.0
  %1263 = vmatpush.msra.mxu0 0.0
  %1264 = vmatpush.msra.mxu0 0.0
  %1265 = vmatpush.msra.mxu0 0.0
  %1266 = vmatpush.msra.mxu0 0.0
  %1267 = vmatpush.msra.mxu0 0.0
  %1268 = vmatpush.msra.mxu0 %v341
  %1269 = vmatpush.msra.mxu0 %v337
  %1270 = vmatpush.msra.mxu0 %v333
  %1271 = vmatpush.msra.mxu0 %v329
  %1272 = vmatmul.f32.gmra.mxu0 %v357
  %v1273 = vpop.f32.mrf.mxu0
  %v1274 = vadd.f32 %v347, %v1273
  %1275 = vmatmul.f32.gmra.mxu0 %v360
  %v1276 = vpop.f32.mrf.mxu0
  %v1277 = vadd.f32 %v347, %v1276
  %1278 = vmatmul.f32.gmra.mxu0 %v363
  %v1279 = vpop.f32.mrf.mxu0
  %v1280 = vadd.f32 %v347, %v1279
  %1281 = vmatmul.f32.gmra.mxu0 %v366
  %v1282 = vpop.f32.mrf.mxu0
  %v1283 = vadd.f32 %v347, %v1282
  %1284 = vmatmul.f32.gmra.mxu0 %v369
  %v1285 = vpop.f32.mrf.mxu0
  %v1286 = vadd.f32 %v347, %v1285
  %1287 = vmatmul.f32.gmra.mxu0 %v372
  %v1288 = vpop.f32.mrf.mxu0
  %v1289 = vadd.f32 %v347, %v1288
  %1290 = vmatmul.f32.gmra.mxu0 %v375
  %v1291 = vpop.f32.mrf.mxu0
  %v1292 = vadd.f32 %v347, %v1291
  %1293 = vmatmul.f32.gmra.mxu0 %v378
  %v1294 = vpop.f32.mrf.mxu0
  %v1295 = vadd.f32 %v347, %v1294
  %1296 = vmatmul.f32.gmra.mxu0 %v381
  %v1297 = vpop.f32.mrf.mxu0
  %v1298 = vadd.f32 %v347, %v1297
  %1299 = vmatmul.f32.gmra.mxu0 %v384
  %v1300 = vpop.f32.mrf.mxu0
  %v1301 = vadd.f32 %v347, %v1300
  %1302 = vmatmul.f32.gmra.mxu0 %v387
  %v1303 = vpop.f32.mrf.mxu0
  %v1304 = vadd.f32 %v347, %v1303
  %1305 = vmatmul.f32.gmra.mxu0 %v390
  %v1306 = vpop.f32.mrf.mxu0
  %v1307 = vadd.f32 %v347, %v1306
  %1308 = vmatmul.f32.gmra.mxu0 %v393
  %v1309 = vpop.f32.mrf.mxu0
  %v1310 = vadd.f32 %v347, %v1309
  %1311 = vmatmul.f32.gmra.mxu0 %v396
  %v1312 = vpop.f32.mrf.mxu0
  %v1313 = vadd.f32 %v347, %v1312
  %1314 = vmatmul.f32.gmra.mxu0 %v399
  %v1315 = vpop.f32.mrf.mxu0
  %v1316 = vadd.f32 %v347, %v1315
  %1317 = vmatmul.f32.gmra.mxu0 %v402
  %v1318 = vpop.f32.mrf.mxu0
  %v1319 = vadd.f32 %v347, %v1318
  %1320 = vmatmul.f32.gmra.mxu0 %v405
  %v1321 = vpop.f32.mrf.mxu0
  %v1322 = vadd.f32 %v347, %v1321
  %1323 = vmatmul.f32.gmra.mxu0 %v408
  %v1324 = vpop.f32.mrf.mxu0
  %v1325 = vadd.f32 %v347, %v1324
  %1326 = vmatmul.f32.gmra.mxu0 %v411
  %v1327 = vpop.f32.mrf.mxu0
  %v1328 = vadd.f32 %v347, %v1327
  %1329 = vmatmul.f32.gmra.mxu0 %v414
  %v1330 = vpop.f32.mrf.mxu0
  %v1331 = vadd.f32 %v347, %v1330
  %1332 = vmatmul.f32.gmra.mxu0 %v417
  %v1333 = vpop.f32.mrf.mxu0
  %v1334 = vadd.f32 %v347, %v1333
  %1335 = vmatmul.f32.gmra.mxu0 %v420
  %v1336 = vpop.f32.mrf.mxu0
  %v1337 = vadd.f32 %v347, %v1336
  %1338 = vmatmul.f32.gmra.mxu0 %v423
  %v1339 = vpop.f32.mrf.mxu0
  %v1340 = vadd.f32 %v347, %v1339
  %1341 = vmatmul.f32.gmra.mxu0 %v426
  %v1342 = vpop.f32.mrf.mxu0
  %v1343 = vadd.f32 %v347, %v1342
  %1344 = vmatmul.f32.gmra.mxu0 %v429
  %v1345 = vpop.f32.mrf.mxu0
  %v1346 = vadd.f32 %v347, %v1345
  %1347 = vmatmul.f32.gmra.mxu0 %v432
  %v1348 = vpop.f32.mrf.mxu0
  %v1349 = vadd.f32 %v347, %v1348
  %1350 = vmatmul.f32.gmra.mxu0 %v435
  %v1351 = vpop.f32.mrf.mxu0
  %v1352 = vadd.f32 %v347, %v1351
  %1353 = vmatmul.f32.gmra.mxu0 %v438
  %v1354 = vpop.f32.mrf.mxu0
  %v1355 = vadd.f32 %v347, %v1354
  %1356 = vmatmul.f32.gmra.mxu0 %v441
  %v1357 = vpop.f32.mrf.mxu0
  %v1358 = vadd.f32 %v347, %v1357
  %1359 = vmatmul.f32.gmra.mxu0 %v444
  %v1360 = vpop.f32.mrf.mxu0
  %v1361 = vadd.f32 %v347, %v1360
  %1362 = vmatmul.f32.gmra.mxu0 %v447
  %v1363 = vpop.f32.mrf.mxu0
  %v1364 = vadd.f32 %v347, %v1363
  %1365 = vmatmul.f32.gmra.mxu0 %v450
  %v1366 = vpop.f32.mrf.mxu0
  %v1367 = vadd.f32 %v347, %v1366
  %1368 = vmatmul.f32.gmra.mxu0 %v453
  %v1369 = vpop.f32.mrf.mxu0
  %v1370 = vadd.f32 %v347, %v1369
  %1371 = vmatmul.f32.gmra.mxu0 %v456
  %v1372 = vpop.f32.mrf.mxu0
  %v1373 = vadd.f32 %v347, %v1372
  %1374 = vmatmul.f32.gmra.mxu0 %v459
  %v1375 = vpop.f32.mrf.mxu0
  %v1376 = vadd.f32 %v347, %v1375
  %1377 = vmatmul.f32.gmra.mxu0 %v462
  %v1378 = vpop.f32.mrf.mxu0
  %v1379 = vadd.f32 %v347, %v1378
  %1380 = vmatmul.f32.gmra.mxu0 %v465
  %v1381 = vpop.f32.mrf.mxu0
  %v1382 = vadd.f32 %v347, %v1381
  %1383 = vmatmul.f32.gmra.mxu0 %v468
  %v1384 = vpop.f32.mrf.mxu0
  %v1385 = vadd.f32 %v347, %v1384
  %1386 = vmatmul.f32.gmra.mxu0 %v471
  %v1387 = vpop.f32.mrf.mxu0
  %v1388 = vadd.f32 %v347, %v1387
  %1389 = vmatmul.f32.gmra.mxu0 %v474
  %v1390 = vpop.f32.mrf.mxu0
  %v1391 = vadd.f32 %v347, %v1390
  %1392 = vmatmul.f32.gmra.mxu0 %v477
  %v1393 = vpop.f32.mrf.mxu0
  %v1394 = vadd.f32 %v347, %v1393
  %1395 = vmatmul.f32.gmra.mxu0 %v480
  %v1396 = vpop.f32.mrf.mxu0
  %v1397 = vadd.f32 %v347, %v1396
  %1398 = vmatmul.f32.gmra.mxu0 %v483
  %v1399 = vpop.f32.mrf.mxu0
  %v1400 = vadd.f32 %v347, %v1399
  %1401 = vmatmul.f32.gmra.mxu0 %v486
  %v1402 = vpop.f32.mrf.mxu0
  %v1403 = vadd.f32 %v347, %v1402
  %1404 = vmatmul.f32.gmra.mxu0 %v489
  %v1405 = vpop.f32.mrf.mxu0
  %v1406 = vadd.f32 %v347, %v1405
  %1407 = vmatmul.f32.gmra.mxu0 %v492
  %v1408 = vpop.f32.mrf.mxu0
  %v1409 = vadd.f32 %v347, %v1408
  %1410 = vmatmul.f32.gmra.mxu0 %v495
  %v1411 = vpop.f32.mrf.mxu0
  %v1412 = vadd.f32 %v347, %v1411
  %1413 = vmatmul.f32.gmra.mxu0 %v498
  %v1414 = vpop.f32.mrf.mxu0
  %v1415 = vadd.f32 %v347, %v1414
  %1416 = vmatmul.f32.gmra.mxu0 %v501
  %v1417 = vpop.f32.mrf.mxu0
  %v1418 = vadd.f32 %v347, %v1417
  %1419 = vmatmul.f32.gmra.mxu0 %v504
  %v1420 = vpop.f32.mrf.mxu0
  %v1421 = vadd.f32 %v347, %v1420
  %1422 = vmatmul.f32.gmra.mxu0 %v507
  %v1423 = vpop.f32.mrf.mxu0
  %v1424 = vadd.f32 %v347, %v1423
  %1425 = vmatmul.f32.gmra.mxu0 %v510
  %v1426 = vpop.f32.mrf.mxu0
  %v1427 = vadd.f32 %v347, %v1426
  %1428 = vmatmul.f32.gmra.mxu0 %v513
  %v1429 = vpop.f32.mrf.mxu0
  %v1430 = vadd.f32 %v347, %v1429
  %1431 = vmatmul.f32.gmra.mxu0 %v516
  %v1432 = vpop.f32.mrf.mxu0
  %v1433 = vadd.f32 %v347, %v1432
  %1434 = vmatmul.f32.gmra.mxu0 %v519
  %v1435 = vpop.f32.mrf.mxu0
  %v1436 = vadd.f32 %v347, %v1435
  %1437 = vmatmul.f32.gmra.mxu0 %v522
  %v1438 = vpop.f32.mrf.mxu0
  %v1439 = vadd.f32 %v347, %v1438
  %1440 = vmatmul.f32.gmra.mxu0 %v525
  %v1441 = vpop.f32.mrf.mxu0
  %v1442 = vadd.f32 %v347, %v1441
  %1443 = vmatmul.f32.gmra.mxu0 %v528
  %v1444 = vpop.f32.mrf.mxu0
  %v1445 = vadd.f32 %v347, %v1444
  %1446 = vmatmul.f32.gmra.mxu0 %v531
  %v1447 = vpop.f32.mrf.mxu0
  %v1448 = vadd.f32 %v347, %v1447
  %1449 = vmatmul.f32.gmra.mxu0 %v534
  %v1450 = vpop.f32.mrf.mxu0
  %v1451 = vadd.f32 %v347, %v1450
  %1452 = vmatmul.f32.gmra.mxu0 %v537
  %v1453 = vpop.f32.mrf.mxu0
  %v1454 = vadd.f32 %v347, %v1453
  %1455 = vmatmul.f32.gmra.mxu0 %v540
  %v1456 = vpop.f32.mrf.mxu0
  %v1457 = vadd.f32 %v347, %v1456
  %1458 = vmatmul.f32.gmra.mxu0 %v543
  %v1459 = vpop.f32.mrf.mxu0
  %v1460 = vadd.f32 %v347, %v1459
  %1461 = vmatmul.f32.gmra.mxu0 %v546
  %v1462 = vpop.f32.mrf.mxu0
  %v1463 = vadd.f32 %v347, %v1462
  %1464 = vmatmul.f32.gmra.mxu0 %v549
  %v1465 = vpop.f32.mrf.mxu0
  %v1466 = vadd.f32 %v347, %v1465
  %1467 = vmatmul.f32.gmra.mxu0 %v552
  %v1468 = vpop.f32.mrf.mxu0
  %v1469 = vadd.f32 %v347, %v1468
  %1470 = vmatmul.f32.gmra.mxu0 %v555
  %v1471 = vpop.f32.mrf.mxu0
  %v1472 = vadd.f32 %v347, %v1471
  %1473 = vmatmul.f32.gmra.mxu0 %v558
  %v1474 = vpop.f32.mrf.mxu0
  %v1475 = vadd.f32 %v347, %v1474
  %1476 = vmatmul.f32.gmra.mxu0 %v561
  %v1477 = vpop.f32.mrf.mxu0
  %v1478 = vadd.f32 %v347, %v1477
  %1479 = vmatmul.f32.gmra.mxu0 %v564
  %v1480 = vpop.f32.mrf.mxu0
  %v1481 = vadd.f32 %v347, %v1480
  %1482 = vmatmul.f32.gmra.mxu0 %v567
  %v1483 = vpop.f32.mrf.mxu0
  %v1484 = vadd.f32 %v347, %v1483
  %1485 = vmatmul.f32.gmra.mxu0 %v570
  %v1486 = vpop.f32.mrf.mxu0
  %v1487 = vadd.f32 %v347, %v1486
  %1488 = vmatmul.f32.gmra.mxu0 %v573
  %v1489 = vpop.f32.mrf.mxu0
  %v1490 = vadd.f32 %v347, %v1489
  %1491 = vmatmul.f32.gmra.mxu0 %v576
  %v1492 = vpop.f32.mrf.mxu0
  %v1493 = vadd.f32 %v347, %v1492
  %1494 = vmatmul.f32.gmra.mxu0 %v579
  %v1495 = vpop.f32.mrf.mxu0
  %v1496 = vadd.f32 %v347, %v1495
  %1497 = vmatmul.f32.gmra.mxu0 %v582
  %v1498 = vpop.f32.mrf.mxu0
  %v1499 = vadd.f32 %v347, %v1498
  %1500 = vmatmul.f32.gmra.mxu0 %v585
  %v1501 = vpop.f32.mrf.mxu0
  %v1502 = vadd.f32 %v347, %v1501
  %1503 = vmatmul.f32.gmra.mxu0 %v588
  %v1504 = vpop.f32.mrf.mxu0
  %v1505 = vadd.f32 %v347, %v1504
  %1506 = vmatmul.f32.gmra.mxu0 %v591
  %v1507 = vpop.f32.mrf.mxu0
  %v1508 = vadd.f32 %v347, %v1507
  %1509 = vmatmul.f32.gmra.mxu0 %v594
  %v1510 = vpop.f32.mrf.mxu0
  %v1511 = vadd.f32 %v347, %v1510
  %1512 = vmatmul.f32.gmra.mxu0 %v597
  %v1513 = vpop.f32.mrf.mxu0
  %v1514 = vadd.f32 %v347, %v1513
  %1515 = vmatmul.f32.gmra.mxu0 %v600
  %v1516 = vpop.f32.mrf.mxu0
  %v1517 = vadd.f32 %v347, %v1516
  %1518 = vmatmul.f32.gmra.mxu0 %v603
  %v1519 = vpop.f32.mrf.mxu0
  %v1520 = vadd.f32 %v347, %v1519
  %1521 = vmatmul.f32.gmra.mxu0 %v606
  %v1522 = vpop.f32.mrf.mxu0
  %v1523 = vadd.f32 %v347, %v1522
  %1524 = vmatmul.f32.gmra.mxu0 %v609
  %v1525 = vpop.f32.mrf.mxu0
  %v1526 = vadd.f32 %v347, %v1525
  %1527 = vmatmul.f32.gmra.mxu0 %v612
  %v1528 = vpop.f32.mrf.mxu0
  %v1529 = vadd.f32 %v347, %v1528
  %1530 = vmatmul.f32.gmra.mxu0 %v615
  %v1531 = vpop.f32.mrf.mxu0
  %v1532 = vadd.f32 %v347, %v1531
  %1533 = vmatmul.f32.gmra.mxu0 %v618
  %v1534 = vpop.f32.mrf.mxu0
  %v1535 = vadd.f32 %v347, %v1534
  %1536 = vmatmul.f32.gmra.mxu0 %v621
  %v1537 = vpop.f32.mrf.mxu0
  %v1538 = vadd.f32 %v347, %v1537
  %1539 = vmatmul.f32.gmra.mxu0 %v624
  %v1540 = vpop.f32.mrf.mxu0
  %v1541 = vadd.f32 %v347, %v1540
  %1542 = vmatmul.f32.gmra.mxu0 %v627
  %v1543 = vpop.f32.mrf.mxu0
  %v1544 = vadd.f32 %v347, %v1543
  %1545 = vmatmul.f32.gmra.mxu0 %v630
  %v1546 = vpop.f32.mrf.mxu0
  %v1547 = vadd.f32 %v347, %v1546
  %1548 = vmatmul.f32.gmra.mxu0 %v633
  %v1549 = vpop.f32.mrf.mxu0
  %v1550 = vadd.f32 %v347, %v1549
  %1551 = vmatmul.f32.gmra.mxu0 %v636
  %v1552 = vpop.f32.mrf.mxu0
  %v1553 = vadd.f32 %v347, %v1552
  %1554 = vmatmul.f32.gmra.mxu0 %v639
  %v1555 = vpop.f32.mrf.mxu0
  %v1556 = vadd.f32 %v347, %v1555
  %1557 = vmatmul.f32.gmra.mxu0 %v642
  %v1558 = vpop.f32.mrf.mxu0
  %v1559 = vadd.f32 %v347, %v1558
  %1560 = vmatmul.f32.gmra.mxu0 %v645
  %v1561 = vpop.f32.mrf.mxu0
  %v1562 = vadd.f32 %v347, %v1561
  %1563 = vmatmul.f32.gmra.mxu0 %v648
  %v1564 = vpop.f32.mrf.mxu0
  %v1565 = vadd.f32 %v347, %v1564
  %1566 = vmatmul.f32.gmra.mxu0 %v651
  %v1567 = vpop.f32.mrf.mxu0
  %v1568 = vadd.f32 %v347, %v1567
  %1569 = vmatmul.f32.gmra.mxu0 %v654
  %v1570 = vpop.f32.mrf.mxu0
  %v1571 = vadd.f32 %v347, %v1570
  %1572 = vmatmul.f32.gmra.mxu0 %v657
  %v1573 = vpop.f32.mrf.mxu0
  %v1574 = vadd.f32 %v347, %v1573
  %1575 = vmatmul.f32.gmra.mxu0 %v660
  %v1576 = vpop.f32.mrf.mxu0
  %v1577 = vadd.f32 %v347, %v1576
  %1578 = vmatmul.f32.gmra.mxu0 %v663
  %v1579 = vpop.f32.mrf.mxu0
  %v1580 = vadd.f32 %v347, %v1579
  %1581 = vmatmul.f32.gmra.mxu0 %v666
  %v1582 = vpop.f32.mrf.mxu0
  %v1583 = vadd.f32 %v347, %v1582
  %1584 = vmatmul.f32.gmra.mxu0 %v669
  %v1585 = vpop.f32.mrf.mxu0
  %v1586 = vadd.f32 %v347, %v1585
  %1587 = vmatmul.f32.gmra.mxu0 %v672
  %v1588 = vpop.f32.mrf.mxu0
  %v1589 = vadd.f32 %v347, %v1588
  %1590 = vmatmul.f32.gmra.mxu0 %v675
  %v1591 = vpop.f32.mrf.mxu0
  %v1592 = vadd.f32 %v347, %v1591
  %1593 = vmatmul.f32.gmra.mxu0 %v678
  %v1594 = vpop.f32.mrf.mxu0
  %v1595 = vadd.f32 %v347, %v1594
  %1596 = vmatmul.f32.gmra.mxu0 %v681
  %v1597 = vpop.f32.mrf.mxu0
  %v1598 = vadd.f32 %v347, %v1597
  %1599 = vmatmul.f32.gmra.mxu0 %v684
  %v1600 = vpop.f32.mrf.mxu0
  %v1601 = vadd.f32 %v347, %v1600
  %1602 = vmatmul.f32.gmra.mxu0 %v687
  %v1603 = vpop.f32.mrf.mxu0
  %v1604 = vadd.f32 %v347, %v1603
  %1605 = vmatmul.f32.gmra.mxu0 %v690
  %v1606 = vpop.f32.mrf.mxu0
  %v1607 = vadd.f32 %v347, %v1606
  %1608 = vmatmul.f32.gmra.mxu0 %v693
  %v1609 = vpop.f32.mrf.mxu0
  %v1610 = vadd.f32 %v347, %v1609
  %1611 = vmatmul.f32.gmra.mxu0 %v696
  %v1612 = vpop.f32.mrf.mxu0
  %v1613 = vadd.f32 %v347, %v1612
  %1614 = vmatmul.f32.gmra.mxu0 %v699
  %v1615 = vpop.f32.mrf.mxu0
  %v1616 = vadd.f32 %v347, %v1615
  %1617 = vmatmul.f32.gmra.mxu0 %v702
  %v1618 = vpop.f32.mrf.mxu0
  %v1619 = vadd.f32 %v347, %v1618
  %1620 = vmatmul.f32.gmra.mxu0 %v705
  %v1621 = vpop.f32.mrf.mxu0
  %v1622 = vadd.f32 %v347, %v1621
  %1623 = vmatmul.f32.gmra.mxu0 %v708
  %v1624 = vpop.f32.mrf.mxu0
  %v1625 = vadd.f32 %v347, %v1624
  %1626 = vmatmul.f32.gmra.mxu0 %v711
  %v1627 = vpop.f32.mrf.mxu0
  %v1628 = vadd.f32 %v347, %v1627
  %1629 = vmatmul.f32.gmra.mxu0 %v714
  %v1630 = vpop.f32.mrf.mxu0
  %v1631 = vadd.f32 %v347, %v1630
  %1632 = vmatmul.f32.gmra.mxu0 %v717
  %v1633 = vpop.f32.mrf.mxu0
  %v1634 = vadd.f32 %v347, %v1633
  %1635 = vmatmul.f32.gmra.mxu0 %v720
  %v1636 = vpop.f32.mrf.mxu0
  %v1637 = vadd.f32 %v347, %v1636
  %1638 = vmatmul.f32.gmra.mxu0 %v723
  %v1639 = vpop.f32.mrf.mxu0
  %v1640 = vadd.f32 %v347, %v1639
  %1641 = vmatmul.f32.gmra.mxu0 %v726
  %v1642 = vpop.f32.mrf.mxu0
  %v1643 = vadd.f32 %v347, %v1642
  %1644 = vmatmul.f32.gmra.mxu0 %v729
  %v1645 = vpop.f32.mrf.mxu0
  %v1646 = vadd.f32 %v347, %v1645
  %1647 = vmatmul.f32.gmra.mxu0 %v732
  %v1648 = vpop.f32.mrf.mxu0
  %v1649 = vadd.f32 %v347, %v1648
  %1650 = vmatmul.f32.gmra.mxu0 %v735
  %v1651 = vpop.f32.mrf.mxu0
  %v1652 = vadd.f32 %v347, %v1651
  %1653 = vmatmul.f32.gmra.mxu0 %v738
  %v1654 = vpop.f32.mrf.mxu0
  %v1655 = vadd.f32 %v347, %v1654
  %1656 = vmatmul.f32.gmra.mxu0 %v741
  %v1657 = vpop.f32.mrf.mxu0
  %v1658 = vadd.f32 %v347, %v1657
  %1659 = vmatmul.f32.gmra.mxu0 %v744
  %v1660 = vpop.f32.mrf.mxu0
  %v1661 = vadd.f32 %v347, %v1660
  %1662 = vmatmul.f32.gmra.mxu0 %v747
  %v1663 = vpop.f32.mrf.mxu0
  %v1664 = vadd.f32 %v347, %v1663
  %1665 = vmatmul.f32.gmra.mxu0 %v750
  %v1666 = vpop.f32.mrf.mxu0
  %v1667 = vadd.f32 %v347, %v1666
  %1668 = vmatmul.f32.gmra.mxu0 %v753
  %v1669 = vpop.f32.mrf.mxu0
  %v1670 = vadd.f32 %v347, %v1669
  %1671 = vmatmul.f32.gmra.mxu0 %v756
  %v1672 = vpop.f32.mrf.mxu0
  %v1673 = vadd.f32 %v347, %v1672
  %1674 = vmatmul.f32.gmra.mxu0 %v759
  %v1675 = vpop.f32.mrf.mxu0
  %v1676 = vadd.f32 %v347, %v1675
  %1677 = vmatmul.f32.gmra.mxu0 %v762
  %v1678 = vpop.f32.mrf.mxu0
  %v1679 = vadd.f32 %v347, %v1678
  %1680 = vmatmul.f32.gmra.mxu0 %v765
  %v1681 = vpop.f32.mrf.mxu0
  %v1682 = vadd.f32 %v347, %v1681
  %1683 = vmatmul.f32.gmra.mxu0 %v768
  %v1684 = vpop.f32.mrf.mxu0
  %v1685 = vadd.f32 %v347, %v1684
  %1686 = vmatmul.f32.gmra.mxu0 %v771
  %v1687 = vpop.f32.mrf.mxu0
  %v1688 = vadd.f32 %v347, %v1687
  %1689 = vmatmul.f32.gmra.mxu0 %v774
  %v1690 = vpop.f32.mrf.mxu0
  %v1691 = vadd.f32 %v347, %v1690
  %1692 = vmatmul.f32.gmra.mxu0 %v777
  %v1693 = vpop.f32.mrf.mxu0
  %v1694 = vadd.f32 %v347, %v1693
  %1695 = vmatmul.f32.gmra.mxu0 %v780
  %v1696 = vpop.f32.mrf.mxu0
  %v1697 = vadd.f32 %v347, %v1696
  %1698 = vmatmul.f32.gmra.mxu0 %v783
  %v1699 = vpop.f32.mrf.mxu0
  %v1700 = vadd.f32 %v347, %v1699
  %1701 = vmatmul.f32.gmra.mxu0 %v786
  %v1702 = vpop.f32.mrf.mxu0
  %v1703 = vadd.f32 %v347, %v1702
  %1704 = vmatmul.f32.gmra.mxu0 %v789
  %v1705 = vpop.f32.mrf.mxu0
  %v1706 = vadd.f32 %v347, %v1705
  %1707 = vmatmul.f32.gmra.mxu0 %v792
  %v1708 = vpop.f32.mrf.mxu0
  %v1709 = vadd.f32 %v347, %v1708
  %1710 = vmatmul.f32.gmra.mxu0 %v795
  %v1711 = vpop.f32.mrf.mxu0
  %v1712 = vadd.f32 %v347, %v1711
  %1713 = vmatmul.f32.gmra.mxu0 %v798
  %v1714 = vpop.f32.mrf.mxu0
  %v1715 = vadd.f32 %v347, %v1714
  %1716 = vmatmul.f32.gmra.mxu0 %v801
  %v1717 = vpop.f32.mrf.mxu0
  %v1718 = vadd.f32 %v347, %v1717
  %1719 = vmatmul.f32.gmra.mxu0 %v804
  %v1720 = vpop.f32.mrf.mxu0
  %v1721 = vadd.f32 %v347, %v1720
  %1722 = vmatmul.f32.gmra.mxu0 %v807
  %v1723 = vpop.f32.mrf.mxu0
  %v1724 = vadd.f32 %v347, %v1723
  %1725 = vmatmul.f32.gmra.mxu0 %v810
  %v1726 = vpop.f32.mrf.mxu0
  %v1727 = vadd.f32 %v347, %v1726
  %1728 = vmatmul.f32.gmra.mxu0 %v813
  %v1729 = vpop.f32.mrf.mxu0
  %v1730 = vadd.f32 %v347, %v1729
  %1731 = vmatmul.f32.gmra.mxu0 %v816
  %v1732 = vpop.f32.mrf.mxu0
  %v1733 = vadd.f32 %v347, %v1732
  %1734 = vmatmul.f32.gmra.mxu0 %v819
  %v1735 = vpop.f32.mrf.mxu0
  %v1736 = vadd.f32 %v347, %v1735
  %1737 = vmatmul.f32.gmra.mxu0 %v822
  %v1738 = vpop.f32.mrf.mxu0
  %v1739 = vadd.f32 %v347, %v1738
  %1740 = vmatmul.f32.gmra.mxu0 %v825
  %v1741 = vpop.f32.mrf.mxu0
  %v1742 = vadd.f32 %v347, %v1741
  %1743 = vmatmul.f32.gmra.mxu0 %v828
  %v1744 = vpop.f32.mrf.mxu0
  %v1745 = vadd.f32 %v347, %v1744
  %1746 = vmatmul.f32.gmra.mxu0 %v831
  %v1747 = vpop.f32.mrf.mxu0
  %v1748 = vadd.f32 %v347, %v1747
  %1749 = vmatmul.f32.gmra.mxu0 %v834
  %v1750 = vpop.f32.mrf.mxu0
  %v1751 = vadd.f32 %v347, %v1750
  %1752 = vmatmul.f32.gmra.mxu0 %v837
  %v1753 = vpop.f32.mrf.mxu0
  %v1754 = vadd.f32 %v347, %v1753
  %1755 = vmatmul.f32.gmra.mxu0 %v840
  %v1756 = vpop.f32.mrf.mxu0
  %v1757 = vadd.f32 %v347, %v1756
  %1758 = vmatmul.f32.gmra.mxu0 %v843
  %v1759 = vpop.f32.mrf.mxu0
  %v1760 = vadd.f32 %v347, %v1759
  %1761 = vmatmul.f32.gmra.mxu0 %v846
  %v1762 = vpop.f32.mrf.mxu0
  %v1763 = vadd.f32 %v347, %v1762
  %1764 = vmatmul.f32.gmra.mxu0 %v849
  %v1765 = vpop.f32.mrf.mxu0
  %v1766 = vadd.f32 %v347, %v1765
  %1767 = vmatmul.f32.gmra.mxu0 %v852
  %v1768 = vpop.f32.mrf.mxu0
  %v1769 = vadd.f32 %v347, %v1768
  %1770 = vmatmul.f32.gmra.mxu0 %v855
  %v1771 = vpop.f32.mrf.mxu0
  %v1772 = vadd.f32 %v347, %v1771
  %1773 = vmatmul.f32.gmra.mxu0 %v858
  %v1774 = vpop.f32.mrf.mxu0
  %v1775 = vadd.f32 %v347, %v1774
  %1776 = vmatmul.f32.gmra.mxu0 %v861
  %v1777 = vpop.f32.mrf.mxu0
  %v1778 = vadd.f32 %v347, %v1777
  %1779 = vmatmul.f32.gmra.mxu0 %v864
  %v1780 = vpop.f32.mrf.mxu0
  %v1781 = vadd.f32 %v347, %v1780
  %1782 = vmatmul.f32.gmra.mxu0 %v867
  %v1783 = vpop.f32.mrf.mxu0
  %v1784 = vadd.f32 %v347, %v1783
  %1785 = vmatmul.f32.gmra.mxu0 %v870
  %v1786 = vpop.f32.mrf.mxu0
  %v1787 = vadd.f32 %v347, %v1786
  %1788 = vmatmul.f32.gmra.mxu0 %v873
  %v1789 = vpop.f32.mrf.mxu0
  %v1790 = vadd.f32 %v347, %v1789
  %1791 = vmatmul.f32.gmra.mxu0 %v876
  %v1792 = vpop.f32.mrf.mxu0
  %v1793 = vadd.f32 %v347, %v1792
  %1794 = vmatmul.f32.gmra.mxu0 %v879
  %v1795 = vpop.f32.mrf.mxu0
  %v1796 = vadd.f32 %v347, %v1795
  %1797 = vmatmul.f32.gmra.mxu0 %v882
  %v1798 = vpop.f32.mrf.mxu0
  %v1799 = vadd.f32 %v347, %v1798
  %1800 = vmatmul.f32.gmra.mxu0 %v885
  %v1801 = vpop.f32.mrf.mxu0
  %v1802 = vadd.f32 %v347, %v1801
  %1803 = vmatmul.f32.gmra.mxu0 %v888
  %v1804 = vpop.f32.mrf.mxu0
  %v1805 = vadd.f32 %v347, %v1804
  %1806 = vmatmul.f32.gmra.mxu0 %v891
  %v1807 = vpop.f32.mrf.mxu0
  %v1808 = vadd.f32 %v347, %v1807
  %1809 = vmatmul.f32.gmra.mxu0 %v894
  %v1810 = vpop.f32.mrf.mxu0
  %v1811 = vadd.f32 %v347, %v1810
  %1812 = vmatmul.f32.gmra.mxu0 %v897
  %v1813 = vpop.f32.mrf.mxu0
  %v1814 = vadd.f32 %v347, %v1813
  %1815 = vmatmul.f32.gmra.mxu0 %v900
  %v1816 = vpop.f32.mrf.mxu0
  %v1817 = vadd.f32 %v347, %v1816
  %1818 = vmatmul.f32.gmra.mxu0 %v903
  %v1819 = vpop.f32.mrf.mxu0
  %v1820 = vadd.f32 %v347, %v1819
  %1821 = vmatmul.f32.gmra.mxu0 %v906
  %v1822 = vpop.f32.mrf.mxu0
  %v1823 = vadd.f32 %v347, %v1822
  %1824 = vmatmul.f32.gmra.mxu0 %v909
  %v1825 = vpop.f32.mrf.mxu0
  %v1826 = vadd.f32 %v347, %v1825
  %1827 = vmatmul.f32.gmra.mxu0 %v912
  %v1828 = vpop.f32.mrf.mxu0
  %v1829 = vadd.f32 %v347, %v1828
  %1830 = vmatmul.f32.gmra.mxu0 %v915
  %v1831 = vpop.f32.mrf.mxu0
  %v1832 = vadd.f32 %v347, %v1831
  %1833 = vmatmul.f32.gmra.mxu0 %v918
  %v1834 = vpop.f32.mrf.mxu0
  %v1835 = vadd.f32 %v347, %v1834
  %1836 = vmatmul.f32.gmra.mxu0 %v921
  %v1837 = vpop.f32.mrf.mxu0
  %v1838 = vadd.f32 %v347, %v1837
  %1839 = vmatmul.f32.gmra.mxu0 %v924
  %v1840 = vpop.f32.mrf.mxu0
  %v1841 = vadd.f32 %v347, %v1840
  %1842 = vmatmul.f32.gmra.mxu0 %v927
  %v1843 = vpop.f32.mrf.mxu0
  %v1844 = vadd.f32 %v347, %v1843
  %1845 = vmatmul.f32.gmra.mxu0 %v930
  %v1846 = vpop.f32.mrf.mxu0
  %v1847 = vadd.f32 %v347, %v1846
  %1848 = vmatmul.f32.gmra.mxu0 %v933
  %v1849 = vpop.f32.mrf.mxu0
  %v1850 = vadd.f32 %v347, %v1849
  %1851 = vmatmul.f32.gmra.mxu0 %v936
  %v1852 = vpop.f32.mrf.mxu0
  %v1853 = vadd.f32 %v347, %v1852
  %1854 = vmatmul.f32.gmra.mxu0 %v939
  %v1855 = vpop.f32.mrf.mxu0
  %v1856 = vadd.f32 %v347, %v1855
  %1857 = vmatmul.f32.gmra.mxu0 %v942
  %v1858 = vpop.f32.mrf.mxu0
  %v1859 = vadd.f32 %v347, %v1858
  %1860 = vmatmul.f32.gmra.mxu0 %v945
  %v1861 = vpop.f32.mrf.mxu0
  %v1862 = vadd.f32 %v347, %v1861
  %1863 = vmatmul.f32.gmra.mxu0 %v948
  %v1864 = vpop.f32.mrf.mxu0
  %v1865 = vadd.f32 %v347, %v1864
  %1866 = vmatmul.f32.gmra.mxu0 %v951
  %v1867 = vpop.f32.mrf.mxu0
  %v1868 = vadd.f32 %v347, %v1867
  %1869 = vmatmul.f32.gmra.mxu0 %v954
  %v1870 = vpop.f32.mrf.mxu0
  %v1871 = vadd.f32 %v347, %v1870
  %1872 = vmatmul.f32.gmra.mxu0 %v957
  %v1873 = vpop.f32.mrf.mxu0
  %v1874 = vadd.f32 %v347, %v1873
  %1875 = vmatmul.f32.gmra.mxu0 %v960
  %v1876 = vpop.f32.mrf.mxu0
  %v1877 = vadd.f32 %v347, %v1876
  %1878 = vmatmul.f32.gmra.mxu0 %v963
  %v1879 = vpop.f32.mrf.mxu0
  %v1880 = vadd.f32 %v347, %v1879
  %1881 = vmatmul.f32.gmra.mxu0 %v966
  %v1882 = vpop.f32.mrf.mxu0
  %v1883 = vadd.f32 %v347, %v1882
  %1884 = vmatmul.f32.gmra.mxu0 %v969
  %v1885 = vpop.f32.mrf.mxu0
  %v1886 = vadd.f32 %v347, %v1885
  %1887 = vmatmul.f32.gmra.mxu0 %v972
  %v1888 = vpop.f32.mrf.mxu0
  %v1889 = vadd.f32 %v347, %v1888
  %1890 = vmatmul.f32.gmra.mxu0 %v975
  %v1891 = vpop.f32.mrf.mxu0
  %v1892 = vadd.f32 %v347, %v1891
  %1893 = vmatmul.f32.gmra.mxu0 %v978
  %v1894 = vpop.f32.mrf.mxu0
  %v1895 = vadd.f32 %v347, %v1894
  %1896 = vmatmul.f32.gmra.mxu0 %v981
  %v1897 = vpop.f32.mrf.mxu0
  %v1898 = vadd.f32 %v347, %v1897
  %1899 = vmatmul.f32.gmra.mxu0 %v984
  %v1900 = vpop.f32.mrf.mxu0
  %v1901 = vadd.f32 %v347, %v1900
  %1902 = vmatmul.f32.gmra.mxu0 %v987
  %v1903 = vpop.f32.mrf.mxu0
  %v1904 = vadd.f32 %v347, %v1903
  %1905 = vmatmul.f32.gmra.mxu0 %v990
  %v1906 = vpop.f32.mrf.mxu0
  %v1907 = vadd.f32 %v347, %v1906
  %1908 = vmatmul.f32.gmra.mxu0 %v993
  %v1909 = vpop.f32.mrf.mxu0
  %v1910 = vadd.f32 %v347, %v1909
  %1911 = vmatmul.f32.gmra.mxu0 %v996
  %v1912 = vpop.f32.mrf.mxu0
  %v1913 = vadd.f32 %v347, %v1912
  %1914 = vmatmul.f32.gmra.mxu0 %v999
  %v1915 = vpop.f32.mrf.mxu0
  %v1916 = vadd.f32 %v347, %v1915
  %1917 = vmatmul.f32.gmra.mxu0 %v1002
  %v1918 = vpop.f32.mrf.mxu0
  %v1919 = vadd.f32 %v347, %v1918
  %1920 = vmatmul.f32.gmra.mxu0 %v1005
  %v1921 = vpop.f32.mrf.mxu0
  %v1922 = vadd.f32 %v347, %v1921
  %1923 = vmatmul.f32.gmra.mxu0 %v1008
  %v1924 = vpop.f32.mrf.mxu0
  %v1925 = vadd.f32 %v347, %v1924
  %1926 = vmatmul.f32.gmra.mxu0 %v1011
  %v1927 = vpop.f32.mrf.mxu0
  %v1928 = vadd.f32 %v347, %v1927
  %1929 = vmatmul.f32.gmra.mxu0 %v1014
  %v1930 = vpop.f32.mrf.mxu0
  %v1931 = vadd.f32 %v347, %v1930
  %1932 = vmatmul.f32.gmra.mxu0 %v1017
  %v1933 = vpop.f32.mrf.mxu0
  %v1934 = vadd.f32 %v347, %v1933
  %1935 = vmatmul.f32.gmra.mxu0 %v1020
  %v1936 = vpop.f32.mrf.mxu0
  %v1937 = vadd.f32 %v347, %v1936
  %1938 = vmatmul.f32.gmra.mxu0 %v1023
  %v1939 = vpop.f32.mrf.mxu0
  %v1940 = vadd.f32 %v347, %v1939
  %1941 = vmatmul.f32.gmra.mxu0 %v1026
  %v1942 = vpop.f32.mrf.mxu0
  %v1943 = vadd.f32 %v347, %v1942
  %1944 = vmatmul.f32.gmra.mxu0 %v1029
  %v1945 = vpop.f32.mrf.mxu0
  %v1946 = vadd.f32 %v347, %v1945
  %1947 = vmatmul.f32.gmra.mxu0 %v1032
  %v1948 = vpop.f32.mrf.mxu0
  %v1949 = vadd.f32 %v347, %v1948
  %1950 = vmatmul.f32.gmra.mxu0 %v1035
  %v1951 = vpop.f32.mrf.mxu0
  %v1952 = vadd.f32 %v347, %v1951
  %1953 = vmatmul.f32.gmra.mxu0 %v1038
  %v1954 = vpop.f32.mrf.mxu0
  %v1955 = vadd.f32 %v347, %v1954
  %1956 = vmatmul.f32.gmra.mxu0 %v1041
  %v1957 = vpop.f32.mrf.mxu0
  %v1958 = vadd.f32 %v347, %v1957
  %1959 = vmatmul.f32.gmra.mxu0 %v1044
  %v1960 = vpop.f32.mrf.mxu0
  %v1961 = vadd.f32 %v347, %v1960
  %1962 = vmatmul.f32.gmra.mxu0 %v1047
  %v1963 = vpop.f32.mrf.mxu0
  %v1964 = vadd.f32 %v347, %v1963
  %1965 = vmatmul.f32.gmra.mxu0 %v1050
  %v1966 = vpop.f32.mrf.mxu0
  %v1967 = vadd.f32 %v347, %v1966
  %1968 = vmatmul.f32.gmra.mxu0 %v1053
  %v1969 = vpop.f32.mrf.mxu0
  %v1970 = vadd.f32 %v347, %v1969
  %1971 = vmatmul.f32.gmra.mxu0 %v1056
  %v1972 = vpop.f32.mrf.mxu0
  %v1973 = vadd.f32 %v347, %v1972
  %1974 = vmatmul.f32.gmra.mxu0 %v1059
  %v1975 = vpop.f32.mrf.mxu0
  %v1976 = vadd.f32 %v347, %v1975
  %1977 = vmatmul.f32.gmra.mxu0 %v1062
  %v1978 = vpop.f32.mrf.mxu0
  %v1979 = vadd.f32 %v347, %v1978
  %1980 = vmatmul.f32.gmra.mxu0 %v1065
  %v1981 = vpop.f32.mrf.mxu0
  %v1982 = vadd.f32 %v347, %v1981
  %1983 = vmatmul.f32.gmra.mxu0 %v1068
  %v1984 = vpop.f32.mrf.mxu0
  %v1985 = vadd.f32 %v347, %v1984
  %1986 = vmatmul.f32.gmra.mxu0 %v1071
  %v1987 = vpop.f32.mrf.mxu0
  %v1988 = vadd.f32 %v347, %v1987
  %1989 = vmatmul.f32.gmra.mxu0 %v1074
  %v1990 = vpop.f32.mrf.mxu0
  %v1991 = vadd.f32 %v347, %v1990
  %1992 = vmatmul.f32.gmra.mxu0 %v1077
  %v1993 = vpop.f32.mrf.mxu0
  %v1994 = vadd.f32 %v347, %v1993
  %1995 = vmatmul.f32.gmra.mxu0 %v1080
  %v1996 = vpop.f32.mrf.mxu0
  %v1997 = vadd.f32 %v347, %v1996
  %1998 = vmatmul.f32.gmra.mxu0 %v1083
  %v1999 = vpop.f32.mrf.mxu0
  %v2000 = vadd.f32 %v347, %v1999
  %2001 = vmatmul.f32.gmra.mxu0 %v1086
  %v2002 = vpop.f32.mrf.mxu0
  %v2003 = vadd.f32 %v347, %v2002
  %2004 = vmatmul.f32.gmra.mxu0 %v1089
  %v2005 = vpop.f32.mrf.mxu0
  %v2006 = vadd.f32 %v347, %v2005
  %2007 = vmatmul.f32.gmra.mxu0 %v1092
  %v2008 = vpop.f32.mrf.mxu0
  %v2009 = vadd.f32 %v347, %v2008
  %2010 = vmatmul.f32.gmra.mxu0 %v1095
  %v2011 = vpop.f32.mrf.mxu0
  %v2012 = vadd.f32 %v347, %v2011
  %2013 = vmatmul.f32.gmra.mxu0 %v1098
  %v2014 = vpop.f32.mrf.mxu0
  %v2015 = vadd.f32 %v347, %v2014
  %2016 = vmatmul.f32.gmra.mxu0 %v1101
  %v2017 = vpop.f32.mrf.mxu0
  %v2018 = vadd.f32 %v347, %v2017
  %2019 = vmatmul.f32.gmra.mxu0 %v1104
  %v2020 = vpop.f32.mrf.mxu0
  %v2021 = vadd.f32 %v347, %v2020
  %2022 = vmatmul.f32.gmra.mxu0 %v1107
  %v2023 = vpop.f32.mrf.mxu0
  %v2024 = vadd.f32 %v347, %v2023
  %2025 = vmatmul.f32.gmra.mxu0 %v1110
  %v2026 = vpop.f32.mrf.mxu0
  %v2027 = vadd.f32 %v347, %v2026
  %2028 = vmatmul.f32.gmra.mxu0 %v1113
  %v2029 = vpop.f32.mrf.mxu0
  %v2030 = vadd.f32 %v347, %v2029
  %2031 = vmatmul.f32.gmra.mxu0 %v1116
  %v2032 = vpop.f32.mrf.mxu0
  %v2033 = vadd.f32 %v347, %v2032
  %2034 = vmatmul.f32.gmra.mxu0 %v1119
  %v2035 = vpop.f32.mrf.mxu0
  %v2036 = vadd.f32 %v347, %v2035
  %2037 = vmatmul.f32.gmra.mxu0 %v1122
  %v2038 = vpop.f32.mrf.mxu0
  %v2039 = vadd.f32 %v347, %v2038
  %2040 = vmatmul.f32.gmra.mxu0 %v1125
  %v2041 = vpop.f32.mrf.mxu0
  %v2042 = vadd.f32 %v347, %v2041
  %2043 = vmatmul.f32.gmra.mxu0 %v1128
  %v2044 = vpop.f32.mrf.mxu0
  %v2045 = vadd.f32 %v347, %v2044
  %2046 = vmatmul.f32.gmra.mxu0 %v1131
  %v2047 = vpop.f32.mrf.mxu0
  %v2048 = vadd.f32 %v347, %v2047
  %2049 = vmatmul.f32.gmra.mxu0 %v1134
  %v2050 = vpop.f32.mrf.mxu0
  %v2051 = vadd.f32 %v347, %v2050
  %2052 = vmatmul.f32.gmra.mxu0 %v1137
  %v2053 = vpop.f32.mrf.mxu0
  %v2054 = vadd.f32 %v347, %v2053
  %2055 = vmatmul.f32.gmra.mxu0 %v1140
  %v2056 = vpop.f32.mrf.mxu0
  %v2057 = vadd.f32 %v347, %v2056
  %2058 = vmatmul.f32.gmra.mxu0 %v1143
  %v2059 = vpop.f32.mrf.mxu0
  %v2060 = vadd.f32 %v347, %v2059
  %2061 = vmatmul.f32.gmra.mxu0 %v1146
  %v2062 = vpop.f32.mrf.mxu0
  %v2063 = vadd.f32 %v347, %v2062
  %2064 = vmatmul.f32.gmra.mxu0 %v1149
  %v2065 = vpop.f32.mrf.mxu0
  %v2066 = vadd.f32 %v347, %v2065
  %2067 = vmatmul.f32.gmra.mxu0 %v1152
  %v2068 = vpop.f32.mrf.mxu0
  %v2069 = vadd.f32 %v347, %v2068
  %2070 = vmatmul.f32.gmra.mxu0 %v1155
  %v2071 = vpop.f32.mrf.mxu0
  %v2072 = vadd.f32 %v347, %v2071
  %2073 = vmatmul.f32.gmra.mxu0 %v1158
  %v2074 = vpop.f32.mrf.mxu0
  %v2075 = vadd.f32 %v347, %v2074
  %2076 = vmatmul.f32.gmra.mxu0 %v1161
  %v2077 = vpop.f32.mrf.mxu0
  %v2078 = vadd.f32 %v347, %v2077
  %2079 = vmatmul.f32.gmra.mxu0 %v1164
  %v2080 = vpop.f32.mrf.mxu0
  %v2081 = vadd.f32 %v347, %v2080
  %2082 = vmatmul.f32.gmra.mxu0 %v1167
  %v2083 = vpop.f32.mrf.mxu0
  %v2084 = vadd.f32 %v347, %v2083
  %2085 = vmatmul.f32.gmra.mxu0 %v1170
  %v2086 = vpop.f32.mrf.mxu0
  %v2087 = vadd.f32 %v347, %v2086
  %2088 = vmatmul.f32.gmra.mxu0 %v1173
  %v2089 = vpop.f32.mrf.mxu0
  %v2090 = vadd.f32 %v347, %v2089
  %2091 = vmatmul.f32.gmra.mxu0 %v1176
  %v2092 = vpop.f32.mrf.mxu0
  %v2093 = vadd.f32 %v347, %v2092
  %2094 = vmatmul.f32.gmra.mxu0 %v1179
  %v2095 = vpop.f32.mrf.mxu0
  %v2096 = vadd.f32 %v347, %v2095
  %2097 = vmatmul.f32.gmra.mxu0 %v1182
  %v2098 = vpop.f32.mrf.mxu0
  %v2099 = vadd.f32 %v347, %v2098
  %2100 = vmatmul.f32.gmra.mxu0 %v1185
  %v2101 = vpop.f32.mrf.mxu0
  %v2102 = vadd.f32 %v347, %v2101
  %2103 = vmatmul.f32.gmra.mxu0 %v1188
  %v2104 = vpop.f32.mrf.mxu0
  %v2105 = vadd.f32 %v347, %v2104
  %2106 = vmatmul.f32.gmra.mxu0 %v1191
  %v2107 = vpop.f32.mrf.mxu0
  %v2108 = vadd.f32 %v347, %v2107
  %2109 = vmatmul.f32.gmra.mxu0 %v1194
  %v2110 = vpop.f32.mrf.mxu0
  %v2111 = vadd.f32 %v347, %v2110
  %2112 = vmatmul.f32.gmra.mxu0 %v1197
  %v2113 = vpop.f32.mrf.mxu0
  %v2114 = vadd.f32 %v347, %v2113
  %2115 = vmatmul.f32.gmra.mxu0 %v1200
  %v2116 = vpop.f32.mrf.mxu0
  %v2117 = vadd.f32 %v347, %v2116
  %2118 = vmatmul.f32.gmra.mxu0 %v1203
  %v2119 = vpop.f32.mrf.mxu0
  %v2120 = vadd.f32 %v347, %v2119
  %2121 = vmatmul.f32.gmra.mxu0 %v1206
  %v2122 = vpop.f32.mrf.mxu0
  %v2123 = vadd.f32 %v347, %v2122
  %2124 = vmatmul.f32.gmra.mxu0 %v1209
  %v2125 = vpop.f32.mrf.mxu0
  %v2126 = vadd.f32 %v347, %v2125
  %2127 = vmatmul.f32.gmra.mxu0 %v1212
  %v2128 = vpop.f32.mrf.mxu0
  %v2129 = vadd.f32 %v347, %v2128
  %2130 = vmatmul.f32.gmra.mxu0 %v1215
  %v2131 = vpop.f32.mrf.mxu0
  %v2132 = vadd.f32 %v347, %v2131
  %2133 = vmatmul.f32.gmra.mxu0 %v1218
  %v2134 = vpop.f32.mrf.mxu0
  %v2135 = vadd.f32 %v347, %v2134
  %2136 = vmatmul.f32.gmra.mxu0 %v1221
  %v2137 = vpop.f32.mrf.mxu0
  %v2138 = vadd.f32 %v347, %v2137
  %2139 = vmatmul.f32.gmra.mxu0 %v1224
  %v2140 = vpop.f32.mrf.mxu0
  %v2141 = vadd.f32 %v347, %v2140
  %2142 = vmatmul.f32.gmra.mxu0 %v1227
  %v2143 = vpop.f32.mrf.mxu0
  %v2144 = vadd.f32 %v347, %v2143
  %2145 = vmatmul.f32.gmra.mxu0 %v1230
  %v2146 = vpop.f32.mrf.mxu0
  %v2147 = vadd.f32 %v347, %v2146
  %2148 = vmatmul.f32.gmra.mxu0 %v1233
  %v2149 = vpop.f32.mrf.mxu0
  %v2150 = vadd.f32 %v347, %v2149
  %2151 = vmatmul.f32.gmra.mxu0 %v1236
  %v2152 = vpop.f32.mrf.mxu0
  %v2153 = vadd.f32 %v347, %v2152
  %2154 = vmatmul.f32.gmra.mxu0 %v1239
  %v2155 = vpop.f32.mrf.mxu0
  %v2156 = vadd.f32 %v347, %v2155
  %2157 = vmatmul.f32.gmra.mxu0 %v1242
  %v2158 = vpop.f32.mrf.mxu0
  %v2159 = vadd.f32 %v347, %v2158
  %2160 = vmatmul.f32.gmra.mxu0 %v1245
  %v2161 = vpop.f32.mrf.mxu0
  %v2162 = vadd.f32 %v347, %v2161
  %2163 = vmatmul.f32.gmra.mxu0 %v1248
  %v2164 = vpop.f32.mrf.mxu0
  %v2165 = vadd.f32 %v347, %v2164
  %2166 = vmatmul.f32.gmra.mxu0 %v1251
  %v2167 = vpop.f32.mrf.mxu0
  %v2168 = vadd.f32 %v347, %v2167
  %2169 = vmatmul.f32.gmra.mxu0 %v1254
  %v2170 = vpop.f32.mrf.mxu0
  %v2171 = vadd.f32 %v347, %v2170
  %2172 = vdwg.mxu0
  %2173 = vmatpush.msra.mxu0 0.0
  %2174 = vmatpush.msra.mxu0 0.0
  %2175 = vmatpush.msra.mxu0 0.0
  %2176 = vmatpush.msra.mxu0 0.0
  %2177 = vmatpush.msra.mxu0 0.0
  %2178 = vmatpush.msra.mxu0 0.0
  %2179 = vmatpush.msra.mxu0 0.0
  %2180 = vmatpush.msra.mxu0 0.0
  %2181 = vmatpush.msra.mxu0 0.0
  %2182 = vmatpush.msra.mxu0 0.0
  %2183 = vmatpush.msra.mxu0 0.0
  %2184 = vmatpush.msra.mxu0 0.0
  %2185 = vmatpush.msra.mxu0 %v342
  %2186 = vmatpush.msra.mxu0 %v338
  %2187 = vmatpush.msra.mxu0 %v334
  %2188 = vmatpush.msra.mxu0 %v330
  %2189 = vmatmul.f32.gmra.mxu0 %v357
  %v2190 = vpop.f32.mrf.mxu0
  %v2191 = vadd.f32 %v348, %v2190
  %2192 = vmatmul.f32.gmra.mxu0 %v360
  %v2193 = vpop.f32.mrf.mxu0
  %v2194 = vadd.f32 %v348, %v2193
  %2195 = vmatmul.f32.gmra.mxu0 %v363
  %v2196 = vpop.f32.mrf.mxu0
  %v2197 = vadd.f32 %v348, %v2196
  %2198 = vmatmul.f32.gmra.mxu0 %v366
  %v2199 = vpop.f32.mrf.mxu0
  %v2200 = vadd.f32 %v348, %v2199
  %2201 = vmatmul.f32.gmra.mxu0 %v369
  %v2202 = vpop.f32.mrf.mxu0
  %v2203 = vadd.f32 %v348, %v2202
  %2204 = vmatmul.f32.gmra.mxu0 %v372
  %v2205 = vpop.f32.mrf.mxu0
  %v2206 = vadd.f32 %v348, %v2205
  %2207 = vmatmul.f32.gmra.mxu0 %v375
  %v2208 = vpop.f32.mrf.mxu0
  %v2209 = vadd.f32 %v348, %v2208
  %2210 = vmatmul.f32.gmra.mxu0 %v378
  %v2211 = vpop.f32.mrf.mxu0
  %v2212 = vadd.f32 %v348, %v2211
  %2213 = vmatmul.f32.gmra.mxu0 %v381
  %v2214 = vpop.f32.mrf.mxu0
  %v2215 = vadd.f32 %v348, %v2214
  %2216 = vmatmul.f32.gmra.mxu0 %v384
  %v2217 = vpop.f32.mrf.mxu0
  %v2218 = vadd.f32 %v348, %v2217
  %2219 = vmatmul.f32.gmra.mxu0 %v387
  %v2220 = vpop.f32.mrf.mxu0
  %v2221 = vadd.f32 %v348, %v2220
  %2222 = vmatmul.f32.gmra.mxu0 %v390
  %v2223 = vpop.f32.mrf.mxu0
  %v2224 = vadd.f32 %v348, %v2223
  %2225 = vmatmul.f32.gmra.mxu0 %v393
  %v2226 = vpop.f32.mrf.mxu0
  %v2227 = vadd.f32 %v348, %v2226
  %2228 = vmatmul.f32.gmra.mxu0 %v396
  %v2229 = vpop.f32.mrf.mxu0
  %v2230 = vadd.f32 %v348, %v2229
  %2231 = vmatmul.f32.gmra.mxu0 %v399
  %v2232 = vpop.f32.mrf.mxu0
  %v2233 = vadd.f32 %v348, %v2232
  %2234 = vmatmul.f32.gmra.mxu0 %v402
  %v2235 = vpop.f32.mrf.mxu0
  %v2236 = vadd.f32 %v348, %v2235
  %2237 = vmatmul.f32.gmra.mxu0 %v405
  %v2238 = vpop.f32.mrf.mxu0
  %v2239 = vadd.f32 %v348, %v2238
  %2240 = vmatmul.f32.gmra.mxu0 %v408
  %v2241 = vpop.f32.mrf.mxu0
  %v2242 = vadd.f32 %v348, %v2241
  %2243 = vmatmul.f32.gmra.mxu0 %v411
  %v2244 = vpop.f32.mrf.mxu0
  %v2245 = vadd.f32 %v348, %v2244
  %2246 = vmatmul.f32.gmra.mxu0 %v414
  %v2247 = vpop.f32.mrf.mxu0
  %v2248 = vadd.f32 %v348, %v2247
  %2249 = vmatmul.f32.gmra.mxu0 %v417
  %v2250 = vpop.f32.mrf.mxu0
  %v2251 = vadd.f32 %v348, %v2250
  %2252 = vmatmul.f32.gmra.mxu0 %v420
  %v2253 = vpop.f32.mrf.mxu0
  %v2254 = vadd.f32 %v348, %v2253
  %2255 = vmatmul.f32.gmra.mxu0 %v423
  %v2256 = vpop.f32.mrf.mxu0
  %v2257 = vadd.f32 %v348, %v2256
  %2258 = vmatmul.f32.gmra.mxu0 %v426
  %v2259 = vpop.f32.mrf.mxu0
  %v2260 = vadd.f32 %v348, %v2259
  %2261 = vmatmul.f32.gmra.mxu0 %v429
  %v2262 = vpop.f32.mrf.mxu0
  %v2263 = vadd.f32 %v348, %v2262
  %2264 = vmatmul.f32.gmra.mxu0 %v432
  %v2265 = vpop.f32.mrf.mxu0
  %v2266 = vadd.f32 %v348, %v2265
  %2267 = vmatmul.f32.gmra.mxu0 %v435
  %v2268 = vpop.f32.mrf.mxu0
  %v2269 = vadd.f32 %v348, %v2268
  %2270 = vmatmul.f32.gmra.mxu0 %v438
  %v2271 = vpop.f32.mrf.mxu0
  %v2272 = vadd.f32 %v348, %v2271
  %2273 = vmatmul.f32.gmra.mxu0 %v441
  %v2274 = vpop.f32.mrf.mxu0
  %v2275 = vadd.f32 %v348, %v2274
  %2276 = vmatmul.f32.gmra.mxu0 %v444
  %v2277 = vpop.f32.mrf.mxu0
  %v2278 = vadd.f32 %v348, %v2277
  %2279 = vmatmul.f32.gmra.mxu0 %v447
  %v2280 = vpop.f32.mrf.mxu0
  %v2281 = vadd.f32 %v348, %v2280
  %2282 = vmatmul.f32.gmra.mxu0 %v450
  %v2283 = vpop.f32.mrf.mxu0
  %v2284 = vadd.f32 %v348, %v2283
  %2285 = vmatmul.f32.gmra.mxu0 %v453
  %v2286 = vpop.f32.mrf.mxu0
  %v2287 = vadd.f32 %v348, %v2286
  %2288 = vmatmul.f32.gmra.mxu0 %v456
  %v2289 = vpop.f32.mrf.mxu0
  %v2290 = vadd.f32 %v348, %v2289
  %2291 = vmatmul.f32.gmra.mxu0 %v459
  %v2292 = vpop.f32.mrf.mxu0
  %v2293 = vadd.f32 %v348, %v2292
  %2294 = vmatmul.f32.gmra.mxu0 %v462
  %v2295 = vpop.f32.mrf.mxu0
  %v2296 = vadd.f32 %v348, %v2295
  %2297 = vmatmul.f32.gmra.mxu0 %v465
  %v2298 = vpop.f32.mrf.mxu0
  %v2299 = vadd.f32 %v348, %v2298
  %2300 = vmatmul.f32.gmra.mxu0 %v468
  %v2301 = vpop.f32.mrf.mxu0
  %v2302 = vadd.f32 %v348, %v2301
  %2303 = vmatmul.f32.gmra.mxu0 %v471
  %v2304 = vpop.f32.mrf.mxu0
  %v2305 = vadd.f32 %v348, %v2304
  %2306 = vmatmul.f32.gmra.mxu0 %v474
  %v2307 = vpop.f32.mrf.mxu0
  %v2308 = vadd.f32 %v348, %v2307
  %2309 = vmatmul.f32.gmra.mxu0 %v477
  %v2310 = vpop.f32.mrf.mxu0
  %v2311 = vadd.f32 %v348, %v2310
  %2312 = vmatmul.f32.gmra.mxu0 %v480
  %v2313 = vpop.f32.mrf.mxu0
  %v2314 = vadd.f32 %v348, %v2313
  %2315 = vmatmul.f32.gmra.mxu0 %v483
  %v2316 = vpop.f32.mrf.mxu0
  %v2317 = vadd.f32 %v348, %v2316
  %2318 = vmatmul.f32.gmra.mxu0 %v486
  %v2319 = vpop.f32.mrf.mxu0
  %v2320 = vadd.f32 %v348, %v2319
  %2321 = vmatmul.f32.gmra.mxu0 %v489
  %v2322 = vpop.f32.mrf.mxu0
  %v2323 = vadd.f32 %v348, %v2322
  %2324 = vmatmul.f32.gmra.mxu0 %v492
  %v2325 = vpop.f32.mrf.mxu0
  %v2326 = vadd.f32 %v348, %v2325
  %2327 = vmatmul.f32.gmra.mxu0 %v495
  %v2328 = vpop.f32.mrf.mxu0
  %v2329 = vadd.f32 %v348, %v2328
  %2330 = vmatmul.f32.gmra.mxu0 %v498
  %v2331 = vpop.f32.mrf.mxu0
  %v2332 = vadd.f32 %v348, %v2331
  %2333 = vmatmul.f32.gmra.mxu0 %v501
  %v2334 = vpop.f32.mrf.mxu0
  %v2335 = vadd.f32 %v348, %v2334
  %2336 = vmatmul.f32.gmra.mxu0 %v504
  %v2337 = vpop.f32.mrf.mxu0
  %v2338 = vadd.f32 %v348, %v2337
  %2339 = vmatmul.f32.gmra.mxu0 %v507
  %v2340 = vpop.f32.mrf.mxu0
  %v2341 = vadd.f32 %v348, %v2340
  %2342 = vmatmul.f32.gmra.mxu0 %v510
  %v2343 = vpop.f32.mrf.mxu0
  %v2344 = vadd.f32 %v348, %v2343
  %2345 = vmatmul.f32.gmra.mxu0 %v513
  %v2346 = vpop.f32.mrf.mxu0
  %v2347 = vadd.f32 %v348, %v2346
  %2348 = vmatmul.f32.gmra.mxu0 %v516
  %v2349 = vpop.f32.mrf.mxu0
  %v2350 = vadd.f32 %v348, %v2349
  %2351 = vmatmul.f32.gmra.mxu0 %v519
  %v2352 = vpop.f32.mrf.mxu0
  %v2353 = vadd.f32 %v348, %v2352
  %2354 = vmatmul.f32.gmra.mxu0 %v522
  %v2355 = vpop.f32.mrf.mxu0
  %v2356 = vadd.f32 %v348, %v2355
  %2357 = vmatmul.f32.gmra.mxu0 %v525
  %v2358 = vpop.f32.mrf.mxu0
  %v2359 = vadd.f32 %v348, %v2358
  %2360 = vmatmul.f32.gmra.mxu0 %v528
  %v2361 = vpop.f32.mrf.mxu0
  %v2362 = vadd.f32 %v348, %v2361
  %2363 = vmatmul.f32.gmra.mxu0 %v531
  %v2364 = vpop.f32.mrf.mxu0
  %v2365 = vadd.f32 %v348, %v2364
  %2366 = vmatmul.f32.gmra.mxu0 %v534
  %v2367 = vpop.f32.mrf.mxu0
  %v2368 = vadd.f32 %v348, %v2367
  %2369 = vmatmul.f32.gmra.mxu0 %v537
  %v2370 = vpop.f32.mrf.mxu0
  %v2371 = vadd.f32 %v348, %v2370
  %2372 = vmatmul.f32.gmra.mxu0 %v540
  %v2373 = vpop.f32.mrf.mxu0
  %v2374 = vadd.f32 %v348, %v2373
  %2375 = vmatmul.f32.gmra.mxu0 %v543
  %v2376 = vpop.f32.mrf.mxu0
  %v2377 = vadd.f32 %v348, %v2376
  %2378 = vmatmul.f32.gmra.mxu0 %v546
  %v2379 = vpop.f32.mrf.mxu0
  %v2380 = vadd.f32 %v348, %v2379
  %2381 = vmatmul.f32.gmra.mxu0 %v549
  %v2382 = vpop.f32.mrf.mxu0
  %v2383 = vadd.f32 %v348, %v2382
  %2384 = vmatmul.f32.gmra.mxu0 %v552
  %v2385 = vpop.f32.mrf.mxu0
  %v2386 = vadd.f32 %v348, %v2385
  %2387 = vmatmul.f32.gmra.mxu0 %v555
  %v2388 = vpop.f32.mrf.mxu0
  %v2389 = vadd.f32 %v348, %v2388
  %2390 = vmatmul.f32.gmra.mxu0 %v558
  %v2391 = vpop.f32.mrf.mxu0
  %v2392 = vadd.f32 %v348, %v2391
  %2393 = vmatmul.f32.gmra.mxu0 %v561
  %v2394 = vpop.f32.mrf.mxu0
  %v2395 = vadd.f32 %v348, %v2394
  %2396 = vmatmul.f32.gmra.mxu0 %v564
  %v2397 = vpop.f32.mrf.mxu0
  %v2398 = vadd.f32 %v348, %v2397
  %2399 = vmatmul.f32.gmra.mxu0 %v567
  %v2400 = vpop.f32.mrf.mxu0
  %v2401 = vadd.f32 %v348, %v2400
  %2402 = vmatmul.f32.gmra.mxu0 %v570
  %v2403 = vpop.f32.mrf.mxu0
  %v2404 = vadd.f32 %v348, %v2403
  %2405 = vmatmul.f32.gmra.mxu0 %v573
  %v2406 = vpop.f32.mrf.mxu0
  %v2407 = vadd.f32 %v348, %v2406
  %2408 = vmatmul.f32.gmra.mxu0 %v576
  %v2409 = vpop.f32.mrf.mxu0
  %v2410 = vadd.f32 %v348, %v2409
  %2411 = vmatmul.f32.gmra.mxu0 %v579
  %v2412 = vpop.f32.mrf.mxu0
  %v2413 = vadd.f32 %v348, %v2412
  %2414 = vmatmul.f32.gmra.mxu0 %v582
  %v2415 = vpop.f32.mrf.mxu0
  %v2416 = vadd.f32 %v348, %v2415
  %2417 = vmatmul.f32.gmra.mxu0 %v585
  %v2418 = vpop.f32.mrf.mxu0
  %v2419 = vadd.f32 %v348, %v2418
  %2420 = vmatmul.f32.gmra.mxu0 %v588
  %v2421 = vpop.f32.mrf.mxu0
  %v2422 = vadd.f32 %v348, %v2421
  %2423 = vmatmul.f32.gmra.mxu0 %v591
  %v2424 = vpop.f32.mrf.mxu0
  %v2425 = vadd.f32 %v348, %v2424
  %2426 = vmatmul.f32.gmra.mxu0 %v594
  %v2427 = vpop.f32.mrf.mxu0
  %v2428 = vadd.f32 %v348, %v2427
  %2429 = vmatmul.f32.gmra.mxu0 %v597
  %v2430 = vpop.f32.mrf.mxu0
  %v2431 = vadd.f32 %v348, %v2430
  %2432 = vmatmul.f32.gmra.mxu0 %v600
  %v2433 = vpop.f32.mrf.mxu0
  %v2434 = vadd.f32 %v348, %v2433
  %2435 = vmatmul.f32.gmra.mxu0 %v603
  %v2436 = vpop.f32.mrf.mxu0
  %v2437 = vadd.f32 %v348, %v2436
  %2438 = vmatmul.f32.gmra.mxu0 %v606
  %v2439 = vpop.f32.mrf.mxu0
  %v2440 = vadd.f32 %v348, %v2439
  %2441 = vmatmul.f32.gmra.mxu0 %v609
  %v2442 = vpop.f32.mrf.mxu0
  %v2443 = vadd.f32 %v348, %v2442
  %2444 = vmatmul.f32.gmra.mxu0 %v612
  %v2445 = vpop.f32.mrf.mxu0
  %v2446 = vadd.f32 %v348, %v2445
  %2447 = vmatmul.f32.gmra.mxu0 %v615
  %v2448 = vpop.f32.mrf.mxu0
  %v2449 = vadd.f32 %v348, %v2448
  %2450 = vmatmul.f32.gmra.mxu0 %v618
  %v2451 = vpop.f32.mrf.mxu0
  %v2452 = vadd.f32 %v348, %v2451
  %2453 = vmatmul.f32.gmra.mxu0 %v621
  %v2454 = vpop.f32.mrf.mxu0
  %v2455 = vadd.f32 %v348, %v2454
  %2456 = vmatmul.f32.gmra.mxu0 %v624
  %v2457 = vpop.f32.mrf.mxu0
  %v2458 = vadd.f32 %v348, %v2457
  %2459 = vmatmul.f32.gmra.mxu0 %v627
  %v2460 = vpop.f32.mrf.mxu0
  %v2461 = vadd.f32 %v348, %v2460
  %2462 = vmatmul.f32.gmra.mxu0 %v630
  %v2463 = vpop.f32.mrf.mxu0
  %v2464 = vadd.f32 %v348, %v2463
  %2465 = vmatmul.f32.gmra.mxu0 %v633
  %v2466 = vpop.f32.mrf.mxu0
  %v2467 = vadd.f32 %v348, %v2466
  %2468 = vmatmul.f32.gmra.mxu0 %v636
  %v2469 = vpop.f32.mrf.mxu0
  %v2470 = vadd.f32 %v348, %v2469
  %2471 = vmatmul.f32.gmra.mxu0 %v639
  %v2472 = vpop.f32.mrf.mxu0
  %v2473 = vadd.f32 %v348, %v2472
  %2474 = vmatmul.f32.gmra.mxu0 %v642
  %v2475 = vpop.f32.mrf.mxu0
  %v2476 = vadd.f32 %v348, %v2475
  %2477 = vmatmul.f32.gmra.mxu0 %v645
  %v2478 = vpop.f32.mrf.mxu0
  %v2479 = vadd.f32 %v348, %v2478
  %2480 = vmatmul.f32.gmra.mxu0 %v648
  %v2481 = vpop.f32.mrf.mxu0
  %v2482 = vadd.f32 %v348, %v2481
  %2483 = vmatmul.f32.gmra.mxu0 %v651
  %v2484 = vpop.f32.mrf.mxu0
  %v2485 = vadd.f32 %v348, %v2484
  %2486 = vmatmul.f32.gmra.mxu0 %v654
  %v2487 = vpop.f32.mrf.mxu0
  %v2488 = vadd.f32 %v348, %v2487
  %2489 = vmatmul.f32.gmra.mxu0 %v657
  %v2490 = vpop.f32.mrf.mxu0
  %v2491 = vadd.f32 %v348, %v2490
  %2492 = vmatmul.f32.gmra.mxu0 %v660
  %v2493 = vpop.f32.mrf.mxu0
  %v2494 = vadd.f32 %v348, %v2493
  %2495 = vmatmul.f32.gmra.mxu0 %v663
  %v2496 = vpop.f32.mrf.mxu0
  %v2497 = vadd.f32 %v348, %v2496
  %2498 = vmatmul.f32.gmra.mxu0 %v666
  %v2499 = vpop.f32.mrf.mxu0
  %v2500 = vadd.f32 %v348, %v2499
  %2501 = vmatmul.f32.gmra.mxu0 %v669
  %v2502 = vpop.f32.mrf.mxu0
  %v2503 = vadd.f32 %v348, %v2502
  %2504 = vmatmul.f32.gmra.mxu0 %v672
  %v2505 = vpop.f32.mrf.mxu0
  %v2506 = vadd.f32 %v348, %v2505
  %2507 = vmatmul.f32.gmra.mxu0 %v675
  %v2508 = vpop.f32.mrf.mxu0
  %v2509 = vadd.f32 %v348, %v2508
  %2510 = vmatmul.f32.gmra.mxu0 %v678
  %v2511 = vpop.f32.mrf.mxu0
  %v2512 = vadd.f32 %v348, %v2511
  %2513 = vmatmul.f32.gmra.mxu0 %v681
  %v2514 = vpop.f32.mrf.mxu0
  %v2515 = vadd.f32 %v348, %v2514
  %2516 = vmatmul.f32.gmra.mxu0 %v684
  %v2517 = vpop.f32.mrf.mxu0
  %v2518 = vadd.f32 %v348, %v2517
  %2519 = vmatmul.f32.gmra.mxu0 %v687
  %v2520 = vpop.f32.mrf.mxu0
  %v2521 = vadd.f32 %v348, %v2520
  %2522 = vmatmul.f32.gmra.mxu0 %v690
  %v2523 = vpop.f32.mrf.mxu0
  %v2524 = vadd.f32 %v348, %v2523
  %2525 = vmatmul.f32.gmra.mxu0 %v693
  %v2526 = vpop.f32.mrf.mxu0
  %v2527 = vadd.f32 %v348, %v2526
  %2528 = vmatmul.f32.gmra.mxu0 %v696
  %v2529 = vpop.f32.mrf.mxu0
  %v2530 = vadd.f32 %v348, %v2529
  %2531 = vmatmul.f32.gmra.mxu0 %v699
  %v2532 = vpop.f32.mrf.mxu0
  %v2533 = vadd.f32 %v348, %v2532
  %2534 = vmatmul.f32.gmra.mxu0 %v702
  %v2535 = vpop.f32.mrf.mxu0
  %v2536 = vadd.f32 %v348, %v2535
  %2537 = vmatmul.f32.gmra.mxu0 %v705
  %v2538 = vpop.f32.mrf.mxu0
  %v2539 = vadd.f32 %v348, %v2538
  %2540 = vmatmul.f32.gmra.mxu0 %v708
  %v2541 = vpop.f32.mrf.mxu0
  %v2542 = vadd.f32 %v348, %v2541
  %2543 = vmatmul.f32.gmra.mxu0 %v711
  %v2544 = vpop.f32.mrf.mxu0
  %v2545 = vadd.f32 %v348, %v2544
  %2546 = vmatmul.f32.gmra.mxu0 %v714
  %v2547 = vpop.f32.mrf.mxu0
  %v2548 = vadd.f32 %v348, %v2547
  %2549 = vmatmul.f32.gmra.mxu0 %v717
  %v2550 = vpop.f32.mrf.mxu0
  %v2551 = vadd.f32 %v348, %v2550
  %2552 = vmatmul.f32.gmra.mxu0 %v720
  %v2553 = vpop.f32.mrf.mxu0
  %v2554 = vadd.f32 %v348, %v2553
  %2555 = vmatmul.f32.gmra.mxu0 %v723
  %v2556 = vpop.f32.mrf.mxu0
  %v2557 = vadd.f32 %v348, %v2556
  %2558 = vmatmul.f32.gmra.mxu0 %v726
  %v2559 = vpop.f32.mrf.mxu0
  %v2560 = vadd.f32 %v348, %v2559
  %2561 = vmatmul.f32.gmra.mxu0 %v729
  %v2562 = vpop.f32.mrf.mxu0
  %v2563 = vadd.f32 %v348, %v2562
  %2564 = vmatmul.f32.gmra.mxu0 %v732
  %v2565 = vpop.f32.mrf.mxu0
  %v2566 = vadd.f32 %v348, %v2565
  %2567 = vmatmul.f32.gmra.mxu0 %v735
  %v2568 = vpop.f32.mrf.mxu0
  %v2569 = vadd.f32 %v348, %v2568
  %2570 = vmatmul.f32.gmra.mxu0 %v738
  %v2571 = vpop.f32.mrf.mxu0
  %v2572 = vadd.f32 %v348, %v2571
  %2573 = vmatmul.f32.gmra.mxu0 %v741
  %v2574 = vpop.f32.mrf.mxu0
  %v2575 = vadd.f32 %v348, %v2574
  %2576 = vmatmul.f32.gmra.mxu0 %v744
  %v2577 = vpop.f32.mrf.mxu0
  %v2578 = vadd.f32 %v348, %v2577
  %2579 = vmatmul.f32.gmra.mxu0 %v747
  %v2580 = vpop.f32.mrf.mxu0
  %v2581 = vadd.f32 %v348, %v2580
  %2582 = vmatmul.f32.gmra.mxu0 %v750
  %v2583 = vpop.f32.mrf.mxu0
  %v2584 = vadd.f32 %v348, %v2583
  %2585 = vmatmul.f32.gmra.mxu0 %v753
  %v2586 = vpop.f32.mrf.mxu0
  %v2587 = vadd.f32 %v348, %v2586
  %2588 = vmatmul.f32.gmra.mxu0 %v756
  %v2589 = vpop.f32.mrf.mxu0
  %v2590 = vadd.f32 %v348, %v2589
  %2591 = vmatmul.f32.gmra.mxu0 %v759
  %v2592 = vpop.f32.mrf.mxu0
  %v2593 = vadd.f32 %v348, %v2592
  %2594 = vmatmul.f32.gmra.mxu0 %v762
  %v2595 = vpop.f32.mrf.mxu0
  %v2596 = vadd.f32 %v348, %v2595
  %2597 = vmatmul.f32.gmra.mxu0 %v765
  %v2598 = vpop.f32.mrf.mxu0
  %v2599 = vadd.f32 %v348, %v2598
  %2600 = vmatmul.f32.gmra.mxu0 %v768
  %v2601 = vpop.f32.mrf.mxu0
  %v2602 = vadd.f32 %v348, %v2601
  %2603 = vmatmul.f32.gmra.mxu0 %v771
  %v2604 = vpop.f32.mrf.mxu0
  %v2605 = vadd.f32 %v348, %v2604
  %2606 = vmatmul.f32.gmra.mxu0 %v774
  %v2607 = vpop.f32.mrf.mxu0
  %v2608 = vadd.f32 %v348, %v2607
  %2609 = vmatmul.f32.gmra.mxu0 %v777
  %v2610 = vpop.f32.mrf.mxu0
  %v2611 = vadd.f32 %v348, %v2610
  %2612 = vmatmul.f32.gmra.mxu0 %v780
  %v2613 = vpop.f32.mrf.mxu0
  %v2614 = vadd.f32 %v348, %v2613
  %2615 = vmatmul.f32.gmra.mxu0 %v783
  %v2616 = vpop.f32.mrf.mxu0
  %v2617 = vadd.f32 %v348, %v2616
  %2618 = vmatmul.f32.gmra.mxu0 %v786
  %v2619 = vpop.f32.mrf.mxu0
  %v2620 = vadd.f32 %v348, %v2619
  %2621 = vmatmul.f32.gmra.mxu0 %v789
  %v2622 = vpop.f32.mrf.mxu0
  %v2623 = vadd.f32 %v348, %v2622
  %2624 = vmatmul.f32.gmra.mxu0 %v792
  %v2625 = vpop.f32.mrf.mxu0
  %v2626 = vadd.f32 %v348, %v2625
  %2627 = vmatmul.f32.gmra.mxu0 %v795
  %v2628 = vpop.f32.mrf.mxu0
  %v2629 = vadd.f32 %v348, %v2628
  %2630 = vmatmul.f32.gmra.mxu0 %v798
  %v2631 = vpop.f32.mrf.mxu0
  %v2632 = vadd.f32 %v348, %v2631
  %2633 = vmatmul.f32.gmra.mxu0 %v801
  %v2634 = vpop.f32.mrf.mxu0
  %v2635 = vadd.f32 %v348, %v2634
  %2636 = vmatmul.f32.gmra.mxu0 %v804
  %v2637 = vpop.f32.mrf.mxu0
  %v2638 = vadd.f32 %v348, %v2637
  %2639 = vmatmul.f32.gmra.mxu0 %v807
  %v2640 = vpop.f32.mrf.mxu0
  %v2641 = vadd.f32 %v348, %v2640
  %2642 = vmatmul.f32.gmra.mxu0 %v810
  %v2643 = vpop.f32.mrf.mxu0
  %v2644 = vadd.f32 %v348, %v2643
  %2645 = vmatmul.f32.gmra.mxu0 %v813
  %v2646 = vpop.f32.mrf.mxu0
  %v2647 = vadd.f32 %v348, %v2646
  %2648 = vmatmul.f32.gmra.mxu0 %v816
  %v2649 = vpop.f32.mrf.mxu0
  %v2650 = vadd.f32 %v348, %v2649
  %2651 = vmatmul.f32.gmra.mxu0 %v819
  %v2652 = vpop.f32.mrf.mxu0
  %v2653 = vadd.f32 %v348, %v2652
  %2654 = vmatmul.f32.gmra.mxu0 %v822
  %v2655 = vpop.f32.mrf.mxu0
  %v2656 = vadd.f32 %v348, %v2655
  %2657 = vmatmul.f32.gmra.mxu0 %v825
  %v2658 = vpop.f32.mrf.mxu0
  %v2659 = vadd.f32 %v348, %v2658
  %2660 = vmatmul.f32.gmra.mxu0 %v828
  %v2661 = vpop.f32.mrf.mxu0
  %v2662 = vadd.f32 %v348, %v2661
  %2663 = vmatmul.f32.gmra.mxu0 %v831
  %v2664 = vpop.f32.mrf.mxu0
  %v2665 = vadd.f32 %v348, %v2664
  %2666 = vmatmul.f32.gmra.mxu0 %v834
  %v2667 = vpop.f32.mrf.mxu0
  %v2668 = vadd.f32 %v348, %v2667
  %2669 = vmatmul.f32.gmra.mxu0 %v837
  %v2670 = vpop.f32.mrf.mxu0
  %v2671 = vadd.f32 %v348, %v2670
  %2672 = vmatmul.f32.gmra.mxu0 %v840
  %v2673 = vpop.f32.mrf.mxu0
  %v2674 = vadd.f32 %v348, %v2673
  %2675 = vmatmul.f32.gmra.mxu0 %v843
  %v2676 = vpop.f32.mrf.mxu0
  %v2677 = vadd.f32 %v348, %v2676
  %2678 = vmatmul.f32.gmra.mxu0 %v846
  %v2679 = vpop.f32.mrf.mxu0
  %v2680 = vadd.f32 %v348, %v2679
  %2681 = vmatmul.f32.gmra.mxu0 %v849
  %v2682 = vpop.f32.mrf.mxu0
  %v2683 = vadd.f32 %v348, %v2682
  %2684 = vmatmul.f32.gmra.mxu0 %v852
  %v2685 = vpop.f32.mrf.mxu0
  %v2686 = vadd.f32 %v348, %v2685
  %2687 = vmatmul.f32.gmra.mxu0 %v855
  %v2688 = vpop.f32.mrf.mxu0
  %v2689 = vadd.f32 %v348, %v2688
  %2690 = vmatmul.f32.gmra.mxu0 %v858
  %v2691 = vpop.f32.mrf.mxu0
  %v2692 = vadd.f32 %v348, %v2691
  %2693 = vmatmul.f32.gmra.mxu0 %v861
  %v2694 = vpop.f32.mrf.mxu0
  %v2695 = vadd.f32 %v348, %v2694
  %2696 = vmatmul.f32.gmra.mxu0 %v864
  %v2697 = vpop.f32.mrf.mxu0
  %v2698 = vadd.f32 %v348, %v2697
  %2699 = vmatmul.f32.gmra.mxu0 %v867
  %v2700 = vpop.f32.mrf.mxu0
  %v2701 = vadd.f32 %v348, %v2700
  %2702 = vmatmul.f32.gmra.mxu0 %v870
  %v2703 = vpop.f32.mrf.mxu0
  %v2704 = vadd.f32 %v348, %v2703
  %2705 = vmatmul.f32.gmra.mxu0 %v873
  %v2706 = vpop.f32.mrf.mxu0
  %v2707 = vadd.f32 %v348, %v2706
  %2708 = vmatmul.f32.gmra.mxu0 %v876
  %v2709 = vpop.f32.mrf.mxu0
  %v2710 = vadd.f32 %v348, %v2709
  %2711 = vmatmul.f32.gmra.mxu0 %v879
  %v2712 = vpop.f32.mrf.mxu0
  %v2713 = vadd.f32 %v348, %v2712
  %2714 = vmatmul.f32.gmra.mxu0 %v882
  %v2715 = vpop.f32.mrf.mxu0
  %v2716 = vadd.f32 %v348, %v2715
  %2717 = vmatmul.f32.gmra.mxu0 %v885
  %v2718 = vpop.f32.mrf.mxu0
  %v2719 = vadd.f32 %v348, %v2718
  %2720 = vmatmul.f32.gmra.mxu0 %v888
  %v2721 = vpop.f32.mrf.mxu0
  %v2722 = vadd.f32 %v348, %v2721
  %2723 = vmatmul.f32.gmra.mxu0 %v891
  %v2724 = vpop.f32.mrf.mxu0
  %v2725 = vadd.f32 %v348, %v2724
  %2726 = vmatmul.f32.gmra.mxu0 %v894
  %v2727 = vpop.f32.mrf.mxu0
  %v2728 = vadd.f32 %v348, %v2727
  %2729 = vmatmul.f32.gmra.mxu0 %v897
  %v2730 = vpop.f32.mrf.mxu0
  %v2731 = vadd.f32 %v348, %v2730
  %2732 = vmatmul.f32.gmra.mxu0 %v900
  %v2733 = vpop.f32.mrf.mxu0
  %v2734 = vadd.f32 %v348, %v2733
  %2735 = vmatmul.f32.gmra.mxu0 %v903
  %v2736 = vpop.f32.mrf.mxu0
  %v2737 = vadd.f32 %v348, %v2736
  %2738 = vmatmul.f32.gmra.mxu0 %v906
  %v2739 = vpop.f32.mrf.mxu0
  %v2740 = vadd.f32 %v348, %v2739
  %2741 = vmatmul.f32.gmra.mxu0 %v909
  %v2742 = vpop.f32.mrf.mxu0
  %v2743 = vadd.f32 %v348, %v2742
  %2744 = vmatmul.f32.gmra.mxu0 %v912
  %v2745 = vpop.f32.mrf.mxu0
  %v2746 = vadd.f32 %v348, %v2745
  %2747 = vmatmul.f32.gmra.mxu0 %v915
  %v2748 = vpop.f32.mrf.mxu0
  %v2749 = vadd.f32 %v348, %v2748
  %2750 = vmatmul.f32.gmra.mxu0 %v918
  %v2751 = vpop.f32.mrf.mxu0
  %v2752 = vadd.f32 %v348, %v2751
  %2753 = vmatmul.f32.gmra.mxu0 %v921
  %v2754 = vpop.f32.mrf.mxu0
  %v2755 = vadd.f32 %v348, %v2754
  %2756 = vmatmul.f32.gmra.mxu0 %v924
  %v2757 = vpop.f32.mrf.mxu0
  %v2758 = vadd.f32 %v348, %v2757
  %2759 = vmatmul.f32.gmra.mxu0 %v927
  %v2760 = vpop.f32.mrf.mxu0
  %v2761 = vadd.f32 %v348, %v2760
  %2762 = vmatmul.f32.gmra.mxu0 %v930
  %v2763 = vpop.f32.mrf.mxu0
  %v2764 = vadd.f32 %v348, %v2763
  %2765 = vmatmul.f32.gmra.mxu0 %v933
  %v2766 = vpop.f32.mrf.mxu0
  %v2767 = vadd.f32 %v348, %v2766
  %2768 = vmatmul.f32.gmra.mxu0 %v936
  %v2769 = vpop.f32.mrf.mxu0
  %v2770 = vadd.f32 %v348, %v2769
  %2771 = vmatmul.f32.gmra.mxu0 %v939
  %v2772 = vpop.f32.mrf.mxu0
  %v2773 = vadd.f32 %v348, %v2772
  %2774 = vmatmul.f32.gmra.mxu0 %v942
  %v2775 = vpop.f32.mrf.mxu0
  %v2776 = vadd.f32 %v348, %v2775
  %2777 = vmatmul.f32.gmra.mxu0 %v945
  %v2778 = vpop.f32.mrf.mxu0
  %v2779 = vadd.f32 %v348, %v2778
  %2780 = vmatmul.f32.gmra.mxu0 %v948
  %v2781 = vpop.f32.mrf.mxu0
  %v2782 = vadd.f32 %v348, %v2781
  %2783 = vmatmul.f32.gmra.mxu0 %v951
  %v2784 = vpop.f32.mrf.mxu0
  %v2785 = vadd.f32 %v348, %v2784
  %2786 = vmatmul.f32.gmra.mxu0 %v954
  %v2787 = vpop.f32.mrf.mxu0
  %v2788 = vadd.f32 %v348, %v2787
  %2789 = vmatmul.f32.gmra.mxu0 %v957
  %v2790 = vpop.f32.mrf.mxu0
  %v2791 = vadd.f32 %v348, %v2790
  %2792 = vmatmul.f32.gmra.mxu0 %v960
  %v2793 = vpop.f32.mrf.mxu0
  %v2794 = vadd.f32 %v348, %v2793
  %2795 = vmatmul.f32.gmra.mxu0 %v963
  %v2796 = vpop.f32.mrf.mxu0
  %v2797 = vadd.f32 %v348, %v2796
  %2798 = vmatmul.f32.gmra.mxu0 %v966
  %v2799 = vpop.f32.mrf.mxu0
  %v2800 = vadd.f32 %v348, %v2799
  %2801 = vmatmul.f32.gmra.mxu0 %v969
  %v2802 = vpop.f32.mrf.mxu0
  %v2803 = vadd.f32 %v348, %v2802
  %2804 = vmatmul.f32.gmra.mxu0 %v972
  %v2805 = vpop.f32.mrf.mxu0
  %v2806 = vadd.f32 %v348, %v2805
  %2807 = vmatmul.f32.gmra.mxu0 %v975
  %v2808 = vpop.f32.mrf.mxu0
  %v2809 = vadd.f32 %v348, %v2808
  %2810 = vmatmul.f32.gmra.mxu0 %v978
  %v2811 = vpop.f32.mrf.mxu0
  %v2812 = vadd.f32 %v348, %v2811
  %2813 = vmatmul.f32.gmra.mxu0 %v981
  %v2814 = vpop.f32.mrf.mxu0
  %v2815 = vadd.f32 %v348, %v2814
  %2816 = vmatmul.f32.gmra.mxu0 %v984
  %v2817 = vpop.f32.mrf.mxu0
  %v2818 = vadd.f32 %v348, %v2817
  %2819 = vmatmul.f32.gmra.mxu0 %v987
  %v2820 = vpop.f32.mrf.mxu0
  %v2821 = vadd.f32 %v348, %v2820
  %2822 = vmatmul.f32.gmra.mxu0 %v990
  %v2823 = vpop.f32.mrf.mxu0
  %v2824 = vadd.f32 %v348, %v2823
  %2825 = vmatmul.f32.gmra.mxu0 %v993
  %v2826 = vpop.f32.mrf.mxu0
  %v2827 = vadd.f32 %v348, %v2826
  %2828 = vmatmul.f32.gmra.mxu0 %v996
  %v2829 = vpop.f32.mrf.mxu0
  %v2830 = vadd.f32 %v348, %v2829
  %2831 = vmatmul.f32.gmra.mxu0 %v999
  %v2832 = vpop.f32.mrf.mxu0
  %v2833 = vadd.f32 %v348, %v2832
  %2834 = vmatmul.f32.gmra.mxu0 %v1002
  %v2835 = vpop.f32.mrf.mxu0
  %v2836 = vadd.f32 %v348, %v2835
  %2837 = vmatmul.f32.gmra.mxu0 %v1005
  %v2838 = vpop.f32.mrf.mxu0
  %v2839 = vadd.f32 %v348, %v2838
  %2840 = vmatmul.f32.gmra.mxu0 %v1008
  %v2841 = vpop.f32.mrf.mxu0
  %v2842 = vadd.f32 %v348, %v2841
  %2843 = vmatmul.f32.gmra.mxu0 %v1011
  %v2844 = vpop.f32.mrf.mxu0
  %v2845 = vadd.f32 %v348, %v2844
  %2846 = vmatmul.f32.gmra.mxu0 %v1014
  %v2847 = vpop.f32.mrf.mxu0
  %v2848 = vadd.f32 %v348, %v2847
  %2849 = vmatmul.f32.gmra.mxu0 %v1017
  %v2850 = vpop.f32.mrf.mxu0
  %v2851 = vadd.f32 %v348, %v2850
  %2852 = vmatmul.f32.gmra.mxu0 %v1020
  %v2853 = vpop.f32.mrf.mxu0
  %v2854 = vadd.f32 %v348, %v2853
  %2855 = vmatmul.f32.gmra.mxu0 %v1023
  %v2856 = vpop.f32.mrf.mxu0
  %v2857 = vadd.f32 %v348, %v2856
  %2858 = vmatmul.f32.gmra.mxu0 %v1026
  %v2859 = vpop.f32.mrf.mxu0
  %v2860 = vadd.f32 %v348, %v2859
  %2861 = vmatmul.f32.gmra.mxu0 %v1029
  %v2862 = vpop.f32.mrf.mxu0
  %v2863 = vadd.f32 %v348, %v2862
  %2864 = vmatmul.f32.gmra.mxu0 %v1032
  %v2865 = vpop.f32.mrf.mxu0
  %v2866 = vadd.f32 %v348, %v2865
  %2867 = vmatmul.f32.gmra.mxu0 %v1035
  %v2868 = vpop.f32.mrf.mxu0
  %v2869 = vadd.f32 %v348, %v2868
  %2870 = vmatmul.f32.gmra.mxu0 %v1038
  %v2871 = vpop.f32.mrf.mxu0
  %v2872 = vadd.f32 %v348, %v2871
  %2873 = vmatmul.f32.gmra.mxu0 %v1041
  %v2874 = vpop.f32.mrf.mxu0
  %v2875 = vadd.f32 %v348, %v2874
  %2876 = vmatmul.f32.gmra.mxu0 %v1044
  %v2877 = vpop.f32.mrf.mxu0
  %v2878 = vadd.f32 %v348, %v2877
  %2879 = vmatmul.f32.gmra.mxu0 %v1047
  %v2880 = vpop.f32.mrf.mxu0
  %v2881 = vadd.f32 %v348, %v2880
  %2882 = vmatmul.f32.gmra.mxu0 %v1050
  %v2883 = vpop.f32.mrf.mxu0
  %v2884 = vadd.f32 %v348, %v2883
  %2885 = vmatmul.f32.gmra.mxu0 %v1053
  %v2886 = vpop.f32.mrf.mxu0
  %v2887 = vadd.f32 %v348, %v2886
  %2888 = vmatmul.f32.gmra.mxu0 %v1056
  %v2889 = vpop.f32.mrf.mxu0
  %v2890 = vadd.f32 %v348, %v2889
  %2891 = vmatmul.f32.gmra.mxu0 %v1059
  %v2892 = vpop.f32.mrf.mxu0
  %v2893 = vadd.f32 %v348, %v2892
  %2894 = vmatmul.f32.gmra.mxu0 %v1062
  %v2895 = vpop.f32.mrf.mxu0
  %v2896 = vadd.f32 %v348, %v2895
  %2897 = vmatmul.f32.gmra.mxu0 %v1065
  %v2898 = vpop.f32.mrf.mxu0
  %v2899 = vadd.f32 %v348, %v2898
  %2900 = vmatmul.f32.gmra.mxu0 %v1068
  %v2901 = vpop.f32.mrf.mxu0
  %v2902 = vadd.f32 %v348, %v2901
  %2903 = vmatmul.f32.gmra.mxu0 %v1071
  %v2904 = vpop.f32.mrf.mxu0
  %v2905 = vadd.f32 %v348, %v2904
  %2906 = vmatmul.f32.gmra.mxu0 %v1074
  %v2907 = vpop.f32.mrf.mxu0
  %v2908 = vadd.f32 %v348, %v2907
  %2909 = vmatmul.f32.gmra.mxu0 %v1077
  %v2910 = vpop.f32.mrf.mxu0
  %v2911 = vadd.f32 %v348, %v2910
  %2912 = vmatmul.f32.gmra.mxu0 %v1080
  %v2913 = vpop.f32.mrf.mxu0
  %v2914 = vadd.f32 %v348, %v2913
  %2915 = vmatmul.f32.gmra.mxu0 %v1083
  %v2916 = vpop.f32.mrf.mxu0
  %v2917 = vadd.f32 %v348, %v2916
  %2918 = vmatmul.f32.gmra.mxu0 %v1086
  %v2919 = vpop.f32.mrf.mxu0
  %v2920 = vadd.f32 %v348, %v2919
  %2921 = vmatmul.f32.gmra.mxu0 %v1089
  %v2922 = vpop.f32.mrf.mxu0
  %v2923 = vadd.f32 %v348, %v2922
  %2924 = vmatmul.f32.gmra.mxu0 %v1092
  %v2925 = vpop.f32.mrf.mxu0
  %v2926 = vadd.f32 %v348, %v2925
  %2927 = vmatmul.f32.gmra.mxu0 %v1095
  %v2928 = vpop.f32.mrf.mxu0
  %v2929 = vadd.f32 %v348, %v2928
  %2930 = vmatmul.f32.gmra.mxu0 %v1098
  %v2931 = vpop.f32.mrf.mxu0
  %v2932 = vadd.f32 %v348, %v2931
  %2933 = vmatmul.f32.gmra.mxu0 %v1101
  %v2934 = vpop.f32.mrf.mxu0
  %v2935 = vadd.f32 %v348, %v2934
  %2936 = vmatmul.f32.gmra.mxu0 %v1104
  %v2937 = vpop.f32.mrf.mxu0
  %v2938 = vadd.f32 %v348, %v2937
  %2939 = vmatmul.f32.gmra.mxu0 %v1107
  %v2940 = vpop.f32.mrf.mxu0
  %v2941 = vadd.f32 %v348, %v2940
  %2942 = vmatmul.f32.gmra.mxu0 %v1110
  %v2943 = vpop.f32.mrf.mxu0
  %v2944 = vadd.f32 %v348, %v2943
  %2945 = vmatmul.f32.gmra.mxu0 %v1113
  %v2946 = vpop.f32.mrf.mxu0
  %v2947 = vadd.f32 %v348, %v2946
  %2948 = vmatmul.f32.gmra.mxu0 %v1116
  %v2949 = vpop.f32.mrf.mxu0
  %v2950 = vadd.f32 %v348, %v2949
  %2951 = vmatmul.f32.gmra.mxu0 %v1119
  %v2952 = vpop.f32.mrf.mxu0
  %v2953 = vadd.f32 %v348, %v2952
  %2954 = vmatmul.f32.gmra.mxu0 %v1122
  %v2955 = vpop.f32.mrf.mxu0
  %v2956 = vadd.f32 %v348, %v2955
  %2957 = vmatmul.f32.gmra.mxu0 %v1125
  %v2958 = vpop.f32.mrf.mxu0
  %v2959 = vadd.f32 %v348, %v2958
  %2960 = vmatmul.f32.gmra.mxu0 %v1128
  %v2961 = vpop.f32.mrf.mxu0
  %v2962 = vadd.f32 %v348, %v2961
  %2963 = vmatmul.f32.gmra.mxu0 %v1131
  %v2964 = vpop.f32.mrf.mxu0
  %v2965 = vadd.f32 %v348, %v2964
  %2966 = vmatmul.f32.gmra.mxu0 %v1134
  %v2967 = vpop.f32.mrf.mxu0
  %v2968 = vadd.f32 %v348, %v2967
  %2969 = vmatmul.f32.gmra.mxu0 %v1137
  %v2970 = vpop.f32.mrf.mxu0
  %v2971 = vadd.f32 %v348, %v2970
  %2972 = vmatmul.f32.gmra.mxu0 %v1140
  %v2973 = vpop.f32.mrf.mxu0
  %v2974 = vadd.f32 %v348, %v2973
  %2975 = vmatmul.f32.gmra.mxu0 %v1143
  %v2976 = vpop.f32.mrf.mxu0
  %v2977 = vadd.f32 %v348, %v2976
  %2978 = vmatmul.f32.gmra.mxu0 %v1146
  %v2979 = vpop.f32.mrf.mxu0
  %v2980 = vadd.f32 %v348, %v2979
  %2981 = vmatmul.f32.gmra.mxu0 %v1149
  %v2982 = vpop.f32.mrf.mxu0
  %v2983 = vadd.f32 %v348, %v2982
  %2984 = vmatmul.f32.gmra.mxu0 %v1152
  %v2985 = vpop.f32.mrf.mxu0
  %v2986 = vadd.f32 %v348, %v2985
  %2987 = vmatmul.f32.gmra.mxu0 %v1155
  %v2988 = vpop.f32.mrf.mxu0
  %v2989 = vadd.f32 %v348, %v2988
  %2990 = vmatmul.f32.gmra.mxu0 %v1158
  %v2991 = vpop.f32.mrf.mxu0
  %v2992 = vadd.f32 %v348, %v2991
  %2993 = vmatmul.f32.gmra.mxu0 %v1161
  %v2994 = vpop.f32.mrf.mxu0
  %v2995 = vadd.f32 %v348, %v2994
  %2996 = vmatmul.f32.gmra.mxu0 %v1164
  %v2997 = vpop.f32.mrf.mxu0
  %v2998 = vadd.f32 %v348, %v2997
  %2999 = vmatmul.f32.gmra.mxu0 %v1167
  %v3000 = vpop.f32.mrf.mxu0
  %v3001 = vadd.f32 %v348, %v3000
  %3002 = vmatmul.f32.gmra.mxu0 %v1170
  %v3003 = vpop.f32.mrf.mxu0
  %v3004 = vadd.f32 %v348, %v3003
  %3005 = vmatmul.f32.gmra.mxu0 %v1173
  %v3006 = vpop.f32.mrf.mxu0
  %v3007 = vadd.f32 %v348, %v3006
  %3008 = vmatmul.f32.gmra.mxu0 %v1176
  %v3009 = vpop.f32.mrf.mxu0
  %v3010 = vadd.f32 %v348, %v3009
  %3011 = vmatmul.f32.gmra.mxu0 %v1179
  %v3012 = vpop.f32.mrf.mxu0
  %v3013 = vadd.f32 %v348, %v3012
  %3014 = vmatmul.f32.gmra.mxu0 %v1182
  %v3015 = vpop.f32.mrf.mxu0
  %v3016 = vadd.f32 %v348, %v3015
  %3017 = vmatmul.f32.gmra.mxu0 %v1185
  %v3018 = vpop.f32.mrf.mxu0
  %v3019 = vadd.f32 %v348, %v3018
  %3020 = vmatmul.f32.gmra.mxu0 %v1188
  %v3021 = vpop.f32.mrf.mxu0
  %v3022 = vadd.f32 %v348, %v3021
  %3023 = vmatmul.f32.gmra.mxu0 %v1191
  %v3024 = vpop.f32.mrf.mxu0
  %v3025 = vadd.f32 %v348, %v3024
  %3026 = vmatmul.f32.gmra.mxu0 %v1194
  %v3027 = vpop.f32.mrf.mxu0
  %v3028 = vadd.f32 %v348, %v3027
  %3029 = vmatmul.f32.gmra.mxu0 %v1197
  %v3030 = vpop.f32.mrf.mxu0
  %v3031 = vadd.f32 %v348, %v3030
  %3032 = vmatmul.f32.gmra.mxu0 %v1200
  %v3033 = vpop.f32.mrf.mxu0
  %v3034 = vadd.f32 %v348, %v3033
  %3035 = vmatmul.f32.gmra.mxu0 %v1203
  %v3036 = vpop.f32.mrf.mxu0
  %v3037 = vadd.f32 %v348, %v3036
  %3038 = vmatmul.f32.gmra.mxu0 %v1206
  %v3039 = vpop.f32.mrf.mxu0
  %v3040 = vadd.f32 %v348, %v3039
  %3041 = vmatmul.f32.gmra.mxu0 %v1209
  %v3042 = vpop.f32.mrf.mxu0
  %v3043 = vadd.f32 %v348, %v3042
  %3044 = vmatmul.f32.gmra.mxu0 %v1212
  %v3045 = vpop.f32.mrf.mxu0
  %v3046 = vadd.f32 %v348, %v3045
  %3047 = vmatmul.f32.gmra.mxu0 %v1215
  %v3048 = vpop.f32.mrf.mxu0
  %v3049 = vadd.f32 %v348, %v3048
  %3050 = vmatmul.f32.gmra.mxu0 %v1218
  %v3051 = vpop.f32.mrf.mxu0
  %v3052 = vadd.f32 %v348, %v3051
  %3053 = vmatmul.f32.gmra.mxu0 %v1221
  %v3054 = vpop.f32.mrf.mxu0
  %v3055 = vadd.f32 %v348, %v3054
  %3056 = vmatmul.f32.gmra.mxu0 %v1224
  %v3057 = vpop.f32.mrf.mxu0
  %v3058 = vadd.f32 %v348, %v3057
  %3059 = vmatmul.f32.gmra.mxu0 %v1227
  %v3060 = vpop.f32.mrf.mxu0
  %v3061 = vadd.f32 %v348, %v3060
  %3062 = vmatmul.f32.gmra.mxu0 %v1230
  %v3063 = vpop.f32.mrf.mxu0
  %v3064 = vadd.f32 %v348, %v3063
  %3065 = vmatmul.f32.gmra.mxu0 %v1233
  %v3066 = vpop.f32.mrf.mxu0
  %v3067 = vadd.f32 %v348, %v3066
  %3068 = vmatmul.f32.gmra.mxu0 %v1236
  %v3069 = vpop.f32.mrf.mxu0
  %v3070 = vadd.f32 %v348, %v3069
  %3071 = vmatmul.f32.gmra.mxu0 %v1239
  %v3072 = vpop.f32.mrf.mxu0
  %v3073 = vadd.f32 %v348, %v3072
  %3074 = vmatmul.f32.gmra.mxu0 %v1242
  %v3075 = vpop.f32.mrf.mxu0
  %v3076 = vadd.f32 %v348, %v3075
  %3077 = vmatmul.f32.gmra.mxu0 %v1245
  %v3078 = vpop.f32.mrf.mxu0
  %v3079 = vadd.f32 %v348, %v3078
  %3080 = vmatmul.f32.gmra.mxu0 %v1248
  %v3081 = vpop.f32.mrf.mxu0
  %v3082 = vadd.f32 %v348, %v3081
  %3083 = vmatmul.f32.gmra.mxu0 %v1251
  %v3084 = vpop.f32.mrf.mxu0
  %v3085 = vadd.f32 %v348, %v3084
  %3086 = vmatmul.f32.gmra.mxu0 %v1254
  %v3087 = vpop.f32.mrf.mxu0
  %v3088 = vadd.f32 %v348, %v3087
  %3089 = vdwg.mxu0
  %3090 = vmatpush.msra.mxu0 0.0
  %3091 = vmatpush.msra.mxu0 0.0
  %3092 = vmatpush.msra.mxu0 0.0
  %3093 = vmatpush.msra.mxu0 0.0
  %3094 = vmatpush.msra.mxu0 0.0
  %3095 = vmatpush.msra.mxu0 0.0
  %3096 = vmatpush.msra.mxu0 0.0
  %3097 = vmatpush.msra.mxu0 0.0
  %3098 = vmatpush.msra.mxu0 0.0
  %3099 = vmatpush.msra.mxu0 0.0
  %3100 = vmatpush.msra.mxu0 0.0
  %3101 = vmatpush.msra.mxu0 0.0
  %3102 = vmatpush.msra.mxu0 %v343
  %3103 = vmatpush.msra.mxu0 %v339
  %3104 = vmatpush.msra.mxu0 %v335
  %3105 = vmatpush.msra.mxu0 %v331
  %3106 = vmatmul.f32.gmra.mxu0 %v357
  %v3107 = vpop.f32.mrf.mxu0
  %v3108 = vadd.f32 %v349, %v3107
  %3109 = vmatmul.f32.gmra.mxu0 %v360
  %v3110 = vpop.f32.mrf.mxu0
  %v3111 = vadd.f32 %v349, %v3110
  %3112 = vmatmul.f32.gmra.mxu0 %v363
  %v3113 = vpop.f32.mrf.mxu0
  %v3114 = vadd.f32 %v349, %v3113
  %3115 = vmatmul.f32.gmra.mxu0 %v366
  %v3116 = vpop.f32.mrf.mxu0
  %v3117 = vadd.f32 %v349, %v3116
  %3118 = vmatmul.f32.gmra.mxu0 %v369
  %v3119 = vpop.f32.mrf.mxu0
  %v3120 = vadd.f32 %v349, %v3119
  %3121 = vmatmul.f32.gmra.mxu0 %v372
  %v3122 = vpop.f32.mrf.mxu0
  %v3123 = vadd.f32 %v349, %v3122
  %3124 = vmatmul.f32.gmra.mxu0 %v375
  %v3125 = vpop.f32.mrf.mxu0
  %v3126 = vadd.f32 %v349, %v3125
  %3127 = vmatmul.f32.gmra.mxu0 %v378
  %v3128 = vpop.f32.mrf.mxu0
  %v3129 = vadd.f32 %v349, %v3128
  %3130 = vmatmul.f32.gmra.mxu0 %v381
  %v3131 = vpop.f32.mrf.mxu0
  %v3132 = vadd.f32 %v349, %v3131
  %3133 = vmatmul.f32.gmra.mxu0 %v384
  %v3134 = vpop.f32.mrf.mxu0
  %v3135 = vadd.f32 %v349, %v3134
  %3136 = vmatmul.f32.gmra.mxu0 %v387
  %v3137 = vpop.f32.mrf.mxu0
  %v3138 = vadd.f32 %v349, %v3137
  %3139 = vmatmul.f32.gmra.mxu0 %v390
  %v3140 = vpop.f32.mrf.mxu0
  %v3141 = vadd.f32 %v349, %v3140
  %3142 = vmatmul.f32.gmra.mxu0 %v393
  %v3143 = vpop.f32.mrf.mxu0
  %v3144 = vadd.f32 %v349, %v3143
  %3145 = vmatmul.f32.gmra.mxu0 %v396
  %v3146 = vpop.f32.mrf.mxu0
  %v3147 = vadd.f32 %v349, %v3146
  %3148 = vmatmul.f32.gmra.mxu0 %v399
  %v3149 = vpop.f32.mrf.mxu0
  %v3150 = vadd.f32 %v349, %v3149
  %3151 = vmatmul.f32.gmra.mxu0 %v402
  %v3152 = vpop.f32.mrf.mxu0
  %v3153 = vadd.f32 %v349, %v3152
  %3154 = vmatmul.f32.gmra.mxu0 %v405
  %v3155 = vpop.f32.mrf.mxu0
  %v3156 = vadd.f32 %v349, %v3155
  %3157 = vmatmul.f32.gmra.mxu0 %v408
  %v3158 = vpop.f32.mrf.mxu0
  %v3159 = vadd.f32 %v349, %v3158
  %3160 = vmatmul.f32.gmra.mxu0 %v411
  %v3161 = vpop.f32.mrf.mxu0
  %v3162 = vadd.f32 %v349, %v3161
  %3163 = vmatmul.f32.gmra.mxu0 %v414
  %v3164 = vpop.f32.mrf.mxu0
  %v3165 = vadd.f32 %v349, %v3164
  %3166 = vmatmul.f32.gmra.mxu0 %v417
  %v3167 = vpop.f32.mrf.mxu0
  %v3168 = vadd.f32 %v349, %v3167
  %3169 = vmatmul.f32.gmra.mxu0 %v420
  %v3170 = vpop.f32.mrf.mxu0
  %v3171 = vadd.f32 %v349, %v3170
  %3172 = vmatmul.f32.gmra.mxu0 %v423
  %v3173 = vpop.f32.mrf.mxu0
  %v3174 = vadd.f32 %v349, %v3173
  %3175 = vmatmul.f32.gmra.mxu0 %v426
  %v3176 = vpop.f32.mrf.mxu0
  %v3177 = vadd.f32 %v349, %v3176
  %3178 = vmatmul.f32.gmra.mxu0 %v429
  %v3179 = vpop.f32.mrf.mxu0
  %v3180 = vadd.f32 %v349, %v3179
  %3181 = vmatmul.f32.gmra.mxu0 %v432
  %v3182 = vpop.f32.mrf.mxu0
  %v3183 = vadd.f32 %v349, %v3182
  %3184 = vmatmul.f32.gmra.mxu0 %v435
  %v3185 = vpop.f32.mrf.mxu0
  %v3186 = vadd.f32 %v349, %v3185
  %3187 = vmatmul.f32.gmra.mxu0 %v438
  %v3188 = vpop.f32.mrf.mxu0
  %v3189 = vadd.f32 %v349, %v3188
  %3190 = vmatmul.f32.gmra.mxu0 %v441
  %v3191 = vpop.f32.mrf.mxu0
  %v3192 = vadd.f32 %v349, %v3191
  %3193 = vmatmul.f32.gmra.mxu0 %v444
  %v3194 = vpop.f32.mrf.mxu0
  %v3195 = vadd.f32 %v349, %v3194
  %3196 = vmatmul.f32.gmra.mxu0 %v447
  %v3197 = vpop.f32.mrf.mxu0
  %v3198 = vadd.f32 %v349, %v3197
  %3199 = vmatmul.f32.gmra.mxu0 %v450
  %v3200 = vpop.f32.mrf.mxu0
  %v3201 = vadd.f32 %v349, %v3200
  %3202 = vmatmul.f32.gmra.mxu0 %v453
  %v3203 = vpop.f32.mrf.mxu0
  %v3204 = vadd.f32 %v349, %v3203
  %3205 = vmatmul.f32.gmra.mxu0 %v456
  %v3206 = vpop.f32.mrf.mxu0
  %v3207 = vadd.f32 %v349, %v3206
  %3208 = vmatmul.f32.gmra.mxu0 %v459
  %v3209 = vpop.f32.mrf.mxu0
  %v3210 = vadd.f32 %v349, %v3209
  %3211 = vmatmul.f32.gmra.mxu0 %v462
  %v3212 = vpop.f32.mrf.mxu0
  %v3213 = vadd.f32 %v349, %v3212
  %3214 = vmatmul.f32.gmra.mxu0 %v465
  %v3215 = vpop.f32.mrf.mxu0
  %v3216 = vadd.f32 %v349, %v3215
  %3217 = vmatmul.f32.gmra.mxu0 %v468
  %v3218 = vpop.f32.mrf.mxu0
  %v3219 = vadd.f32 %v349, %v3218
  %3220 = vmatmul.f32.gmra.mxu0 %v471
  %v3221 = vpop.f32.mrf.mxu0
  %v3222 = vadd.f32 %v349, %v3221
  %3223 = vmatmul.f32.gmra.mxu0 %v474
  %v3224 = vpop.f32.mrf.mxu0
  %v3225 = vadd.f32 %v349, %v3224
  %3226 = vmatmul.f32.gmra.mxu0 %v477
  %v3227 = vpop.f32.mrf.mxu0
  %v3228 = vadd.f32 %v349, %v3227
  %3229 = vmatmul.f32.gmra.mxu0 %v480
  %v3230 = vpop.f32.mrf.mxu0
  %v3231 = vadd.f32 %v349, %v3230
  %3232 = vmatmul.f32.gmra.mxu0 %v483
  %v3233 = vpop.f32.mrf.mxu0
  %v3234 = vadd.f32 %v349, %v3233
  %3235 = vmatmul.f32.gmra.mxu0 %v486
  %v3236 = vpop.f32.mrf.mxu0
  %v3237 = vadd.f32 %v349, %v3236
  %3238 = vmatmul.f32.gmra.mxu0 %v489
  %v3239 = vpop.f32.mrf.mxu0
  %v3240 = vadd.f32 %v349, %v3239
  %3241 = vmatmul.f32.gmra.mxu0 %v492
  %v3242 = vpop.f32.mrf.mxu0
  %v3243 = vadd.f32 %v349, %v3242
  %3244 = vmatmul.f32.gmra.mxu0 %v495
  %v3245 = vpop.f32.mrf.mxu0
  %v3246 = vadd.f32 %v349, %v3245
  %3247 = vmatmul.f32.gmra.mxu0 %v498
  %v3248 = vpop.f32.mrf.mxu0
  %v3249 = vadd.f32 %v349, %v3248
  %3250 = vmatmul.f32.gmra.mxu0 %v501
  %v3251 = vpop.f32.mrf.mxu0
  %v3252 = vadd.f32 %v349, %v3251
  %3253 = vmatmul.f32.gmra.mxu0 %v504
  %v3254 = vpop.f32.mrf.mxu0
  %v3255 = vadd.f32 %v349, %v3254
  %3256 = vmatmul.f32.gmra.mxu0 %v507
  %v3257 = vpop.f32.mrf.mxu0
  %v3258 = vadd.f32 %v349, %v3257
  %3259 = vmatmul.f32.gmra.mxu0 %v510
  %v3260 = vpop.f32.mrf.mxu0
  %v3261 = vadd.f32 %v349, %v3260
  %3262 = vmatmul.f32.gmra.mxu0 %v513
  %v3263 = vpop.f32.mrf.mxu0
  %v3264 = vadd.f32 %v349, %v3263
  %3265 = vmatmul.f32.gmra.mxu0 %v516
  %v3266 = vpop.f32.mrf.mxu0
  %v3267 = vadd.f32 %v349, %v3266
  %3268 = vmatmul.f32.gmra.mxu0 %v519
  %v3269 = vpop.f32.mrf.mxu0
  %v3270 = vadd.f32 %v349, %v3269
  %3271 = vmatmul.f32.gmra.mxu0 %v522
  %v3272 = vpop.f32.mrf.mxu0
  %v3273 = vadd.f32 %v349, %v3272
  %3274 = vmatmul.f32.gmra.mxu0 %v525
  %v3275 = vpop.f32.mrf.mxu0
  %v3276 = vadd.f32 %v349, %v3275
  %3277 = vmatmul.f32.gmra.mxu0 %v528
  %v3278 = vpop.f32.mrf.mxu0
  %v3279 = vadd.f32 %v349, %v3278
  %3280 = vmatmul.f32.gmra.mxu0 %v531
  %v3281 = vpop.f32.mrf.mxu0
  %v3282 = vadd.f32 %v349, %v3281
  %3283 = vmatmul.f32.gmra.mxu0 %v534
  %v3284 = vpop.f32.mrf.mxu0
  %v3285 = vadd.f32 %v349, %v3284
  %3286 = vmatmul.f32.gmra.mxu0 %v537
  %v3287 = vpop.f32.mrf.mxu0
  %v3288 = vadd.f32 %v349, %v3287
  %3289 = vmatmul.f32.gmra.mxu0 %v540
  %v3290 = vpop.f32.mrf.mxu0
  %v3291 = vadd.f32 %v349, %v3290
  %3292 = vmatmul.f32.gmra.mxu0 %v543
  %v3293 = vpop.f32.mrf.mxu0
  %v3294 = vadd.f32 %v349, %v3293
  %3295 = vmatmul.f32.gmra.mxu0 %v546
  %v3296 = vpop.f32.mrf.mxu0
  %v3297 = vadd.f32 %v349, %v3296
  %3298 = vmatmul.f32.gmra.mxu0 %v549
  %v3299 = vpop.f32.mrf.mxu0
  %v3300 = vadd.f32 %v349, %v3299
  %3301 = vmatmul.f32.gmra.mxu0 %v552
  %v3302 = vpop.f32.mrf.mxu0
  %v3303 = vadd.f32 %v349, %v3302
  %3304 = vmatmul.f32.gmra.mxu0 %v555
  %v3305 = vpop.f32.mrf.mxu0
  %v3306 = vadd.f32 %v349, %v3305
  %3307 = vmatmul.f32.gmra.mxu0 %v558
  %v3308 = vpop.f32.mrf.mxu0
  %v3309 = vadd.f32 %v349, %v3308
  %3310 = vmatmul.f32.gmra.mxu0 %v561
  %v3311 = vpop.f32.mrf.mxu0
  %v3312 = vadd.f32 %v349, %v3311
  %3313 = vmatmul.f32.gmra.mxu0 %v564
  %v3314 = vpop.f32.mrf.mxu0
  %v3315 = vadd.f32 %v349, %v3314
  %3316 = vmatmul.f32.gmra.mxu0 %v567
  %v3317 = vpop.f32.mrf.mxu0
  %v3318 = vadd.f32 %v349, %v3317
  %3319 = vmatmul.f32.gmra.mxu0 %v570
  %v3320 = vpop.f32.mrf.mxu0
  %v3321 = vadd.f32 %v349, %v3320
  %3322 = vmatmul.f32.gmra.mxu0 %v573
  %v3323 = vpop.f32.mrf.mxu0
  %v3324 = vadd.f32 %v349, %v3323
  %3325 = vmatmul.f32.gmra.mxu0 %v576
  %v3326 = vpop.f32.mrf.mxu0
  %v3327 = vadd.f32 %v349, %v3326
  %3328 = vmatmul.f32.gmra.mxu0 %v579
  %v3329 = vpop.f32.mrf.mxu0
  %v3330 = vadd.f32 %v349, %v3329
  %3331 = vmatmul.f32.gmra.mxu0 %v582
  %v3332 = vpop.f32.mrf.mxu0
  %v3333 = vadd.f32 %v349, %v3332
  %3334 = vmatmul.f32.gmra.mxu0 %v585
  %v3335 = vpop.f32.mrf.mxu0
  %v3336 = vadd.f32 %v349, %v3335
  %3337 = vmatmul.f32.gmra.mxu0 %v588
  %v3338 = vpop.f32.mrf.mxu0
  %v3339 = vadd.f32 %v349, %v3338
  %3340 = vmatmul.f32.gmra.mxu0 %v591
  %v3341 = vpop.f32.mrf.mxu0
  %v3342 = vadd.f32 %v349, %v3341
  %3343 = vmatmul.f32.gmra.mxu0 %v594
  %v3344 = vpop.f32.mrf.mxu0
  %v3345 = vadd.f32 %v349, %v3344
  %3346 = vmatmul.f32.gmra.mxu0 %v597
  %v3347 = vpop.f32.mrf.mxu0
  %v3348 = vadd.f32 %v349, %v3347
  %3349 = vmatmul.f32.gmra.mxu0 %v600
  %v3350 = vpop.f32.mrf.mxu0
  %v3351 = vadd.f32 %v349, %v3350
  %3352 = vmatmul.f32.gmra.mxu0 %v603
  %v3353 = vpop.f32.mrf.mxu0
  %v3354 = vadd.f32 %v349, %v3353
  %3355 = vmatmul.f32.gmra.mxu0 %v606
  %v3356 = vpop.f32.mrf.mxu0
  %v3357 = vadd.f32 %v349, %v3356
  %3358 = vmatmul.f32.gmra.mxu0 %v609
  %v3359 = vpop.f32.mrf.mxu0
  %v3360 = vadd.f32 %v349, %v3359
  %3361 = vmatmul.f32.gmra.mxu0 %v612
  %v3362 = vpop.f32.mrf.mxu0
  %v3363 = vadd.f32 %v349, %v3362
  %3364 = vmatmul.f32.gmra.mxu0 %v615
  %v3365 = vpop.f32.mrf.mxu0
  %v3366 = vadd.f32 %v349, %v3365
  %3367 = vmatmul.f32.gmra.mxu0 %v618
  %v3368 = vpop.f32.mrf.mxu0
  %v3369 = vadd.f32 %v349, %v3368
  %3370 = vmatmul.f32.gmra.mxu0 %v621
  %v3371 = vpop.f32.mrf.mxu0
  %v3372 = vadd.f32 %v349, %v3371
  %3373 = vmatmul.f32.gmra.mxu0 %v624
  %v3374 = vpop.f32.mrf.mxu0
  %v3375 = vadd.f32 %v349, %v3374
  %3376 = vmatmul.f32.gmra.mxu0 %v627
  %v3377 = vpop.f32.mrf.mxu0
  %v3378 = vadd.f32 %v349, %v3377
  %3379 = vmatmul.f32.gmra.mxu0 %v630
  %v3380 = vpop.f32.mrf.mxu0
  %v3381 = vadd.f32 %v349, %v3380
  %3382 = vmatmul.f32.gmra.mxu0 %v633
  %v3383 = vpop.f32.mrf.mxu0
  %v3384 = vadd.f32 %v349, %v3383
  %3385 = vmatmul.f32.gmra.mxu0 %v636
  %v3386 = vpop.f32.mrf.mxu0
  %v3387 = vadd.f32 %v349, %v3386
  %3388 = vmatmul.f32.gmra.mxu0 %v639
  %v3389 = vpop.f32.mrf.mxu0
  %v3390 = vadd.f32 %v349, %v3389
  %3391 = vmatmul.f32.gmra.mxu0 %v642
  %v3392 = vpop.f32.mrf.mxu0
  %v3393 = vadd.f32 %v349, %v3392
  %3394 = vmatmul.f32.gmra.mxu0 %v645
  %v3395 = vpop.f32.mrf.mxu0
  %v3396 = vadd.f32 %v349, %v3395
  %3397 = vmatmul.f32.gmra.mxu0 %v648
  %v3398 = vpop.f32.mrf.mxu0
  %v3399 = vadd.f32 %v349, %v3398
  %3400 = vmatmul.f32.gmra.mxu0 %v651
  %v3401 = vpop.f32.mrf.mxu0
  %v3402 = vadd.f32 %v349, %v3401
  %3403 = vmatmul.f32.gmra.mxu0 %v654
  %v3404 = vpop.f32.mrf.mxu0
  %v3405 = vadd.f32 %v349, %v3404
  %3406 = vmatmul.f32.gmra.mxu0 %v657
  %v3407 = vpop.f32.mrf.mxu0
  %v3408 = vadd.f32 %v349, %v3407
  %3409 = vmatmul.f32.gmra.mxu0 %v660
  %v3410 = vpop.f32.mrf.mxu0
  %v3411 = vadd.f32 %v349, %v3410
  %3412 = vmatmul.f32.gmra.mxu0 %v663
  %v3413 = vpop.f32.mrf.mxu0
  %v3414 = vadd.f32 %v349, %v3413
  %3415 = vmatmul.f32.gmra.mxu0 %v666
  %v3416 = vpop.f32.mrf.mxu0
  %v3417 = vadd.f32 %v349, %v3416
  %3418 = vmatmul.f32.gmra.mxu0 %v669
  %v3419 = vpop.f32.mrf.mxu0
  %v3420 = vadd.f32 %v349, %v3419
  %3421 = vmatmul.f32.gmra.mxu0 %v672
  %v3422 = vpop.f32.mrf.mxu0
  %v3423 = vadd.f32 %v349, %v3422
  %3424 = vmatmul.f32.gmra.mxu0 %v675
  %v3425 = vpop.f32.mrf.mxu0
  %v3426 = vadd.f32 %v349, %v3425
  %3427 = vmatmul.f32.gmra.mxu0 %v678
  %v3428 = vpop.f32.mrf.mxu0
  %v3429 = vadd.f32 %v349, %v3428
  %3430 = vmatmul.f32.gmra.mxu0 %v681
  %v3431 = vpop.f32.mrf.mxu0
  %v3432 = vadd.f32 %v349, %v3431
  %3433 = vmatmul.f32.gmra.mxu0 %v684
  %v3434 = vpop.f32.mrf.mxu0
  %v3435 = vadd.f32 %v349, %v3434
  %3436 = vmatmul.f32.gmra.mxu0 %v687
  %v3437 = vpop.f32.mrf.mxu0
  %v3438 = vadd.f32 %v349, %v3437
  %3439 = vmatmul.f32.gmra.mxu0 %v690
  %v3440 = vpop.f32.mrf.mxu0
  %v3441 = vadd.f32 %v349, %v3440
  %3442 = vmatmul.f32.gmra.mxu0 %v693
  %v3443 = vpop.f32.mrf.mxu0
  %v3444 = vadd.f32 %v349, %v3443
  %3445 = vmatmul.f32.gmra.mxu0 %v696
  %v3446 = vpop.f32.mrf.mxu0
  %v3447 = vadd.f32 %v349, %v3446
  %3448 = vmatmul.f32.gmra.mxu0 %v699
  %v3449 = vpop.f32.mrf.mxu0
  %v3450 = vadd.f32 %v349, %v3449
  %3451 = vmatmul.f32.gmra.mxu0 %v702
  %v3452 = vpop.f32.mrf.mxu0
  %v3453 = vadd.f32 %v349, %v3452
  %3454 = vmatmul.f32.gmra.mxu0 %v705
  %v3455 = vpop.f32.mrf.mxu0
  %v3456 = vadd.f32 %v349, %v3455
  %3457 = vmatmul.f32.gmra.mxu0 %v708
  %v3458 = vpop.f32.mrf.mxu0
  %v3459 = vadd.f32 %v349, %v3458
  %3460 = vmatmul.f32.gmra.mxu0 %v711
  %v3461 = vpop.f32.mrf.mxu0
  %v3462 = vadd.f32 %v349, %v3461
  %3463 = vmatmul.f32.gmra.mxu0 %v714
  %v3464 = vpop.f32.mrf.mxu0
  %v3465 = vadd.f32 %v349, %v3464
  %3466 = vmatmul.f32.gmra.mxu0 %v717
  %v3467 = vpop.f32.mrf.mxu0
  %v3468 = vadd.f32 %v349, %v3467
  %3469 = vmatmul.f32.gmra.mxu0 %v720
  %v3470 = vpop.f32.mrf.mxu0
  %v3471 = vadd.f32 %v349, %v3470
  %3472 = vmatmul.f32.gmra.mxu0 %v723
  %v3473 = vpop.f32.mrf.mxu0
  %v3474 = vadd.f32 %v349, %v3473
  %3475 = vmatmul.f32.gmra.mxu0 %v726
  %v3476 = vpop.f32.mrf.mxu0
  %v3477 = vadd.f32 %v349, %v3476
  %3478 = vmatmul.f32.gmra.mxu0 %v729
  %v3479 = vpop.f32.mrf.mxu0
  %v3480 = vadd.f32 %v349, %v3479
  %3481 = vmatmul.f32.gmra.mxu0 %v732
  %v3482 = vpop.f32.mrf.mxu0
  %v3483 = vadd.f32 %v349, %v3482
  %3484 = vmatmul.f32.gmra.mxu0 %v735
  %v3485 = vpop.f32.mrf.mxu0
  %v3486 = vadd.f32 %v349, %v3485
  %3487 = vmatmul.f32.gmra.mxu0 %v738
  %v3488 = vpop.f32.mrf.mxu0
  %v3489 = vadd.f32 %v349, %v3488
  %3490 = vmatmul.f32.gmra.mxu0 %v741
  %v3491 = vpop.f32.mrf.mxu0
  %v3492 = vadd.f32 %v349, %v3491
  %3493 = vmatmul.f32.gmra.mxu0 %v744
  %v3494 = vpop.f32.mrf.mxu0
  %v3495 = vadd.f32 %v349, %v3494
  %3496 = vmatmul.f32.gmra.mxu0 %v747
  %v3497 = vpop.f32.mrf.mxu0
  %v3498 = vadd.f32 %v349, %v3497
  %3499 = vmatmul.f32.gmra.mxu0 %v750
  %v3500 = vpop.f32.mrf.mxu0
  %v3501 = vadd.f32 %v349, %v3500
  %3502 = vmatmul.f32.gmra.mxu0 %v753
  %v3503 = vpop.f32.mrf.mxu0
  %v3504 = vadd.f32 %v349, %v3503
  %3505 = vmatmul.f32.gmra.mxu0 %v756
  %v3506 = vpop.f32.mrf.mxu0
  %v3507 = vadd.f32 %v349, %v3506
  %3508 = vmatmul.f32.gmra.mxu0 %v759
  %v3509 = vpop.f32.mrf.mxu0
  %v3510 = vadd.f32 %v349, %v3509
  %3511 = vmatmul.f32.gmra.mxu0 %v762
  %v3512 = vpop.f32.mrf.mxu0
  %v3513 = vadd.f32 %v349, %v3512
  %3514 = vmatmul.f32.gmra.mxu0 %v765
  %v3515 = vpop.f32.mrf.mxu0
  %v3516 = vadd.f32 %v349, %v3515
  %3517 = vmatmul.f32.gmra.mxu0 %v768
  %v3518 = vpop.f32.mrf.mxu0
  %v3519 = vadd.f32 %v349, %v3518
  %3520 = vmatmul.f32.gmra.mxu0 %v771
  %v3521 = vpop.f32.mrf.mxu0
  %v3522 = vadd.f32 %v349, %v3521
  %3523 = vmatmul.f32.gmra.mxu0 %v774
  %v3524 = vpop.f32.mrf.mxu0
  %v3525 = vadd.f32 %v349, %v3524
  %3526 = vmatmul.f32.gmra.mxu0 %v777
  %v3527 = vpop.f32.mrf.mxu0
  %v3528 = vadd.f32 %v349, %v3527
  %3529 = vmatmul.f32.gmra.mxu0 %v780
  %v3530 = vpop.f32.mrf.mxu0
  %v3531 = vadd.f32 %v349, %v3530
  %3532 = vmatmul.f32.gmra.mxu0 %v783
  %v3533 = vpop.f32.mrf.mxu0
  %v3534 = vadd.f32 %v349, %v3533
  %3535 = vmatmul.f32.gmra.mxu0 %v786
  %v3536 = vpop.f32.mrf.mxu0
  %v3537 = vadd.f32 %v349, %v3536
  %3538 = vmatmul.f32.gmra.mxu0 %v789
  %v3539 = vpop.f32.mrf.mxu0
  %v3540 = vadd.f32 %v349, %v3539
  %3541 = vmatmul.f32.gmra.mxu0 %v792
  %v3542 = vpop.f32.mrf.mxu0
  %v3543 = vadd.f32 %v349, %v3542
  %3544 = vmatmul.f32.gmra.mxu0 %v795
  %v3545 = vpop.f32.mrf.mxu0
  %v3546 = vadd.f32 %v349, %v3545
  %3547 = vmatmul.f32.gmra.mxu0 %v798
  %v3548 = vpop.f32.mrf.mxu0
  %v3549 = vadd.f32 %v349, %v3548
  %3550 = vmatmul.f32.gmra.mxu0 %v801
  %v3551 = vpop.f32.mrf.mxu0
  %v3552 = vadd.f32 %v349, %v3551
  %3553 = vmatmul.f32.gmra.mxu0 %v804
  %v3554 = vpop.f32.mrf.mxu0
  %v3555 = vadd.f32 %v349, %v3554
  %3556 = vmatmul.f32.gmra.mxu0 %v807
  %v3557 = vpop.f32.mrf.mxu0
  %v3558 = vadd.f32 %v349, %v3557
  %3559 = vmatmul.f32.gmra.mxu0 %v810
  %v3560 = vpop.f32.mrf.mxu0
  %v3561 = vadd.f32 %v349, %v3560
  %3562 = vmatmul.f32.gmra.mxu0 %v813
  %v3563 = vpop.f32.mrf.mxu0
  %v3564 = vadd.f32 %v349, %v3563
  %3565 = vmatmul.f32.gmra.mxu0 %v816
  %v3566 = vpop.f32.mrf.mxu0
  %v3567 = vadd.f32 %v349, %v3566
  %3568 = vmatmul.f32.gmra.mxu0 %v819
  %v3569 = vpop.f32.mrf.mxu0
  %v3570 = vadd.f32 %v349, %v3569
  %3571 = vmatmul.f32.gmra.mxu0 %v822
  %v3572 = vpop.f32.mrf.mxu0
  %v3573 = vadd.f32 %v349, %v3572
  %3574 = vmatmul.f32.gmra.mxu0 %v825
  %v3575 = vpop.f32.mrf.mxu0
  %v3576 = vadd.f32 %v349, %v3575
  %3577 = vmatmul.f32.gmra.mxu0 %v828
  %v3578 = vpop.f32.mrf.mxu0
  %v3579 = vadd.f32 %v349, %v3578
  %3580 = vmatmul.f32.gmra.mxu0 %v831
  %v3581 = vpop.f32.mrf.mxu0
  %v3582 = vadd.f32 %v349, %v3581
  %3583 = vmatmul.f32.gmra.mxu0 %v834
  %v3584 = vpop.f32.mrf.mxu0
  %v3585 = vadd.f32 %v349, %v3584
  %3586 = vmatmul.f32.gmra.mxu0 %v837
  %v3587 = vpop.f32.mrf.mxu0
  %v3588 = vadd.f32 %v349, %v3587
  %3589 = vmatmul.f32.gmra.mxu0 %v840
  %v3590 = vpop.f32.mrf.mxu0
  %v3591 = vadd.f32 %v349, %v3590
  %3592 = vmatmul.f32.gmra.mxu0 %v843
  %v3593 = vpop.f32.mrf.mxu0
  %v3594 = vadd.f32 %v349, %v3593
  %3595 = vmatmul.f32.gmra.mxu0 %v846
  %v3596 = vpop.f32.mrf.mxu0
  %v3597 = vadd.f32 %v349, %v3596
  %3598 = vmatmul.f32.gmra.mxu0 %v849
  %v3599 = vpop.f32.mrf.mxu0
  %v3600 = vadd.f32 %v349, %v3599
  %3601 = vmatmul.f32.gmra.mxu0 %v852
  %v3602 = vpop.f32.mrf.mxu0
  %v3603 = vadd.f32 %v349, %v3602
  %3604 = vmatmul.f32.gmra.mxu0 %v855
  %v3605 = vpop.f32.mrf.mxu0
  %v3606 = vadd.f32 %v349, %v3605
  %3607 = vmatmul.f32.gmra.mxu0 %v858
  %v3608 = vpop.f32.mrf.mxu0
  %v3609 = vadd.f32 %v349, %v3608
  %3610 = vmatmul.f32.gmra.mxu0 %v861
  %v3611 = vpop.f32.mrf.mxu0
  %v3612 = vadd.f32 %v349, %v3611
  %3613 = vmatmul.f32.gmra.mxu0 %v864
  %v3614 = vpop.f32.mrf.mxu0
  %v3615 = vadd.f32 %v349, %v3614
  %3616 = vmatmul.f32.gmra.mxu0 %v867
  %v3617 = vpop.f32.mrf.mxu0
  %v3618 = vadd.f32 %v349, %v3617
  %3619 = vmatmul.f32.gmra.mxu0 %v870
  %v3620 = vpop.f32.mrf.mxu0
  %v3621 = vadd.f32 %v349, %v3620
  %3622 = vmatmul.f32.gmra.mxu0 %v873
  %v3623 = vpop.f32.mrf.mxu0
  %v3624 = vadd.f32 %v349, %v3623
  %3625 = vmatmul.f32.gmra.mxu0 %v876
  %v3626 = vpop.f32.mrf.mxu0
  %v3627 = vadd.f32 %v349, %v3626
  %3628 = vmatmul.f32.gmra.mxu0 %v879
  %v3629 = vpop.f32.mrf.mxu0
  %v3630 = vadd.f32 %v349, %v3629
  %3631 = vmatmul.f32.gmra.mxu0 %v882
  %v3632 = vpop.f32.mrf.mxu0
  %v3633 = vadd.f32 %v349, %v3632
  %3634 = vmatmul.f32.gmra.mxu0 %v885
  %v3635 = vpop.f32.mrf.mxu0
  %v3636 = vadd.f32 %v349, %v3635
  %3637 = vmatmul.f32.gmra.mxu0 %v888
  %v3638 = vpop.f32.mrf.mxu0
  %v3639 = vadd.f32 %v349, %v3638
  %3640 = vmatmul.f32.gmra.mxu0 %v891
  %v3641 = vpop.f32.mrf.mxu0
  %v3642 = vadd.f32 %v349, %v3641
  %3643 = vmatmul.f32.gmra.mxu0 %v894
  %v3644 = vpop.f32.mrf.mxu0
  %v3645 = vadd.f32 %v349, %v3644
  %3646 = vmatmul.f32.gmra.mxu0 %v897
  %v3647 = vpop.f32.mrf.mxu0
  %v3648 = vadd.f32 %v349, %v3647
  %3649 = vmatmul.f32.gmra.mxu0 %v900
  %v3650 = vpop.f32.mrf.mxu0
  %v3651 = vadd.f32 %v349, %v3650
  %3652 = vmatmul.f32.gmra.mxu0 %v903
  %v3653 = vpop.f32.mrf.mxu0
  %v3654 = vadd.f32 %v349, %v3653
  %3655 = vmatmul.f32.gmra.mxu0 %v906
  %v3656 = vpop.f32.mrf.mxu0
  %v3657 = vadd.f32 %v349, %v3656
  %3658 = vmatmul.f32.gmra.mxu0 %v909
  %v3659 = vpop.f32.mrf.mxu0
  %v3660 = vadd.f32 %v349, %v3659
  %3661 = vmatmul.f32.gmra.mxu0 %v912
  %v3662 = vpop.f32.mrf.mxu0
  %v3663 = vadd.f32 %v349, %v3662
  %3664 = vmatmul.f32.gmra.mxu0 %v915
  %v3665 = vpop.f32.mrf.mxu0
  %v3666 = vadd.f32 %v349, %v3665
  %3667 = vmatmul.f32.gmra.mxu0 %v918
  %v3668 = vpop.f32.mrf.mxu0
  %v3669 = vadd.f32 %v349, %v3668
  %3670 = vmatmul.f32.gmra.mxu0 %v921
  %v3671 = vpop.f32.mrf.mxu0
  %v3672 = vadd.f32 %v349, %v3671
  %3673 = vmatmul.f32.gmra.mxu0 %v924
  %v3674 = vpop.f32.mrf.mxu0
  %v3675 = vadd.f32 %v349, %v3674
  %3676 = vmatmul.f32.gmra.mxu0 %v927
  %v3677 = vpop.f32.mrf.mxu0
  %v3678 = vadd.f32 %v349, %v3677
  %3679 = vmatmul.f32.gmra.mxu0 %v930
  %v3680 = vpop.f32.mrf.mxu0
  %v3681 = vadd.f32 %v349, %v3680
  %3682 = vmatmul.f32.gmra.mxu0 %v933
  %v3683 = vpop.f32.mrf.mxu0
  %v3684 = vadd.f32 %v349, %v3683
  %3685 = vmatmul.f32.gmra.mxu0 %v936
  %v3686 = vpop.f32.mrf.mxu0
  %v3687 = vadd.f32 %v349, %v3686
  %3688 = vmatmul.f32.gmra.mxu0 %v939
  %v3689 = vpop.f32.mrf.mxu0
  %v3690 = vadd.f32 %v349, %v3689
  %3691 = vmatmul.f32.gmra.mxu0 %v942
  %v3692 = vpop.f32.mrf.mxu0
  %v3693 = vadd.f32 %v349, %v3692
  %3694 = vmatmul.f32.gmra.mxu0 %v945
  %v3695 = vpop.f32.mrf.mxu0
  %v3696 = vadd.f32 %v349, %v3695
  %3697 = vmatmul.f32.gmra.mxu0 %v948
  %v3698 = vpop.f32.mrf.mxu0
  %v3699 = vadd.f32 %v349, %v3698
  %3700 = vmatmul.f32.gmra.mxu0 %v951
  %v3701 = vpop.f32.mrf.mxu0
  %v3702 = vadd.f32 %v349, %v3701
  %3703 = vmatmul.f32.gmra.mxu0 %v954
  %v3704 = vpop.f32.mrf.mxu0
  %v3705 = vadd.f32 %v349, %v3704
  %3706 = vmatmul.f32.gmra.mxu0 %v957
  %v3707 = vpop.f32.mrf.mxu0
  %v3708 = vadd.f32 %v349, %v3707
  %3709 = vmatmul.f32.gmra.mxu0 %v960
  %v3710 = vpop.f32.mrf.mxu0
  %v3711 = vadd.f32 %v349, %v3710
  %3712 = vmatmul.f32.gmra.mxu0 %v963
  %v3713 = vpop.f32.mrf.mxu0
  %v3714 = vadd.f32 %v349, %v3713
  %3715 = vmatmul.f32.gmra.mxu0 %v966
  %v3716 = vpop.f32.mrf.mxu0
  %v3717 = vadd.f32 %v349, %v3716
  %3718 = vmatmul.f32.gmra.mxu0 %v969
  %v3719 = vpop.f32.mrf.mxu0
  %v3720 = vadd.f32 %v349, %v3719
  %3721 = vmatmul.f32.gmra.mxu0 %v972
  %v3722 = vpop.f32.mrf.mxu0
  %v3723 = vadd.f32 %v349, %v3722
  %3724 = vmatmul.f32.gmra.mxu0 %v975
  %v3725 = vpop.f32.mrf.mxu0
  %v3726 = vadd.f32 %v349, %v3725
  %3727 = vmatmul.f32.gmra.mxu0 %v978
  %v3728 = vpop.f32.mrf.mxu0
  %v3729 = vadd.f32 %v349, %v3728
  %3730 = vmatmul.f32.gmra.mxu0 %v981
  %v3731 = vpop.f32.mrf.mxu0
  %v3732 = vadd.f32 %v349, %v3731
  %3733 = vmatmul.f32.gmra.mxu0 %v984
  %v3734 = vpop.f32.mrf.mxu0
  %v3735 = vadd.f32 %v349, %v3734
  %3736 = vmatmul.f32.gmra.mxu0 %v987
  %v3737 = vpop.f32.mrf.mxu0
  %v3738 = vadd.f32 %v349, %v3737
  %3739 = vmatmul.f32.gmra.mxu0 %v990
  %v3740 = vpop.f32.mrf.mxu0
  %v3741 = vadd.f32 %v349, %v3740
  %3742 = vmatmul.f32.gmra.mxu0 %v993
  %v3743 = vpop.f32.mrf.mxu0
  %v3744 = vadd.f32 %v349, %v3743
  %3745 = vmatmul.f32.gmra.mxu0 %v996
  %v3746 = vpop.f32.mrf.mxu0
  %v3747 = vadd.f32 %v349, %v3746
  %3748 = vmatmul.f32.gmra.mxu0 %v999
  %v3749 = vpop.f32.mrf.mxu0
  %v3750 = vadd.f32 %v349, %v3749
  %3751 = vmatmul.f32.gmra.mxu0 %v1002
  %v3752 = vpop.f32.mrf.mxu0
  %v3753 = vadd.f32 %v349, %v3752
  %3754 = vmatmul.f32.gmra.mxu0 %v1005
  %v3755 = vpop.f32.mrf.mxu0
  %v3756 = vadd.f32 %v349, %v3755
  %3757 = vmatmul.f32.gmra.mxu0 %v1008
  %v3758 = vpop.f32.mrf.mxu0
  %v3759 = vadd.f32 %v349, %v3758
  %3760 = vmatmul.f32.gmra.mxu0 %v1011
  %v3761 = vpop.f32.mrf.mxu0
  %v3762 = vadd.f32 %v349, %v3761
  %3763 = vmatmul.f32.gmra.mxu0 %v1014
  %v3764 = vpop.f32.mrf.mxu0
  %v3765 = vadd.f32 %v349, %v3764
  %3766 = vmatmul.f32.gmra.mxu0 %v1017
  %v3767 = vpop.f32.mrf.mxu0
  %v3768 = vadd.f32 %v349, %v3767
  %3769 = vmatmul.f32.gmra.mxu0 %v1020
  %v3770 = vpop.f32.mrf.mxu0
  %v3771 = vadd.f32 %v349, %v3770
  %3772 = vmatmul.f32.gmra.mxu0 %v1023
  %v3773 = vpop.f32.mrf.mxu0
  %v3774 = vadd.f32 %v349, %v3773
  %3775 = vmatmul.f32.gmra.mxu0 %v1026
  %v3776 = vpop.f32.mrf.mxu0
  %v3777 = vadd.f32 %v349, %v3776
  %3778 = vmatmul.f32.gmra.mxu0 %v1029
  %v3779 = vpop.f32.mrf.mxu0
  %v3780 = vadd.f32 %v349, %v3779
  %3781 = vmatmul.f32.gmra.mxu0 %v1032
  %v3782 = vpop.f32.mrf.mxu0
  %v3783 = vadd.f32 %v349, %v3782
  %3784 = vmatmul.f32.gmra.mxu0 %v1035
  %v3785 = vpop.f32.mrf.mxu0
  %v3786 = vadd.f32 %v349, %v3785
  %3787 = vmatmul.f32.gmra.mxu0 %v1038
  %v3788 = vpop.f32.mrf.mxu0
  %v3789 = vadd.f32 %v349, %v3788
  %3790 = vmatmul.f32.gmra.mxu0 %v1041
  %v3791 = vpop.f32.mrf.mxu0
  %v3792 = vadd.f32 %v349, %v3791
  %3793 = vmatmul.f32.gmra.mxu0 %v1044
  %v3794 = vpop.f32.mrf.mxu0
  %v3795 = vadd.f32 %v349, %v3794
  %3796 = vmatmul.f32.gmra.mxu0 %v1047
  %v3797 = vpop.f32.mrf.mxu0
  %v3798 = vadd.f32 %v349, %v3797
  %3799 = vmatmul.f32.gmra.mxu0 %v1050
  %v3800 = vpop.f32.mrf.mxu0
  %v3801 = vadd.f32 %v349, %v3800
  %3802 = vmatmul.f32.gmra.mxu0 %v1053
  %v3803 = vpop.f32.mrf.mxu0
  %v3804 = vadd.f32 %v349, %v3803
  %3805 = vmatmul.f32.gmra.mxu0 %v1056
  %v3806 = vpop.f32.mrf.mxu0
  %v3807 = vadd.f32 %v349, %v3806
  %3808 = vmatmul.f32.gmra.mxu0 %v1059
  %v3809 = vpop.f32.mrf.mxu0
  %v3810 = vadd.f32 %v349, %v3809
  %3811 = vmatmul.f32.gmra.mxu0 %v1062
  %v3812 = vpop.f32.mrf.mxu0
  %v3813 = vadd.f32 %v349, %v3812
  %3814 = vmatmul.f32.gmra.mxu0 %v1065
  %v3815 = vpop.f32.mrf.mxu0
  %v3816 = vadd.f32 %v349, %v3815
  %3817 = vmatmul.f32.gmra.mxu0 %v1068
  %v3818 = vpop.f32.mrf.mxu0
  %v3819 = vadd.f32 %v349, %v3818
  %3820 = vmatmul.f32.gmra.mxu0 %v1071
  %v3821 = vpop.f32.mrf.mxu0
  %v3822 = vadd.f32 %v349, %v3821
  %3823 = vmatmul.f32.gmra.mxu0 %v1074
  %v3824 = vpop.f32.mrf.mxu0
  %v3825 = vadd.f32 %v349, %v3824
  %3826 = vmatmul.f32.gmra.mxu0 %v1077
  %v3827 = vpop.f32.mrf.mxu0
  %v3828 = vadd.f32 %v349, %v3827
  %3829 = vmatmul.f32.gmra.mxu0 %v1080
  %v3830 = vpop.f32.mrf.mxu0
  %v3831 = vadd.f32 %v349, %v3830
  %3832 = vmatmul.f32.gmra.mxu0 %v1083
  %v3833 = vpop.f32.mrf.mxu0
  %v3834 = vadd.f32 %v349, %v3833
  %3835 = vmatmul.f32.gmra.mxu0 %v1086
  %v3836 = vpop.f32.mrf.mxu0
  %v3837 = vadd.f32 %v349, %v3836
  %3838 = vmatmul.f32.gmra.mxu0 %v1089
  %v3839 = vpop.f32.mrf.mxu0
  %v3840 = vadd.f32 %v349, %v3839
  %3841 = vmatmul.f32.gmra.mxu0 %v1092
  %v3842 = vpop.f32.mrf.mxu0
  %v3843 = vadd.f32 %v349, %v3842
  %3844 = vmatmul.f32.gmra.mxu0 %v1095
  %v3845 = vpop.f32.mrf.mxu0
  %v3846 = vadd.f32 %v349, %v3845
  %3847 = vmatmul.f32.gmra.mxu0 %v1098
  %v3848 = vpop.f32.mrf.mxu0
  %v3849 = vadd.f32 %v349, %v3848
  %3850 = vmatmul.f32.gmra.mxu0 %v1101
  %v3851 = vpop.f32.mrf.mxu0
  %v3852 = vadd.f32 %v349, %v3851
  %3853 = vmatmul.f32.gmra.mxu0 %v1104
  %v3854 = vpop.f32.mrf.mxu0
  %v3855 = vadd.f32 %v349, %v3854
  %3856 = vmatmul.f32.gmra.mxu0 %v1107
  %v3857 = vpop.f32.mrf.mxu0
  %v3858 = vadd.f32 %v349, %v3857
  %3859 = vmatmul.f32.gmra.mxu0 %v1110
  %v3860 = vpop.f32.mrf.mxu0
  %v3861 = vadd.f32 %v349, %v3860
  %3862 = vmatmul.f32.gmra.mxu0 %v1113
  %v3863 = vpop.f32.mrf.mxu0
  %v3864 = vadd.f32 %v349, %v3863
  %3865 = vmatmul.f32.gmra.mxu0 %v1116
  %v3866 = vpop.f32.mrf.mxu0
  %v3867 = vadd.f32 %v349, %v3866
  %3868 = vmatmul.f32.gmra.mxu0 %v1119
  %v3869 = vpop.f32.mrf.mxu0
  %v3870 = vadd.f32 %v349, %v3869
  %3871 = vmatmul.f32.gmra.mxu0 %v1122
  %v3872 = vpop.f32.mrf.mxu0
  %v3873 = vadd.f32 %v349, %v3872
  %3874 = vmatmul.f32.gmra.mxu0 %v1125
  %v3875 = vpop.f32.mrf.mxu0
  %v3876 = vadd.f32 %v349, %v3875
  %3877 = vmatmul.f32.gmra.mxu0 %v1128
  %v3878 = vpop.f32.mrf.mxu0
  %v3879 = vadd.f32 %v349, %v3878
  %3880 = vmatmul.f32.gmra.mxu0 %v1131
  %v3881 = vpop.f32.mrf.mxu0
  %v3882 = vadd.f32 %v349, %v3881
  %3883 = vmatmul.f32.gmra.mxu0 %v1134
  %v3884 = vpop.f32.mrf.mxu0
  %v3885 = vadd.f32 %v349, %v3884
  %3886 = vmatmul.f32.gmra.mxu0 %v1137
  %v3887 = vpop.f32.mrf.mxu0
  %v3888 = vadd.f32 %v349, %v3887
  %3889 = vmatmul.f32.gmra.mxu0 %v1140
  %v3890 = vpop.f32.mrf.mxu0
  %v3891 = vadd.f32 %v349, %v3890
  %3892 = vmatmul.f32.gmra.mxu0 %v1143
  %v3893 = vpop.f32.mrf.mxu0
  %v3894 = vadd.f32 %v349, %v3893
  %3895 = vmatmul.f32.gmra.mxu0 %v1146
  %v3896 = vpop.f32.mrf.mxu0
  %v3897 = vadd.f32 %v349, %v3896
  %3898 = vmatmul.f32.gmra.mxu0 %v1149
  %v3899 = vpop.f32.mrf.mxu0
  %v3900 = vadd.f32 %v349, %v3899
  %3901 = vmatmul.f32.gmra.mxu0 %v1152
  %v3902 = vpop.f32.mrf.mxu0
  %v3903 = vadd.f32 %v349, %v3902
  %3904 = vmatmul.f32.gmra.mxu0 %v1155
  %v3905 = vpop.f32.mrf.mxu0
  %v3906 = vadd.f32 %v349, %v3905
  %3907 = vmatmul.f32.gmra.mxu0 %v1158
  %v3908 = vpop.f32.mrf.mxu0
  %v3909 = vadd.f32 %v349, %v3908
  %3910 = vmatmul.f32.gmra.mxu0 %v1161
  %v3911 = vpop.f32.mrf.mxu0
  %v3912 = vadd.f32 %v349, %v3911
  %3913 = vmatmul.f32.gmra.mxu0 %v1164
  %v3914 = vpop.f32.mrf.mxu0
  %v3915 = vadd.f32 %v349, %v3914
  %3916 = vmatmul.f32.gmra.mxu0 %v1167
  %v3917 = vpop.f32.mrf.mxu0
  %v3918 = vadd.f32 %v349, %v3917
  %3919 = vmatmul.f32.gmra.mxu0 %v1170
  %v3920 = vpop.f32.mrf.mxu0
  %v3921 = vadd.f32 %v349, %v3920
  %3922 = vmatmul.f32.gmra.mxu0 %v1173
  %v3923 = vpop.f32.mrf.mxu0
  %v3924 = vadd.f32 %v349, %v3923
  %3925 = vmatmul.f32.gmra.mxu0 %v1176
  %v3926 = vpop.f32.mrf.mxu0
  %v3927 = vadd.f32 %v349, %v3926
  %3928 = vmatmul.f32.gmra.mxu0 %v1179
  %v3929 = vpop.f32.mrf.mxu0
  %v3930 = vadd.f32 %v349, %v3929
  %3931 = vmatmul.f32.gmra.mxu0 %v1182
  %v3932 = vpop.f32.mrf.mxu0
  %v3933 = vadd.f32 %v349, %v3932
  %3934 = vmatmul.f32.gmra.mxu0 %v1185
  %v3935 = vpop.f32.mrf.mxu0
  %v3936 = vadd.f32 %v349, %v3935
  %3937 = vmatmul.f32.gmra.mxu0 %v1188
  %v3938 = vpop.f32.mrf.mxu0
  %v3939 = vadd.f32 %v349, %v3938
  %3940 = vmatmul.f32.gmra.mxu0 %v1191
  %v3941 = vpop.f32.mrf.mxu0
  %v3942 = vadd.f32 %v349, %v3941
  %3943 = vmatmul.f32.gmra.mxu0 %v1194
  %v3944 = vpop.f32.mrf.mxu0
  %v3945 = vadd.f32 %v349, %v3944
  %3946 = vmatmul.f32.gmra.mxu0 %v1197
  %v3947 = vpop.f32.mrf.mxu0
  %v3948 = vadd.f32 %v349, %v3947
  %3949 = vmatmul.f32.gmra.mxu0 %v1200
  %v3950 = vpop.f32.mrf.mxu0
  %v3951 = vadd.f32 %v349, %v3950
  %3952 = vmatmul.f32.gmra.mxu0 %v1203
  %v3953 = vpop.f32.mrf.mxu0
  %v3954 = vadd.f32 %v349, %v3953
  %3955 = vmatmul.f32.gmra.mxu0 %v1206
  %v3956 = vpop.f32.mrf.mxu0
  %v3957 = vadd.f32 %v349, %v3956
  %3958 = vmatmul.f32.gmra.mxu0 %v1209
  %v3959 = vpop.f32.mrf.mxu0
  %v3960 = vadd.f32 %v349, %v3959
  %3961 = vmatmul.f32.gmra.mxu0 %v1212
  %v3962 = vpop.f32.mrf.mxu0
  %v3963 = vadd.f32 %v349, %v3962
  %3964 = vmatmul.f32.gmra.mxu0 %v1215
  %v3965 = vpop.f32.mrf.mxu0
  %v3966 = vadd.f32 %v349, %v3965
  %3967 = vmatmul.f32.gmra.mxu0 %v1218
  %v3968 = vpop.f32.mrf.mxu0
  %v3969 = vadd.f32 %v349, %v3968
  %3970 = vmatmul.f32.gmra.mxu0 %v1221
  %v3971 = vpop.f32.mrf.mxu0
  %v3972 = vadd.f32 %v349, %v3971
  %3973 = vmatmul.f32.gmra.mxu0 %v1224
  %v3974 = vpop.f32.mrf.mxu0
  %v3975 = vadd.f32 %v349, %v3974
  %3976 = vmatmul.f32.gmra.mxu0 %v1227
  %v3977 = vpop.f32.mrf.mxu0
  %v3978 = vadd.f32 %v349, %v3977
  %3979 = vmatmul.f32.gmra.mxu0 %v1230
  %v3980 = vpop.f32.mrf.mxu0
  %v3981 = vadd.f32 %v349, %v3980
  %3982 = vmatmul.f32.gmra.mxu0 %v1233
  %v3983 = vpop.f32.mrf.mxu0
  %v3984 = vadd.f32 %v349, %v3983
  %3985 = vmatmul.f32.gmra.mxu0 %v1236
  %v3986 = vpop.f32.mrf.mxu0
  %v3987 = vadd.f32 %v349, %v3986
  %3988 = vmatmul.f32.gmra.mxu0 %v1239
  %v3989 = vpop.f32.mrf.mxu0
  %v3990 = vadd.f32 %v349, %v3989
  %3991 = vmatmul.f32.gmra.mxu0 %v1242
  %v3992 = vpop.f32.mrf.mxu0
  %v3993 = vadd.f32 %v349, %v3992
  %3994 = vmatmul.f32.gmra.mxu0 %v1245
  %v3995 = vpop.f32.mrf.mxu0
  %v3996 = vadd.f32 %v349, %v3995
  %3997 = vmatmul.f32.gmra.mxu0 %v1248
  %v3998 = vpop.f32.mrf.mxu0
  %v3999 = vadd.f32 %v349, %v3998
  %4000 = vmatmul.f32.gmra.mxu0 %v1251
  %v4001 = vpop.f32.mrf.mxu0
  %v4002 = vadd.f32 %v349, %v4001
  %4003 = vmatmul.f32.gmra.mxu0 %v1254
  %v4004 = vpop.f32.mrf.mxu0
  %v4005 = vadd.f32 %v349, %v4004
  %4006 = vdwg.mxu0
  %4007 = vmatpush.msra.mxu0 0.0
  %4008 = vmatpush.msra.mxu0 0.0
  %4009 = vmatpush.msra.mxu0 0.0
  %4010 = vmatpush.msra.mxu0 0.0
  %4011 = vmatpush.msra.mxu0 0.0
  %4012 = vmatpush.msra.mxu0 0.0
  %4013 = vmatpush.msra.mxu0 0.0
  %4014 = vmatpush.msra.mxu0 0.0
  %4015 = vmatpush.msra.mxu0 0.0
  %4016 = vmatpush.msra.mxu0 0.0
  %4017 = vmatpush.msra.mxu0 0.0
  %4018 = vmatpush.msra.mxu0 0.0
  %4019 = vmatpush.msra.mxu0 %v344
  %4020 = vmatpush.msra.mxu0 %v340
  %4021 = vmatpush.msra.mxu0 %v336
  %4022 = vmatpush.msra.mxu0 %v332
  %4023 = vmatmul.f32.gmra.mxu0 %v357
  %v4024 = vpop.f32.mrf.mxu0
  %v4025 = vadd.f32 %v350, %v4024
  %4026 = vmatmul.f32.gmra.mxu0 %v360
  %v4027 = vpop.f32.mrf.mxu0
  %v4028 = vadd.f32 %v350, %v4027
  %4029 = vmatmul.f32.gmra.mxu0 %v363
  %v4030 = vpop.f32.mrf.mxu0
  %v4031 = vadd.f32 %v350, %v4030
  %4032 = vmatmul.f32.gmra.mxu0 %v366
  %v4033 = vpop.f32.mrf.mxu0
  %v4034 = vadd.f32 %v350, %v4033
  %4035 = vmatmul.f32.gmra.mxu0 %v369
  %v4036 = vpop.f32.mrf.mxu0
  %v4037 = vadd.f32 %v350, %v4036
  %4038 = vmatmul.f32.gmra.mxu0 %v372
  %v4039 = vpop.f32.mrf.mxu0
  %v4040 = vadd.f32 %v350, %v4039
  %4041 = vmatmul.f32.gmra.mxu0 %v375
  %v4042 = vpop.f32.mrf.mxu0
  %v4043 = vadd.f32 %v350, %v4042
  %4044 = vmatmul.f32.gmra.mxu0 %v378
  %v4045 = vpop.f32.mrf.mxu0
  %v4046 = vadd.f32 %v350, %v4045
  %4047 = vmatmul.f32.gmra.mxu0 %v381
  %v4048 = vpop.f32.mrf.mxu0
  %v4049 = vadd.f32 %v350, %v4048
  %4050 = vmatmul.f32.gmra.mxu0 %v384
  %v4051 = vpop.f32.mrf.mxu0
  %v4052 = vadd.f32 %v350, %v4051
  %4053 = vmatmul.f32.gmra.mxu0 %v387
  %v4054 = vpop.f32.mrf.mxu0
  %v4055 = vadd.f32 %v350, %v4054
  %4056 = vmatmul.f32.gmra.mxu0 %v390
  %v4057 = vpop.f32.mrf.mxu0
  %v4058 = vadd.f32 %v350, %v4057
  %4059 = vmatmul.f32.gmra.mxu0 %v393
  %v4060 = vpop.f32.mrf.mxu0
  %v4061 = vadd.f32 %v350, %v4060
  %4062 = vmatmul.f32.gmra.mxu0 %v396
  %v4063 = vpop.f32.mrf.mxu0
  %v4064 = vadd.f32 %v350, %v4063
  %4065 = vmatmul.f32.gmra.mxu0 %v399
  %v4066 = vpop.f32.mrf.mxu0
  %v4067 = vadd.f32 %v350, %v4066
  %4068 = vmatmul.f32.gmra.mxu0 %v402
  %v4069 = vpop.f32.mrf.mxu0
  %v4070 = vadd.f32 %v350, %v4069
  %4071 = vmatmul.f32.gmra.mxu0 %v405
  %v4072 = vpop.f32.mrf.mxu0
  %v4073 = vadd.f32 %v350, %v4072
  %4074 = vmatmul.f32.gmra.mxu0 %v408
  %v4075 = vpop.f32.mrf.mxu0
  %v4076 = vadd.f32 %v350, %v4075
  %4077 = vmatmul.f32.gmra.mxu0 %v411
  %v4078 = vpop.f32.mrf.mxu0
  %v4079 = vadd.f32 %v350, %v4078
  %4080 = vmatmul.f32.gmra.mxu0 %v414
  %v4081 = vpop.f32.mrf.mxu0
  %v4082 = vadd.f32 %v350, %v4081
  %4083 = vmatmul.f32.gmra.mxu0 %v417
  %v4084 = vpop.f32.mrf.mxu0
  %v4085 = vadd.f32 %v350, %v4084
  %4086 = vmatmul.f32.gmra.mxu0 %v420
  %v4087 = vpop.f32.mrf.mxu0
  %v4088 = vadd.f32 %v350, %v4087
  %4089 = vmatmul.f32.gmra.mxu0 %v423
  %v4090 = vpop.f32.mrf.mxu0
  %v4091 = vadd.f32 %v350, %v4090
  %4092 = vmatmul.f32.gmra.mxu0 %v426
  %v4093 = vpop.f32.mrf.mxu0
  %v4094 = vadd.f32 %v350, %v4093
  %4095 = vmatmul.f32.gmra.mxu0 %v429
  %v4096 = vpop.f32.mrf.mxu0
  %v4097 = vadd.f32 %v350, %v4096
  %4098 = vmatmul.f32.gmra.mxu0 %v432
  %v4099 = vpop.f32.mrf.mxu0
  %v4100 = vadd.f32 %v350, %v4099
  %4101 = vmatmul.f32.gmra.mxu0 %v435
  %v4102 = vpop.f32.mrf.mxu0
  %v4103 = vadd.f32 %v350, %v4102
  %4104 = vmatmul.f32.gmra.mxu0 %v438
  %v4105 = vpop.f32.mrf.mxu0
  %v4106 = vadd.f32 %v350, %v4105
  %4107 = vmatmul.f32.gmra.mxu0 %v441
  %v4108 = vpop.f32.mrf.mxu0
  %v4109 = vadd.f32 %v350, %v4108
  %4110 = vmatmul.f32.gmra.mxu0 %v444
  %v4111 = vpop.f32.mrf.mxu0
  %v4112 = vadd.f32 %v350, %v4111
  %4113 = vmatmul.f32.gmra.mxu0 %v447
  %v4114 = vpop.f32.mrf.mxu0
  %v4115 = vadd.f32 %v350, %v4114
  %4116 = vmatmul.f32.gmra.mxu0 %v450
  %v4117 = vpop.f32.mrf.mxu0
  %v4118 = vadd.f32 %v350, %v4117
  %4119 = vmatmul.f32.gmra.mxu0 %v453
  %v4120 = vpop.f32.mrf.mxu0
  %v4121 = vadd.f32 %v350, %v4120
  %4122 = vmatmul.f32.gmra.mxu0 %v456
  %v4123 = vpop.f32.mrf.mxu0
  %v4124 = vadd.f32 %v350, %v4123
  %4125 = vmatmul.f32.gmra.mxu0 %v459
  %v4126 = vpop.f32.mrf.mxu0
  %v4127 = vadd.f32 %v350, %v4126
  %4128 = vmatmul.f32.gmra.mxu0 %v462
  %v4129 = vpop.f32.mrf.mxu0
  %v4130 = vadd.f32 %v350, %v4129
  %4131 = vmatmul.f32.gmra.mxu0 %v465
  %v4132 = vpop.f32.mrf.mxu0
  %v4133 = vadd.f32 %v350, %v4132
  %4134 = vmatmul.f32.gmra.mxu0 %v468
  %v4135 = vpop.f32.mrf.mxu0
  %v4136 = vadd.f32 %v350, %v4135
  %4137 = vmatmul.f32.gmra.mxu0 %v471
  %v4138 = vpop.f32.mrf.mxu0
  %v4139 = vadd.f32 %v350, %v4138
  %4140 = vmatmul.f32.gmra.mxu0 %v474
  %v4141 = vpop.f32.mrf.mxu0
  %v4142 = vadd.f32 %v350, %v4141
  %4143 = vmatmul.f32.gmra.mxu0 %v477
  %v4144 = vpop.f32.mrf.mxu0
  %v4145 = vadd.f32 %v350, %v4144
  %4146 = vmatmul.f32.gmra.mxu0 %v480
  %v4147 = vpop.f32.mrf.mxu0
  %v4148 = vadd.f32 %v350, %v4147
  %4149 = vmatmul.f32.gmra.mxu0 %v483
  %v4150 = vpop.f32.mrf.mxu0
  %v4151 = vadd.f32 %v350, %v4150
  %4152 = vmatmul.f32.gmra.mxu0 %v486
  %v4153 = vpop.f32.mrf.mxu0
  %v4154 = vadd.f32 %v350, %v4153
  %4155 = vmatmul.f32.gmra.mxu0 %v489
  %v4156 = vpop.f32.mrf.mxu0
  %v4157 = vadd.f32 %v350, %v4156
  %4158 = vmatmul.f32.gmra.mxu0 %v492
  %v4159 = vpop.f32.mrf.mxu0
  %v4160 = vadd.f32 %v350, %v4159
  %4161 = vmatmul.f32.gmra.mxu0 %v495
  %v4162 = vpop.f32.mrf.mxu0
  %v4163 = vadd.f32 %v350, %v4162
  %4164 = vmatmul.f32.gmra.mxu0 %v498
  %v4165 = vpop.f32.mrf.mxu0
  %v4166 = vadd.f32 %v350, %v4165
  %4167 = vmatmul.f32.gmra.mxu0 %v501
  %v4168 = vpop.f32.mrf.mxu0
  %v4169 = vadd.f32 %v350, %v4168
  %4170 = vmatmul.f32.gmra.mxu0 %v504
  %v4171 = vpop.f32.mrf.mxu0
  %v4172 = vadd.f32 %v350, %v4171
  %4173 = vmatmul.f32.gmra.mxu0 %v507
  %v4174 = vpop.f32.mrf.mxu0
  %v4175 = vadd.f32 %v350, %v4174
  %4176 = vmatmul.f32.gmra.mxu0 %v510
  %v4177 = vpop.f32.mrf.mxu0
  %v4178 = vadd.f32 %v350, %v4177
  %4179 = vmatmul.f32.gmra.mxu0 %v513
  %v4180 = vpop.f32.mrf.mxu0
  %v4181 = vadd.f32 %v350, %v4180
  %4182 = vmatmul.f32.gmra.mxu0 %v516
  %v4183 = vpop.f32.mrf.mxu0
  %v4184 = vadd.f32 %v350, %v4183
  %4185 = vmatmul.f32.gmra.mxu0 %v519
  %v4186 = vpop.f32.mrf.mxu0
  %v4187 = vadd.f32 %v350, %v4186
  %4188 = vmatmul.f32.gmra.mxu0 %v522
  %v4189 = vpop.f32.mrf.mxu0
  %v4190 = vadd.f32 %v350, %v4189
  %4191 = vmatmul.f32.gmra.mxu0 %v525
  %v4192 = vpop.f32.mrf.mxu0
  %v4193 = vadd.f32 %v350, %v4192
  %4194 = vmatmul.f32.gmra.mxu0 %v528
  %v4195 = vpop.f32.mrf.mxu0
  %v4196 = vadd.f32 %v350, %v4195
  %4197 = vmatmul.f32.gmra.mxu0 %v531
  %v4198 = vpop.f32.mrf.mxu0
  %v4199 = vadd.f32 %v350, %v4198
  %4200 = vmatmul.f32.gmra.mxu0 %v534
  %v4201 = vpop.f32.mrf.mxu0
  %v4202 = vadd.f32 %v350, %v4201
  %4203 = vmatmul.f32.gmra.mxu0 %v537
  %v4204 = vpop.f32.mrf.mxu0
  %v4205 = vadd.f32 %v350, %v4204
  %4206 = vmatmul.f32.gmra.mxu0 %v540
  %v4207 = vpop.f32.mrf.mxu0
  %v4208 = vadd.f32 %v350, %v4207
  %4209 = vmatmul.f32.gmra.mxu0 %v543
  %v4210 = vpop.f32.mrf.mxu0
  %v4211 = vadd.f32 %v350, %v4210
  %4212 = vmatmul.f32.gmra.mxu0 %v546
  %v4213 = vpop.f32.mrf.mxu0
  %v4214 = vadd.f32 %v350, %v4213
  %4215 = vmatmul.f32.gmra.mxu0 %v549
  %v4216 = vpop.f32.mrf.mxu0
  %v4217 = vadd.f32 %v350, %v4216
  %4218 = vmatmul.f32.gmra.mxu0 %v552
  %v4219 = vpop.f32.mrf.mxu0
  %v4220 = vadd.f32 %v350, %v4219
  %4221 = vmatmul.f32.gmra.mxu0 %v555
  %v4222 = vpop.f32.mrf.mxu0
  %v4223 = vadd.f32 %v350, %v4222
  %4224 = vmatmul.f32.gmra.mxu0 %v558
  %v4225 = vpop.f32.mrf.mxu0
  %v4226 = vadd.f32 %v350, %v4225
  %4227 = vmatmul.f32.gmra.mxu0 %v561
  %v4228 = vpop.f32.mrf.mxu0
  %v4229 = vadd.f32 %v350, %v4228
  %4230 = vmatmul.f32.gmra.mxu0 %v564
  %v4231 = vpop.f32.mrf.mxu0
  %v4232 = vadd.f32 %v350, %v4231
  %4233 = vmatmul.f32.gmra.mxu0 %v567
  %v4234 = vpop.f32.mrf.mxu0
  %v4235 = vadd.f32 %v350, %v4234
  %4236 = vmatmul.f32.gmra.mxu0 %v570
  %v4237 = vpop.f32.mrf.mxu0
  %v4238 = vadd.f32 %v350, %v4237
  %4239 = vmatmul.f32.gmra.mxu0 %v573
  %v4240 = vpop.f32.mrf.mxu0
  %v4241 = vadd.f32 %v350, %v4240
  %4242 = vmatmul.f32.gmra.mxu0 %v576
  %v4243 = vpop.f32.mrf.mxu0
  %v4244 = vadd.f32 %v350, %v4243
  %4245 = vmatmul.f32.gmra.mxu0 %v579
  %v4246 = vpop.f32.mrf.mxu0
  %v4247 = vadd.f32 %v350, %v4246
  %4248 = vmatmul.f32.gmra.mxu0 %v582
  %v4249 = vpop.f32.mrf.mxu0
  %v4250 = vadd.f32 %v350, %v4249
  %4251 = vmatmul.f32.gmra.mxu0 %v585
  %v4252 = vpop.f32.mrf.mxu0
  %v4253 = vadd.f32 %v350, %v4252
  %4254 = vmatmul.f32.gmra.mxu0 %v588
  %v4255 = vpop.f32.mrf.mxu0
  %v4256 = vadd.f32 %v350, %v4255
  %4257 = vmatmul.f32.gmra.mxu0 %v591
  %v4258 = vpop.f32.mrf.mxu0
  %v4259 = vadd.f32 %v350, %v4258
  %4260 = vmatmul.f32.gmra.mxu0 %v594
  %v4261 = vpop.f32.mrf.mxu0
  %v4262 = vadd.f32 %v350, %v4261
  %4263 = vmatmul.f32.gmra.mxu0 %v597
  %v4264 = vpop.f32.mrf.mxu0
  %v4265 = vadd.f32 %v350, %v4264
  %4266 = vmatmul.f32.gmra.mxu0 %v600
  %v4267 = vpop.f32.mrf.mxu0
  %v4268 = vadd.f32 %v350, %v4267
  %4269 = vmatmul.f32.gmra.mxu0 %v603
  %v4270 = vpop.f32.mrf.mxu0
  %v4271 = vadd.f32 %v350, %v4270
  %4272 = vmatmul.f32.gmra.mxu0 %v606
  %v4273 = vpop.f32.mrf.mxu0
  %v4274 = vadd.f32 %v350, %v4273
  %4275 = vmatmul.f32.gmra.mxu0 %v609
  %v4276 = vpop.f32.mrf.mxu0
  %v4277 = vadd.f32 %v350, %v4276
  %4278 = vmatmul.f32.gmra.mxu0 %v612
  %v4279 = vpop.f32.mrf.mxu0
  %v4280 = vadd.f32 %v350, %v4279
  %4281 = vmatmul.f32.gmra.mxu0 %v615
  %v4282 = vpop.f32.mrf.mxu0
  %v4283 = vadd.f32 %v350, %v4282
  %4284 = vmatmul.f32.gmra.mxu0 %v618
  %v4285 = vpop.f32.mrf.mxu0
  %v4286 = vadd.f32 %v350, %v4285
  %4287 = vmatmul.f32.gmra.mxu0 %v621
  %v4288 = vpop.f32.mrf.mxu0
  %v4289 = vadd.f32 %v350, %v4288
  %4290 = vmatmul.f32.gmra.mxu0 %v624
  %v4291 = vpop.f32.mrf.mxu0
  %v4292 = vadd.f32 %v350, %v4291
  %4293 = vmatmul.f32.gmra.mxu0 %v627
  %v4294 = vpop.f32.mrf.mxu0
  %v4295 = vadd.f32 %v350, %v4294
  %4296 = vmatmul.f32.gmra.mxu0 %v630
  %v4297 = vpop.f32.mrf.mxu0
  %v4298 = vadd.f32 %v350, %v4297
  %4299 = vmatmul.f32.gmra.mxu0 %v633
  %v4300 = vpop.f32.mrf.mxu0
  %v4301 = vadd.f32 %v350, %v4300
  %4302 = vmatmul.f32.gmra.mxu0 %v636
  %v4303 = vpop.f32.mrf.mxu0
  %v4304 = vadd.f32 %v350, %v4303
  %4305 = vmatmul.f32.gmra.mxu0 %v639
  %v4306 = vpop.f32.mrf.mxu0
  %v4307 = vadd.f32 %v350, %v4306
  %4308 = vmatmul.f32.gmra.mxu0 %v642
  %v4309 = vpop.f32.mrf.mxu0
  %v4310 = vadd.f32 %v350, %v4309
  %4311 = vmatmul.f32.gmra.mxu0 %v645
  %v4312 = vpop.f32.mrf.mxu0
  %v4313 = vadd.f32 %v350, %v4312
  %4314 = vmatmul.f32.gmra.mxu0 %v648
  %v4315 = vpop.f32.mrf.mxu0
  %v4316 = vadd.f32 %v350, %v4315
  %4317 = vmatmul.f32.gmra.mxu0 %v651
  %v4318 = vpop.f32.mrf.mxu0
  %v4319 = vadd.f32 %v350, %v4318
  %4320 = vmatmul.f32.gmra.mxu0 %v654
  %v4321 = vpop.f32.mrf.mxu0
  %v4322 = vadd.f32 %v350, %v4321
  %4323 = vmatmul.f32.gmra.mxu0 %v657
  %v4324 = vpop.f32.mrf.mxu0
  %v4325 = vadd.f32 %v350, %v4324
  %4326 = vmatmul.f32.gmra.mxu0 %v660
  %v4327 = vpop.f32.mrf.mxu0
  %v4328 = vadd.f32 %v350, %v4327
  %4329 = vmatmul.f32.gmra.mxu0 %v663
  %v4330 = vpop.f32.mrf.mxu0
  %v4331 = vadd.f32 %v350, %v4330
  %4332 = vmatmul.f32.gmra.mxu0 %v666
  %v4333 = vpop.f32.mrf.mxu0
  %v4334 = vadd.f32 %v350, %v4333
  %4335 = vmatmul.f32.gmra.mxu0 %v669
  %v4336 = vpop.f32.mrf.mxu0
  %v4337 = vadd.f32 %v350, %v4336
  %4338 = vmatmul.f32.gmra.mxu0 %v672
  %v4339 = vpop.f32.mrf.mxu0
  %v4340 = vadd.f32 %v350, %v4339
  %4341 = vmatmul.f32.gmra.mxu0 %v675
  %v4342 = vpop.f32.mrf.mxu0
  %v4343 = vadd.f32 %v350, %v4342
  %4344 = vmatmul.f32.gmra.mxu0 %v678
  %v4345 = vpop.f32.mrf.mxu0
  %v4346 = vadd.f32 %v350, %v4345
  %4347 = vmatmul.f32.gmra.mxu0 %v681
  %v4348 = vpop.f32.mrf.mxu0
  %v4349 = vadd.f32 %v350, %v4348
  %4350 = vmatmul.f32.gmra.mxu0 %v684
  %v4351 = vpop.f32.mrf.mxu0
  %v4352 = vadd.f32 %v350, %v4351
  %4353 = vmatmul.f32.gmra.mxu0 %v687
  %v4354 = vpop.f32.mrf.mxu0
  %v4355 = vadd.f32 %v350, %v4354
  %4356 = vmatmul.f32.gmra.mxu0 %v690
  %v4357 = vpop.f32.mrf.mxu0
  %v4358 = vadd.f32 %v350, %v4357
  %4359 = vmatmul.f32.gmra.mxu0 %v693
  %v4360 = vpop.f32.mrf.mxu0
  %v4361 = vadd.f32 %v350, %v4360
  %4362 = vmatmul.f32.gmra.mxu0 %v696
  %v4363 = vpop.f32.mrf.mxu0
  %v4364 = vadd.f32 %v350, %v4363
  %4365 = vmatmul.f32.gmra.mxu0 %v699
  %v4366 = vpop.f32.mrf.mxu0
  %v4367 = vadd.f32 %v350, %v4366
  %4368 = vmatmul.f32.gmra.mxu0 %v702
  %v4369 = vpop.f32.mrf.mxu0
  %v4370 = vadd.f32 %v350, %v4369
  %4371 = vmatmul.f32.gmra.mxu0 %v705
  %v4372 = vpop.f32.mrf.mxu0
  %v4373 = vadd.f32 %v350, %v4372
  %4374 = vmatmul.f32.gmra.mxu0 %v708
  %v4375 = vpop.f32.mrf.mxu0
  %v4376 = vadd.f32 %v350, %v4375
  %4377 = vmatmul.f32.gmra.mxu0 %v711
  %v4378 = vpop.f32.mrf.mxu0
  %v4379 = vadd.f32 %v350, %v4378
  %4380 = vmatmul.f32.gmra.mxu0 %v714
  %v4381 = vpop.f32.mrf.mxu0
  %v4382 = vadd.f32 %v350, %v4381
  %4383 = vmatmul.f32.gmra.mxu0 %v717
  %v4384 = vpop.f32.mrf.mxu0
  %v4385 = vadd.f32 %v350, %v4384
  %4386 = vmatmul.f32.gmra.mxu0 %v720
  %v4387 = vpop.f32.mrf.mxu0
  %v4388 = vadd.f32 %v350, %v4387
  %4389 = vmatmul.f32.gmra.mxu0 %v723
  %v4390 = vpop.f32.mrf.mxu0
  %v4391 = vadd.f32 %v350, %v4390
  %4392 = vmatmul.f32.gmra.mxu0 %v726
  %v4393 = vpop.f32.mrf.mxu0
  %v4394 = vadd.f32 %v350, %v4393
  %4395 = vmatmul.f32.gmra.mxu0 %v729
  %v4396 = vpop.f32.mrf.mxu0
  %v4397 = vadd.f32 %v350, %v4396
  %4398 = vmatmul.f32.gmra.mxu0 %v732
  %v4399 = vpop.f32.mrf.mxu0
  %v4400 = vadd.f32 %v350, %v4399
  %4401 = vmatmul.f32.gmra.mxu0 %v735
  %v4402 = vpop.f32.mrf.mxu0
  %v4403 = vadd.f32 %v350, %v4402
  %4404 = vmatmul.f32.gmra.mxu0 %v738
  %v4405 = vpop.f32.mrf.mxu0
  %v4406 = vadd.f32 %v350, %v4405
  %4407 = vmatmul.f32.gmra.mxu0 %v741
  %v4408 = vpop.f32.mrf.mxu0
  %v4409 = vadd.f32 %v350, %v4408
  %4410 = vmatmul.f32.gmra.mxu0 %v744
  %v4411 = vpop.f32.mrf.mxu0
  %v4412 = vadd.f32 %v350, %v4411
  %4413 = vmatmul.f32.gmra.mxu0 %v747
  %v4414 = vpop.f32.mrf.mxu0
  %v4415 = vadd.f32 %v350, %v4414
  %4416 = vmatmul.f32.gmra.mxu0 %v750
  %v4417 = vpop.f32.mrf.mxu0
  %v4418 = vadd.f32 %v350, %v4417
  %4419 = vmatmul.f32.gmra.mxu0 %v753
  %v4420 = vpop.f32.mrf.mxu0
  %v4421 = vadd.f32 %v350, %v4420
  %4422 = vmatmul.f32.gmra.mxu0 %v756
  %v4423 = vpop.f32.mrf.mxu0
  %v4424 = vadd.f32 %v350, %v4423
  %4425 = vmatmul.f32.gmra.mxu0 %v759
  %v4426 = vpop.f32.mrf.mxu0
  %v4427 = vadd.f32 %v350, %v4426
  %4428 = vmatmul.f32.gmra.mxu0 %v762
  %v4429 = vpop.f32.mrf.mxu0
  %v4430 = vadd.f32 %v350, %v4429
  %4431 = vmatmul.f32.gmra.mxu0 %v765
  %v4432 = vpop.f32.mrf.mxu0
  %v4433 = vadd.f32 %v350, %v4432
  %4434 = vmatmul.f32.gmra.mxu0 %v768
  %v4435 = vpop.f32.mrf.mxu0
  %v4436 = vadd.f32 %v350, %v4435
  %4437 = vmatmul.f32.gmra.mxu0 %v771
  %v4438 = vpop.f32.mrf.mxu0
  %v4439 = vadd.f32 %v350, %v4438
  %4440 = vmatmul.f32.gmra.mxu0 %v774
  %v4441 = vpop.f32.mrf.mxu0
  %v4442 = vadd.f32 %v350, %v4441
  %4443 = vmatmul.f32.gmra.mxu0 %v777
  %v4444 = vpop.f32.mrf.mxu0
  %v4445 = vadd.f32 %v350, %v4444
  %4446 = vmatmul.f32.gmra.mxu0 %v780
  %v4447 = vpop.f32.mrf.mxu0
  %v4448 = vadd.f32 %v350, %v4447
  %4449 = vmatmul.f32.gmra.mxu0 %v783
  %v4450 = vpop.f32.mrf.mxu0
  %v4451 = vadd.f32 %v350, %v4450
  %4452 = vmatmul.f32.gmra.mxu0 %v786
  %v4453 = vpop.f32.mrf.mxu0
  %v4454 = vadd.f32 %v350, %v4453
  %4455 = vmatmul.f32.gmra.mxu0 %v789
  %v4456 = vpop.f32.mrf.mxu0
  %v4457 = vadd.f32 %v350, %v4456
  %4458 = vmatmul.f32.gmra.mxu0 %v792
  %v4459 = vpop.f32.mrf.mxu0
  %v4460 = vadd.f32 %v350, %v4459
  %4461 = vmatmul.f32.gmra.mxu0 %v795
  %v4462 = vpop.f32.mrf.mxu0
  %v4463 = vadd.f32 %v350, %v4462
  %4464 = vmatmul.f32.gmra.mxu0 %v798
  %v4465 = vpop.f32.mrf.mxu0
  %v4466 = vadd.f32 %v350, %v4465
  %4467 = vmatmul.f32.gmra.mxu0 %v801
  %v4468 = vpop.f32.mrf.mxu0
  %v4469 = vadd.f32 %v350, %v4468
  %4470 = vmatmul.f32.gmra.mxu0 %v804
  %v4471 = vpop.f32.mrf.mxu0
  %v4472 = vadd.f32 %v350, %v4471
  %4473 = vmatmul.f32.gmra.mxu0 %v807
  %v4474 = vpop.f32.mrf.mxu0
  %v4475 = vadd.f32 %v350, %v4474
  %4476 = vmatmul.f32.gmra.mxu0 %v810
  %v4477 = vpop.f32.mrf.mxu0
  %v4478 = vadd.f32 %v350, %v4477
  %4479 = vmatmul.f32.gmra.mxu0 %v813
  %v4480 = vpop.f32.mrf.mxu0
  %v4481 = vadd.f32 %v350, %v4480
  %4482 = vmatmul.f32.gmra.mxu0 %v816
  %v4483 = vpop.f32.mrf.mxu0
  %v4484 = vadd.f32 %v350, %v4483
  %4485 = vmatmul.f32.gmra.mxu0 %v819
  %v4486 = vpop.f32.mrf.mxu0
  %v4487 = vadd.f32 %v350, %v4486
  %4488 = vmatmul.f32.gmra.mxu0 %v822
  %v4489 = vpop.f32.mrf.mxu0
  %v4490 = vadd.f32 %v350, %v4489
  %4491 = vmatmul.f32.gmra.mxu0 %v825
  %v4492 = vpop.f32.mrf.mxu0
  %v4493 = vadd.f32 %v350, %v4492
  %4494 = vmatmul.f32.gmra.mxu0 %v828
  %v4495 = vpop.f32.mrf.mxu0
  %v4496 = vadd.f32 %v350, %v4495
  %4497 = vmatmul.f32.gmra.mxu0 %v831
  %v4498 = vpop.f32.mrf.mxu0
  %v4499 = vadd.f32 %v350, %v4498
  %4500 = vmatmul.f32.gmra.mxu0 %v834
  %v4501 = vpop.f32.mrf.mxu0
  %v4502 = vadd.f32 %v350, %v4501
  %4503 = vmatmul.f32.gmra.mxu0 %v837
  %v4504 = vpop.f32.mrf.mxu0
  %v4505 = vadd.f32 %v350, %v4504
  %4506 = vmatmul.f32.gmra.mxu0 %v840
  %v4507 = vpop.f32.mrf.mxu0
  %v4508 = vadd.f32 %v350, %v4507
  %4509 = vmatmul.f32.gmra.mxu0 %v843
  %v4510 = vpop.f32.mrf.mxu0
  %v4511 = vadd.f32 %v350, %v4510
  %4512 = vmatmul.f32.gmra.mxu0 %v846
  %v4513 = vpop.f32.mrf.mxu0
  %v4514 = vadd.f32 %v350, %v4513
  %4515 = vmatmul.f32.gmra.mxu0 %v849
  %v4516 = vpop.f32.mrf.mxu0
  %v4517 = vadd.f32 %v350, %v4516
  %4518 = vmatmul.f32.gmra.mxu0 %v852
  %v4519 = vpop.f32.mrf.mxu0
  %v4520 = vadd.f32 %v350, %v4519
  %4521 = vmatmul.f32.gmra.mxu0 %v855
  %v4522 = vpop.f32.mrf.mxu0
  %v4523 = vadd.f32 %v350, %v4522
  %4524 = vmatmul.f32.gmra.mxu0 %v858
  %v4525 = vpop.f32.mrf.mxu0
  %v4526 = vadd.f32 %v350, %v4525
  %4527 = vmatmul.f32.gmra.mxu0 %v861
  %v4528 = vpop.f32.mrf.mxu0
  %v4529 = vadd.f32 %v350, %v4528
  %4530 = vmatmul.f32.gmra.mxu0 %v864
  %v4531 = vpop.f32.mrf.mxu0
  %v4532 = vadd.f32 %v350, %v4531
  %4533 = vmatmul.f32.gmra.mxu0 %v867
  %v4534 = vpop.f32.mrf.mxu0
  %v4535 = vadd.f32 %v350, %v4534
  %4536 = vmatmul.f32.gmra.mxu0 %v870
  %v4537 = vpop.f32.mrf.mxu0
  %v4538 = vadd.f32 %v350, %v4537
  %4539 = vmatmul.f32.gmra.mxu0 %v873
  %v4540 = vpop.f32.mrf.mxu0
  %v4541 = vadd.f32 %v350, %v4540
  %4542 = vmatmul.f32.gmra.mxu0 %v876
  %v4543 = vpop.f32.mrf.mxu0
  %v4544 = vadd.f32 %v350, %v4543
  %4545 = vmatmul.f32.gmra.mxu0 %v879
  %v4546 = vpop.f32.mrf.mxu0
  %v4547 = vadd.f32 %v350, %v4546
  %4548 = vmatmul.f32.gmra.mxu0 %v882
  %v4549 = vpop.f32.mrf.mxu0
  %v4550 = vadd.f32 %v350, %v4549
  %4551 = vmatmul.f32.gmra.mxu0 %v885
  %v4552 = vpop.f32.mrf.mxu0
  %v4553 = vadd.f32 %v350, %v4552
  %4554 = vmatmul.f32.gmra.mxu0 %v888
  %v4555 = vpop.f32.mrf.mxu0
  %v4556 = vadd.f32 %v350, %v4555
  %4557 = vmatmul.f32.gmra.mxu0 %v891
  %v4558 = vpop.f32.mrf.mxu0
  %v4559 = vadd.f32 %v350, %v4558
  %4560 = vmatmul.f32.gmra.mxu0 %v894
  %v4561 = vpop.f32.mrf.mxu0
  %v4562 = vadd.f32 %v350, %v4561
  %4563 = vmatmul.f32.gmra.mxu0 %v897
  %v4564 = vpop.f32.mrf.mxu0
  %v4565 = vadd.f32 %v350, %v4564
  %4566 = vmatmul.f32.gmra.mxu0 %v900
  %v4567 = vpop.f32.mrf.mxu0
  %v4568 = vadd.f32 %v350, %v4567
  %4569 = vmatmul.f32.gmra.mxu0 %v903
  %v4570 = vpop.f32.mrf.mxu0
  %v4571 = vadd.f32 %v350, %v4570
  %4572 = vmatmul.f32.gmra.mxu0 %v906
  %v4573 = vpop.f32.mrf.mxu0
  %v4574 = vadd.f32 %v350, %v4573
  %4575 = vmatmul.f32.gmra.mxu0 %v909
  %v4576 = vpop.f32.mrf.mxu0
  %v4577 = vadd.f32 %v350, %v4576
  %4578 = vmatmul.f32.gmra.mxu0 %v912
  %v4579 = vpop.f32.mrf.mxu0
  %v4580 = vadd.f32 %v350, %v4579
  %4581 = vmatmul.f32.gmra.mxu0 %v915
  %v4582 = vpop.f32.mrf.mxu0
  %v4583 = vadd.f32 %v350, %v4582
  %4584 = vmatmul.f32.gmra.mxu0 %v918
  %v4585 = vpop.f32.mrf.mxu0
  %v4586 = vadd.f32 %v350, %v4585
  %4587 = vmatmul.f32.gmra.mxu0 %v921
  %v4588 = vpop.f32.mrf.mxu0
  %v4589 = vadd.f32 %v350, %v4588
  %4590 = vmatmul.f32.gmra.mxu0 %v924
  %v4591 = vpop.f32.mrf.mxu0
  %v4592 = vadd.f32 %v350, %v4591
  %4593 = vmatmul.f32.gmra.mxu0 %v927
  %v4594 = vpop.f32.mrf.mxu0
  %v4595 = vadd.f32 %v350, %v4594
  %4596 = vmatmul.f32.gmra.mxu0 %v930
  %v4597 = vpop.f32.mrf.mxu0
  %v4598 = vadd.f32 %v350, %v4597
  %4599 = vmatmul.f32.gmra.mxu0 %v933
  %v4600 = vpop.f32.mrf.mxu0
  %v4601 = vadd.f32 %v350, %v4600
  %4602 = vmatmul.f32.gmra.mxu0 %v936
  %v4603 = vpop.f32.mrf.mxu0
  %v4604 = vadd.f32 %v350, %v4603
  %4605 = vmatmul.f32.gmra.mxu0 %v939
  %v4606 = vpop.f32.mrf.mxu0
  %v4607 = vadd.f32 %v350, %v4606
  %4608 = vmatmul.f32.gmra.mxu0 %v942
  %v4609 = vpop.f32.mrf.mxu0
  %v4610 = vadd.f32 %v350, %v4609
  %4611 = vmatmul.f32.gmra.mxu0 %v945
  %v4612 = vpop.f32.mrf.mxu0
  %v4613 = vadd.f32 %v350, %v4612
  %4614 = vmatmul.f32.gmra.mxu0 %v948
  %v4615 = vpop.f32.mrf.mxu0
  %v4616 = vadd.f32 %v350, %v4615
  %4617 = vmatmul.f32.gmra.mxu0 %v951
  %v4618 = vpop.f32.mrf.mxu0
  %v4619 = vadd.f32 %v350, %v4618
  %4620 = vmatmul.f32.gmra.mxu0 %v954
  %v4621 = vpop.f32.mrf.mxu0
  %v4622 = vadd.f32 %v350, %v4621
  %4623 = vmatmul.f32.gmra.mxu0 %v957
  %v4624 = vpop.f32.mrf.mxu0
  %v4625 = vadd.f32 %v350, %v4624
  %4626 = vmatmul.f32.gmra.mxu0 %v960
  %v4627 = vpop.f32.mrf.mxu0
  %v4628 = vadd.f32 %v350, %v4627
  %4629 = vmatmul.f32.gmra.mxu0 %v963
  %v4630 = vpop.f32.mrf.mxu0
  %v4631 = vadd.f32 %v350, %v4630
  %4632 = vmatmul.f32.gmra.mxu0 %v966
  %v4633 = vpop.f32.mrf.mxu0
  %v4634 = vadd.f32 %v350, %v4633
  %4635 = vmatmul.f32.gmra.mxu0 %v969
  %v4636 = vpop.f32.mrf.mxu0
  %v4637 = vadd.f32 %v350, %v4636
  %4638 = vmatmul.f32.gmra.mxu0 %v972
  %v4639 = vpop.f32.mrf.mxu0
  %v4640 = vadd.f32 %v350, %v4639
  %4641 = vmatmul.f32.gmra.mxu0 %v975
  %v4642 = vpop.f32.mrf.mxu0
  %v4643 = vadd.f32 %v350, %v4642
  %4644 = vmatmul.f32.gmra.mxu0 %v978
  %v4645 = vpop.f32.mrf.mxu0
  %v4646 = vadd.f32 %v350, %v4645
  %4647 = vmatmul.f32.gmra.mxu0 %v981
  %v4648 = vpop.f32.mrf.mxu0
  %v4649 = vadd.f32 %v350, %v4648
  %4650 = vmatmul.f32.gmra.mxu0 %v984
  %v4651 = vpop.f32.mrf.mxu0
  %v4652 = vadd.f32 %v350, %v4651
  %4653 = vmatmul.f32.gmra.mxu0 %v987
  %v4654 = vpop.f32.mrf.mxu0
  %v4655 = vadd.f32 %v350, %v4654
  %4656 = vmatmul.f32.gmra.mxu0 %v990
  %v4657 = vpop.f32.mrf.mxu0
  %v4658 = vadd.f32 %v350, %v4657
  %4659 = vmatmul.f32.gmra.mxu0 %v993
  %v4660 = vpop.f32.mrf.mxu0
  %v4661 = vadd.f32 %v350, %v4660
  %4662 = vmatmul.f32.gmra.mxu0 %v996
  %v4663 = vpop.f32.mrf.mxu0
  %v4664 = vadd.f32 %v350, %v4663
  %4665 = vmatmul.f32.gmra.mxu0 %v999
  %v4666 = vpop.f32.mrf.mxu0
  %v4667 = vadd.f32 %v350, %v4666
  %4668 = vmatmul.f32.gmra.mxu0 %v1002
  %v4669 = vpop.f32.mrf.mxu0
  %v4670 = vadd.f32 %v350, %v4669
  %4671 = vmatmul.f32.gmra.mxu0 %v1005
  %v4672 = vpop.f32.mrf.mxu0
  %v4673 = vadd.f32 %v350, %v4672
  %4674 = vmatmul.f32.gmra.mxu0 %v1008
  %v4675 = vpop.f32.mrf.mxu0
  %v4676 = vadd.f32 %v350, %v4675
  %4677 = vmatmul.f32.gmra.mxu0 %v1011
  %v4678 = vpop.f32.mrf.mxu0
  %v4679 = vadd.f32 %v350, %v4678
  %4680 = vmatmul.f32.gmra.mxu0 %v1014
  %v4681 = vpop.f32.mrf.mxu0
  %v4682 = vadd.f32 %v350, %v4681
  %4683 = vmatmul.f32.gmra.mxu0 %v1017
  %v4684 = vpop.f32.mrf.mxu0
  %v4685 = vadd.f32 %v350, %v4684
  %4686 = vmatmul.f32.gmra.mxu0 %v1020
  %v4687 = vpop.f32.mrf.mxu0
  %v4688 = vadd.f32 %v350, %v4687
  %4689 = vmatmul.f32.gmra.mxu0 %v1023
  %v4690 = vpop.f32.mrf.mxu0
  %v4691 = vadd.f32 %v350, %v4690
  %4692 = vmatmul.f32.gmra.mxu0 %v1026
  %v4693 = vpop.f32.mrf.mxu0
  %v4694 = vadd.f32 %v350, %v4693
  %4695 = vmatmul.f32.gmra.mxu0 %v1029
  %v4696 = vpop.f32.mrf.mxu0
  %v4697 = vadd.f32 %v350, %v4696
  %4698 = vmatmul.f32.gmra.mxu0 %v1032
  %v4699 = vpop.f32.mrf.mxu0
  %v4700 = vadd.f32 %v350, %v4699
  %4701 = vmatmul.f32.gmra.mxu0 %v1035
  %v4702 = vpop.f32.mrf.mxu0
  %v4703 = vadd.f32 %v350, %v4702
  %4704 = vmatmul.f32.gmra.mxu0 %v1038
  %v4705 = vpop.f32.mrf.mxu0
  %v4706 = vadd.f32 %v350, %v4705
  %4707 = vmatmul.f32.gmra.mxu0 %v1041
  %v4708 = vpop.f32.mrf.mxu0
  %v4709 = vadd.f32 %v350, %v4708
  %4710 = vmatmul.f32.gmra.mxu0 %v1044
  %v4711 = vpop.f32.mrf.mxu0
  %v4712 = vadd.f32 %v350, %v4711
  %4713 = vmatmul.f32.gmra.mxu0 %v1047
  %v4714 = vpop.f32.mrf.mxu0
  %v4715 = vadd.f32 %v350, %v4714
  %4716 = vmatmul.f32.gmra.mxu0 %v1050
  %v4717 = vpop.f32.mrf.mxu0
  %v4718 = vadd.f32 %v350, %v4717
  %4719 = vmatmul.f32.gmra.mxu0 %v1053
  %v4720 = vpop.f32.mrf.mxu0
  %v4721 = vadd.f32 %v350, %v4720
  %4722 = vmatmul.f32.gmra.mxu0 %v1056
  %v4723 = vpop.f32.mrf.mxu0
  %v4724 = vadd.f32 %v350, %v4723
  %4725 = vmatmul.f32.gmra.mxu0 %v1059
  %v4726 = vpop.f32.mrf.mxu0
  %v4727 = vadd.f32 %v350, %v4726
  %4728 = vmatmul.f32.gmra.mxu0 %v1062
  %v4729 = vpop.f32.mrf.mxu0
  %v4730 = vadd.f32 %v350, %v4729
  %4731 = vmatmul.f32.gmra.mxu0 %v1065
  %v4732 = vpop.f32.mrf.mxu0
  %v4733 = vadd.f32 %v350, %v4732
  %4734 = vmatmul.f32.gmra.mxu0 %v1068
  %v4735 = vpop.f32.mrf.mxu0
  %v4736 = vadd.f32 %v350, %v4735
  %4737 = vmatmul.f32.gmra.mxu0 %v1071
  %v4738 = vpop.f32.mrf.mxu0
  %v4739 = vadd.f32 %v350, %v4738
  %4740 = vmatmul.f32.gmra.mxu0 %v1074
  %v4741 = vpop.f32.mrf.mxu0
  %v4742 = vadd.f32 %v350, %v4741
  %4743 = vmatmul.f32.gmra.mxu0 %v1077
  %v4744 = vpop.f32.mrf.mxu0
  %v4745 = vadd.f32 %v350, %v4744
  %4746 = vmatmul.f32.gmra.mxu0 %v1080
  %v4747 = vpop.f32.mrf.mxu0
  %v4748 = vadd.f32 %v350, %v4747
  %4749 = vmatmul.f32.gmra.mxu0 %v1083
  %v4750 = vpop.f32.mrf.mxu0
  %v4751 = vadd.f32 %v350, %v4750
  %4752 = vmatmul.f32.gmra.mxu0 %v1086
  %v4753 = vpop.f32.mrf.mxu0
  %v4754 = vadd.f32 %v350, %v4753
  %4755 = vmatmul.f32.gmra.mxu0 %v1089
  %v4756 = vpop.f32.mrf.mxu0
  %v4757 = vadd.f32 %v350, %v4756
  %4758 = vmatmul.f32.gmra.mxu0 %v1092
  %v4759 = vpop.f32.mrf.mxu0
  %v4760 = vadd.f32 %v350, %v4759
  %4761 = vmatmul.f32.gmra.mxu0 %v1095
  %v4762 = vpop.f32.mrf.mxu0
  %v4763 = vadd.f32 %v350, %v4762
  %4764 = vmatmul.f32.gmra.mxu0 %v1098
  %v4765 = vpop.f32.mrf.mxu0
  %v4766 = vadd.f32 %v350, %v4765
  %4767 = vmatmul.f32.gmra.mxu0 %v1101
  %v4768 = vpop.f32.mrf.mxu0
  %v4769 = vadd.f32 %v350, %v4768
  %4770 = vmatmul.f32.gmra.mxu0 %v1104
  %v4771 = vpop.f32.mrf.mxu0
  %v4772 = vadd.f32 %v350, %v4771
  %4773 = vmatmul.f32.gmra.mxu0 %v1107
  %v4774 = vpop.f32.mrf.mxu0
  %v4775 = vadd.f32 %v350, %v4774
  %4776 = vmatmul.f32.gmra.mxu0 %v1110
  %v4777 = vpop.f32.mrf.mxu0
  %v4778 = vadd.f32 %v350, %v4777
  %4779 = vmatmul.f32.gmra.mxu0 %v1113
  %v4780 = vpop.f32.mrf.mxu0
  %v4781 = vadd.f32 %v350, %v4780
  %4782 = vmatmul.f32.gmra.mxu0 %v1116
  %v4783 = vpop.f32.mrf.mxu0
  %v4784 = vadd.f32 %v350, %v4783
  %4785 = vmatmul.f32.gmra.mxu0 %v1119
  %v4786 = vpop.f32.mrf.mxu0
  %v4787 = vadd.f32 %v350, %v4786
  %4788 = vmatmul.f32.gmra.mxu0 %v1122
  %v4789 = vpop.f32.mrf.mxu0
  %v4790 = vadd.f32 %v350, %v4789
  %4791 = vmatmul.f32.gmra.mxu0 %v1125
  %v4792 = vpop.f32.mrf.mxu0
  %v4793 = vadd.f32 %v350, %v4792
  %4794 = vmatmul.f32.gmra.mxu0 %v1128
  %v4795 = vpop.f32.mrf.mxu0
  %v4796 = vadd.f32 %v350, %v4795
  %4797 = vmatmul.f32.gmra.mxu0 %v1131
  %v4798 = vpop.f32.mrf.mxu0
  %v4799 = vadd.f32 %v350, %v4798
  %4800 = vmatmul.f32.gmra.mxu0 %v1134
  %v4801 = vpop.f32.mrf.mxu0
  %v4802 = vadd.f32 %v350, %v4801
  %4803 = vmatmul.f32.gmra.mxu0 %v1137
  %v4804 = vpop.f32.mrf.mxu0
  %v4805 = vadd.f32 %v350, %v4804
  %4806 = vmatmul.f32.gmra.mxu0 %v1140
  %v4807 = vpop.f32.mrf.mxu0
  %v4808 = vadd.f32 %v350, %v4807
  %4809 = vmatmul.f32.gmra.mxu0 %v1143
  %v4810 = vpop.f32.mrf.mxu0
  %v4811 = vadd.f32 %v350, %v4810
  %4812 = vmatmul.f32.gmra.mxu0 %v1146
  %v4813 = vpop.f32.mrf.mxu0
  %v4814 = vadd.f32 %v350, %v4813
  %4815 = vmatmul.f32.gmra.mxu0 %v1149
  %v4816 = vpop.f32.mrf.mxu0
  %v4817 = vadd.f32 %v350, %v4816
  %4818 = vmatmul.f32.gmra.mxu0 %v1152
  %v4819 = vpop.f32.mrf.mxu0
  %v4820 = vadd.f32 %v350, %v4819
  %4821 = vmatmul.f32.gmra.mxu0 %v1155
  %v4822 = vpop.f32.mrf.mxu0
  %v4823 = vadd.f32 %v350, %v4822
  %4824 = vmatmul.f32.gmra.mxu0 %v1158
  %v4825 = vpop.f32.mrf.mxu0
  %v4826 = vadd.f32 %v350, %v4825
  %4827 = vmatmul.f32.gmra.mxu0 %v1161
  %v4828 = vpop.f32.mrf.mxu0
  %v4829 = vadd.f32 %v350, %v4828
  %4830 = vmatmul.f32.gmra.mxu0 %v1164
  %v4831 = vpop.f32.mrf.mxu0
  %v4832 = vadd.f32 %v350, %v4831
  %4833 = vmatmul.f32.gmra.mxu0 %v1167
  %v4834 = vpop.f32.mrf.mxu0
  %v4835 = vadd.f32 %v350, %v4834
  %4836 = vmatmul.f32.gmra.mxu0 %v1170
  %v4837 = vpop.f32.mrf.mxu0
  %v4838 = vadd.f32 %v350, %v4837
  %4839 = vmatmul.f32.gmra.mxu0 %v1173
  %v4840 = vpop.f32.mrf.mxu0
  %v4841 = vadd.f32 %v350, %v4840
  %4842 = vmatmul.f32.gmra.mxu0 %v1176
  %v4843 = vpop.f32.mrf.mxu0
  %v4844 = vadd.f32 %v350, %v4843
  %4845 = vmatmul.f32.gmra.mxu0 %v1179
  %v4846 = vpop.f32.mrf.mxu0
  %v4847 = vadd.f32 %v350, %v4846
  %4848 = vmatmul.f32.gmra.mxu0 %v1182
  %v4849 = vpop.f32.mrf.mxu0
  %v4850 = vadd.f32 %v350, %v4849
  %4851 = vmatmul.f32.gmra.mxu0 %v1185
  %v4852 = vpop.f32.mrf.mxu0
  %v4853 = vadd.f32 %v350, %v4852
  %4854 = vmatmul.f32.gmra.mxu0 %v1188
  %v4855 = vpop.f32.mrf.mxu0
  %v4856 = vadd.f32 %v350, %v4855
  %4857 = vmatmul.f32.gmra.mxu0 %v1191
  %v4858 = vpop.f32.mrf.mxu0
  %v4859 = vadd.f32 %v350, %v4858
  %4860 = vmatmul.f32.gmra.mxu0 %v1194
  %v4861 = vpop.f32.mrf.mxu0
  %v4862 = vadd.f32 %v350, %v4861
  %4863 = vmatmul.f32.gmra.mxu0 %v1197
  %v4864 = vpop.f32.mrf.mxu0
  %v4865 = vadd.f32 %v350, %v4864
  %4866 = vmatmul.f32.gmra.mxu0 %v1200
  %v4867 = vpop.f32.mrf.mxu0
  %v4868 = vadd.f32 %v350, %v4867
  %4869 = vmatmul.f32.gmra.mxu0 %v1203
  %v4870 = vpop.f32.mrf.mxu0
  %v4871 = vadd.f32 %v350, %v4870
  %4872 = vmatmul.f32.gmra.mxu0 %v1206
  %v4873 = vpop.f32.mrf.mxu0
  %v4874 = vadd.f32 %v350, %v4873
  %4875 = vmatmul.f32.gmra.mxu0 %v1209
  %v4876 = vpop.f32.mrf.mxu0
  %v4877 = vadd.f32 %v350, %v4876
  %4878 = vmatmul.f32.gmra.mxu0 %v1212
  %v4879 = vpop.f32.mrf.mxu0
  %v4880 = vadd.f32 %v350, %v4879
  %4881 = vmatmul.f32.gmra.mxu0 %v1215
  %v4882 = vpop.f32.mrf.mxu0
  %v4883 = vadd.f32 %v350, %v4882
  %4884 = vmatmul.f32.gmra.mxu0 %v1218
  %v4885 = vpop.f32.mrf.mxu0
  %v4886 = vadd.f32 %v350, %v4885
  %4887 = vmatmul.f32.gmra.mxu0 %v1221
  %v4888 = vpop.f32.mrf.mxu0
  %v4889 = vadd.f32 %v350, %v4888
  %4890 = vmatmul.f32.gmra.mxu0 %v1224
  %v4891 = vpop.f32.mrf.mxu0
  %v4892 = vadd.f32 %v350, %v4891
  %4893 = vmatmul.f32.gmra.mxu0 %v1227
  %v4894 = vpop.f32.mrf.mxu0
  %v4895 = vadd.f32 %v350, %v4894
  %4896 = vmatmul.f32.gmra.mxu0 %v1230
  %v4897 = vpop.f32.mrf.mxu0
  %v4898 = vadd.f32 %v350, %v4897
  %4899 = vmatmul.f32.gmra.mxu0 %v1233
  %v4900 = vpop.f32.mrf.mxu0
  %v4901 = vadd.f32 %v350, %v4900
  %4902 = vmatmul.f32.gmra.mxu0 %v1236
  %v4903 = vpop.f32.mrf.mxu0
  %v4904 = vadd.f32 %v350, %v4903
  %4905 = vmatmul.f32.gmra.mxu0 %v1239
  %v4906 = vpop.f32.mrf.mxu0
  %v4907 = vadd.f32 %v350, %v4906
  %4908 = vmatmul.f32.gmra.mxu0 %v1242
  %v4909 = vpop.f32.mrf.mxu0
  %v4910 = vadd.f32 %v350, %v4909
  %4911 = vmatmul.f32.gmra.mxu0 %v1245
  %v4912 = vpop.f32.mrf.mxu0
  %v4913 = vadd.f32 %v350, %v4912
  %4914 = vmatmul.f32.gmra.mxu0 %v1248
  %v4915 = vpop.f32.mrf.mxu0
  %v4916 = vadd.f32 %v350, %v4915
  %4917 = vmatmul.f32.gmra.mxu0 %v1251
  %v4918 = vpop.f32.mrf.mxu0
  %v4919 = vadd.f32 %v350, %v4918
  %4920 = vmatmul.f32.gmra.mxu0 %v1254
  %v4921 = vpop.f32.mrf.mxu0
  %v4922 = vadd.f32 %v350, %v4921
  %4923 = vdwg.mxu0
  %4924 = vst [vmem:[#allocation2] sm:$0xff] %v1274
  %4925 = vst [vmem:[#allocation2 + $0x8] sm:$0xff] %v2191
  %4926 = vst [vmem:[#allocation2 + $0x10] sm:$0xff] %v3108
  %4927 = vst [vmem:[#allocation2 + $0x18] sm:$0xff] %v4025
  %4928 = vst [vmem:[#allocation2 + $0x20] sm:$0xff] %v1277
  %4929 = vst [vmem:[#allocation2 + $0x28] sm:$0xff] %v2194
  %4930 = vst [vmem:[#allocation2 + $0x30] sm:$0xff] %v3111
  %4931 = vst [vmem:[#allocation2 + $0x38] sm:$0xff] %v4028
  %4932 = vst [vmem:[#allocation2 + $0x40] sm:$0xff] %v1280
  %4933 = vst [vmem:[#allocation2 + $0x48] sm:$0xff] %v2197
  %4934 = vst [vmem:[#allocation2 + $0x50] sm:$0xff] %v3114
  %4935 = vst [vmem:[#allocation2 + $0x58] sm:$0xff] %v4031
  %4936 = vst [vmem:[#allocation2 + $0x60] sm:$0xff] %v1283
  %4937 = vst [vmem:[#allocation2 + $0x68] sm:$0xff] %v2200
  %4938 = vst [vmem:[#allocation2 + $0x70] sm:$0xff] %v3117
  %4939 = vst [vmem:[#allocation2 + $0x78] sm:$0xff] %v4034
  %4940 = vst [vmem:[#allocation2 + $0x80] sm:$0xff] %v1286
  %4941 = vst [vmem:[#allocation2 + $0x88] sm:$0xff] %v2203
  %4942 = vst [vmem:[#allocation2 + $0x90] sm:$0xff] %v3120
  %4943 = vst [vmem:[#allocation2 + $0x98] sm:$0xff] %v4037
  %4944 = vst [vmem:[#allocation2 + $0xa0] sm:$0xff] %v1289
  %4945 = vst [vmem:[#allocation2 + $0xa8] sm:$0xff] %v2206
  %4946 = vst [vmem:[#allocation2 + $0xb0] sm:$0xff] %v3123
  %4947 = vst [vmem:[#allocation2 + $0xb8] sm:$0xff] %v4040
  %4948 = vst [vmem:[#allocation2 + $0xc0] sm:$0xff] %v1292
  %4949 = vst [vmem:[#allocation2 + $0xc8] sm:$0xff] %v2209
  %4950 = vst [vmem:[#allocation2 + $0xd0] sm:$0xff] %v3126
  %4951 = vst [vmem:[#allocation2 + $0xd8] sm:$0xff] %v4043
  %4952 = vst [vmem:[#allocation2 + $0xe0] sm:$0xff] %v1295
  %4953 = vst [vmem:[#allocation2 + $0xe8] sm:$0xff] %v2212
  %4954 = vst [vmem:[#allocation2 + $0xf0] sm:$0xff] %v3129
  %4955 = vst [vmem:[#allocation2 + $0xf8] sm:$0xff] %v4046
  %4956 = vst [vmem:[#allocation2 + $0x100] sm:$0xff] %v1298
  %4957 = vst [vmem:[#allocation2 + $0x108] sm:$0xff] %v2215
  %4958 = vst [vmem:[#allocation2 + $0x110] sm:$0xff] %v3132
  %4959 = vst [vmem:[#allocation2 + $0x118] sm:$0xff] %v4049
  %4960 = vst [vmem:[#allocation2 + $0x120] sm:$0xff] %v1301
  %4961 = vst [vmem:[#allocation2 + $0x128] sm:$0xff] %v2218
  %4962 = vst [vmem:[#allocation2 + $0x130] sm:$0xff] %v3135
  %4963 = vst [vmem:[#allocation2 + $0x138] sm:$0xff] %v4052
  %4964 = vst [vmem:[#allocation2 + $0x140] sm:$0xff] %v1304
  %4965 = vst [vmem:[#allocation2 + $0x148] sm:$0xff] %v2221
  %4966 = vst [vmem:[#allocation2 + $0x150] sm:$0xff] %v3138
  %4967 = vst [vmem:[#allocation2 + $0x158] sm:$0xff] %v4055
  %4968 = vst [vmem:[#allocation2 + $0x160] sm:$0xff] %v1307
  %4969 = vst [vmem:[#allocation2 + $0x168] sm:$0xff] %v2224
  %4970 = vst [vmem:[#allocation2 + $0x170] sm:$0xff] %v3141
  %4971 = vst [vmem:[#allocation2 + $0x178] sm:$0xff] %v4058
  %4972 = vst [vmem:[#allocation2 + $0x180] sm:$0xff] %v1310
  %4973 = vst [vmem:[#allocation2 + $0x188] sm:$0xff] %v2227
  %4974 = vst [vmem:[#allocation2 + $0x190] sm:$0xff] %v3144
  %4975 = vst [vmem:[#allocation2 + $0x198] sm:$0xff] %v4061
  %4976 = vst [vmem:[#allocation2 + $0x1a0] sm:$0xff] %v1313
  %4977 = vst [vmem:[#allocation2 + $0x1a8] sm:$0xff] %v2230
  %4978 = vst [vmem:[#allocation2 + $0x1b0] sm:$0xff] %v3147
  %4979 = vst [vmem:[#allocation2 + $0x1b8] sm:$0xff] %v4064
  %4980 = vst [vmem:[#allocation2 + $0x1c0] sm:$0xff] %v1316
  %4981 = vst [vmem:[#allocation2 + $0x1c8] sm:$0xff] %v2233
  %4982 = vst [vmem:[#allocation2 + $0x1d0] sm:$0xff] %v3150
  %4983 = vst [vmem:[#allocation2 + $0x1d8] sm:$0xff] %v4067
  %4984 = vst [vmem:[#allocation2 + $0x1e0] sm:$0xff] %v1319
  %4985 = vst [vmem:[#allocation2 + $0x1e8] sm:$0xff] %v2236
  %4986 = vst [vmem:[#allocation2 + $0x1f0] sm:$0xff] %v3153
  %4987 = vst [vmem:[#allocation2 + $0x1f8] sm:$0xff] %v4070
  %4988 = vst [vmem:[#allocation2 + $0x200] sm:$0xff] %v1322
  %4989 = vst [vmem:[#allocation2 + $0x208] sm:$0xff] %v2239
  %4990 = vst [vmem:[#allocation2 + $0x210] sm:$0xff] %v3156
  %4991 = vst [vmem:[#allocation2 + $0x218] sm:$0xff] %v4073
  %4992 = vst [vmem:[#allocation2 + $0x220] sm:$0xff] %v1325
  %4993 = vst [vmem:[#allocation2 + $0x228] sm:$0xff] %v2242
  %4994 = vst [vmem:[#allocation2 + $0x230] sm:$0xff] %v3159
  %4995 = vst [vmem:[#allocation2 + $0x238] sm:$0xff] %v4076
  %4996 = vst [vmem:[#allocation2 + $0x240] sm:$0xff] %v1328
  %4997 = vst [vmem:[#allocation2 + $0x248] sm:$0xff] %v2245
  %4998 = vst [vmem:[#allocation2 + $0x250] sm:$0xff] %v3162
  %4999 = vst [vmem:[#allocation2 + $0x258] sm:$0xff] %v4079
  %5000 = vst [vmem:[#allocation2 + $0x260] sm:$0xff] %v1331
  %5001 = vst [vmem:[#allocation2 + $0x268] sm:$0xff] %v2248
  %5002 = vst [vmem:[#allocation2 + $0x270] sm:$0xff] %v3165
  %5003 = vst [vmem:[#allocation2 + $0x278] sm:$0xff] %v4082
  %5004 = vst [vmem:[#allocation2 + $0x280] sm:$0xff] %v1334
  %5005 = vst [vmem:[#allocation2 + $0x288] sm:$0xff] %v2251
  %5006 = vst [vmem:[#allocation2 + $0x290] sm:$0xff] %v3168
  %5007 = vst [vmem:[#allocation2 + $0x298] sm:$0xff] %v4085
  %5008 = vst [vmem:[#allocation2 + $0x2a0] sm:$0xff] %v1337
  %5009 = vst [vmem:[#allocation2 + $0x2a8] sm:$0xff] %v2254
  %5010 = vst [vmem:[#allocation2 + $0x2b0] sm:$0xff] %v3171
  %5011 = vst [vmem:[#allocation2 + $0x2b8] sm:$0xff] %v4088
  %5012 = vst [vmem:[#allocation2 + $0x2c0] sm:$0xff] %v1340
  %5013 = vst [vmem:[#allocation2 + $0x2c8] sm:$0xff] %v2257
  %5014 = vst [vmem:[#allocation2 + $0x2d0] sm:$0xff] %v3174
  %5015 = vst [vmem:[#allocation2 + $0x2d8] sm:$0xff] %v4091
  %5016 = vst [vmem:[#allocation2 + $0x2e0] sm:$0xff] %v1343
  %5017 = vst [vmem:[#allocation2 + $0x2e8] sm:$0xff] %v2260
  %5018 = vst [vmem:[#allocation2 + $0x2f0] sm:$0xff] %v3177
  %5019 = vst [vmem:[#allocation2 + $0x2f8] sm:$0xff] %v4094
  %5020 = vst [vmem:[#allocation2 + $0x300] sm:$0xff] %v1346
  %5021 = vst [vmem:[#allocation2 + $0x308] sm:$0xff] %v2263
  %5022 = vst [vmem:[#allocation2 + $0x310] sm:$0xff] %v3180
  %5023 = vst [vmem:[#allocation2 + $0x318] sm:$0xff] %v4097
  %5024 = vst [vmem:[#allocation2 + $0x320] sm:$0xff] %v1349
  %5025 = vst [vmem:[#allocation2 + $0x328] sm:$0xff] %v2266
  %5026 = vst [vmem:[#allocation2 + $0x330] sm:$0xff] %v3183
  %5027 = vst [vmem:[#allocation2 + $0x338] sm:$0xff] %v4100
  %5028 = vst [vmem:[#allocation2 + $0x340] sm:$0xff] %v1352
  %5029 = vst [vmem:[#allocation2 + $0x348] sm:$0xff] %v2269
  %5030 = vst [vmem:[#allocation2 + $0x350] sm:$0xff] %v3186
  %5031 = vst [vmem:[#allocation2 + $0x358] sm:$0xff] %v4103
  %5032 = vst [vmem:[#allocation2 + $0x360] sm:$0xff] %v1355
  %5033 = vst [vmem:[#allocation2 + $0x368] sm:$0xff] %v2272
  %5034 = vst [vmem:[#allocation2 + $0x370] sm:$0xff] %v3189
  %5035 = vst [vmem:[#allocation2 + $0x378] sm:$0xff] %v4106
  %5036 = vst [vmem:[#allocation2 + $0x380] sm:$0xff] %v1358
  %5037 = vst [vmem:[#allocation2 + $0x388] sm:$0xff] %v2275
  %5038 = vst [vmem:[#allocation2 + $0x390] sm:$0xff] %v3192
  %5039 = vst [vmem:[#allocation2 + $0x398] sm:$0xff] %v4109
  %5040 = vst [vmem:[#allocation2 + $0x3a0] sm:$0xff] %v1361
  %5041 = vst [vmem:[#allocation2 + $0x3a8] sm:$0xff] %v2278
  %5042 = vst [vmem:[#allocation2 + $0x3b0] sm:$0xff] %v3195
  %5043 = vst [vmem:[#allocation2 + $0x3b8] sm:$0xff] %v4112
  %5044 = vst [vmem:[#allocation2 + $0x3c0] sm:$0xff] %v1364
  %5045 = vst [vmem:[#allocation2 + $0x3c8] sm:$0xff] %v2281
  %5046 = vst [vmem:[#allocation2 + $0x3d0] sm:$0xff] %v3198
  %5047 = vst [vmem:[#allocation2 + $0x3d8] sm:$0xff] %v4115
  %5048 = vst [vmem:[#allocation2 + $0x3e0] sm:$0xff] %v1367
  %5049 = vst [vmem:[#allocation2 + $0x3e8] sm:$0xff] %v2284
  %5050 = vst [vmem:[#allocation2 + $0x3f0] sm:$0xff] %v3201
  %5051 = vst [vmem:[#allocation2 + $0x3f8] sm:$0xff] %v4118
  %5052 = vst [vmem:[#allocation2 + $0x400] sm:$0xff] %v1370
  %5053 = vst [vmem:[#allocation2 + $0x408] sm:$0xff] %v2287
  %5054 = vst [vmem:[#allocation2 + $0x410] sm:$0xff] %v3204
  %5055 = vst [vmem:[#allocation2 + $0x418] sm:$0xff] %v4121
  %5056 = vst [vmem:[#allocation2 + $0x420] sm:$0xff] %v1373
  %5057 = vst [vmem:[#allocation2 + $0x428] sm:$0xff] %v2290
  %5058 = vst [vmem:[#allocation2 + $0x430] sm:$0xff] %v3207
  %5059 = vst [vmem:[#allocation2 + $0x438] sm:$0xff] %v4124
  %5060 = vst [vmem:[#allocation2 + $0x440] sm:$0xff] %v1376
  %5061 = vst [vmem:[#allocation2 + $0x448] sm:$0xff] %v2293
  %5062 = vst [vmem:[#allocation2 + $0x450] sm:$0xff] %v3210
  %5063 = vst [vmem:[#allocation2 + $0x458] sm:$0xff] %v4127
  %5064 = vst [vmem:[#allocation2 + $0x460] sm:$0xff] %v1379
  %5065 = vst [vmem:[#allocation2 + $0x468] sm:$0xff] %v2296
  %5066 = vst [vmem:[#allocation2 + $0x470] sm:$0xff] %v3213
  %5067 = vst [vmem:[#allocation2 + $0x478] sm:$0xff] %v4130
  %5068 = vst [vmem:[#allocation2 + $0x480] sm:$0xff] %v1382
  %5069 = vst [vmem:[#allocation2 + $0x488] sm:$0xff] %v2299
  %5070 = vst [vmem:[#allocation2 + $0x490] sm:$0xff] %v3216
  %5071 = vst [vmem:[#allocation2 + $0x498] sm:$0xff] %v4133
  %5072 = vst [vmem:[#allocation2 + $0x4a0] sm:$0xff] %v1385
  %5073 = vst [vmem:[#allocation2 + $0x4a8] sm:$0xff] %v2302
  %5074 = vst [vmem:[#allocation2 + $0x4b0] sm:$0xff] %v3219
  %5075 = vst [vmem:[#allocation2 + $0x4b8] sm:$0xff] %v4136
  %5076 = vst [vmem:[#allocation2 + $0x4c0] sm:$0xff] %v1388
  %5077 = vst [vmem:[#allocation2 + $0x4c8] sm:$0xff] %v2305
  %5078 = vst [vmem:[#allocation2 + $0x4d0] sm:$0xff] %v3222
  %5079 = vst [vmem:[#allocation2 + $0x4d8] sm:$0xff] %v4139
  %5080 = vst [vmem:[#allocation2 + $0x4e0] sm:$0xff] %v1391
  %5081 = vst [vmem:[#allocation2 + $0x4e8] sm:$0xff] %v2308
  %5082 = vst [vmem:[#allocation2 + $0x4f0] sm:$0xff] %v3225
  %5083 = vst [vmem:[#allocation2 + $0x4f8] sm:$0xff] %v4142
  %5084 = vst [vmem:[#allocation2 + $0x500] sm:$0xff] %v1394
  %5085 = vst [vmem:[#allocation2 + $0x508] sm:$0xff] %v2311
  %5086 = vst [vmem:[#allocation2 + $0x510] sm:$0xff] %v3228
  %5087 = vst [vmem:[#allocation2 + $0x518] sm:$0xff] %v4145
  %5088 = vst [vmem:[#allocation2 + $0x520] sm:$0xff] %v1397
  %5089 = vst [vmem:[#allocation2 + $0x528] sm:$0xff] %v2314
  %5090 = vst [vmem:[#allocation2 + $0x530] sm:$0xff] %v3231
  %5091 = vst [vmem:[#allocation2 + $0x538] sm:$0xff] %v4148
  %5092 = vst [vmem:[#allocation2 + $0x540] sm:$0xff] %v1400
  %5093 = vst [vmem:[#allocation2 + $0x548] sm:$0xff] %v2317
  %5094 = vst [vmem:[#allocation2 + $0x550] sm:$0xff] %v3234
  %5095 = vst [vmem:[#allocation2 + $0x558] sm:$0xff] %v4151
  %5096 = vst [vmem:[#allocation2 + $0x560] sm:$0xff] %v1403
  %5097 = vst [vmem:[#allocation2 + $0x568] sm:$0xff] %v2320
  %5098 = vst [vmem:[#allocation2 + $0x570] sm:$0xff] %v3237
  %5099 = vst [vmem:[#allocation2 + $0x578] sm:$0xff] %v4154
  %5100 = vst [vmem:[#allocation2 + $0x580] sm:$0xff] %v1406
  %5101 = vst [vmem:[#allocation2 + $0x588] sm:$0xff] %v2323
  %5102 = vst [vmem:[#allocation2 + $0x590] sm:$0xff] %v3240
  %5103 = vst [vmem:[#allocation2 + $0x598] sm:$0xff] %v4157
  %5104 = vst [vmem:[#allocation2 + $0x5a0] sm:$0xff] %v1409
  %5105 = vst [vmem:[#allocation2 + $0x5a8] sm:$0xff] %v2326
  %5106 = vst [vmem:[#allocation2 + $0x5b0] sm:$0xff] %v3243
  %5107 = vst [vmem:[#allocation2 + $0x5b8] sm:$0xff] %v4160
  %5108 = vst [vmem:[#allocation2 + $0x5c0] sm:$0xff] %v1412
  %5109 = vst [vmem:[#allocation2 + $0x5c8] sm:$0xff] %v2329
  %5110 = vst [vmem:[#allocation2 + $0x5d0] sm:$0xff] %v3246
  %5111 = vst [vmem:[#allocation2 + $0x5d8] sm:$0xff] %v4163
  %5112 = vst [vmem:[#allocation2 + $0x5e0] sm:$0xff] %v1415
  %5113 = vst [vmem:[#allocation2 + $0x5e8] sm:$0xff] %v2332
  %5114 = vst [vmem:[#allocation2 + $0x5f0] sm:$0xff] %v3249
  %5115 = vst [vmem:[#allocation2 + $0x5f8] sm:$0xff] %v4166
  %5116 = vst [vmem:[#allocation2 + $0x600] sm:$0xff] %v1418
  %5117 = vst [vmem:[#allocation2 + $0x608] sm:$0xff] %v2335
  %5118 = vst [vmem:[#allocation2 + $0x610] sm:$0xff] %v3252
  %5119 = vst [vmem:[#allocation2 + $0x618] sm:$0xff] %v4169
  %5120 = vst [vmem:[#allocation2 + $0x620] sm:$0xff] %v1421
  %5121 = vst [vmem:[#allocation2 + $0x628] sm:$0xff] %v2338
  %5122 = vst [vmem:[#allocation2 + $0x630] sm:$0xff] %v3255
  %5123 = vst [vmem:[#allocation2 + $0x638] sm:$0xff] %v4172
  %5124 = vst [vmem:[#allocation2 + $0x640] sm:$0xff] %v1424
  %5125 = vst [vmem:[#allocation2 + $0x648] sm:$0xff] %v2341
  %5126 = vst [vmem:[#allocation2 + $0x650] sm:$0xff] %v3258
  %5127 = vst [vmem:[#allocation2 + $0x658] sm:$0xff] %v4175
  %5128 = vst [vmem:[#allocation2 + $0x660] sm:$0xff] %v1427
  %5129 = vst [vmem:[#allocation2 + $0x668] sm:$0xff] %v2344
  %5130 = vst [vmem:[#allocation2 + $0x670] sm:$0xff] %v3261
  %5131 = vst [vmem:[#allocation2 + $0x678] sm:$0xff] %v4178
  %5132 = vst [vmem:[#allocation2 + $0x680] sm:$0xff] %v1430
  %5133 = vst [vmem:[#allocation2 + $0x688] sm:$0xff] %v2347
  %5134 = vst [vmem:[#allocation2 + $0x690] sm:$0xff] %v3264
  %5135 = vst [vmem:[#allocation2 + $0x698] sm:$0xff] %v4181
  %5136 = vst [vmem:[#allocation2 + $0x6a0] sm:$0xff] %v1433
  %5137 = vst [vmem:[#allocation2 + $0x6a8] sm:$0xff] %v2350
  %5138 = vst [vmem:[#allocation2 + $0x6b0] sm:$0xff] %v3267
  %5139 = vst [vmem:[#allocation2 + $0x6b8] sm:$0xff] %v4184
  %5140 = vst [vmem:[#allocation2 + $0x6c0] sm:$0xff] %v1436
  %5141 = vst [vmem:[#allocation2 + $0x6c8] sm:$0xff] %v2353
  %5142 = vst [vmem:[#allocation2 + $0x6d0] sm:$0xff] %v3270
  %5143 = vst [vmem:[#allocation2 + $0x6d8] sm:$0xff] %v4187
  %5144 = vst [vmem:[#allocation2 + $0x6e0] sm:$0xff] %v1439
  %5145 = vst [vmem:[#allocation2 + $0x6e8] sm:$0xff] %v2356
  %5146 = vst [vmem:[#allocation2 + $0x6f0] sm:$0xff] %v3273
  %5147 = vst [vmem:[#allocation2 + $0x6f8] sm:$0xff] %v4190
  %5148 = vst [vmem:[#allocation2 + $0x700] sm:$0xff] %v1442
  %5149 = vst [vmem:[#allocation2 + $0x708] sm:$0xff] %v2359
  %5150 = vst [vmem:[#allocation2 + $0x710] sm:$0xff] %v3276
  %5151 = vst [vmem:[#allocation2 + $0x718] sm:$0xff] %v4193
  %5152 = vst [vmem:[#allocation2 + $0x720] sm:$0xff] %v1445
  %5153 = vst [vmem:[#allocation2 + $0x728] sm:$0xff] %v2362
  %5154 = vst [vmem:[#allocation2 + $0x730] sm:$0xff] %v3279
  %5155 = vst [vmem:[#allocation2 + $0x738] sm:$0xff] %v4196
  %5156 = vst [vmem:[#allocation2 + $0x740] sm:$0xff] %v1448
  %5157 = vst [vmem:[#allocation2 + $0x748] sm:$0xff] %v2365
  %5158 = vst [vmem:[#allocation2 + $0x750] sm:$0xff] %v3282
  %5159 = vst [vmem:[#allocation2 + $0x758] sm:$0xff] %v4199
  %5160 = vst [vmem:[#allocation2 + $0x760] sm:$0xff] %v1451
  %5161 = vst [vmem:[#allocation2 + $0x768] sm:$0xff] %v2368
  %5162 = vst [vmem:[#allocation2 + $0x770] sm:$0xff] %v3285
  %5163 = vst [vmem:[#allocation2 + $0x778] sm:$0xff] %v4202
  %5164 = vst [vmem:[#allocation2 + $0x780] sm:$0xff] %v1454
  %5165 = vst [vmem:[#allocation2 + $0x788] sm:$0xff] %v2371
  %5166 = vst [vmem:[#allocation2 + $0x790] sm:$0xff] %v3288
  %5167 = vst [vmem:[#allocation2 + $0x798] sm:$0xff] %v4205
  %5168 = vst [vmem:[#allocation2 + $0x7a0] sm:$0xff] %v1457
  %5169 = vst [vmem:[#allocation2 + $0x7a8] sm:$0xff] %v2374
  %5170 = vst [vmem:[#allocation2 + $0x7b0] sm:$0xff] %v3291
  %5171 = vst [vmem:[#allocation2 + $0x7b8] sm:$0xff] %v4208
  %5172 = vst [vmem:[#allocation2 + $0x7c0] sm:$0xff] %v1460
  %5173 = vst [vmem:[#allocation2 + $0x7c8] sm:$0xff] %v2377
  %5174 = vst [vmem:[#allocation2 + $0x7d0] sm:$0xff] %v3294
  %5175 = vst [vmem:[#allocation2 + $0x7d8] sm:$0xff] %v4211
  %5176 = vst [vmem:[#allocation2 + $0x7e0] sm:$0xff] %v1463
  %5177 = vst [vmem:[#allocation2 + $0x7e8] sm:$0xff] %v2380
  %5178 = vst [vmem:[#allocation2 + $0x7f0] sm:$0xff] %v3297
  %5179 = vst [vmem:[#allocation2 + $0x7f8] sm:$0xff] %v4214
  %5180 = vst [vmem:[#allocation2 + $0x800] sm:$0xff] %v1466
  %5181 = vst [vmem:[#allocation2 + $0x808] sm:$0xff] %v2383
  %5182 = vst [vmem:[#allocation2 + $0x810] sm:$0xff] %v3300
  %5183 = vst [vmem:[#allocation2 + $0x818] sm:$0xff] %v4217
  %5184 = vst [vmem:[#allocation2 + $0x820] sm:$0xff] %v1469
  %5185 = vst [vmem:[#allocation2 + $0x828] sm:$0xff] %v2386
  %5186 = vst [vmem:[#allocation2 + $0x830] sm:$0xff] %v3303
  %5187 = vst [vmem:[#allocation2 + $0x838] sm:$0xff] %v4220
  %5188 = vst [vmem:[#allocation2 + $0x840] sm:$0xff] %v1472
  %5189 = vst [vmem:[#allocation2 + $0x848] sm:$0xff] %v2389
  %5190 = vst [vmem:[#allocation2 + $0x850] sm:$0xff] %v3306
  %5191 = vst [vmem:[#allocation2 + $0x858] sm:$0xff] %v4223
  %5192 = vst [vmem:[#allocation2 + $0x860] sm:$0xff] %v1475
  %5193 = vst [vmem:[#allocation2 + $0x868] sm:$0xff] %v2392
  %5194 = vst [vmem:[#allocation2 + $0x870] sm:$0xff] %v3309
  %5195 = vst [vmem:[#allocation2 + $0x878] sm:$0xff] %v4226
  %5196 = vst [vmem:[#allocation2 + $0x880] sm:$0xff] %v1478
  %5197 = vst [vmem:[#allocation2 + $0x888] sm:$0xff] %v2395
  %5198 = vst [vmem:[#allocation2 + $0x890] sm:$0xff] %v3312
  %5199 = vst [vmem:[#allocation2 + $0x898] sm:$0xff] %v4229
  %5200 = vst [vmem:[#allocation2 + $0x8a0] sm:$0xff] %v1481
  %5201 = vst [vmem:[#allocation2 + $0x8a8] sm:$0xff] %v2398
  %5202 = vst [vmem:[#allocation2 + $0x8b0] sm:$0xff] %v3315
  %5203 = vst [vmem:[#allocation2 + $0x8b8] sm:$0xff] %v4232
  %5204 = vst [vmem:[#allocation2 + $0x8c0] sm:$0xff] %v1484
  %5205 = vst [vmem:[#allocation2 + $0x8c8] sm:$0xff] %v2401
  %5206 = vst [vmem:[#allocation2 + $0x8d0] sm:$0xff] %v3318
  %5207 = vst [vmem:[#allocation2 + $0x8d8] sm:$0xff] %v4235
  %5208 = vst [vmem:[#allocation2 + $0x8e0] sm:$0xff] %v1487
  %5209 = vst [vmem:[#allocation2 + $0x8e8] sm:$0xff] %v2404
  %5210 = vst [vmem:[#allocation2 + $0x8f0] sm:$0xff] %v3321
  %5211 = vst [vmem:[#allocation2 + $0x8f8] sm:$0xff] %v4238
  %5212 = vst [vmem:[#allocation2 + $0x900] sm:$0xff] %v1490
  %5213 = vst [vmem:[#allocation2 + $0x908] sm:$0xff] %v2407
  %5214 = vst [vmem:[#allocation2 + $0x910] sm:$0xff] %v3324
  %5215 = vst [vmem:[#allocation2 + $0x918] sm:$0xff] %v4241
  %5216 = vst [vmem:[#allocation2 + $0x920] sm:$0xff] %v1493
  %5217 = vst [vmem:[#allocation2 + $0x928] sm:$0xff] %v2410
  %5218 = vst [vmem:[#allocation2 + $0x930] sm:$0xff] %v3327
  %5219 = vst [vmem:[#allocation2 + $0x938] sm:$0xff] %v4244
  %5220 = vst [vmem:[#allocation2 + $0x940] sm:$0xff] %v1496
  %5221 = vst [vmem:[#allocation2 + $0x948] sm:$0xff] %v2413
  %5222 = vst [vmem:[#allocation2 + $0x950] sm:$0xff] %v3330
  %5223 = vst [vmem:[#allocation2 + $0x958] sm:$0xff] %v4247
  %5224 = vst [vmem:[#allocation2 + $0x960] sm:$0xff] %v1499
  %5225 = vst [vmem:[#allocation2 + $0x968] sm:$0xff] %v2416
  %5226 = vst [vmem:[#allocation2 + $0x970] sm:$0xff] %v3333
  %5227 = vst [vmem:[#allocation2 + $0x978] sm:$0xff] %v4250
  %5228 = vst [vmem:[#allocation2 + $0x980] sm:$0xff] %v1502
  %5229 = vst [vmem:[#allocation2 + $0x988] sm:$0xff] %v2419
  %5230 = vst [vmem:[#allocation2 + $0x990] sm:$0xff] %v3336
  %5231 = vst [vmem:[#allocation2 + $0x998] sm:$0xff] %v4253
  %5232 = vst [vmem:[#allocation2 + $0x9a0] sm:$0xff] %v1505
  %5233 = vst [vmem:[#allocation2 + $0x9a8] sm:$0xff] %v2422
  %5234 = vst [vmem:[#allocation2 + $0x9b0] sm:$0xff] %v3339
  %5235 = vst [vmem:[#allocation2 + $0x9b8] sm:$0xff] %v4256
  %5236 = vst [vmem:[#allocation2 + $0x9c0] sm:$0xff] %v1508
  %5237 = vst [vmem:[#allocation2 + $0x9c8] sm:$0xff] %v2425
  %5238 = vst [vmem:[#allocation2 + $0x9d0] sm:$0xff] %v3342
  %5239 = vst [vmem:[#allocation2 + $0x9d8] sm:$0xff] %v4259
  %5240 = vst [vmem:[#allocation2 + $0x9e0] sm:$0xff] %v1511
  %5241 = vst [vmem:[#allocation2 + $0x9e8] sm:$0xff] %v2428
  %5242 = vst [vmem:[#allocation2 + $0x9f0] sm:$0xff] %v3345
  %5243 = vst [vmem:[#allocation2 + $0x9f8] sm:$0xff] %v4262
  %5244 = vst [vmem:[#allocation2 + $0xa00] sm:$0xff] %v1514
  %5245 = vst [vmem:[#allocation2 + $0xa08] sm:$0xff] %v2431
  %5246 = vst [vmem:[#allocation2 + $0xa10] sm:$0xff] %v3348
  %5247 = vst [vmem:[#allocation2 + $0xa18] sm:$0xff] %v4265
  %5248 = vst [vmem:[#allocation2 + $0xa20] sm:$0xff] %v1517
  %5249 = vst [vmem:[#allocation2 + $0xa28] sm:$0xff] %v2434
  %5250 = vst [vmem:[#allocation2 + $0xa30] sm:$0xff] %v3351
  %5251 = vst [vmem:[#allocation2 + $0xa38] sm:$0xff] %v4268
  %5252 = vst [vmem:[#allocation2 + $0xa40] sm:$0xff] %v1520
  %5253 = vst [vmem:[#allocation2 + $0xa48] sm:$0xff] %v2437
  %5254 = vst [vmem:[#allocation2 + $0xa50] sm:$0xff] %v3354
  %5255 = vst [vmem:[#allocation2 + $0xa58] sm:$0xff] %v4271
  %5256 = vst [vmem:[#allocation2 + $0xa60] sm:$0xff] %v1523
  %5257 = vst [vmem:[#allocation2 + $0xa68] sm:$0xff] %v2440
  %5258 = vst [vmem:[#allocation2 + $0xa70] sm:$0xff] %v3357
  %5259 = vst [vmem:[#allocation2 + $0xa78] sm:$0xff] %v4274
  %5260 = vst [vmem:[#allocation2 + $0xa80] sm:$0xff] %v1526
  %5261 = vst [vmem:[#allocation2 + $0xa88] sm:$0xff] %v2443
  %5262 = vst [vmem:[#allocation2 + $0xa90] sm:$0xff] %v3360
  %5263 = vst [vmem:[#allocation2 + $0xa98] sm:$0xff] %v4277
  %5264 = vst [vmem:[#allocation2 + $0xaa0] sm:$0xff] %v1529
  %5265 = vst [vmem:[#allocation2 + $0xaa8] sm:$0xff] %v2446
  %5266 = vst [vmem:[#allocation2 + $0xab0] sm:$0xff] %v3363
  %5267 = vst [vmem:[#allocation2 + $0xab8] sm:$0xff] %v4280
  %5268 = vst [vmem:[#allocation2 + $0xac0] sm:$0xff] %v1532
  %5269 = vst [vmem:[#allocation2 + $0xac8] sm:$0xff] %v2449
  %5270 = vst [vmem:[#allocation2 + $0xad0] sm:$0xff] %v3366
  %5271 = vst [vmem:[#allocation2 + $0xad8] sm:$0xff] %v4283
  %5272 = vst [vmem:[#allocation2 + $0xae0] sm:$0xff] %v1535
  %5273 = vst [vmem:[#allocation2 + $0xae8] sm:$0xff] %v2452
  %5274 = vst [vmem:[#allocation2 + $0xaf0] sm:$0xff] %v3369
  %5275 = vst [vmem:[#allocation2 + $0xaf8] sm:$0xff] %v4286
  %5276 = vst [vmem:[#allocation2 + $0xb00] sm:$0xff] %v1538
  %5277 = vst [vmem:[#allocation2 + $0xb08] sm:$0xff] %v2455
  %5278 = vst [vmem:[#allocation2 + $0xb10] sm:$0xff] %v3372
  %5279 = vst [vmem:[#allocation2 + $0xb18] sm:$0xff] %v4289
  %5280 = vst [vmem:[#allocation2 + $0xb20] sm:$0xff] %v1541
  %5281 = vst [vmem:[#allocation2 + $0xb28] sm:$0xff] %v2458
  %5282 = vst [vmem:[#allocation2 + $0xb30] sm:$0xff] %v3375
  %5283 = vst [vmem:[#allocation2 + $0xb38] sm:$0xff] %v4292
  %5284 = vst [vmem:[#allocation2 + $0xb40] sm:$0xff] %v1544
  %5285 = vst [vmem:[#allocation2 + $0xb48] sm:$0xff] %v2461
  %5286 = vst [vmem:[#allocation2 + $0xb50] sm:$0xff] %v3378
  %5287 = vst [vmem:[#allocation2 + $0xb58] sm:$0xff] %v4295
  %5288 = vst [vmem:[#allocation2 + $0xb60] sm:$0xff] %v1547
  %5289 = vst [vmem:[#allocation2 + $0xb68] sm:$0xff] %v2464
  %5290 = vst [vmem:[#allocation2 + $0xb70] sm:$0xff] %v3381
  %5291 = vst [vmem:[#allocation2 + $0xb78] sm:$0xff] %v4298
  %5292 = vst [vmem:[#allocation2 + $0xb80] sm:$0xff] %v1550
  %5293 = vst [vmem:[#allocation2 + $0xb88] sm:$0xff] %v2467
  %5294 = vst [vmem:[#allocation2 + $0xb90] sm:$0xff] %v3384
  %5295 = vst [vmem:[#allocation2 + $0xb98] sm:$0xff] %v4301
  %5296 = vst [vmem:[#allocation2 + $0xba0] sm:$0xff] %v1553
  %5297 = vst [vmem:[#allocation2 + $0xba8] sm:$0xff] %v2470
  %5298 = vst [vmem:[#allocation2 + $0xbb0] sm:$0xff] %v3387
  %5299 = vst [vmem:[#allocation2 + $0xbb8] sm:$0xff] %v4304
  %5300 = vst [vmem:[#allocation2 + $0xbc0] sm:$0xff] %v1556
  %5301 = vst [vmem:[#allocation2 + $0xbc8] sm:$0xff] %v2473
  %5302 = vst [vmem:[#allocation2 + $0xbd0] sm:$0xff] %v3390
  %5303 = vst [vmem:[#allocation2 + $0xbd8] sm:$0xff] %v4307
  %5304 = vst [vmem:[#allocation2 + $0xbe0] sm:$0xff] %v1559
  %5305 = vst [vmem:[#allocation2 + $0xbe8] sm:$0xff] %v2476
  %5306 = vst [vmem:[#allocation2 + $0xbf0] sm:$0xff] %v3393
  %5307 = vst [vmem:[#allocation2 + $0xbf8] sm:$0xff] %v4310
  %5308 = vst [vmem:[#allocation2 + $0xc00] sm:$0xff] %v1562
  %5309 = vst [vmem:[#allocation2 + $0xc08] sm:$0xff] %v2479
  %5310 = vst [vmem:[#allocation2 + $0xc10] sm:$0xff] %v3396
  %5311 = vst [vmem:[#allocation2 + $0xc18] sm:$0xff] %v4313
  %5312 = vst [vmem:[#allocation2 + $0xc20] sm:$0xff] %v1565
  %5313 = vst [vmem:[#allocation2 + $0xc28] sm:$0xff] %v2482
  %5314 = vst [vmem:[#allocation2 + $0xc30] sm:$0xff] %v3399
  %5315 = vst [vmem:[#allocation2 + $0xc38] sm:$0xff] %v4316
  %5316 = vst [vmem:[#allocation2 + $0xc40] sm:$0xff] %v1568
  %5317 = vst [vmem:[#allocation2 + $0xc48] sm:$0xff] %v2485
  %5318 = vst [vmem:[#allocation2 + $0xc50] sm:$0xff] %v3402
  %5319 = vst [vmem:[#allocation2 + $0xc58] sm:$0xff] %v4319
  %5320 = vst [vmem:[#allocation2 + $0xc60] sm:$0xff] %v1571
  %5321 = vst [vmem:[#allocation2 + $0xc68] sm:$0xff] %v2488
  %5322 = vst [vmem:[#allocation2 + $0xc70] sm:$0xff] %v3405
  %5323 = vst [vmem:[#allocation2 + $0xc78] sm:$0xff] %v4322
  %5324 = vst [vmem:[#allocation2 + $0xc80] sm:$0xff] %v1574
  %5325 = vst [vmem:[#allocation2 + $0xc88] sm:$0xff] %v2491
  %5326 = vst [vmem:[#allocation2 + $0xc90] sm:$0xff] %v3408
  %5327 = vst [vmem:[#allocation2 + $0xc98] sm:$0xff] %v4325
  %5328 = vst [vmem:[#allocation2 + $0xca0] sm:$0xff] %v1577
  %5329 = vst [vmem:[#allocation2 + $0xca8] sm:$0xff] %v2494
  %5330 = vst [vmem:[#allocation2 + $0xcb0] sm:$0xff] %v3411
  %5331 = vst [vmem:[#allocation2 + $0xcb8] sm:$0xff] %v4328
  %5332 = vst [vmem:[#allocation2 + $0xcc0] sm:$0xff] %v1580
  %5333 = vst [vmem:[#allocation2 + $0xcc8] sm:$0xff] %v2497
  %5334 = vst [vmem:[#allocation2 + $0xcd0] sm:$0xff] %v3414
  %5335 = vst [vmem:[#allocation2 + $0xcd8] sm:$0xff] %v4331
  %5336 = vst [vmem:[#allocation2 + $0xce0] sm:$0xff] %v1583
  %5337 = vst [vmem:[#allocation2 + $0xce8] sm:$0xff] %v2500
  %5338 = vst [vmem:[#allocation2 + $0xcf0] sm:$0xff] %v3417
  %5339 = vst [vmem:[#allocation2 + $0xcf8] sm:$0xff] %v4334
  %5340 = vst [vmem:[#allocation2 + $0xd00] sm:$0xff] %v1586
  %5341 = vst [vmem:[#allocation2 + $0xd08] sm:$0xff] %v2503
  %5342 = vst [vmem:[#allocation2 + $0xd10] sm:$0xff] %v3420
  %5343 = vst [vmem:[#allocation2 + $0xd18] sm:$0xff] %v4337
  %5344 = vst [vmem:[#allocation2 + $0xd20] sm:$0xff] %v1589
  %5345 = vst [vmem:[#allocation2 + $0xd28] sm:$0xff] %v2506
  %5346 = vst [vmem:[#allocation2 + $0xd30] sm:$0xff] %v3423
  %5347 = vst [vmem:[#allocation2 + $0xd38] sm:$0xff] %v4340
  %5348 = vst [vmem:[#allocation2 + $0xd40] sm:$0xff] %v1592
  %5349 = vst [vmem:[#allocation2 + $0xd48] sm:$0xff] %v2509
  %5350 = vst [vmem:[#allocation2 + $0xd50] sm:$0xff] %v3426
  %5351 = vst [vmem:[#allocation2 + $0xd58] sm:$0xff] %v4343
  %5352 = vst [vmem:[#allocation2 + $0xd60] sm:$0xff] %v1595
  %5353 = vst [vmem:[#allocation2 + $0xd68] sm:$0xff] %v2512
  %5354 = vst [vmem:[#allocation2 + $0xd70] sm:$0xff] %v3429
  %5355 = vst [vmem:[#allocation2 + $0xd78] sm:$0xff] %v4346
  %5356 = vst [vmem:[#allocation2 + $0xd80] sm:$0xff] %v1598
  %5357 = vst [vmem:[#allocation2 + $0xd88] sm:$0xff] %v2515
  %5358 = vst [vmem:[#allocation2 + $0xd90] sm:$0xff] %v3432
  %5359 = vst [vmem:[#allocation2 + $0xd98] sm:$0xff] %v4349
  %5360 = vst [vmem:[#allocation2 + $0xda0] sm:$0xff] %v1601
  %5361 = vst [vmem:[#allocation2 + $0xda8] sm:$0xff] %v2518
  %5362 = vst [vmem:[#allocation2 + $0xdb0] sm:$0xff] %v3435
  %5363 = vst [vmem:[#allocation2 + $0xdb8] sm:$0xff] %v4352
  %5364 = vst [vmem:[#allocation2 + $0xdc0] sm:$0xff] %v1604
  %5365 = vst [vmem:[#allocation2 + $0xdc8] sm:$0xff] %v2521
  %5366 = vst [vmem:[#allocation2 + $0xdd0] sm:$0xff] %v3438
  %5367 = vst [vmem:[#allocation2 + $0xdd8] sm:$0xff] %v4355
  %5368 = vst [vmem:[#allocation2 + $0xde0] sm:$0xff] %v1607
  %5369 = vst [vmem:[#allocation2 + $0xde8] sm:$0xff] %v2524
  %5370 = vst [vmem:[#allocation2 + $0xdf0] sm:$0xff] %v3441
  %5371 = vst [vmem:[#allocation2 + $0xdf8] sm:$0xff] %v4358
  %5372 = vst [vmem:[#allocation2 + $0xe00] sm:$0xff] %v1610
  %5373 = vst [vmem:[#allocation2 + $0xe08] sm:$0xff] %v2527
  %5374 = vst [vmem:[#allocation2 + $0xe10] sm:$0xff] %v3444
  %5375 = vst [vmem:[#allocation2 + $0xe18] sm:$0xff] %v4361
  %5376 = vst [vmem:[#allocation2 + $0xe20] sm:$0xff] %v1613
  %5377 = vst [vmem:[#allocation2 + $0xe28] sm:$0xff] %v2530
  %5378 = vst [vmem:[#allocation2 + $0xe30] sm:$0xff] %v3447
  %5379 = vst [vmem:[#allocation2 + $0xe38] sm:$0xff] %v4364
  %5380 = vst [vmem:[#allocation2 + $0xe40] sm:$0xff] %v1616
  %5381 = vst [vmem:[#allocation2 + $0xe48] sm:$0xff] %v2533
  %5382 = vst [vmem:[#allocation2 + $0xe50] sm:$0xff] %v3450
  %5383 = vst [vmem:[#allocation2 + $0xe58] sm:$0xff] %v4367
  %5384 = vst [vmem:[#allocation2 + $0xe60] sm:$0xff] %v1619
  %5385 = vst [vmem:[#allocation2 + $0xe68] sm:$0xff] %v2536
  %5386 = vst [vmem:[#allocation2 + $0xe70] sm:$0xff] %v3453
  %5387 = vst [vmem:[#allocation2 + $0xe78] sm:$0xff] %v4370
  %5388 = vst [vmem:[#allocation2 + $0xe80] sm:$0xff] %v1622
  %5389 = vst [vmem:[#allocation2 + $0xe88] sm:$0xff] %v2539
  %5390 = vst [vmem:[#allocation2 + $0xe90] sm:$0xff] %v3456
  %5391 = vst [vmem:[#allocation2 + $0xe98] sm:$0xff] %v4373
  %5392 = vst [vmem:[#allocation2 + $0xea0] sm:$0xff] %v1625
  %5393 = vst [vmem:[#allocation2 + $0xea8] sm:$0xff] %v2542
  %5394 = vst [vmem:[#allocation2 + $0xeb0] sm:$0xff] %v3459
  %5395 = vst [vmem:[#allocation2 + $0xeb8] sm:$0xff] %v4376
  %5396 = vst [vmem:[#allocation2 + $0xec0] sm:$0xff] %v1628
  %5397 = vst [vmem:[#allocation2 + $0xec8] sm:$0xff] %v2545
  %5398 = vst [vmem:[#allocation2 + $0xed0] sm:$0xff] %v3462
  %5399 = vst [vmem:[#allocation2 + $0xed8] sm:$0xff] %v4379
  %5400 = vst [vmem:[#allocation2 + $0xee0] sm:$0xff] %v1631
  %5401 = vst [vmem:[#allocation2 + $0xee8] sm:$0xff] %v2548
  %5402 = vst [vmem:[#allocation2 + $0xef0] sm:$0xff] %v3465
  %5403 = vst [vmem:[#allocation2 + $0xef8] sm:$0xff] %v4382
  %5404 = vst [vmem:[#allocation2 + $0xf00] sm:$0xff] %v1634
  %5405 = vst [vmem:[#allocation2 + $0xf08] sm:$0xff] %v2551
  %5406 = vst [vmem:[#allocation2 + $0xf10] sm:$0xff] %v3468
  %5407 = vst [vmem:[#allocation2 + $0xf18] sm:$0xff] %v4385
  %5408 = vst [vmem:[#allocation2 + $0xf20] sm:$0xff] %v1637
  %5409 = vst [vmem:[#allocation2 + $0xf28] sm:$0xff] %v2554
  %5410 = vst [vmem:[#allocation2 + $0xf30] sm:$0xff] %v3471
  %5411 = vst [vmem:[#allocation2 + $0xf38] sm:$0xff] %v4388
  %5412 = vst [vmem:[#allocation2 + $0xf40] sm:$0xff] %v1640
  %5413 = vst [vmem:[#allocation2 + $0xf48] sm:$0xff] %v2557
  %5414 = vst [vmem:[#allocation2 + $0xf50] sm:$0xff] %v3474
  %5415 = vst [vmem:[#allocation2 + $0xf58] sm:$0xff] %v4391
  %5416 = vst [vmem:[#allocation2 + $0xf60] sm:$0xff] %v1643
  %5417 = vst [vmem:[#allocation2 + $0xf68] sm:$0xff] %v2560
  %5418 = vst [vmem:[#allocation2 + $0xf70] sm:$0xff] %v3477
  %5419 = vst [vmem:[#allocation2 + $0xf78] sm:$0xff] %v4394
  %5420 = vst [vmem:[#allocation2 + $0xf80] sm:$0xff] %v1646
  %5421 = vst [vmem:[#allocation2 + $0xf88] sm:$0xff] %v2563
  %5422 = vst [vmem:[#allocation2 + $0xf90] sm:$0xff] %v3480
  %5423 = vst [vmem:[#allocation2 + $0xf98] sm:$0xff] %v4397
  %5424 = vst [vmem:[#allocation2 + $0xfa0] sm:$0xff] %v1649
  %5425 = vst [vmem:[#allocation2 + $0xfa8] sm:$0xff] %v2566
  %5426 = vst [vmem:[#allocation2 + $0xfb0] sm:$0xff] %v3483
  %5427 = vst [vmem:[#allocation2 + $0xfb8] sm:$0xff] %v4400
  %5428 = vst [vmem:[#allocation2 + $0xfc0] sm:$0xff] %v1652
  %5429 = vst [vmem:[#allocation2 + $0xfc8] sm:$0xff] %v2569
  %5430 = vst [vmem:[#allocation2 + $0xfd0] sm:$0xff] %v3486
  %5431 = vst [vmem:[#allocation2 + $0xfd8] sm:$0xff] %v4403
  %5432 = vst [vmem:[#allocation2 + $0xfe0] sm:$0xff] %v1655
  %5433 = vst [vmem:[#allocation2 + $0xfe8] sm:$0xff] %v2572
  %5434 = vst [vmem:[#allocation2 + $0xff0] sm:$0xff] %v3489
  %5435 = vst [vmem:[#allocation2 + $0xff8] sm:$0xff] %v4406
  %5436 = vst [vmem:[#allocation2 + $0x1000] sm:$0xff] %v1658
  %5437 = vst [vmem:[#allocation2 + $0x1008] sm:$0xff] %v2575
  %5438 = vst [vmem:[#allocation2 + $0x1010] sm:$0xff] %v3492
  %5439 = vst [vmem:[#allocation2 + $0x1018] sm:$0xff] %v4409
  %5440 = vst [vmem:[#allocation2 + $0x1020] sm:$0xff] %v1661
  %5441 = vst [vmem:[#allocation2 + $0x1028] sm:$0xff] %v2578
  %5442 = vst [vmem:[#allocation2 + $0x1030] sm:$0xff] %v3495
  %5443 = vst [vmem:[#allocation2 + $0x1038] sm:$0xff] %v4412
  %5444 = vst [vmem:[#allocation2 + $0x1040] sm:$0xff] %v1664
  %5445 = vst [vmem:[#allocation2 + $0x1048] sm:$0xff] %v2581
  %5446 = vst [vmem:[#allocation2 + $0x1050] sm:$0xff] %v3498
  %5447 = vst [vmem:[#allocation2 + $0x1058] sm:$0xff] %v4415
  %5448 = vst [vmem:[#allocation2 + $0x1060] sm:$0xff] %v1667
  %5449 = vst [vmem:[#allocation2 + $0x1068] sm:$0xff] %v2584
  %5450 = vst [vmem:[#allocation2 + $0x1070] sm:$0xff] %v3501
  %5451 = vst [vmem:[#allocation2 + $0x1078] sm:$0xff] %v4418
  %5452 = vst [vmem:[#allocation2 + $0x1080] sm:$0xff] %v1670
  %5453 = vst [vmem:[#allocation2 + $0x1088] sm:$0xff] %v2587
  %5454 = vst [vmem:[#allocation2 + $0x1090] sm:$0xff] %v3504
  %5455 = vst [vmem:[#allocation2 + $0x1098] sm:$0xff] %v4421
  %5456 = vst [vmem:[#allocation2 + $0x10a0] sm:$0xff] %v1673
  %5457 = vst [vmem:[#allocation2 + $0x10a8] sm:$0xff] %v2590
  %5458 = vst [vmem:[#allocation2 + $0x10b0] sm:$0xff] %v3507
  %5459 = vst [vmem:[#allocation2 + $0x10b8] sm:$0xff] %v4424
  %5460 = vst [vmem:[#allocation2 + $0x10c0] sm:$0xff] %v1676
  %5461 = vst [vmem:[#allocation2 + $0x10c8] sm:$0xff] %v2593
  %5462 = vst [vmem:[#allocation2 + $0x10d0] sm:$0xff] %v3510
  %5463 = vst [vmem:[#allocation2 + $0x10d8] sm:$0xff] %v4427
  %5464 = vst [vmem:[#allocation2 + $0x10e0] sm:$0xff] %v1679
  %5465 = vst [vmem:[#allocation2 + $0x10e8] sm:$0xff] %v2596
  %5466 = vst [vmem:[#allocation2 + $0x10f0] sm:$0xff] %v3513
  %5467 = vst [vmem:[#allocation2 + $0x10f8] sm:$0xff] %v4430
  %5468 = vst [vmem:[#allocation2 + $0x1100] sm:$0xff] %v1682
  %5469 = vst [vmem:[#allocation2 + $0x1108] sm:$0xff] %v2599
  %5470 = vst [vmem:[#allocation2 + $0x1110] sm:$0xff] %v3516
  %5471 = vst [vmem:[#allocation2 + $0x1118] sm:$0xff] %v4433
  %5472 = vst [vmem:[#allocation2 + $0x1120] sm:$0xff] %v1685
  %5473 = vst [vmem:[#allocation2 + $0x1128] sm:$0xff] %v2602
  %5474 = vst [vmem:[#allocation2 + $0x1130] sm:$0xff] %v3519
  %5475 = vst [vmem:[#allocation2 + $0x1138] sm:$0xff] %v4436
  %5476 = vst [vmem:[#allocation2 + $0x1140] sm:$0xff] %v1688
  %5477 = vst [vmem:[#allocation2 + $0x1148] sm:$0xff] %v2605
  %5478 = vst [vmem:[#allocation2 + $0x1150] sm:$0xff] %v3522
  %5479 = vst [vmem:[#allocation2 + $0x1158] sm:$0xff] %v4439
  %5480 = vst [vmem:[#allocation2 + $0x1160] sm:$0xff] %v1691
  %5481 = vst [vmem:[#allocation2 + $0x1168] sm:$0xff] %v2608
  %5482 = vst [vmem:[#allocation2 + $0x1170] sm:$0xff] %v3525
  %5483 = vst [vmem:[#allocation2 + $0x1178] sm:$0xff] %v4442
  %5484 = vst [vmem:[#allocation2 + $0x1180] sm:$0xff] %v1694
  %5485 = vst [vmem:[#allocation2 + $0x1188] sm:$0xff] %v2611
  %5486 = vst [vmem:[#allocation2 + $0x1190] sm:$0xff] %v3528
  %5487 = vst [vmem:[#allocation2 + $0x1198] sm:$0xff] %v4445
  %5488 = vst [vmem:[#allocation2 + $0x11a0] sm:$0xff] %v1697
  %5489 = vst [vmem:[#allocation2 + $0x11a8] sm:$0xff] %v2614
  %5490 = vst [vmem:[#allocation2 + $0x11b0] sm:$0xff] %v3531
  %5491 = vst [vmem:[#allocation2 + $0x11b8] sm:$0xff] %v4448
  %5492 = vst [vmem:[#allocation2 + $0x11c0] sm:$0xff] %v1700
  %5493 = vst [vmem:[#allocation2 + $0x11c8] sm:$0xff] %v2617
  %5494 = vst [vmem:[#allocation2 + $0x11d0] sm:$0xff] %v3534
  %5495 = vst [vmem:[#allocation2 + $0x11d8] sm:$0xff] %v4451
  %5496 = vst [vmem:[#allocation2 + $0x11e0] sm:$0xff] %v1703
  %5497 = vst [vmem:[#allocation2 + $0x11e8] sm:$0xff] %v2620
  %5498 = vst [vmem:[#allocation2 + $0x11f0] sm:$0xff] %v3537
  %5499 = vst [vmem:[#allocation2 + $0x11f8] sm:$0xff] %v4454
  %5500 = vst [vmem:[#allocation2 + $0x1200] sm:$0xff] %v1706
  %5501 = vst [vmem:[#allocation2 + $0x1208] sm:$0xff] %v2623
  %5502 = vst [vmem:[#allocation2 + $0x1210] sm:$0xff] %v3540
  %5503 = vst [vmem:[#allocation2 + $0x1218] sm:$0xff] %v4457
  %5504 = vst [vmem:[#allocation2 + $0x1220] sm:$0xff] %v1709
  %5505 = vst [vmem:[#allocation2 + $0x1228] sm:$0xff] %v2626
  %5506 = vst [vmem:[#allocation2 + $0x1230] sm:$0xff] %v3543
  %5507 = vst [vmem:[#allocation2 + $0x1238] sm:$0xff] %v4460
  %5508 = vst [vmem:[#allocation2 + $0x1240] sm:$0xff] %v1712
  %5509 = vst [vmem:[#allocation2 + $0x1248] sm:$0xff] %v2629
  %5510 = vst [vmem:[#allocation2 + $0x1250] sm:$0xff] %v3546
  %5511 = vst [vmem:[#allocation2 + $0x1258] sm:$0xff] %v4463
  %5512 = vst [vmem:[#allocation2 + $0x1260] sm:$0xff] %v1715
  %5513 = vst [vmem:[#allocation2 + $0x1268] sm:$0xff] %v2632
  %5514 = vst [vmem:[#allocation2 + $0x1270] sm:$0xff] %v3549
  %5515 = vst [vmem:[#allocation2 + $0x1278] sm:$0xff] %v4466
  %5516 = vst [vmem:[#allocation2 + $0x1280] sm:$0xff] %v1718
  %5517 = vst [vmem:[#allocation2 + $0x1288] sm:$0xff] %v2635
  %5518 = vst [vmem:[#allocation2 + $0x1290] sm:$0xff] %v3552
  %5519 = vst [vmem:[#allocation2 + $0x1298] sm:$0xff] %v4469
  %5520 = vst [vmem:[#allocation2 + $0x12a0] sm:$0xff] %v1721
  %5521 = vst [vmem:[#allocation2 + $0x12a8] sm:$0xff] %v2638
  %5522 = vst [vmem:[#allocation2 + $0x12b0] sm:$0xff] %v3555
  %5523 = vst [vmem:[#allocation2 + $0x12b8] sm:$0xff] %v4472
  %5524 = vst [vmem:[#allocation2 + $0x12c0] sm:$0xff] %v1724
  %5525 = vst [vmem:[#allocation2 + $0x12c8] sm:$0xff] %v2641
  %5526 = vst [vmem:[#allocation2 + $0x12d0] sm:$0xff] %v3558
  %5527 = vst [vmem:[#allocation2 + $0x12d8] sm:$0xff] %v4475
  %5528 = vst [vmem:[#allocation2 + $0x12e0] sm:$0xff] %v1727
  %5529 = vst [vmem:[#allocation2 + $0x12e8] sm:$0xff] %v2644
  %5530 = vst [vmem:[#allocation2 + $0x12f0] sm:$0xff] %v3561
  %5531 = vst [vmem:[#allocation2 + $0x12f8] sm:$0xff] %v4478
  %5532 = vst [vmem:[#allocation2 + $0x1300] sm:$0xff] %v1730
  %5533 = vst [vmem:[#allocation2 + $0x1308] sm:$0xff] %v2647
  %5534 = vst [vmem:[#allocation2 + $0x1310] sm:$0xff] %v3564
  %5535 = vst [vmem:[#allocation2 + $0x1318] sm:$0xff] %v4481
  %5536 = vst [vmem:[#allocation2 + $0x1320] sm:$0xff] %v1733
  %5537 = vst [vmem:[#allocation2 + $0x1328] sm:$0xff] %v2650
  %5538 = vst [vmem:[#allocation2 + $0x1330] sm:$0xff] %v3567
  %5539 = vst [vmem:[#allocation2 + $0x1338] sm:$0xff] %v4484
  %5540 = vst [vmem:[#allocation2 + $0x1340] sm:$0xff] %v1736
  %5541 = vst [vmem:[#allocation2 + $0x1348] sm:$0xff] %v2653
  %5542 = vst [vmem:[#allocation2 + $0x1350] sm:$0xff] %v3570
  %5543 = vst [vmem:[#allocation2 + $0x1358] sm:$0xff] %v4487
  %5544 = vst [vmem:[#allocation2 + $0x1360] sm:$0xff] %v1739
  %5545 = vst [vmem:[#allocation2 + $0x1368] sm:$0xff] %v2656
  %5546 = vst [vmem:[#allocation2 + $0x1370] sm:$0xff] %v3573
  %5547 = vst [vmem:[#allocation2 + $0x1378] sm:$0xff] %v4490
  %5548 = vst [vmem:[#allocation2 + $0x1380] sm:$0xff] %v1742
  %5549 = vst [vmem:[#allocation2 + $0x1388] sm:$0xff] %v2659
  %5550 = vst [vmem:[#allocation2 + $0x1390] sm:$0xff] %v3576
  %5551 = vst [vmem:[#allocation2 + $0x1398] sm:$0xff] %v4493
  %5552 = vst [vmem:[#allocation2 + $0x13a0] sm:$0xff] %v1745
  %5553 = vst [vmem:[#allocation2 + $0x13a8] sm:$0xff] %v2662
  %5554 = vst [vmem:[#allocation2 + $0x13b0] sm:$0xff] %v3579
  %5555 = vst [vmem:[#allocation2 + $0x13b8] sm:$0xff] %v4496
  %5556 = vst [vmem:[#allocation2 + $0x13c0] sm:$0xff] %v1748
  %5557 = vst [vmem:[#allocation2 + $0x13c8] sm:$0xff] %v2665
  %5558 = vst [vmem:[#allocation2 + $0x13d0] sm:$0xff] %v3582
  %5559 = vst [vmem:[#allocation2 + $0x13d8] sm:$0xff] %v4499
  %5560 = vst [vmem:[#allocation2 + $0x13e0] sm:$0xff] %v1751
  %5561 = vst [vmem:[#allocation2 + $0x13e8] sm:$0xff] %v2668
  %5562 = vst [vmem:[#allocation2 + $0x13f0] sm:$0xff] %v3585
  %5563 = vst [vmem:[#allocation2 + $0x13f8] sm:$0xff] %v4502
  %5564 = vst [vmem:[#allocation2 + $0x1400] sm:$0xff] %v1754
  %5565 = vst [vmem:[#allocation2 + $0x1408] sm:$0xff] %v2671
  %5566 = vst [vmem:[#allocation2 + $0x1410] sm:$0xff] %v3588
  %5567 = vst [vmem:[#allocation2 + $0x1418] sm:$0xff] %v4505
  %5568 = vst [vmem:[#allocation2 + $0x1420] sm:$0xff] %v1757
  %5569 = vst [vmem:[#allocation2 + $0x1428] sm:$0xff] %v2674
  %5570 = vst [vmem:[#allocation2 + $0x1430] sm:$0xff] %v3591
  %5571 = vst [vmem:[#allocation2 + $0x1438] sm:$0xff] %v4508
  %5572 = vst [vmem:[#allocation2 + $0x1440] sm:$0xff] %v1760
  %5573 = vst [vmem:[#allocation2 + $0x1448] sm:$0xff] %v2677
  %5574 = vst [vmem:[#allocation2 + $0x1450] sm:$0xff] %v3594
  %5575 = vst [vmem:[#allocation2 + $0x1458] sm:$0xff] %v4511
  %5576 = vst [vmem:[#allocation2 + $0x1460] sm:$0xff] %v1763
  %5577 = vst [vmem:[#allocation2 + $0x1468] sm:$0xff] %v2680
  %5578 = vst [vmem:[#allocation2 + $0x1470] sm:$0xff] %v3597
  %5579 = vst [vmem:[#allocation2 + $0x1478] sm:$0xff] %v4514
  %5580 = vst [vmem:[#allocation2 + $0x1480] sm:$0xff] %v1766
  %5581 = vst [vmem:[#allocation2 + $0x1488] sm:$0xff] %v2683
  %5582 = vst [vmem:[#allocation2 + $0x1490] sm:$0xff] %v3600
  %5583 = vst [vmem:[#allocation2 + $0x1498] sm:$0xff] %v4517
  %5584 = vst [vmem:[#allocation2 + $0x14a0] sm:$0xff] %v1769
  %5585 = vst [vmem:[#allocation2 + $0x14a8] sm:$0xff] %v2686
  %5586 = vst [vmem:[#allocation2 + $0x14b0] sm:$0xff] %v3603
  %5587 = vst [vmem:[#allocation2 + $0x14b8] sm:$0xff] %v4520
  %5588 = vst [vmem:[#allocation2 + $0x14c0] sm:$0xff] %v1772
  %5589 = vst [vmem:[#allocation2 + $0x14c8] sm:$0xff] %v2689
  %5590 = vst [vmem:[#allocation2 + $0x14d0] sm:$0xff] %v3606
  %5591 = vst [vmem:[#allocation2 + $0x14d8] sm:$0xff] %v4523
  %5592 = vst [vmem:[#allocation2 + $0x14e0] sm:$0xff] %v1775
  %5593 = vst [vmem:[#allocation2 + $0x14e8] sm:$0xff] %v2692
  %5594 = vst [vmem:[#allocation2 + $0x14f0] sm:$0xff] %v3609
  %5595 = vst [vmem:[#allocation2 + $0x14f8] sm:$0xff] %v4526
  %5596 = vst [vmem:[#allocation2 + $0x1500] sm:$0xff] %v1778
  %5597 = vst [vmem:[#allocation2 + $0x1508] sm:$0xff] %v2695
  %5598 = vst [vmem:[#allocation2 + $0x1510] sm:$0xff] %v3612
  %5599 = vst [vmem:[#allocation2 + $0x1518] sm:$0xff] %v4529
  %5600 = vst [vmem:[#allocation2 + $0x1520] sm:$0xff] %v1781
  %5601 = vst [vmem:[#allocation2 + $0x1528] sm:$0xff] %v2698
  %5602 = vst [vmem:[#allocation2 + $0x1530] sm:$0xff] %v3615
  %5603 = vst [vmem:[#allocation2 + $0x1538] sm:$0xff] %v4532
  %5604 = vst [vmem:[#allocation2 + $0x1540] sm:$0xff] %v1784
  %5605 = vst [vmem:[#allocation2 + $0x1548] sm:$0xff] %v2701
  %5606 = vst [vmem:[#allocation2 + $0x1550] sm:$0xff] %v3618
  %5607 = vst [vmem:[#allocation2 + $0x1558] sm:$0xff] %v4535
  %5608 = vst [vmem:[#allocation2 + $0x1560] sm:$0xff] %v1787
  %5609 = vst [vmem:[#allocation2 + $0x1568] sm:$0xff] %v2704
  %5610 = vst [vmem:[#allocation2 + $0x1570] sm:$0xff] %v3621
  %5611 = vst [vmem:[#allocation2 + $0x1578] sm:$0xff] %v4538
  %5612 = vst [vmem:[#allocation2 + $0x1580] sm:$0xff] %v1790
  %5613 = vst [vmem:[#allocation2 + $0x1588] sm:$0xff] %v2707
  %5614 = vst [vmem:[#allocation2 + $0x1590] sm:$0xff] %v3624
  %5615 = vst [vmem:[#allocation2 + $0x1598] sm:$0xff] %v4541
  %5616 = vst [vmem:[#allocation2 + $0x15a0] sm:$0xff] %v1793
  %5617 = vst [vmem:[#allocation2 + $0x15a8] sm:$0xff] %v2710
  %5618 = vst [vmem:[#allocation2 + $0x15b0] sm:$0xff] %v3627
  %5619 = vst [vmem:[#allocation2 + $0x15b8] sm:$0xff] %v4544
  %5620 = vst [vmem:[#allocation2 + $0x15c0] sm:$0xff] %v1796
  %5621 = vst [vmem:[#allocation2 + $0x15c8] sm:$0xff] %v2713
  %5622 = vst [vmem:[#allocation2 + $0x15d0] sm:$0xff] %v3630
  %5623 = vst [vmem:[#allocation2 + $0x15d8] sm:$0xff] %v4547
  %5624 = vst [vmem:[#allocation2 + $0x15e0] sm:$0xff] %v1799
  %5625 = vst [vmem:[#allocation2 + $0x15e8] sm:$0xff] %v2716
  %5626 = vst [vmem:[#allocation2 + $0x15f0] sm:$0xff] %v3633
  %5627 = vst [vmem:[#allocation2 + $0x15f8] sm:$0xff] %v4550
  %5628 = vst [vmem:[#allocation2 + $0x1600] sm:$0xff] %v1802
  %5629 = vst [vmem:[#allocation2 + $0x1608] sm:$0xff] %v2719
  %5630 = vst [vmem:[#allocation2 + $0x1610] sm:$0xff] %v3636
  %5631 = vst [vmem:[#allocation2 + $0x1618] sm:$0xff] %v4553
  %5632 = vst [vmem:[#allocation2 + $0x1620] sm:$0xff] %v1805
  %5633 = vst [vmem:[#allocation2 + $0x1628] sm:$0xff] %v2722
  %5634 = vst [vmem:[#allocation2 + $0x1630] sm:$0xff] %v3639
  %5635 = vst [vmem:[#allocation2 + $0x1638] sm:$0xff] %v4556
  %5636 = vst [vmem:[#allocation2 + $0x1640] sm:$0xff] %v1808
  %5637 = vst [vmem:[#allocation2 + $0x1648] sm:$0xff] %v2725
  %5638 = vst [vmem:[#allocation2 + $0x1650] sm:$0xff] %v3642
  %5639 = vst [vmem:[#allocation2 + $0x1658] sm:$0xff] %v4559
  %5640 = vst [vmem:[#allocation2 + $0x1660] sm:$0xff] %v1811
  %5641 = vst [vmem:[#allocation2 + $0x1668] sm:$0xff] %v2728
  %5642 = vst [vmem:[#allocation2 + $0x1670] sm:$0xff] %v3645
  %5643 = vst [vmem:[#allocation2 + $0x1678] sm:$0xff] %v4562
  %5644 = vst [vmem:[#allocation2 + $0x1680] sm:$0xff] %v1814
  %5645 = vst [vmem:[#allocation2 + $0x1688] sm:$0xff] %v2731
  %5646 = vst [vmem:[#allocation2 + $0x1690] sm:$0xff] %v3648
  %5647 = vst [vmem:[#allocation2 + $0x1698] sm:$0xff] %v4565
  %5648 = vst [vmem:[#allocation2 + $0x16a0] sm:$0xff] %v1817
  %5649 = vst [vmem:[#allocation2 + $0x16a8] sm:$0xff] %v2734
  %5650 = vst [vmem:[#allocation2 + $0x16b0] sm:$0xff] %v3651
  %5651 = vst [vmem:[#allocation2 + $0x16b8] sm:$0xff] %v4568
  %5652 = vst [vmem:[#allocation2 + $0x16c0] sm:$0xff] %v1820
  %5653 = vst [vmem:[#allocation2 + $0x16c8] sm:$0xff] %v2737
  %5654 = vst [vmem:[#allocation2 + $0x16d0] sm:$0xff] %v3654
  %5655 = vst [vmem:[#allocation2 + $0x16d8] sm:$0xff] %v4571
  %5656 = vst [vmem:[#allocation2 + $0x16e0] sm:$0xff] %v1823
  %5657 = vst [vmem:[#allocation2 + $0x16e8] sm:$0xff] %v2740
  %5658 = vst [vmem:[#allocation2 + $0x16f0] sm:$0xff] %v3657
  %5659 = vst [vmem:[#allocation2 + $0x16f8] sm:$0xff] %v4574
  %5660 = vst [vmem:[#allocation2 + $0x1700] sm:$0xff] %v1826
  %5661 = vst [vmem:[#allocation2 + $0x1708] sm:$0xff] %v2743
  %5662 = vst [vmem:[#allocation2 + $0x1710] sm:$0xff] %v3660
  %5663 = vst [vmem:[#allocation2 + $0x1718] sm:$0xff] %v4577
  %5664 = vst [vmem:[#allocation2 + $0x1720] sm:$0xff] %v1829
  %5665 = vst [vmem:[#allocation2 + $0x1728] sm:$0xff] %v2746
  %5666 = vst [vmem:[#allocation2 + $0x1730] sm:$0xff] %v3663
  %5667 = vst [vmem:[#allocation2 + $0x1738] sm:$0xff] %v4580
  %5668 = vst [vmem:[#allocation2 + $0x1740] sm:$0xff] %v1832
  %5669 = vst [vmem:[#allocation2 + $0x1748] sm:$0xff] %v2749
  %5670 = vst [vmem:[#allocation2 + $0x1750] sm:$0xff] %v3666
  %5671 = vst [vmem:[#allocation2 + $0x1758] sm:$0xff] %v4583
  %5672 = vst [vmem:[#allocation2 + $0x1760] sm:$0xff] %v1835
  %5673 = vst [vmem:[#allocation2 + $0x1768] sm:$0xff] %v2752
  %5674 = vst [vmem:[#allocation2 + $0x1770] sm:$0xff] %v3669
  %5675 = vst [vmem:[#allocation2 + $0x1778] sm:$0xff] %v4586
  %5676 = vst [vmem:[#allocation2 + $0x1780] sm:$0xff] %v1838
  %5677 = vst [vmem:[#allocation2 + $0x1788] sm:$0xff] %v2755
  %5678 = vst [vmem:[#allocation2 + $0x1790] sm:$0xff] %v3672
  %5679 = vst [vmem:[#allocation2 + $0x1798] sm:$0xff] %v4589
  %5680 = vst [vmem:[#allocation2 + $0x17a0] sm:$0xff] %v1841
  %5681 = vst [vmem:[#allocation2 + $0x17a8] sm:$0xff] %v2758
  %5682 = vst [vmem:[#allocation2 + $0x17b0] sm:$0xff] %v3675
  %5683 = vst [vmem:[#allocation2 + $0x17b8] sm:$0xff] %v4592
  %5684 = vst [vmem:[#allocation2 + $0x17c0] sm:$0xff] %v1844
  %5685 = vst [vmem:[#allocation2 + $0x17c8] sm:$0xff] %v2761
  %5686 = vst [vmem:[#allocation2 + $0x17d0] sm:$0xff] %v3678
  %5687 = vst [vmem:[#allocation2 + $0x17d8] sm:$0xff] %v4595
  %5688 = vst [vmem:[#allocation2 + $0x17e0] sm:$0xff] %v1847
  %5689 = vst [vmem:[#allocation2 + $0x17e8] sm:$0xff] %v2764
  %5690 = vst [vmem:[#allocation2 + $0x17f0] sm:$0xff] %v3681
  %5691 = vst [vmem:[#allocation2 + $0x17f8] sm:$0xff] %v4598
  %5692 = vst [vmem:[#allocation2 + $0x1800] sm:$0xff] %v1850
  %5693 = vst [vmem:[#allocation2 + $0x1808] sm:$0xff] %v2767
  %5694 = vst [vmem:[#allocation2 + $0x1810] sm:$0xff] %v3684
  %5695 = vst [vmem:[#allocation2 + $0x1818] sm:$0xff] %v4601
  %5696 = vst [vmem:[#allocation2 + $0x1820] sm:$0xff] %v1853
  %5697 = vst [vmem:[#allocation2 + $0x1828] sm:$0xff] %v2770
  %5698 = vst [vmem:[#allocation2 + $0x1830] sm:$0xff] %v3687
  %5699 = vst [vmem:[#allocation2 + $0x1838] sm:$0xff] %v4604
  %5700 = vst [vmem:[#allocation2 + $0x1840] sm:$0xff] %v1856
  %5701 = vst [vmem:[#allocation2 + $0x1848] sm:$0xff] %v2773
  %5702 = vst [vmem:[#allocation2 + $0x1850] sm:$0xff] %v3690
  %5703 = vst [vmem:[#allocation2 + $0x1858] sm:$0xff] %v4607
  %5704 = vst [vmem:[#allocation2 + $0x1860] sm:$0xff] %v1859
  %5705 = vst [vmem:[#allocation2 + $0x1868] sm:$0xff] %v2776
  %5706 = vst [vmem:[#allocation2 + $0x1870] sm:$0xff] %v3693
  %5707 = vst [vmem:[#allocation2 + $0x1878] sm:$0xff] %v4610
  %5708 = vst [vmem:[#allocation2 + $0x1880] sm:$0xff] %v1862
  %5709 = vst [vmem:[#allocation2 + $0x1888] sm:$0xff] %v2779
  %5710 = vst [vmem:[#allocation2 + $0x1890] sm:$0xff] %v3696
  %5711 = vst [vmem:[#allocation2 + $0x1898] sm:$0xff] %v4613
  %5712 = vst [vmem:[#allocation2 + $0x18a0] sm:$0xff] %v1865
  %5713 = vst [vmem:[#allocation2 + $0x18a8] sm:$0xff] %v2782
  %5714 = vst [vmem:[#allocation2 + $0x18b0] sm:$0xff] %v3699
  %5715 = vst [vmem:[#allocation2 + $0x18b8] sm:$0xff] %v4616
  %5716 = vst [vmem:[#allocation2 + $0x18c0] sm:$0xff] %v1868
  %5717 = vst [vmem:[#allocation2 + $0x18c8] sm:$0xff] %v2785
  %5718 = vst [vmem:[#allocation2 + $0x18d0] sm:$0xff] %v3702
  %5719 = vst [vmem:[#allocation2 + $0x18d8] sm:$0xff] %v4619
  %5720 = vst [vmem:[#allocation2 + $0x18e0] sm:$0xff] %v1871
  %5721 = vst [vmem:[#allocation2 + $0x18e8] sm:$0xff] %v2788
  %5722 = vst [vmem:[#allocation2 + $0x18f0] sm:$0xff] %v3705
  %5723 = vst [vmem:[#allocation2 + $0x18f8] sm:$0xff] %v4622
  %5724 = vst [vmem:[#allocation2 + $0x1900] sm:$0xff] %v1874
  %5725 = vst [vmem:[#allocation2 + $0x1908] sm:$0xff] %v2791
  %5726 = vst [vmem:[#allocation2 + $0x1910] sm:$0xff] %v3708
  %5727 = vst [vmem:[#allocation2 + $0x1918] sm:$0xff] %v4625
  %5728 = vst [vmem:[#allocation2 + $0x1920] sm:$0xff] %v1877
  %5729 = vst [vmem:[#allocation2 + $0x1928] sm:$0xff] %v2794
  %5730 = vst [vmem:[#allocation2 + $0x1930] sm:$0xff] %v3711
  %5731 = vst [vmem:[#allocation2 + $0x1938] sm:$0xff] %v4628
  %5732 = vst [vmem:[#allocation2 + $0x1940] sm:$0xff] %v1880
  %5733 = vst [vmem:[#allocation2 + $0x1948] sm:$0xff] %v2797
  %5734 = vst [vmem:[#allocation2 + $0x1950] sm:$0xff] %v3714
  %5735 = vst [vmem:[#allocation2 + $0x1958] sm:$0xff] %v4631
  %5736 = vst [vmem:[#allocation2 + $0x1960] sm:$0xff] %v1883
  %5737 = vst [vmem:[#allocation2 + $0x1968] sm:$0xff] %v2800
  %5738 = vst [vmem:[#allocation2 + $0x1970] sm:$0xff] %v3717
  %5739 = vst [vmem:[#allocation2 + $0x1978] sm:$0xff] %v4634
  %5740 = vst [vmem:[#allocation2 + $0x1980] sm:$0xff] %v1886
  %5741 = vst [vmem:[#allocation2 + $0x1988] sm:$0xff] %v2803
  %5742 = vst [vmem:[#allocation2 + $0x1990] sm:$0xff] %v3720
  %5743 = vst [vmem:[#allocation2 + $0x1998] sm:$0xff] %v4637
  %5744 = vst [vmem:[#allocation2 + $0x19a0] sm:$0xff] %v1889
  %5745 = vst [vmem:[#allocation2 + $0x19a8] sm:$0xff] %v2806
  %5746 = vst [vmem:[#allocation2 + $0x19b0] sm:$0xff] %v3723
  %5747 = vst [vmem:[#allocation2 + $0x19b8] sm:$0xff] %v4640
  %5748 = vst [vmem:[#allocation2 + $0x19c0] sm:$0xff] %v1892
  %5749 = vst [vmem:[#allocation2 + $0x19c8] sm:$0xff] %v2809
  %5750 = vst [vmem:[#allocation2 + $0x19d0] sm:$0xff] %v3726
  %5751 = vst [vmem:[#allocation2 + $0x19d8] sm:$0xff] %v4643
  %5752 = vst [vmem:[#allocation2 + $0x19e0] sm:$0xff] %v1895
  %5753 = vst [vmem:[#allocation2 + $0x19e8] sm:$0xff] %v2812
  %5754 = vst [vmem:[#allocation2 + $0x19f0] sm:$0xff] %v3729
  %5755 = vst [vmem:[#allocation2 + $0x19f8] sm:$0xff] %v4646
  %5756 = vst [vmem:[#allocation2 + $0x1a00] sm:$0xff] %v1898
  %5757 = vst [vmem:[#allocation2 + $0x1a08] sm:$0xff] %v2815
  %5758 = vst [vmem:[#allocation2 + $0x1a10] sm:$0xff] %v3732
  %5759 = vst [vmem:[#allocation2 + $0x1a18] sm:$0xff] %v4649
  %5760 = vst [vmem:[#allocation2 + $0x1a20] sm:$0xff] %v1901
  %5761 = vst [vmem:[#allocation2 + $0x1a28] sm:$0xff] %v2818
  %5762 = vst [vmem:[#allocation2 + $0x1a30] sm:$0xff] %v3735
  %5763 = vst [vmem:[#allocation2 + $0x1a38] sm:$0xff] %v4652
  %5764 = vst [vmem:[#allocation2 + $0x1a40] sm:$0xff] %v1904
  %5765 = vst [vmem:[#allocation2 + $0x1a48] sm:$0xff] %v2821
  %5766 = vst [vmem:[#allocation2 + $0x1a50] sm:$0xff] %v3738
  %5767 = vst [vmem:[#allocation2 + $0x1a58] sm:$0xff] %v4655
  %5768 = vst [vmem:[#allocation2 + $0x1a60] sm:$0xff] %v1907
  %5769 = vst [vmem:[#allocation2 + $0x1a68] sm:$0xff] %v2824
  %5770 = vst [vmem:[#allocation2 + $0x1a70] sm:$0xff] %v3741
  %5771 = vst [vmem:[#allocation2 + $0x1a78] sm:$0xff] %v4658
  %5772 = vst [vmem:[#allocation2 + $0x1a80] sm:$0xff] %v1910
  %5773 = vst [vmem:[#allocation2 + $0x1a88] sm:$0xff] %v2827
  %5774 = vst [vmem:[#allocation2 + $0x1a90] sm:$0xff] %v3744
  %5775 = vst [vmem:[#allocation2 + $0x1a98] sm:$0xff] %v4661
  %5776 = vst [vmem:[#allocation2 + $0x1aa0] sm:$0xff] %v1913
  %5777 = vst [vmem:[#allocation2 + $0x1aa8] sm:$0xff] %v2830
  %5778 = vst [vmem:[#allocation2 + $0x1ab0] sm:$0xff] %v3747
  %5779 = vst [vmem:[#allocation2 + $0x1ab8] sm:$0xff] %v4664
  %5780 = vst [vmem:[#allocation2 + $0x1ac0] sm:$0xff] %v1916
  %5781 = vst [vmem:[#allocation2 + $0x1ac8] sm:$0xff] %v2833
  %5782 = vst [vmem:[#allocation2 + $0x1ad0] sm:$0xff] %v3750
  %5783 = vst [vmem:[#allocation2 + $0x1ad8] sm:$0xff] %v4667
  %5784 = vst [vmem:[#allocation2 + $0x1ae0] sm:$0xff] %v1919
  %5785 = vst [vmem:[#allocation2 + $0x1ae8] sm:$0xff] %v2836
  %5786 = vst [vmem:[#allocation2 + $0x1af0] sm:$0xff] %v3753
  %5787 = vst [vmem:[#allocation2 + $0x1af8] sm:$0xff] %v4670
  %5788 = vst [vmem:[#allocation2 + $0x1b00] sm:$0xff] %v1922
  %5789 = vst [vmem:[#allocation2 + $0x1b08] sm:$0xff] %v2839
  %5790 = vst [vmem:[#allocation2 + $0x1b10] sm:$0xff] %v3756
  %5791 = vst [vmem:[#allocation2 + $0x1b18] sm:$0xff] %v4673
  %5792 = vst [vmem:[#allocation2 + $0x1b20] sm:$0xff] %v1925
  %5793 = vst [vmem:[#allocation2 + $0x1b28] sm:$0xff] %v2842
  %5794 = vst [vmem:[#allocation2 + $0x1b30] sm:$0xff] %v3759
  %5795 = vst [vmem:[#allocation2 + $0x1b38] sm:$0xff] %v4676
  %5796 = vst [vmem:[#allocation2 + $0x1b40] sm:$0xff] %v1928
  %5797 = vst [vmem:[#allocation2 + $0x1b48] sm:$0xff] %v2845
  %5798 = vst [vmem:[#allocation2 + $0x1b50] sm:$0xff] %v3762
  %5799 = vst [vmem:[#allocation2 + $0x1b58] sm:$0xff] %v4679
  %5800 = vst [vmem:[#allocation2 + $0x1b60] sm:$0xff] %v1931
  %5801 = vst [vmem:[#allocation2 + $0x1b68] sm:$0xff] %v2848
  %5802 = vst [vmem:[#allocation2 + $0x1b70] sm:$0xff] %v3765
  %5803 = vst [vmem:[#allocation2 + $0x1b78] sm:$0xff] %v4682
  %5804 = vst [vmem:[#allocation2 + $0x1b80] sm:$0xff] %v1934
  %5805 = vst [vmem:[#allocation2 + $0x1b88] sm:$0xff] %v2851
  %5806 = vst [vmem:[#allocation2 + $0x1b90] sm:$0xff] %v3768
  %5807 = vst [vmem:[#allocation2 + $0x1b98] sm:$0xff] %v4685
  %5808 = vst [vmem:[#allocation2 + $0x1ba0] sm:$0xff] %v1937
  %5809 = vst [vmem:[#allocation2 + $0x1ba8] sm:$0xff] %v2854
  %5810 = vst [vmem:[#allocation2 + $0x1bb0] sm:$0xff] %v3771
  %5811 = vst [vmem:[#allocation2 + $0x1bb8] sm:$0xff] %v4688
  %5812 = vst [vmem:[#allocation2 + $0x1bc0] sm:$0xff] %v1940
  %5813 = vst [vmem:[#allocation2 + $0x1bc8] sm:$0xff] %v2857
  %5814 = vst [vmem:[#allocation2 + $0x1bd0] sm:$0xff] %v3774
  %5815 = vst [vmem:[#allocation2 + $0x1bd8] sm:$0xff] %v4691
  %5816 = vst [vmem:[#allocation2 + $0x1be0] sm:$0xff] %v1943
  %5817 = vst [vmem:[#allocation2 + $0x1be8] sm:$0xff] %v2860
  %5818 = vst [vmem:[#allocation2 + $0x1bf0] sm:$0xff] %v3777
  %5819 = vst [vmem:[#allocation2 + $0x1bf8] sm:$0xff] %v4694
  %5820 = vst [vmem:[#allocation2 + $0x1c00] sm:$0xff] %v1946
  %5821 = vst [vmem:[#allocation2 + $0x1c08] sm:$0xff] %v2863
  %5822 = vst [vmem:[#allocation2 + $0x1c10] sm:$0xff] %v3780
  %5823 = vst [vmem:[#allocation2 + $0x1c18] sm:$0xff] %v4697
  %5824 = vst [vmem:[#allocation2 + $0x1c20] sm:$0xff] %v1949
  %5825 = vst [vmem:[#allocation2 + $0x1c28] sm:$0xff] %v2866
  %5826 = vst [vmem:[#allocation2 + $0x1c30] sm:$0xff] %v3783
  %5827 = vst [vmem:[#allocation2 + $0x1c38] sm:$0xff] %v4700
  %5828 = vst [vmem:[#allocation2 + $0x1c40] sm:$0xff] %v1952
  %5829 = vst [vmem:[#allocation2 + $0x1c48] sm:$0xff] %v2869
  %5830 = vst [vmem:[#allocation2 + $0x1c50] sm:$0xff] %v3786
  %5831 = vst [vmem:[#allocation2 + $0x1c58] sm:$0xff] %v4703
  %5832 = vst [vmem:[#allocation2 + $0x1c60] sm:$0xff] %v1955
  %5833 = vst [vmem:[#allocation2 + $0x1c68] sm:$0xff] %v2872
  %5834 = vst [vmem:[#allocation2 + $0x1c70] sm:$0xff] %v3789
  %5835 = vst [vmem:[#allocation2 + $0x1c78] sm:$0xff] %v4706
  %5836 = vst [vmem:[#allocation2 + $0x1c80] sm:$0xff] %v1958
  %5837 = vst [vmem:[#allocation2 + $0x1c88] sm:$0xff] %v2875
  %5838 = vst [vmem:[#allocation2 + $0x1c90] sm:$0xff] %v3792
  %5839 = vst [vmem:[#allocation2 + $0x1c98] sm:$0xff] %v4709
  %5840 = vst [vmem:[#allocation2 + $0x1ca0] sm:$0xff] %v1961
  %5841 = vst [vmem:[#allocation2 + $0x1ca8] sm:$0xff] %v2878
  %5842 = vst [vmem:[#allocation2 + $0x1cb0] sm:$0xff] %v3795
  %5843 = vst [vmem:[#allocation2 + $0x1cb8] sm:$0xff] %v4712
  %5844 = vst [vmem:[#allocation2 + $0x1cc0] sm:$0xff] %v1964
  %5845 = vst [vmem:[#allocation2 + $0x1cc8] sm:$0xff] %v2881
  %5846 = vst [vmem:[#allocation2 + $0x1cd0] sm:$0xff] %v3798
  %5847 = vst [vmem:[#allocation2 + $0x1cd8] sm:$0xff] %v4715
  %5848 = vst [vmem:[#allocation2 + $0x1ce0] sm:$0xff] %v1967
  %5849 = vst [vmem:[#allocation2 + $0x1ce8] sm:$0xff] %v2884
  %5850 = vst [vmem:[#allocation2 + $0x1cf0] sm:$0xff] %v3801
  %5851 = vst [vmem:[#allocation2 + $0x1cf8] sm:$0xff] %v4718
  %5852 = vst [vmem:[#allocation2 + $0x1d00] sm:$0xff] %v1970
  %5853 = vst [vmem:[#allocation2 + $0x1d08] sm:$0xff] %v2887
  %5854 = vst [vmem:[#allocation2 + $0x1d10] sm:$0xff] %v3804
  %5855 = vst [vmem:[#allocation2 + $0x1d18] sm:$0xff] %v4721
  %5856 = vst [vmem:[#allocation2 + $0x1d20] sm:$0xff] %v1973
  %5857 = vst [vmem:[#allocation2 + $0x1d28] sm:$0xff] %v2890
  %5858 = vst [vmem:[#allocation2 + $0x1d30] sm:$0xff] %v3807
  %5859 = vst [vmem:[#allocation2 + $0x1d38] sm:$0xff] %v4724
  %5860 = vst [vmem:[#allocation2 + $0x1d40] sm:$0xff] %v1976
  %5861 = vst [vmem:[#allocation2 + $0x1d48] sm:$0xff] %v2893
  %5862 = vst [vmem:[#allocation2 + $0x1d50] sm:$0xff] %v3810
  %5863 = vst [vmem:[#allocation2 + $0x1d58] sm:$0xff] %v4727
  %5864 = vst [vmem:[#allocation2 + $0x1d60] sm:$0xff] %v1979
  %5865 = vst [vmem:[#allocation2 + $0x1d68] sm:$0xff] %v2896
  %5866 = vst [vmem:[#allocation2 + $0x1d70] sm:$0xff] %v3813
  %5867 = vst [vmem:[#allocation2 + $0x1d78] sm:$0xff] %v4730
  %5868 = vst [vmem:[#allocation2 + $0x1d80] sm:$0xff] %v1982
  %5869 = vst [vmem:[#allocation2 + $0x1d88] sm:$0xff] %v2899
  %5870 = vst [vmem:[#allocation2 + $0x1d90] sm:$0xff] %v3816
  %5871 = vst [vmem:[#allocation2 + $0x1d98] sm:$0xff] %v4733
  %5872 = vst [vmem:[#allocation2 + $0x1da0] sm:$0xff] %v1985
  %5873 = vst [vmem:[#allocation2 + $0x1da8] sm:$0xff] %v2902
  %5874 = vst [vmem:[#allocation2 + $0x1db0] sm:$0xff] %v3819
  %5875 = vst [vmem:[#allocation2 + $0x1db8] sm:$0xff] %v4736
  %5876 = vst [vmem:[#allocation2 + $0x1dc0] sm:$0xff] %v1988
  %5877 = vst [vmem:[#allocation2 + $0x1dc8] sm:$0xff] %v2905
  %5878 = vst [vmem:[#allocation2 + $0x1dd0] sm:$0xff] %v3822
  %5879 = vst [vmem:[#allocation2 + $0x1dd8] sm:$0xff] %v4739
  %5880 = vst [vmem:[#allocation2 + $0x1de0] sm:$0xff] %v1991
  %5881 = vst [vmem:[#allocation2 + $0x1de8] sm:$0xff] %v2908
  %5882 = vst [vmem:[#allocation2 + $0x1df0] sm:$0xff] %v3825
  %5883 = vst [vmem:[#allocation2 + $0x1df8] sm:$0xff] %v4742
  %5884 = vst [vmem:[#allocation2 + $0x1e00] sm:$0xff] %v1994
  %5885 = vst [vmem:[#allocation2 + $0x1e08] sm:$0xff] %v2911
  %5886 = vst [vmem:[#allocation2 + $0x1e10] sm:$0xff] %v3828
  %5887 = vst [vmem:[#allocation2 + $0x1e18] sm:$0xff] %v4745
  %5888 = vst [vmem:[#allocation2 + $0x1e20] sm:$0xff] %v1997
  %5889 = vst [vmem:[#allocation2 + $0x1e28] sm:$0xff] %v2914
  %5890 = vst [vmem:[#allocation2 + $0x1e30] sm:$0xff] %v3831
  %5891 = vst [vmem:[#allocation2 + $0x1e38] sm:$0xff] %v4748
  %5892 = vst [vmem:[#allocation2 + $0x1e40] sm:$0xff] %v2000
  %5893 = vst [vmem:[#allocation2 + $0x1e48] sm:$0xff] %v2917
  %5894 = vst [vmem:[#allocation2 + $0x1e50] sm:$0xff] %v3834
  %5895 = vst [vmem:[#allocation2 + $0x1e58] sm:$0xff] %v4751
  %5896 = vst [vmem:[#allocation2 + $0x1e60] sm:$0xff] %v2003
  %5897 = vst [vmem:[#allocation2 + $0x1e68] sm:$0xff] %v2920
  %5898 = vst [vmem:[#allocation2 + $0x1e70] sm:$0xff] %v3837
  %5899 = vst [vmem:[#allocation2 + $0x1e78] sm:$0xff] %v4754
  %5900 = vst [vmem:[#allocation2 + $0x1e80] sm:$0xff] %v2006
  %5901 = vst [vmem:[#allocation2 + $0x1e88] sm:$0xff] %v2923
  %5902 = vst [vmem:[#allocation2 + $0x1e90] sm:$0xff] %v3840
  %5903 = vst [vmem:[#allocation2 + $0x1e98] sm:$0xff] %v4757
  %5904 = vst [vmem:[#allocation2 + $0x1ea0] sm:$0xff] %v2009
  %5905 = vst [vmem:[#allocation2 + $0x1ea8] sm:$0xff] %v2926
  %5906 = vst [vmem:[#allocation2 + $0x1eb0] sm:$0xff] %v3843
  %5907 = vst [vmem:[#allocation2 + $0x1eb8] sm:$0xff] %v4760
  %5908 = vst [vmem:[#allocation2 + $0x1ec0] sm:$0xff] %v2012
  %5909 = vst [vmem:[#allocation2 + $0x1ec8] sm:$0xff] %v2929
  %5910 = vst [vmem:[#allocation2 + $0x1ed0] sm:$0xff] %v3846
  %5911 = vst [vmem:[#allocation2 + $0x1ed8] sm:$0xff] %v4763
  %5912 = vst [vmem:[#allocation2 + $0x1ee0] sm:$0xff] %v2015
  %5913 = vst [vmem:[#allocation2 + $0x1ee8] sm:$0xff] %v2932
  %5914 = vst [vmem:[#allocation2 + $0x1ef0] sm:$0xff] %v3849
  %5915 = vst [vmem:[#allocation2 + $0x1ef8] sm:$0xff] %v4766
  %5916 = vst [vmem:[#allocation2 + $0x1f00] sm:$0xff] %v2018
  %5917 = vst [vmem:[#allocation2 + $0x1f08] sm:$0xff] %v2935
  %5918 = vst [vmem:[#allocation2 + $0x1f10] sm:$0xff] %v3852
  %5919 = vst [vmem:[#allocation2 + $0x1f18] sm:$0xff] %v4769
  %5920 = vst [vmem:[#allocation2 + $0x1f20] sm:$0xff] %v2021
  %5921 = vst [vmem:[#allocation2 + $0x1f28] sm:$0xff] %v2938
  %5922 = vst [vmem:[#allocation2 + $0x1f30] sm:$0xff] %v3855
  %5923 = vst [vmem:[#allocation2 + $0x1f38] sm:$0xff] %v4772
  %5924 = vst [vmem:[#allocation2 + $0x1f40] sm:$0xff] %v2024
  %5925 = vst [vmem:[#allocation2 + $0x1f48] sm:$0xff] %v2941
  %5926 = vst [vmem:[#allocation2 + $0x1f50] sm:$0xff] %v3858
  %5927 = vst [vmem:[#allocation2 + $0x1f58] sm:$0xff] %v4775
  %5928 = vst [vmem:[#allocation2 + $0x1f60] sm:$0xff] %v2027
  %5929 = vst [vmem:[#allocation2 + $0x1f68] sm:$0xff] %v2944
  %5930 = vst [vmem:[#allocation2 + $0x1f70] sm:$0xff] %v3861
  %5931 = vst [vmem:[#allocation2 + $0x1f78] sm:$0xff] %v4778
  %5932 = vst [vmem:[#allocation2 + $0x1f80] sm:$0xff] %v2030
  %5933 = vst [vmem:[#allocation2 + $0x1f88] sm:$0xff] %v2947
  %5934 = vst [vmem:[#allocation2 + $0x1f90] sm:$0xff] %v3864
  %5935 = vst [vmem:[#allocation2 + $0x1f98] sm:$0xff] %v4781
  %5936 = vst [vmem:[#allocation2 + $0x1fa0] sm:$0xff] %v2033
  %5937 = vst [vmem:[#allocation2 + $0x1fa8] sm:$0xff] %v2950
  %5938 = vst [vmem:[#allocation2 + $0x1fb0] sm:$0xff] %v3867
  %5939 = vst [vmem:[#allocation2 + $0x1fb8] sm:$0xff] %v4784
  %5940 = vst [vmem:[#allocation2 + $0x1fc0] sm:$0xff] %v2036
  %5941 = vst [vmem:[#allocation2 + $0x1fc8] sm:$0xff] %v2953
  %5942 = vst [vmem:[#allocation2 + $0x1fd0] sm:$0xff] %v3870
  %5943 = vst [vmem:[#allocation2 + $0x1fd8] sm:$0xff] %v4787
  %5944 = vst [vmem:[#allocation2 + $0x1fe0] sm:$0xff] %v2039
  %5945 = vst [vmem:[#allocation2 + $0x1fe8] sm:$0xff] %v2956
  %5946 = vst [vmem:[#allocation2 + $0x1ff0] sm:$0xff] %v3873
  %5947 = vst [vmem:[#allocation2 + $0x1ff8] sm:$0xff] %v4790
  %5948 = vst [vmem:[#allocation2 + $0x2000] sm:$0xff] %v2042
  %5949 = vst [vmem:[#allocation2 + $0x2008] sm:$0xff] %v2959
  %5950 = vst [vmem:[#allocation2 + $0x2010] sm:$0xff] %v3876
  %5951 = vst [vmem:[#allocation2 + $0x2018] sm:$0xff] %v4793
  %5952 = vst [vmem:[#allocation2 + $0x2020] sm:$0xff] %v2045
  %5953 = vst [vmem:[#allocation2 + $0x2028] sm:$0xff] %v2962
  %5954 = vst [vmem:[#allocation2 + $0x2030] sm:$0xff] %v3879
  %5955 = vst [vmem:[#allocation2 + $0x2038] sm:$0xff] %v4796
  %5956 = vst [vmem:[#allocation2 + $0x2040] sm:$0xff] %v2048
  %5957 = vst [vmem:[#allocation2 + $0x2048] sm:$0xff] %v2965
  %5958 = vst [vmem:[#allocation2 + $0x2050] sm:$0xff] %v3882
  %5959 = vst [vmem:[#allocation2 + $0x2058] sm:$0xff] %v4799
  %5960 = vst [vmem:[#allocation2 + $0x2060] sm:$0xff] %v2051
  %5961 = vst [vmem:[#allocation2 + $0x2068] sm:$0xff] %v2968
  %5962 = vst [vmem:[#allocation2 + $0x2070] sm:$0xff] %v3885
  %5963 = vst [vmem:[#allocation2 + $0x2078] sm:$0xff] %v4802
  %5964 = vst [vmem:[#allocation2 + $0x2080] sm:$0xff] %v2054
  %5965 = vst [vmem:[#allocation2 + $0x2088] sm:$0xff] %v2971
  %5966 = vst [vmem:[#allocation2 + $0x2090] sm:$0xff] %v3888
  %5967 = vst [vmem:[#allocation2 + $0x2098] sm:$0xff] %v4805
  %5968 = vst [vmem:[#allocation2 + $0x20a0] sm:$0xff] %v2057
  %5969 = vst [vmem:[#allocation2 + $0x20a8] sm:$0xff] %v2974
  %5970 = vst [vmem:[#allocation2 + $0x20b0] sm:$0xff] %v3891
  %5971 = vst [vmem:[#allocation2 + $0x20b8] sm:$0xff] %v4808
  %5972 = vst [vmem:[#allocation2 + $0x20c0] sm:$0xff] %v2060
  %5973 = vst [vmem:[#allocation2 + $0x20c8] sm:$0xff] %v2977
  %5974 = vst [vmem:[#allocation2 + $0x20d0] sm:$0xff] %v3894
  %5975 = vst [vmem:[#allocation2 + $0x20d8] sm:$0xff] %v4811
  %5976 = vst [vmem:[#allocation2 + $0x20e0] sm:$0xff] %v2063
  %5977 = vst [vmem:[#allocation2 + $0x20e8] sm:$0xff] %v2980
  %5978 = vst [vmem:[#allocation2 + $0x20f0] sm:$0xff] %v3897
  %5979 = vst [vmem:[#allocation2 + $0x20f8] sm:$0xff] %v4814
  %5980 = vst [vmem:[#allocation2 + $0x2100] sm:$0xff] %v2066
  %5981 = vst [vmem:[#allocation2 + $0x2108] sm:$0xff] %v2983
  %5982 = vst [vmem:[#allocation2 + $0x2110] sm:$0xff] %v3900
  %5983 = vst [vmem:[#allocation2 + $0x2118] sm:$0xff] %v4817
  %5984 = vst [vmem:[#allocation2 + $0x2120] sm:$0xff] %v2069
  %5985 = vst [vmem:[#allocation2 + $0x2128] sm:$0xff] %v2986
  %5986 = vst [vmem:[#allocation2 + $0x2130] sm:$0xff] %v3903
  %5987 = vst [vmem:[#allocation2 + $0x2138] sm:$0xff] %v4820
  %5988 = vst [vmem:[#allocation2 + $0x2140] sm:$0xff] %v2072
  %5989 = vst [vmem:[#allocation2 + $0x2148] sm:$0xff] %v2989
  %5990 = vst [vmem:[#allocation2 + $0x2150] sm:$0xff] %v3906
  %5991 = vst [vmem:[#allocation2 + $0x2158] sm:$0xff] %v4823
  %5992 = vst [vmem:[#allocation2 + $0x2160] sm:$0xff] %v2075
  %5993 = vst [vmem:[#allocation2 + $0x2168] sm:$0xff] %v2992
  %5994 = vst [vmem:[#allocation2 + $0x2170] sm:$0xff] %v3909
  %5995 = vst [vmem:[#allocation2 + $0x2178] sm:$0xff] %v4826
  %5996 = vst [vmem:[#allocation2 + $0x2180] sm:$0xff] %v2078
  %5997 = vst [vmem:[#allocation2 + $0x2188] sm:$0xff] %v2995
  %5998 = vst [vmem:[#allocation2 + $0x2190] sm:$0xff] %v3912
  %5999 = vst [vmem:[#allocation2 + $0x2198] sm:$0xff] %v4829
  %6000 = vst [vmem:[#allocation2 + $0x21a0] sm:$0xff] %v2081
  %6001 = vst [vmem:[#allocation2 + $0x21a8] sm:$0xff] %v2998
  %6002 = vst [vmem:[#allocation2 + $0x21b0] sm:$0xff] %v3915
  %6003 = vst [vmem:[#allocation2 + $0x21b8] sm:$0xff] %v4832
  %6004 = vst [vmem:[#allocation2 + $0x21c0] sm:$0xff] %v2084
  %6005 = vst [vmem:[#allocation2 + $0x21c8] sm:$0xff] %v3001
  %6006 = vst [vmem:[#allocation2 + $0x21d0] sm:$0xff] %v3918
  %6007 = vst [vmem:[#allocation2 + $0x21d8] sm:$0xff] %v4835
  %6008 = vst [vmem:[#allocation2 + $0x21e0] sm:$0xff] %v2087
  %6009 = vst [vmem:[#allocation2 + $0x21e8] sm:$0xff] %v3004
  %6010 = vst [vmem:[#allocation2 + $0x21f0] sm:$0xff] %v3921
  %6011 = vst [vmem:[#allocation2 + $0x21f8] sm:$0xff] %v4838
  %6012 = vst [vmem:[#allocation2 + $0x2200] sm:$0xff] %v2090
  %6013 = vst [vmem:[#allocation2 + $0x2208] sm:$0xff] %v3007
  %6014 = vst [vmem:[#allocation2 + $0x2210] sm:$0xff] %v3924
  %6015 = vst [vmem:[#allocation2 + $0x2218] sm:$0xff] %v4841
  %6016 = vst [vmem:[#allocation2 + $0x2220] sm:$0xff] %v2093
  %6017 = vst [vmem:[#allocation2 + $0x2228] sm:$0xff] %v3010
  %6018 = vst [vmem:[#allocation2 + $0x2230] sm:$0xff] %v3927
  %6019 = vst [vmem:[#allocation2 + $0x2238] sm:$0xff] %v4844
  %6020 = vst [vmem:[#allocation2 + $0x2240] sm:$0xff] %v2096
  %6021 = vst [vmem:[#allocation2 + $0x2248] sm:$0xff] %v3013
  %6022 = vst [vmem:[#allocation2 + $0x2250] sm:$0xff] %v3930
  %6023 = vst [vmem:[#allocation2 + $0x2258] sm:$0xff] %v4847
  %6024 = vst [vmem:[#allocation2 + $0x2260] sm:$0xff] %v2099
  %6025 = vst [vmem:[#allocation2 + $0x2268] sm:$0xff] %v3016
  %6026 = vst [vmem:[#allocation2 + $0x2270] sm:$0xff] %v3933
  %6027 = vst [vmem:[#allocation2 + $0x2278] sm:$0xff] %v4850
  %6028 = vst [vmem:[#allocation2 + $0x2280] sm:$0xff] %v2102
  %6029 = vst [vmem:[#allocation2 + $0x2288] sm:$0xff] %v3019
  %6030 = vst [vmem:[#allocation2 + $0x2290] sm:$0xff] %v3936
  %6031 = vst [vmem:[#allocation2 + $0x2298] sm:$0xff] %v4853
  %6032 = vst [vmem:[#allocation2 + $0x22a0] sm:$0xff] %v2105
  %6033 = vst [vmem:[#allocation2 + $0x22a8] sm:$0xff] %v3022
  %6034 = vst [vmem:[#allocation2 + $0x22b0] sm:$0xff] %v3939
  %6035 = vst [vmem:[#allocation2 + $0x22b8] sm:$0xff] %v4856
  %6036 = vst [vmem:[#allocation2 + $0x22c0] sm:$0xff] %v2108
  %6037 = vst [vmem:[#allocation2 + $0x22c8] sm:$0xff] %v3025
  %6038 = vst [vmem:[#allocation2 + $0x22d0] sm:$0xff] %v3942
  %6039 = vst [vmem:[#allocation2 + $0x22d8] sm:$0xff] %v4859
  %6040 = vst [vmem:[#allocation2 + $0x22e0] sm:$0xff] %v2111
  %6041 = vst [vmem:[#allocation2 + $0x22e8] sm:$0xff] %v3028
  %6042 = vst [vmem:[#allocation2 + $0x22f0] sm:$0xff] %v3945
  %6043 = vst [vmem:[#allocation2 + $0x22f8] sm:$0xff] %v4862
  %6044 = vst [vmem:[#allocation2 + $0x2300] sm:$0xff] %v2114
  %6045 = vst [vmem:[#allocation2 + $0x2308] sm:$0xff] %v3031
  %6046 = vst [vmem:[#allocation2 + $0x2310] sm:$0xff] %v3948
  %6047 = vst [vmem:[#allocation2 + $0x2318] sm:$0xff] %v4865
  %6048 = vst [vmem:[#allocation2 + $0x2320] sm:$0xff] %v2117
  %6049 = vst [vmem:[#allocation2 + $0x2328] sm:$0xff] %v3034
  %6050 = vst [vmem:[#allocation2 + $0x2330] sm:$0xff] %v3951
  %6051 = vst [vmem:[#allocation2 + $0x2338] sm:$0xff] %v4868
  %6052 = vst [vmem:[#allocation2 + $0x2340] sm:$0xff] %v2120
  %6053 = vst [vmem:[#allocation2 + $0x2348] sm:$0xff] %v3037
  %6054 = vst [vmem:[#allocation2 + $0x2350] sm:$0xff] %v3954
  %6055 = vst [vmem:[#allocation2 + $0x2358] sm:$0xff] %v4871
  %6056 = vst [vmem:[#allocation2 + $0x2360] sm:$0xff] %v2123
  %6057 = vst [vmem:[#allocation2 + $0x2368] sm:$0xff] %v3040
  %6058 = vst [vmem:[#allocation2 + $0x2370] sm:$0xff] %v3957
  %6059 = vst [vmem:[#allocation2 + $0x2378] sm:$0xff] %v4874
  %6060 = vst [vmem:[#allocation2 + $0x2380] sm:$0xff] %v2126
  %6061 = vst [vmem:[#allocation2 + $0x2388] sm:$0xff] %v3043
  %6062 = vst [vmem:[#allocation2 + $0x2390] sm:$0xff] %v3960
  %6063 = vst [vmem:[#allocation2 + $0x2398] sm:$0xff] %v4877
  %6064 = vst [vmem:[#allocation2 + $0x23a0] sm:$0xff] %v2129
  %6065 = vst [vmem:[#allocation2 + $0x23a8] sm:$0xff] %v3046
  %6066 = vst [vmem:[#allocation2 + $0x23b0] sm:$0xff] %v3963
  %6067 = vst [vmem:[#allocation2 + $0x23b8] sm:$0xff] %v4880
  %6068 = vst [vmem:[#allocation2 + $0x23c0] sm:$0xff] %v2132
  %6069 = vst [vmem:[#allocation2 + $0x23c8] sm:$0xff] %v3049
  %6070 = vst [vmem:[#allocation2 + $0x23d0] sm:$0xff] %v3966
  %6071 = vst [vmem:[#allocation2 + $0x23d8] sm:$0xff] %v4883
  %6072 = vst [vmem:[#allocation2 + $0x23e0] sm:$0xff] %v2135
  %6073 = vst [vmem:[#allocation2 + $0x23e8] sm:$0xff] %v3052
  %6074 = vst [vmem:[#allocation2 + $0x23f0] sm:$0xff] %v3969
  %6075 = vst [vmem:[#allocation2 + $0x23f8] sm:$0xff] %v4886
  %6076 = vst [vmem:[#allocation2 + $0x2400] sm:$0xff] %v2138
  %6077 = vst [vmem:[#allocation2 + $0x2408] sm:$0xff] %v3055
  %6078 = vst [vmem:[#allocation2 + $0x2410] sm:$0xff] %v3972
  %6079 = vst [vmem:[#allocation2 + $0x2418] sm:$0xff] %v4889
  %6080 = vst [vmem:[#allocation2 + $0x2420] sm:$0xff] %v2141
  %6081 = vst [vmem:[#allocation2 + $0x2428] sm:$0xff] %v3058
  %6082 = vst [vmem:[#allocation2 + $0x2430] sm:$0xff] %v3975
  %6083 = vst [vmem:[#allocation2 + $0x2438] sm:$0xff] %v4892
  %6084 = vst [vmem:[#allocation2 + $0x2440] sm:$0xff] %v2144
  %6085 = vst [vmem:[#allocation2 + $0x2448] sm:$0xff] %v3061
  %6086 = vst [vmem:[#allocation2 + $0x2450] sm:$0xff] %v3978
  %6087 = vst [vmem:[#allocation2 + $0x2458] sm:$0xff] %v4895
  %6088 = vst [vmem:[#allocation2 + $0x2460] sm:$0xff] %v2147
  %6089 = vst [vmem:[#allocation2 + $0x2468] sm:$0xff] %v3064
  %6090 = vst [vmem:[#allocation2 + $0x2470] sm:$0xff] %v3981
  %6091 = vst [vmem:[#allocation2 + $0x2478] sm:$0xff] %v4898
  %6092 = vst [vmem:[#allocation2 + $0x2480] sm:$0xff] %v2150
  %6093 = vst [vmem:[#allocation2 + $0x2488] sm:$0xff] %v3067
  %6094 = vst [vmem:[#allocation2 + $0x2490] sm:$0xff] %v3984
  %6095 = vst [vmem:[#allocation2 + $0x2498] sm:$0xff] %v4901
  %6096 = vst [vmem:[#allocation2 + $0x24a0] sm:$0xff] %v2153
  %6097 = vst [vmem:[#allocation2 + $0x24a8] sm:$0xff] %v3070
  %6098 = vst [vmem:[#allocation2 + $0x24b0] sm:$0xff] %v3987
  %6099 = vst [vmem:[#allocation2 + $0x24b8] sm:$0xff] %v4904
  %6100 = vst [vmem:[#allocation2 + $0x24c0] sm:$0xff] %v2156
  %6101 = vst [vmem:[#allocation2 + $0x24c8] sm:$0xff] %v3073
  %6102 = vst [vmem:[#allocation2 + $0x24d0] sm:$0xff] %v3990
  %6103 = vst [vmem:[#allocation2 + $0x24d8] sm:$0xff] %v4907
  %6104 = vst [vmem:[#allocation2 + $0x24e0] sm:$0xff] %v2159
  %6105 = vst [vmem:[#allocation2 + $0x24e8] sm:$0xff] %v3076
  %6106 = vst [vmem:[#allocation2 + $0x24f0] sm:$0xff] %v3993
  %6107 = vst [vmem:[#allocation2 + $0x24f8] sm:$0xff] %v4910
  %6108 = vst [vmem:[#allocation2 + $0x2500] sm:$0xff] %v2162
  %6109 = vst [vmem:[#allocation2 + $0x2508] sm:$0xff] %v3079
  %6110 = vst [vmem:[#allocation2 + $0x2510] sm:$0xff] %v3996
  %6111 = vst [vmem:[#allocation2 + $0x2518] sm:$0xff] %v4913
  %6112 = vst [vmem:[#allocation2 + $0x2520] sm:$0xff] %v2165
  %6113 = vst [vmem:[#allocation2 + $0x2528] sm:$0xff] %v3082
  %6114 = vst [vmem:[#allocation2 + $0x2530] sm:$0xff] %v3999
  %6115 = vst [vmem:[#allocation2 + $0x2538] sm:$0xff] %v4916
  %6116 = vst [vmem:[#allocation2 + $0x2540] sm:$0xff] %v2168
  %6117 = vst [vmem:[#allocation2 + $0x2548] sm:$0xff] %v3085
  %6118 = vst [vmem:[#allocation2 + $0x2550] sm:$0xff] %v4002
  %6119 = vst [vmem:[#allocation2 + $0x2558] sm:$0xff] %v4919
  %6120 = vst [vmem:[#allocation2 + $0x2560] sm:$0xff] %v2171
  %6121 = vst [vmem:[#allocation2 + $0x2568] sm:$0xff] %v3088
  %6122 = vst [vmem:[#allocation2 + $0x2570] sm:$0xff] %v4005
  %6123 = vst [vmem:[#allocation2 + $0x2578] sm:$0xff] %v4922
  %v6124 = vld [vmem:[%s4] sm:$0xff]
  %v6125 = vld [vmem:[%s4 + $0x8] sm:$0xff]
  %v6126 = vld [vmem:[%s4 + $0x10] sm:$0xff]
  %v6127 = vld [vmem:[%s4 + $0x18] sm:$0xff]
  %v6128 = vld [vmem:[%s4 + $0x20] sm:$0xff]
  %v6129 = vld [vmem:[%s4 + $0x28] sm:$0xff]
  %v6130 = vld [vmem:[%s4 + $0x30] sm:$0xff]
  %v6131 = vld [vmem:[%s4 + $0x38] sm:$0xff]
  %v6132 = vld [vmem:[%s4 + $0x40] sm:$0xff]
  %v6133 = vld [vmem:[%s4 + $0x48] sm:$0xff]
  %v6134 = vld [vmem:[%s4 + $0x50] sm:$0xff]
  %v6135 = vld [vmem:[%s4 + $0x58] sm:$0xff]
  %v6136 = vld [vmem:[%s4 + $0x60] sm:$0xff]
  %v6137 = vld [vmem:[%s4 + $0x68] sm:$0xff]
  %v6138 = vld [vmem:[%s4 + $0x70] sm:$0xff]
  %v6139 = vld [vmem:[%s4 + $0x78] sm:$0xff]
  %v6140 = vld [vmem:[%s4 + $0x80] sm:$0xff]
  %v6141 = vld [vmem:[%s4 + $0x88] sm:$0xff]
  %v6142 = vld [vmem:[%s4 + $0x90] sm:$0xff]
  %v6143 = vld [vmem:[%s4 + $0x98] sm:$0xff]
  %v6144 = vld [vmem:[%s4 + $0xa0] sm:$0xff]
  %v6145 = vld [vmem:[%s4 + $0xa8] sm:$0xff]
  %v6146 = vld [vmem:[%s4 + $0xb0] sm:$0xff]
  %v6147 = vld [vmem:[%s4 + $0xb8] sm:$0xff]
  %v6148 = vld [vmem:[%s4 + $0xc0] sm:$0xff]
  %v6149 = vld [vmem:[%s4 + $0xc8] sm:$0xff]
  %v6150 = vld [vmem:[%s4 + $0xd0] sm:$0xff]
  %v6151 = vld [vmem:[%s4 + $0xd8] sm:$0xff]
  %v6152 = vld [vmem:[%s4 + $0xe0] sm:$0xff]
  %v6153 = vld [vmem:[%s4 + $0xe8] sm:$0xff]
  %v6154 = vld [vmem:[%s4 + $0xf0] sm:$0xff]
  %v6155 = vld [vmem:[%s4 + $0xf8] sm:$0xff]
  %v6156 = vld [vmem:[%s4 + $0x100] sm:$0xff]
  %v6157 = vld [vmem:[%s4 + $0x108] sm:$0xff]
  %v6158 = vld [vmem:[%s4 + $0x110] sm:$0xff]
  %v6159 = vld [vmem:[%s4 + $0x118] sm:$0xff]
  %v6160 = vld [vmem:[%s4 + $0x120] sm:$0xff]
  %v6161 = vld [vmem:[%s4 + $0x128] sm:$0xff]
  %v6162 = vld [vmem:[%s4 + $0x130] sm:$0xff]
  %v6163 = vld [vmem:[%s4 + $0x138] sm:$0xff]
  %v6164 = vld [vmem:[%s4 + $0x140] sm:$0xff]
  %v6165 = vld [vmem:[%s4 + $0x148] sm:$0xff]
  %v6166 = vld [vmem:[%s4 + $0x150] sm:$0xff]
  %v6167 = vld [vmem:[%s4 + $0x158] sm:$0xff]
  %v6168 = vld [vmem:[%s4 + $0x160] sm:$0xff]
  %v6169 = vld [vmem:[%s4 + $0x168] sm:$0xff]
  %v6170 = vld [vmem:[%s4 + $0x170] sm:$0xff]
  %v6171 = vld [vmem:[%s4 + $0x178] sm:$0xff]
  %v6172 = vld [vmem:[%s4 + $0x180] sm:$0xff]
  %v6173 = vld [vmem:[%s4 + $0x188] sm:$0xff]
  %v6174 = vld [vmem:[%s4 + $0x190] sm:$0xff]
  %v6175 = vld [vmem:[%s4 + $0x198] sm:$0xff]
  %v6176 = vld [vmem:[%s4 + $0x1a0] sm:$0xff]
  %v6177 = vld [vmem:[%s4 + $0x1a8] sm:$0xff]
  %v6178 = vld [vmem:[%s4 + $0x1b0] sm:$0xff]
  %v6179 = vld [vmem:[%s4 + $0x1b8] sm:$0xff]
  %v6180 = vld [vmem:[%s4 + $0x1c0] sm:$0xff]
  %v6181 = vld [vmem:[%s4 + $0x1c8] sm:$0xff]
  %v6182 = vld [vmem:[%s4 + $0x1d0] sm:$0xff]
  %v6183 = vld [vmem:[%s4 + $0x1d8] sm:$0xff]
  %v6184 = vld [vmem:[%s4 + $0x1e0] sm:$0xff]
  %v6185 = vld [vmem:[%s4 + $0x1e8] sm:$0xff]
  %v6186 = vld [vmem:[%s4 + $0x1f0] sm:$0xff]
  %v6187 = vld [vmem:[%s4 + $0x1f8] sm:$0xff]
  %v6188 = vld [vmem:[%s4 + $0x200] sm:$0xff]
  %v6189 = vld [vmem:[%s4 + $0x208] sm:$0xff]
  %v6190 = vld [vmem:[%s4 + $0x210] sm:$0xff]
  %v6191 = vld [vmem:[%s4 + $0x218] sm:$0xff]
  %v6192 = vld [vmem:[%s4 + $0x220] sm:$0xff]
  %v6193 = vld [vmem:[%s4 + $0x228] sm:$0xff]
  %v6194 = vld [vmem:[%s4 + $0x230] sm:$0xff]
  %v6195 = vld [vmem:[%s4 + $0x238] sm:$0xff]
  %v6196 = vld [vmem:[%s4 + $0x240] sm:$0xff]
  %v6197 = vld [vmem:[%s4 + $0x248] sm:$0xff]
  %v6198 = vld [vmem:[%s4 + $0x250] sm:$0xff]
  %v6199 = vld [vmem:[%s4 + $0x258] sm:$0xff]
  %v6200 = vld [vmem:[%s4 + $0x260] sm:$0xff]
  %v6201 = vld [vmem:[%s4 + $0x268] sm:$0xff]
  %v6202 = vld [vmem:[%s4 + $0x270] sm:$0xff]
  %v6203 = vld [vmem:[%s4 + $0x278] sm:$0xff]
  %v6204 = vld [vmem:[%s4 + $0x280] sm:$0xff]
  %v6205 = vld [vmem:[%s4 + $0x288] sm:$0xff]
  %v6206 = vld [vmem:[%s4 + $0x290] sm:$0xff]
  %v6207 = vld [vmem:[%s4 + $0x298] sm:$0xff]
  %v6208 = vld [vmem:[%s4 + $0x2a0] sm:$0xff]
  %v6209 = vld [vmem:[%s4 + $0x2a8] sm:$0xff]
  %v6210 = vld [vmem:[%s4 + $0x2b0] sm:$0xff]
  %v6211 = vld [vmem:[%s4 + $0x2b8] sm:$0xff]
  %v6212 = vld [vmem:[%s4 + $0x2c0] sm:$0xff]
  %v6213 = vld [vmem:[%s4 + $0x2c8] sm:$0xff]
  %v6214 = vld [vmem:[%s4 + $0x2d0] sm:$0xff]
  %v6215 = vld [vmem:[%s4 + $0x2d8] sm:$0xff]
  %v6216 = vld [vmem:[%s4 + $0x2e0] sm:$0xff]
  %v6217 = vld [vmem:[%s4 + $0x2e8] sm:$0xff]
  %v6218 = vld [vmem:[%s4 + $0x2f0] sm:$0xff]
  %v6219 = vld [vmem:[%s4 + $0x2f8] sm:$0xff]
  %v6220 = vld [vmem:[%s4 + $0x300] sm:$0xff]
  %v6221 = vld [vmem:[%s4 + $0x308] sm:$0xff]
  %v6222 = vld [vmem:[%s4 + $0x310] sm:$0xff]
  %v6223 = vld [vmem:[%s4 + $0x318] sm:$0xff]
  %v6224 = vld [vmem:[%s4 + $0x320] sm:$0xff]
  %v6225 = vld [vmem:[%s4 + $0x328] sm:$0xff]
  %v6226 = vld [vmem:[%s4 + $0x330] sm:$0xff]
  %v6227 = vld [vmem:[%s4 + $0x338] sm:$0xff]
  %v6228 = vld [vmem:[%s4 + $0x340] sm:$0xff]
  %v6229 = vld [vmem:[%s4 + $0x348] sm:$0xff]
  %v6230 = vld [vmem:[%s4 + $0x350] sm:$0xff]
  %v6231 = vld [vmem:[%s4 + $0x358] sm:$0xff]
  %v6232 = vld [vmem:[%s4 + $0x360] sm:$0xff]
  %v6233 = vld [vmem:[%s4 + $0x368] sm:$0xff]
  %v6234 = vld [vmem:[%s4 + $0x370] sm:$0xff]
  %v6235 = vld [vmem:[%s4 + $0x378] sm:$0xff]
  %v6236 = vld [vmem:[%s4 + $0x380] sm:$0xff]
  %v6237 = vld [vmem:[%s4 + $0x388] sm:$0xff]
  %v6238 = vld [vmem:[%s4 + $0x390] sm:$0xff]
  %v6239 = vld [vmem:[%s4 + $0x398] sm:$0xff]
  %v6240 = vld [vmem:[%s4 + $0x3a0] sm:$0xff]
  %v6241 = vld [vmem:[%s4 + $0x3a8] sm:$0xff]
  %v6242 = vld [vmem:[%s4 + $0x3b0] sm:$0xff]
  %v6243 = vld [vmem:[%s4 + $0x3b8] sm:$0xff]
  %v6244 = vld [vmem:[%s4 + $0x3c0] sm:$0xff]
  %v6245 = vld [vmem:[%s4 + $0x3c8] sm:$0xff]
  %v6246 = vld [vmem:[%s4 + $0x3d0] sm:$0xff]
  %v6247 = vld [vmem:[%s4 + $0x3d8] sm:$0xff]
  %v6248 = vld [vmem:[%s4 + $0x3e0] sm:$0xff]
  %v6249 = vld [vmem:[%s4 + $0x3e8] sm:$0xff]
  %v6250 = vld [vmem:[%s4 + $0x3f0] sm:$0xff]
  %v6251 = vld [vmem:[%s4 + $0x3f8] sm:$0xff]
  %v6252 = vld [vmem:[%s4 + $0x400] sm:$0xff]
  %v6253 = vld [vmem:[%s4 + $0x408] sm:$0xff]
  %v6254 = vld [vmem:[%s4 + $0x410] sm:$0xff]
  %v6255 = vld [vmem:[%s4 + $0x418] sm:$0xff]
  %v6256 = vld [vmem:[%s4 + $0x420] sm:$0xff]
  %v6257 = vld [vmem:[%s4 + $0x428] sm:$0xff]
  %v6258 = vld [vmem:[%s4 + $0x430] sm:$0xff]
  %v6259 = vld [vmem:[%s4 + $0x438] sm:$0xff]
  %v6260 = vld [vmem:[%s4 + $0x440] sm:$0xff]
  %v6261 = vld [vmem:[%s4 + $0x448] sm:$0xff]
  %v6262 = vld [vmem:[%s4 + $0x450] sm:$0xff]
  %v6263 = vld [vmem:[%s4 + $0x458] sm:$0xff]
  %v6264 = vld [vmem:[%s4 + $0x460] sm:$0xff]
  %v6265 = vld [vmem:[%s4 + $0x468] sm:$0xff]
  %v6266 = vld [vmem:[%s4 + $0x470] sm:$0xff]
  %v6267 = vld [vmem:[%s4 + $0x478] sm:$0xff]
  %v6268 = vld [vmem:[%s4 + $0x480] sm:$0xff]
  %v6269 = vld [vmem:[%s4 + $0x488] sm:$0xff]
  %v6270 = vld [vmem:[%s4 + $0x490] sm:$0xff]
  %v6271 = vld [vmem:[%s4 + $0x498] sm:$0xff]
  %v6272 = vld [vmem:[%s4 + $0x4a0] sm:$0xff]
  %v6273 = vld [vmem:[%s4 + $0x4a8] sm:$0xff]
  %v6274 = vld [vmem:[%s4 + $0x4b0] sm:$0xff]
  %v6275 = vld [vmem:[%s4 + $0x4b8] sm:$0xff]
  %v6276 = vld [vmem:[%s4 + $0x4c0] sm:$0xff]
  %v6277 = vld [vmem:[%s4 + $0x4c8] sm:$0xff]
  %v6278 = vld [vmem:[%s4 + $0x4d0] sm:$0xff]
  %v6279 = vld [vmem:[%s4 + $0x4d8] sm:$0xff]
  %v6280 = vld [vmem:[%s4 + $0x4e0] sm:$0xff]
  %v6281 = vld [vmem:[%s4 + $0x4e8] sm:$0xff]
  %v6282 = vld [vmem:[%s4 + $0x4f0] sm:$0xff]
  %v6283 = vld [vmem:[%s4 + $0x4f8] sm:$0xff]
  %v6284 = vld [vmem:[%s4 + $0x500] sm:$0xff]
  %v6285 = vld [vmem:[%s4 + $0x508] sm:$0xff]
  %v6286 = vld [vmem:[%s4 + $0x510] sm:$0xff]
  %v6287 = vld [vmem:[%s4 + $0x518] sm:$0xff]
  %v6288 = vld [vmem:[%s4 + $0x520] sm:$0xff]
  %v6289 = vld [vmem:[%s4 + $0x528] sm:$0xff]
  %v6290 = vld [vmem:[%s4 + $0x530] sm:$0xff]
  %v6291 = vld [vmem:[%s4 + $0x538] sm:$0xff]
  %v6292 = vld [vmem:[%s4 + $0x540] sm:$0xff]
  %v6293 = vld [vmem:[%s4 + $0x548] sm:$0xff]
  %v6294 = vld [vmem:[%s4 + $0x550] sm:$0xff]
  %v6295 = vld [vmem:[%s4 + $0x558] sm:$0xff]
  %v6296 = vld [vmem:[%s4 + $0x560] sm:$0xff]
  %v6297 = vld [vmem:[%s4 + $0x568] sm:$0xff]
  %v6298 = vld [vmem:[%s4 + $0x570] sm:$0xff]
  %v6299 = vld [vmem:[%s4 + $0x578] sm:$0xff]
  %v6300 = vld [vmem:[%s4 + $0x580] sm:$0xff]
  %v6301 = vld [vmem:[%s4 + $0x588] sm:$0xff]
  %v6302 = vld [vmem:[%s4 + $0x590] sm:$0xff]
  %v6303 = vld [vmem:[%s4 + $0x598] sm:$0xff]
  %v6304 = vld [vmem:[%s4 + $0x5a0] sm:$0xff]
  %v6305 = vld [vmem:[%s4 + $0x5a8] sm:$0xff]
  %v6306 = vld [vmem:[%s4 + $0x5b0] sm:$0xff]
  %v6307 = vld [vmem:[%s4 + $0x5b8] sm:$0xff]
  %v6308 = vld [vmem:[%s4 + $0x5c0] sm:$0xff]
  %v6309 = vld [vmem:[%s4 + $0x5c8] sm:$0xff]
  %v6310 = vld [vmem:[%s4 + $0x5d0] sm:$0xff]
  %v6311 = vld [vmem:[%s4 + $0x5d8] sm:$0xff]
  %v6312 = vld [vmem:[%s4 + $0x5e0] sm:$0xff]
  %v6313 = vld [vmem:[%s4 + $0x5e8] sm:$0xff]
  %v6314 = vld [vmem:[%s4 + $0x5f0] sm:$0xff]
  %v6315 = vld [vmem:[%s4 + $0x5f8] sm:$0xff]
  %v6316 = vld [vmem:[%s4 + $0x600] sm:$0xff]
  %v6317 = vld [vmem:[%s4 + $0x608] sm:$0xff]
  %v6318 = vld [vmem:[%s4 + $0x610] sm:$0xff]
  %v6319 = vld [vmem:[%s4 + $0x618] sm:$0xff]
  %v6320 = vld [vmem:[%s4 + $0x620] sm:$0xff]
  %v6321 = vld [vmem:[%s4 + $0x628] sm:$0xff]
  %v6322 = vld [vmem:[%s4 + $0x630] sm:$0xff]
  %v6323 = vld [vmem:[%s4 + $0x638] sm:$0xff]
  %v6324 = vld [vmem:[%s4 + $0x640] sm:$0xff]
  %v6325 = vld [vmem:[%s4 + $0x648] sm:$0xff]
  %v6326 = vld [vmem:[%s4 + $0x650] sm:$0xff]
  %v6327 = vld [vmem:[%s4 + $0x658] sm:$0xff]
  %v6328 = vld [vmem:[%s4 + $0x660] sm:$0xff]
  %v6329 = vld [vmem:[%s4 + $0x668] sm:$0xff]
  %v6330 = vld [vmem:[%s4 + $0x670] sm:$0xff]
  %v6331 = vld [vmem:[%s4 + $0x678] sm:$0xff]
  %v6332 = vld [vmem:[%s4 + $0x680] sm:$0xff]
  %v6333 = vld [vmem:[%s4 + $0x688] sm:$0xff]
  %v6334 = vld [vmem:[%s4 + $0x690] sm:$0xff]
  %v6335 = vld [vmem:[%s4 + $0x698] sm:$0xff]
  %v6336 = vld [vmem:[%s4 + $0x6a0] sm:$0xff]
  %v6337 = vld [vmem:[%s4 + $0x6a8] sm:$0xff]
  %v6338 = vld [vmem:[%s4 + $0x6b0] sm:$0xff]
  %v6339 = vld [vmem:[%s4 + $0x6b8] sm:$0xff]
  %v6340 = vld [vmem:[%s4 + $0x6c0] sm:$0xff]
  %v6341 = vld [vmem:[%s4 + $0x6c8] sm:$0xff]
  %v6342 = vld [vmem:[%s4 + $0x6d0] sm:$0xff]
  %v6343 = vld [vmem:[%s4 + $0x6d8] sm:$0xff]
  %v6344 = vld [vmem:[%s4 + $0x6e0] sm:$0xff]
  %v6345 = vld [vmem:[%s4 + $0x6e8] sm:$0xff]
  %v6346 = vld [vmem:[%s4 + $0x6f0] sm:$0xff]
  %v6347 = vld [vmem:[%s4 + $0x6f8] sm:$0xff]
  %v6348 = vld [vmem:[%s4 + $0x700] sm:$0xff]
  %v6349 = vld [vmem:[%s4 + $0x708] sm:$0xff]
  %v6350 = vld [vmem:[%s4 + $0x710] sm:$0xff]
  %v6351 = vld [vmem:[%s4 + $0x718] sm:$0xff]
  %v6352 = vld [vmem:[%s4 + $0x720] sm:$0xff]
  %v6353 = vld [vmem:[%s4 + $0x728] sm:$0xff]
  %v6354 = vld [vmem:[%s4 + $0x730] sm:$0xff]
  %v6355 = vld [vmem:[%s4 + $0x738] sm:$0xff]
  %v6356 = vld [vmem:[%s4 + $0x740] sm:$0xff]
  %v6357 = vld [vmem:[%s4 + $0x748] sm:$0xff]
  %v6358 = vld [vmem:[%s4 + $0x750] sm:$0xff]
  %v6359 = vld [vmem:[%s4 + $0x758] sm:$0xff]
  %v6360 = vld [vmem:[%s4 + $0x760] sm:$0xff]
  %v6361 = vld [vmem:[%s4 + $0x768] sm:$0xff]
  %v6362 = vld [vmem:[%s4 + $0x770] sm:$0xff]
  %v6363 = vld [vmem:[%s4 + $0x778] sm:$0xff]
  %v6364 = vld [vmem:[%s4 + $0x780] sm:$0xff]
  %v6365 = vld [vmem:[%s4 + $0x788] sm:$0xff]
  %v6366 = vld [vmem:[%s4 + $0x790] sm:$0xff]
  %v6367 = vld [vmem:[%s4 + $0x798] sm:$0xff]
  %v6368 = vld [vmem:[%s4 + $0x7a0] sm:$0xff]
  %v6369 = vld [vmem:[%s4 + $0x7a8] sm:$0xff]
  %v6370 = vld [vmem:[%s4 + $0x7b0] sm:$0xff]
  %v6371 = vld [vmem:[%s4 + $0x7b8] sm:$0xff]
  %v6372 = vld [vmem:[%s4 + $0x7c0] sm:$0xff]
  %v6373 = vld [vmem:[%s4 + $0x7c8] sm:$0xff]
  %v6374 = vld [vmem:[%s4 + $0x7d0] sm:$0xff]
  %v6375 = vld [vmem:[%s4 + $0x7d8] sm:$0xff]
  %v6376 = vld [vmem:[%s4 + $0x7e0] sm:$0xff]
  %v6377 = vld [vmem:[%s4 + $0x7e8] sm:$0xff]
  %v6378 = vld [vmem:[%s4 + $0x7f0] sm:$0xff]
  %v6379 = vld [vmem:[%s4 + $0x7f8] sm:$0xff]
  %v6380 = vld [vmem:[%s5] sm:$0xf]
  %v6381 = vld [vmem:[%s0] sm:$0x3]
  %v6382 = vld [vmem:[%s2] sm:$0xff]
  %v6383 = vld [vmem:[%s2 + $0x8] sm:$0xff]
  %v6384 = vld [vmem:[%s2 + $0x10] sm:$0xff]
  %v6385 = vld [vmem:[%s2 + $0x18] sm:$0xff]
  %v6386 = vld [vmem:[%s2 + $0x20] sm:$0xff]
  %v6387 = vld [vmem:[%s2 + $0x28] sm:$0xff]
  %v6388 = vld [vmem:[%s2 + $0x30] sm:$0xff]
  %v6389 = vld [vmem:[%s2 + $0x38] sm:$0xff]
  %v6390 = vld [vmem:[%s2 + $0x40] sm:$0xff]
  %v6391 = vld [vmem:[%s2 + $0x48] sm:$0xff]
  %v6392 = vld [vmem:[%s2 + $0x50] sm:$0xff]
  %v6393 = vld [vmem:[%s2 + $0x58] sm:$0xff]
  %v6394 = vld [vmem:[%s2 + $0x60] sm:$0xff]
  %v6395 = vld [vmem:[%s2 + $0x68] sm:$0xff]
  %v6396 = vld [vmem:[%s2 + $0x70] sm:$0xff]
  %v6397 = vld [vmem:[%s2 + $0x78] sm:$0xff]
  %v6398 = vld [vmem:[%s3] sm:$0xf]
  %v6400 = vperm.slane %v6398, 0
  %v6401 = vperm.slane %v6398, 1
  %v6402 = vperm.slane %v6398, 2
  %v6403 = vperm.slane %v6398, 3
  %v6409 = vsel %vm355, %v6381, 0
  %6411 = vmatpush.msra.mxu0 0.0
  %6412 = vmatpush.msra.mxu0 0.0
  %6413 = vmatpush.msra.mxu0 0.0
  %6414 = vmatpush.msra.mxu0 0.0
  %6415 = vmatpush.msra.mxu0 0.0
  %6416 = vmatpush.msra.mxu0 0.0
  %6417 = vmatpush.msra.mxu0 0.0
  %6418 = vmatpush.msra.mxu0 0.0
  %6419 = vmatpush.msra.mxu0 0.0
  %6420 = vmatpush.msra.mxu0 0.0
  %6421 = vmatpush.msra.mxu0 0.0
  %6422 = vmatpush.msra.mxu0 0.0
  %6423 = vmatpush.msra.mxu0 %v6394
  %6424 = vmatpush.msra.mxu0 %v6390
  %6425 = vmatpush.msra.mxu0 %v6386
  %6426 = vmatpush.msra.mxu0 %v6382
  %6427 = vmatmul.f32.gmra.mxu0 %v6409
  %v6428 = vpop.f32.mrf.mxu0
  %v6429 = vadd.f32 %v6400, %v6428
  %6430 = vdwg.mxu0
  %6431 = vmatpush.msra.mxu0 0.0
  %6432 = vmatpush.msra.mxu0 0.0
  %6433 = vmatpush.msra.mxu0 0.0
  %6434 = vmatpush.msra.mxu0 0.0
  %6435 = vmatpush.msra.mxu0 0.0
  %6436 = vmatpush.msra.mxu0 0.0
  %6437 = vmatpush.msra.mxu0 0.0
  %6438 = vmatpush.msra.mxu0 0.0
  %6439 = vmatpush.msra.mxu0 0.0
  %6440 = vmatpush.msra.mxu0 0.0
  %6441 = vmatpush.msra.mxu0 0.0
  %6442 = vmatpush.msra.mxu0 0.0
  %6443 = vmatpush.msra.mxu0 %v6395
  %6444 = vmatpush.msra.mxu0 %v6391
  %6445 = vmatpush.msra.mxu0 %v6387
  %6446 = vmatpush.msra.mxu0 %v6383
  %6447 = vmatmul.f32.gmra.mxu0 %v6409
  %v6448 = vpop.f32.mrf.mxu0
  %v6449 = vadd.f32 %v6401, %v6448
  %6450 = vdwg.mxu0
  %6451 = vmatpush.msra.mxu0 0.0
  %6452 = vmatpush.msra.mxu0 0.0
  %6453 = vmatpush.msra.mxu0 0.0
  %6454 = vmatpush.msra.mxu0 0.0
  %6455 = vmatpush.msra.mxu0 0.0
  %6456 = vmatpush.msra.mxu0 0.0
  %6457 = vmatpush.msra.mxu0 0.0
  %6458 = vmatpush.msra.mxu0 0.0
  %6459 = vmatpush.msra.mxu0 0.0
  %6460 = vmatpush.msra.mxu0 0.0
  %6461 = vmatpush.msra.mxu0 0.0
  %6462 = vmatpush.msra.mxu0 0.0
  %6463 = vmatpush.msra.mxu0 %v6396
  %6464 = vmatpush.msra.mxu0 %v6392
  %6465 = vmatpush.msra.mxu0 %v6388
  %6466 = vmatpush.msra.mxu0 %v6384
  %6467 = vmatmul.f32.gmra.mxu0 %v6409
  %v6468 = vpop.f32.mrf.mxu0
  %v6469 = vadd.f32 %v6402, %v6468
  %6470 = vdwg.mxu0
  %6471 = vmatpush.msra.mxu0 0.0
  %6472 = vmatpush.msra.mxu0 0.0
  %6473 = vmatpush.msra.mxu0 0.0
  %6474 = vmatpush.msra.mxu0 0.0
  %6475 = vmatpush.msra.mxu0 0.0
  %6476 = vmatpush.msra.mxu0 0.0
  %6477 = vmatpush.msra.mxu0 0.0
  %6478 = vmatpush.msra.mxu0 0.0
  %6479 = vmatpush.msra.mxu0 0.0
  %6480 = vmatpush.msra.mxu0 0.0
  %6481 = vmatpush.msra.mxu0 0.0
  %6482 = vmatpush.msra.mxu0 0.0
  %6483 = vmatpush.msra.mxu0 %v6397
  %6484 = vmatpush.msra.mxu0 %v6393
  %6485 = vmatpush.msra.mxu0 %v6389
  %6486 = vmatpush.msra.mxu0 %v6385
  %6487 = vmatmul.f32.gmra.mxu0 %v6409
  %v6488 = vpop.f32.mrf.mxu0
  %v6489 = vadd.f32 %v6403, %v6488
  %6490 = vdwg.mxu0
  %v6491 = vxor.u32 %v6429, 2147483648
  %v6492 = vmul.f32 %v6491, 1.442695
  %v6493 = vpow.pop %v6492
  %v6494 = vadd.f32 %v6493, 1.0
  %v6495 = vrcp.pop %v6494
  %v6496 = vmul.f32 %v6494, %v6495
  %v6497 = vsub.f32 1.0, %v6496
  %v6498 = vmul.f32 %v6495, %v6497
  %v6499 = vadd.f32 %v6495, %v6498
  %vm6500 = vweird.f32 %v6494
  %vm6501 = vweird.f32 %v6495
  %vm6502 = vmor %vm6500, %vm6501
  %v6503 = vsel %vm6502, %v6495, %v6499
  %v6504 = vand.u32 2147483647, %v6494
  %vm6505 = vcmp.eq.f32.partialorder %v6504, 8.507059e+37
  %v6506 = vand.u32 %v6494, 2147483648
  %v6507 = vor.u32 1.1754944e-38, %v6506
  %v6508 = vsel %vm6505, %v6507, %v6503
  %v6509 = vmul.f32 1.0, %v6508
  %v6510 = vxor.u32 %v6449, 2147483648
  %v6511 = vmul.f32 %v6510, 1.442695
  %v6512 = vpow.pop %v6511
  %v6513 = vadd.f32 %v6512, 1.0
  %v6514 = vrcp.pop %v6513
  %v6515 = vmul.f32 %v6513, %v6514
  %v6516 = vsub.f32 1.0, %v6515
  %v6517 = vmul.f32 %v6514, %v6516
  %v6518 = vadd.f32 %v6514, %v6517
  %vm6519 = vweird.f32 %v6513
  %vm6520 = vweird.f32 %v6514
  %vm6521 = vmor %vm6519, %vm6520
  %v6522 = vsel %vm6521, %v6514, %v6518
  %v6523 = vand.u32 2147483647, %v6513
  %vm6524 = vcmp.eq.f32.partialorder %v6523, 8.507059e+37
  %v6525 = vand.u32 %v6513, 2147483648
  %v6526 = vor.u32 1.1754944e-38, %v6525
  %v6527 = vsel %vm6524, %v6526, %v6522
  %v6528 = vmul.f32 1.0, %v6527
  %v6529 = vtanh.pop %v6469
  %v6530 = vxor.u32 %v6489, 2147483648
  %v6531 = vmul.f32 %v6530, 1.442695
  %v6532 = vpow.pop %v6531
  %v6533 = vadd.f32 %v6532, 1.0
  %v6534 = vrcp.pop %v6533
  %v6535 = vmul.f32 %v6533, %v6534
  %v6536 = vsub.f32 1.0, %v6535
  %v6537 = vmul.f32 %v6534, %v6536
  %v6538 = vadd.f32 %v6534, %v6537
  %vm6539 = vweird.f32 %v6533
  %vm6540 = vweird.f32 %v6534
  %vm6541 = vmor %vm6539, %vm6540
  %v6542 = vsel %vm6541, %v6534, %v6538
  %v6543 = vand.u32 2147483647, %v6533
  %vm6544 = vcmp.eq.f32.partialorder %v6543, 8.507059e+37
  %v6545 = vand.u32 %v6533, 2147483648
  %v6546 = vor.u32 1.1754944e-38, %v6545
  %v6547 = vsel %vm6544, %v6546, %v6542
  %v6548 = vmul.f32 1.0, %v6547
  %v6549 = vmul.f32 %v6528, 0.0
  %v6550 = vmul.f32 %v6509, %v6529
  %v6551 = vadd.f32 %v6549, %v6550
  %v6552 = vtanh.pop %v6551
  %v6553 = vmul.f32 %v6548, %v6552
  loop: start=0, step=1, limit=150
  $region34: #{lstm_forward.1} parent=0 // loop_pre_header
    _
  $region35: #{lstm_forward.1} parent=0 // loop_header
    %s6555 = sphi 0, %s6559
    %p6556 = scmp.ge.s32.totalorder %s6555, 150
    %v6560 = vphi %v6553, %v10275
    %v6561 = vphi %v6551, %v10273
    %v6562 = vphi 0.0, %v10200
    %v6563 = vphi 0.0, %v10198
  $region36: #{lstm_forward.1} parent=0 // loop_header_branch
    %6558 = sbr.rel (%p6556) target = $region40
  $region37: #{lstm_forward.1} parent=0 // loop_body
    %s6564 = smul.u32 %s6555, 16
    %s6565 = smul.u32 %s6555, 8
    %s6566 = sshra.s32 %s6564, 3
    %s6567 = sand.u32 %s6564, 7
    %s6568 = smul.u32 %s6566, 4
    %s6569 = smul.addr %s6568, 8
    %s6570 = scalar_lea.vmem [#allocation2], %s6569
    %v6571 = vld [vmem:[%s6570] sm:$0xff]
    %v6572 = vld [vmem:[%s6570 + $0x8] sm:$0xff]
    %v6573 = vld [vmem:[%s6570 + $0x10] sm:$0xff]
    %v6574 = vld [vmem:[%s6570 + $0x18] sm:$0xff]
    %v6575 = vld [vmem:[%s6570 + $0x20] sm:$0xff]
    %v6576 = vld [vmem:[%s6570 + $0x28] sm:$0xff]
    %v6577 = vld [vmem:[%s6570 + $0x30] sm:$0xff]
    %v6578 = vld [vmem:[%s6570 + $0x38] sm:$0xff]
    %6579 = vmatpush.msra.mxu0 %v6244
    %6580 = vmatpush.msra.mxu0 %v6236
    %6581 = vmatpush.msra.mxu0 %v6228
    %6582 = vmatpush.msra.mxu0 %v6220
    %6583 = vmatpush.msra.mxu0 %v6212
    %6584 = vmatpush.msra.mxu0 %v6204
    %6585 = vmatpush.msra.mxu0 %v6196
    %6586 = vmatpush.msra.mxu0 %v6188
    %6587 = vmatpush.msra.mxu0 %v6180
    %6588 = vmatpush.msra.mxu0 %v6172
    %6589 = vmatpush.msra.mxu0 %v6164
    %6590 = vmatpush.msra.mxu0 %v6156
    %6591 = vmatpush.msra.mxu0 %v6148
    %6592 = vmatpush.msra.mxu0 %v6140
    %6593 = vmatpush.msra.mxu0 %v6132
    %6594 = vmatpush.msra.mxu0 %v6124
    %6595 = vmatmul.f32.gmra.mxu0 %v6560
    %v6596 = vpop.f32.mrf.mxu0
    %v6597 = vadd.f32 0.0, %v6596
    %6598 = vdwg.mxu0
    %6599 = vmatpush.msra.mxu0 %v6372
    %6600 = vmatpush.msra.mxu0 %v6364
    %6601 = vmatpush.msra.mxu0 %v6356
    %6602 = vmatpush.msra.mxu0 %v6348
    %6603 = vmatpush.msra.mxu0 %v6340
    %6604 = vmatpush.msra.mxu0 %v6332
    %6605 = vmatpush.msra.mxu0 %v6324
    %6606 = vmatpush.msra.mxu0 %v6316
    %6607 = vmatpush.msra.mxu0 %v6308
    %6608 = vmatpush.msra.mxu0 %v6300
    %6609 = vmatpush.msra.mxu0 %v6292
    %6610 = vmatpush.msra.mxu0 %v6284
    %6611 = vmatpush.msra.mxu0 %v6276
    %6612 = vmatpush.msra.mxu0 %v6268
    %6613 = vmatpush.msra.mxu0 %v6260
    %6614 = vmatpush.msra.mxu0 %v6252
    %6615 = vmatmul.f32.gmra.mxu0 %v6562
    %v6616 = vpop.f32.mrf.mxu0
    %v6617 = vadd.f32 %v6597, %v6616
    %6618 = vdwg.mxu0
    %6619 = vmatpush.msra.mxu0 %v6245
    %6620 = vmatpush.msra.mxu0 %v6237
    %6621 = vmatpush.msra.mxu0 %v6229
    %6622 = vmatpush.msra.mxu0 %v6221
    %6623 = vmatpush.msra.mxu0 %v6213
    %6624 = vmatpush.msra.mxu0 %v6205
    %6625 = vmatpush.msra.mxu0 %v6197
    %6626 = vmatpush.msra.mxu0 %v6189
    %6627 = vmatpush.msra.mxu0 %v6181
    %6628 = vmatpush.msra.mxu0 %v6173
    %6629 = vmatpush.msra.mxu0 %v6165
    %6630 = vmatpush.msra.mxu0 %v6157
    %6631 = vmatpush.msra.mxu0 %v6149
    %6632 = vmatpush.msra.mxu0 %v6141
    %6633 = vmatpush.msra.mxu0 %v6133
    %6634 = vmatpush.msra.mxu0 %v6125
    %6635 = vmatmul.f32.gmra.mxu0 %v6560
    %v6636 = vpop.f32.mrf.mxu0
    %v6637 = vadd.f32 0.0, %v6636
    %6638 = vdwg.mxu0
    %6639 = vmatpush.msra.mxu0 %v6373
    %6640 = vmatpush.msra.mxu0 %v6365
    %6641 = vmatpush.msra.mxu0 %v6357
    %6642 = vmatpush.msra.mxu0 %v6349
    %6643 = vmatpush.msra.mxu0 %v6341
    %6644 = vmatpush.msra.mxu0 %v6333
    %6645 = vmatpush.msra.mxu0 %v6325
    %6646 = vmatpush.msra.mxu0 %v6317
    %6647 = vmatpush.msra.mxu0 %v6309
    %6648 = vmatpush.msra.mxu0 %v6301
    %6649 = vmatpush.msra.mxu0 %v6293
    %6650 = vmatpush.msra.mxu0 %v6285
    %6651 = vmatpush.msra.mxu0 %v6277
    %6652 = vmatpush.msra.mxu0 %v6269
    %6653 = vmatpush.msra.mxu0 %v6261
    %6654 = vmatpush.msra.mxu0 %v6253
    %6655 = vmatmul.f32.gmra.mxu0 %v6562
    %v6656 = vpop.f32.mrf.mxu0
    %v6657 = vadd.f32 %v6637, %v6656
    %6658 = vdwg.mxu0
    %6659 = vmatpush.msra.mxu0 %v6246
    %6660 = vmatpush.msra.mxu0 %v6238
    %6661 = vmatpush.msra.mxu0 %v6230
    %6662 = vmatpush.msra.mxu0 %v6222
    %6663 = vmatpush.msra.mxu0 %v6214
    %6664 = vmatpush.msra.mxu0 %v6206
    %6665 = vmatpush.msra.mxu0 %v6198
    %6666 = vmatpush.msra.mxu0 %v6190
    %6667 = vmatpush.msra.mxu0 %v6182
    %6668 = vmatpush.msra.mxu0 %v6174
    %6669 = vmatpush.msra.mxu0 %v6166
    %6670 = vmatpush.msra.mxu0 %v6158
    %6671 = vmatpush.msra.mxu0 %v6150
    %6672 = vmatpush.msra.mxu0 %v6142
    %6673 = vmatpush.msra.mxu0 %v6134
    %6674 = vmatpush.msra.mxu0 %v6126
    %6675 = vmatmul.f32.gmra.mxu0 %v6560
    %v6676 = vpop.f32.mrf.mxu0
    %v6677 = vadd.f32 0.0, %v6676
    %6678 = vdwg.mxu0
    %6679 = vmatpush.msra.mxu0 %v6374
    %6680 = vmatpush.msra.mxu0 %v6366
    %6681 = vmatpush.msra.mxu0 %v6358
    %6682 = vmatpush.msra.mxu0 %v6350
    %6683 = vmatpush.msra.mxu0 %v6342
    %6684 = vmatpush.msra.mxu0 %v6334
    %6685 = vmatpush.msra.mxu0 %v6326
    %6686 = vmatpush.msra.mxu0 %v6318
    %6687 = vmatpush.msra.mxu0 %v6310
    %6688 = vmatpush.msra.mxu0 %v6302
    %6689 = vmatpush.msra.mxu0 %v6294
    %6690 = vmatpush.msra.mxu0 %v6286
    %6691 = vmatpush.msra.mxu0 %v6278
    %6692 = vmatpush.msra.mxu0 %v6270
    %6693 = vmatpush.msra.mxu0 %v6262
    %6694 = vmatpush.msra.mxu0 %v6254
    %6695 = vmatmul.f32.gmra.mxu0 %v6562
    %v6696 = vpop.f32.mrf.mxu0
    %v6697 = vadd.f32 %v6677, %v6696
    %6698 = vdwg.mxu0
    %6699 = vmatpush.msra.mxu0 %v6247
    %6700 = vmatpush.msra.mxu0 %v6239
    %6701 = vmatpush.msra.mxu0 %v6231
    %6702 = vmatpush.msra.mxu0 %v6223
    %6703 = vmatpush.msra.mxu0 %v6215
    %6704 = vmatpush.msra.mxu0 %v6207
    %6705 = vmatpush.msra.mxu0 %v6199
    %6706 = vmatpush.msra.mxu0 %v6191
    %6707 = vmatpush.msra.mxu0 %v6183
    %6708 = vmatpush.msra.mxu0 %v6175
    %6709 = vmatpush.msra.mxu0 %v6167
    %6710 = vmatpush.msra.mxu0 %v6159
    %6711 = vmatpush.msra.mxu0 %v6151
    %6712 = vmatpush.msra.mxu0 %v6143
    %6713 = vmatpush.msra.mxu0 %v6135
    %6714 = vmatpush.msra.mxu0 %v6127
    %6715 = vmatmul.f32.gmra.mxu0 %v6560
    %v6716 = vpop.f32.mrf.mxu0
    %v6717 = vadd.f32 0.0, %v6716
    %6718 = vdwg.mxu0
    %6719 = vmatpush.msra.mxu0 %v6375
    %6720 = vmatpush.msra.mxu0 %v6367
    %6721 = vmatpush.msra.mxu0 %v6359
    %6722 = vmatpush.msra.mxu0 %v6351
    %6723 = vmatpush.msra.mxu0 %v6343
    %6724 = vmatpush.msra.mxu0 %v6335
    %6725 = vmatpush.msra.mxu0 %v6327
    %6726 = vmatpush.msra.mxu0 %v6319
    %6727 = vmatpush.msra.mxu0 %v6311
    %6728 = vmatpush.msra.mxu0 %v6303
    %6729 = vmatpush.msra.mxu0 %v6295
    %6730 = vmatpush.msra.mxu0 %v6287
    %6731 = vmatpush.msra.mxu0 %v6279
    %6732 = vmatpush.msra.mxu0 %v6271
    %6733 = vmatpush.msra.mxu0 %v6263
    %6734 = vmatpush.msra.mxu0 %v6255
    %6735 = vmatmul.f32.gmra.mxu0 %v6562
    %v6736 = vpop.f32.mrf.mxu0
    %v6737 = vadd.f32 %v6717, %v6736
    %6738 = vdwg.mxu0
    %6739 = vmatpush.msra.mxu0 %v6248
    %6740 = vmatpush.msra.mxu0 %v6240
    %6741 = vmatpush.msra.mxu0 %v6232
    %6742 = vmatpush.msra.mxu0 %v6224
    %6743 = vmatpush.msra.mxu0 %v6216
    %6744 = vmatpush.msra.mxu0 %v6208
    %6745 = vmatpush.msra.mxu0 %v6200
    %6746 = vmatpush.msra.mxu0 %v6192
    %6747 = vmatpush.msra.mxu0 %v6184
    %6748 = vmatpush.msra.mxu0 %v6176
    %6749 = vmatpush.msra.mxu0 %v6168
    %6750 = vmatpush.msra.mxu0 %v6160
    %6751 = vmatpush.msra.mxu0 %v6152
    %6752 = vmatpush.msra.mxu0 %v6144
    %6753 = vmatpush.msra.mxu0 %v6136
    %6754 = vmatpush.msra.mxu0 %v6128
    %6755 = vmatmul.f32.gmra.mxu0 %v6560
    %v6756 = vpop.f32.mrf.mxu0
    %v6757 = vadd.f32 0.0, %v6756
    %6758 = vdwg.mxu0
    %6759 = vmatpush.msra.mxu0 %v6376
    %6760 = vmatpush.msra.mxu0 %v6368
    %6761 = vmatpush.msra.mxu0 %v6360
    %6762 = vmatpush.msra.mxu0 %v6352
    %6763 = vmatpush.msra.mxu0 %v6344
    %6764 = vmatpush.msra.mxu0 %v6336
    %6765 = vmatpush.msra.mxu0 %v6328
    %6766 = vmatpush.msra.mxu0 %v6320
    %6767 = vmatpush.msra.mxu0 %v6312
    %6768 = vmatpush.msra.mxu0 %v6304
    %6769 = vmatpush.msra.mxu0 %v6296
    %6770 = vmatpush.msra.mxu0 %v6288
    %6771 = vmatpush.msra.mxu0 %v6280
    %6772 = vmatpush.msra.mxu0 %v6272
    %6773 = vmatpush.msra.mxu0 %v6264
    %6774 = vmatpush.msra.mxu0 %v6256
    %6775 = vmatmul.f32.gmra.mxu0 %v6562
    %v6776 = vpop.f32.mrf.mxu0
    %v6777 = vadd.f32 %v6757, %v6776
    %6778 = vdwg.mxu0
    %6779 = vmatpush.msra.mxu0 %v6249
    %6780 = vmatpush.msra.mxu0 %v6241
    %6781 = vmatpush.msra.mxu0 %v6233
    %6782 = vmatpush.msra.mxu0 %v6225
    %6783 = vmatpush.msra.mxu0 %v6217
    %6784 = vmatpush.msra.mxu0 %v6209
    %6785 = vmatpush.msra.mxu0 %v6201
    %6786 = vmatpush.msra.mxu0 %v6193
    %6787 = vmatpush.msra.mxu0 %v6185
    %6788 = vmatpush.msra.mxu0 %v6177
    %6789 = vmatpush.msra.mxu0 %v6169
    %6790 = vmatpush.msra.mxu0 %v6161
    %6791 = vmatpush.msra.mxu0 %v6153
    %6792 = vmatpush.msra.mxu0 %v6145
    %6793 = vmatpush.msra.mxu0 %v6137
    %6794 = vmatpush.msra.mxu0 %v6129
    %6795 = vmatmul.f32.gmra.mxu0 %v6560
    %v6796 = vpop.f32.mrf.mxu0
    %v6797 = vadd.f32 0.0, %v6796
    %6798 = vdwg.mxu0
    %6799 = vmatpush.msra.mxu0 %v6377
    %6800 = vmatpush.msra.mxu0 %v6369
    %6801 = vmatpush.msra.mxu0 %v6361
    %6802 = vmatpush.msra.mxu0 %v6353
    %6803 = vmatpush.msra.mxu0 %v6345
    %6804 = vmatpush.msra.mxu0 %v6337
    %6805 = vmatpush.msra.mxu0 %v6329
    %6806 = vmatpush.msra.mxu0 %v6321
    %6807 = vmatpush.msra.mxu0 %v6313
    %6808 = vmatpush.msra.mxu0 %v6305
    %6809 = vmatpush.msra.mxu0 %v6297
    %6810 = vmatpush.msra.mxu0 %v6289
    %6811 = vmatpush.msra.mxu0 %v6281
    %6812 = vmatpush.msra.mxu0 %v6273
    %6813 = vmatpush.msra.mxu0 %v6265
    %6814 = vmatpush.msra.mxu0 %v6257
    %6815 = vmatmul.f32.gmra.mxu0 %v6562
    %v6816 = vpop.f32.mrf.mxu0
    %v6817 = vadd.f32 %v6797, %v6816
    %6818 = vdwg.mxu0
    %6819 = vmatpush.msra.mxu0 %v6250
    %6820 = vmatpush.msra.mxu0 %v6242
    %6821 = vmatpush.msra.mxu0 %v6234
    %6822 = vmatpush.msra.mxu0 %v6226
    %6823 = vmatpush.msra.mxu0 %v6218
    %6824 = vmatpush.msra.mxu0 %v6210
    %6825 = vmatpush.msra.mxu0 %v6202
    %6826 = vmatpush.msra.mxu0 %v6194
    %6827 = vmatpush.msra.mxu0 %v6186
    %6828 = vmatpush.msra.mxu0 %v6178
    %6829 = vmatpush.msra.mxu0 %v6170
    %6830 = vmatpush.msra.mxu0 %v6162
    %6831 = vmatpush.msra.mxu0 %v6154
    %6832 = vmatpush.msra.mxu0 %v6146
    %6833 = vmatpush.msra.mxu0 %v6138
    %6834 = vmatpush.msra.mxu0 %v6130
    %6835 = vmatmul.f32.gmra.mxu0 %v6560
    %v6836 = vpop.f32.mrf.mxu0
    %v6837 = vadd.f32 0.0, %v6836
    %6838 = vdwg.mxu0
    %6839 = vmatpush.msra.mxu0 %v6378
    %6840 = vmatpush.msra.mxu0 %v6370
    %6841 = vmatpush.msra.mxu0 %v6362
    %6842 = vmatpush.msra.mxu0 %v6354
    %6843 = vmatpush.msra.mxu0 %v6346
    %6844 = vmatpush.msra.mxu0 %v6338
    %6845 = vmatpush.msra.mxu0 %v6330
    %6846 = vmatpush.msra.mxu0 %v6322
    %6847 = vmatpush.msra.mxu0 %v6314
    %6848 = vmatpush.msra.mxu0 %v6306
    %6849 = vmatpush.msra.mxu0 %v6298
    %6850 = vmatpush.msra.mxu0 %v6290
    %6851 = vmatpush.msra.mxu0 %v6282
    %6852 = vmatpush.msra.mxu0 %v6274
    %6853 = vmatpush.msra.mxu0 %v6266
    %6854 = vmatpush.msra.mxu0 %v6258
    %6855 = vmatmul.f32.gmra.mxu0 %v6562
    %v6856 = vpop.f32.mrf.mxu0
    %v6857 = vadd.f32 %v6837, %v6856
    %6858 = vdwg.mxu0
    %6859 = vmatpush.msra.mxu0 %v6251
    %6860 = vmatpush.msra.mxu0 %v6243
    %6861 = vmatpush.msra.mxu0 %v6235
    %6862 = vmatpush.msra.mxu0 %v6227
    %6863 = vmatpush.msra.mxu0 %v6219
    %6864 = vmatpush.msra.mxu0 %v6211
    %6865 = vmatpush.msra.mxu0 %v6203
    %6866 = vmatpush.msra.mxu0 %v6195
    %6867 = vmatpush.msra.mxu0 %v6187
    %6868 = vmatpush.msra.mxu0 %v6179
    %6869 = vmatpush.msra.mxu0 %v6171
    %6870 = vmatpush.msra.mxu0 %v6163
    %6871 = vmatpush.msra.mxu0 %v6155
    %6872 = vmatpush.msra.mxu0 %v6147
    %6873 = vmatpush.msra.mxu0 %v6139
    %6874 = vmatpush.msra.mxu0 %v6131
    %6875 = vmatmul.f32.gmra.mxu0 %v6560
    %v6876 = vpop.f32.mrf.mxu0
    %v6877 = vadd.f32 0.0, %v6876
    %6878 = vdwg.mxu0
    %6879 = vmatpush.msra.mxu0 %v6379
    %6880 = vmatpush.msra.mxu0 %v6371
    %6881 = vmatpush.msra.mxu0 %v6363
    %6882 = vmatpush.msra.mxu0 %v6355
    %6883 = vmatpush.msra.mxu0 %v6347
    %6884 = vmatpush.msra.mxu0 %v6339
    %6885 = vmatpush.msra.mxu0 %v6331
    %6886 = vmatpush.msra.mxu0 %v6323
    %6887 = vmatpush.msra.mxu0 %v6315
    %6888 = vmatpush.msra.mxu0 %v6307
    %6889 = vmatpush.msra.mxu0 %v6299
    %6890 = vmatpush.msra.mxu0 %v6291
    %6891 = vmatpush.msra.mxu0 %v6283
    %6892 = vmatpush.msra.mxu0 %v6275
    %6893 = vmatpush.msra.mxu0 %v6267
    %6894 = vmatpush.msra.mxu0 %v6259
    %6895 = vmatmul.f32.gmra.mxu0 %v6562
    %v6896 = vpop.f32.mrf.mxu0
    %v6897 = vadd.f32 %v6877, %v6896
    %6898 = vdwg.mxu0
    %v6900 = vperm.slane %v6380, 0
    %v6901 = vperm.slane %v6380, 1
    %v6902 = vperm.slane %v6380, 2
    %v6903 = vperm.slane %v6380, 3
    %v6908 = vadd.f32 %v6777, %v6900
    %v6909 = vadd.f32 %v6817, %v6901
    %v6910 = vadd.f32 %v6857, %v6902
    %v6911 = vadd.f32 %v6897, %v6903
    %v6912 = vxor.u32 %v6908, 2147483648
    %v6913 = vmul.f32 %v6912, 1.442695
    %v6914 = vpow.pop %v6913
    %v6915 = vadd.f32 %v6914, 1.0
    %v6916 = vrcp.pop %v6915
    %v6917 = vmul.f32 %v6915, %v6916
    %v6918 = vsub.f32 1.0, %v6917
    %v6919 = vmul.f32 %v6916, %v6918
    %v6920 = vadd.f32 %v6916, %v6919
    %vm6921 = vweird.f32 %v6915
    %vm6922 = vweird.f32 %v6916
    %vm6923 = vmor %vm6921, %vm6922
    %v6924 = vsel %vm6923, %v6916, %v6920
    %v6925 = vand.u32 2147483647, %v6915
    %vm6926 = vcmp.eq.f32.partialorder %v6925, 8.507059e+37
    %v6927 = vand.u32 %v6915, 2147483648
    %v6928 = vor.u32 1.1754944e-38, %v6927
    %v6929 = vsel %vm6926, %v6928, %v6924
    %v6930 = vmul.f32 1.0, %v6929
    %v6931 = vxor.u32 %v6909, 2147483648
    %v6932 = vmul.f32 %v6931, 1.442695
    %v6933 = vpow.pop %v6932
    %v6934 = vadd.f32 %v6933, 1.0
    %v6935 = vrcp.pop %v6934
    %v6936 = vmul.f32 %v6934, %v6935
    %v6937 = vsub.f32 1.0, %v6936
    %v6938 = vmul.f32 %v6935, %v6937
    %v6939 = vadd.f32 %v6935, %v6938
    %vm6940 = vweird.f32 %v6934
    %vm6941 = vweird.f32 %v6935
    %vm6942 = vmor %vm6940, %vm6941
    %v6943 = vsel %vm6942, %v6935, %v6939
    %v6944 = vand.u32 2147483647, %v6934
    %vm6945 = vcmp.eq.f32.partialorder %v6944, 8.507059e+37
    %v6946 = vand.u32 %v6934, 2147483648
    %v6947 = vor.u32 1.1754944e-38, %v6946
    %v6948 = vsel %vm6945, %v6947, %v6943
    %v6949 = vmul.f32 1.0, %v6948
    %v6950 = vtanh.pop %v6910
    %v6951 = vxor.u32 %v6911, 2147483648
    %v6952 = vmul.f32 %v6951, 1.442695
    %v6953 = vpow.pop %v6952
    %v6954 = vadd.f32 %v6953, 1.0
    %v6955 = vrcp.pop %v6954
    %v6956 = vmul.f32 %v6954, %v6955
    %v6957 = vsub.f32 1.0, %v6956
    %v6958 = vmul.f32 %v6955, %v6957
    %v6959 = vadd.f32 %v6955, %v6958
    %vm6960 = vweird.f32 %v6954
    %vm6961 = vweird.f32 %v6955
    %vm6962 = vmor %vm6960, %vm6961
    %v6963 = vsel %vm6962, %v6955, %v6959
    %v6964 = vand.u32 2147483647, %v6954
    %vm6965 = vcmp.eq.f32.partialorder %v6964, 8.507059e+37
    %v6966 = vand.u32 %v6954, 2147483648
    %v6967 = vor.u32 1.1754944e-38, %v6966
    %v6968 = vsel %vm6965, %v6967, %v6963
    %v6969 = vmul.f32 1.0, %v6968
    %v6970 = vmul.f32 %v6949, %v6563
    %v6971 = vmul.f32 %v6930, %v6950
    %v6972 = vadd.f32 %v6970, %v6971
    %v6973 = vtanh.pop %v6972
    %v6974 = vmul.f32 %v6969, %v6973
    %v6975 = vadd.f32 %v6617, %v6571
    %v6976 = vadd.f32 %v6657, %v6572
    %v6977 = vadd.f32 %v6697, %v6573
    %v6978 = vadd.f32 %v6737, %v6574
    %v6979 = vxor.u32 %v6975, 2147483648
    %v6980 = vmul.f32 %v6979, 1.442695
    %v6981 = vpow.pop %v6980
    %v6982 = vadd.f32 %v6981, 1.0
    %v6983 = vrcp.pop %v6982
    %v6984 = vmul.f32 %v6982, %v6983
    %v6985 = vsub.f32 1.0, %v6984
    %v6986 = vmul.f32 %v6983, %v6985
    %v6987 = vadd.f32 %v6983, %v6986
    %vm6988 = vweird.f32 %v6982
    %vm6989 = vweird.f32 %v6983
    %vm6990 = vmor %vm6988, %vm6989
    %v6991 = vsel %vm6990, %v6983, %v6987
    %v6992 = vand.u32 2147483647, %v6982
    %vm6993 = vcmp.eq.f32.partialorder %v6992, 8.507059e+37
    %v6994 = vand.u32 %v6982, 2147483648
    %v6995 = vor.u32 1.1754944e-38, %v6994
    %v6996 = vsel %vm6993, %v6995, %v6991
    %v6997 = vmul.f32 1.0, %v6996
    %v6998 = vxor.u32 %v6976, 2147483648
    %v6999 = vmul.f32 %v6998, 1.442695
    %v7000 = vpow.pop %v6999
    %v7001 = vadd.f32 %v7000, 1.0
    %v7002 = vrcp.pop %v7001
    %v7003 = vmul.f32 %v7001, %v7002
    %v7004 = vsub.f32 1.0, %v7003
    %v7005 = vmul.f32 %v7002, %v7004
    %v7006 = vadd.f32 %v7002, %v7005
    %vm7007 = vweird.f32 %v7001
    %vm7008 = vweird.f32 %v7002
    %vm7009 = vmor %vm7007, %vm7008
    %v7010 = vsel %vm7009, %v7002, %v7006
    %v7011 = vand.u32 2147483647, %v7001
    %vm7012 = vcmp.eq.f32.partialorder %v7011, 8.507059e+37
    %v7013 = vand.u32 %v7001, 2147483648
    %v7014 = vor.u32 1.1754944e-38, %v7013
    %v7015 = vsel %vm7012, %v7014, %v7010
    %v7016 = vmul.f32 1.0, %v7015
    %v7017 = vtanh.pop %v6977
    %v7018 = vxor.u32 %v6978, 2147483648
    %v7019 = vmul.f32 %v7018, 1.442695
    %v7020 = vpow.pop %v7019
    %v7021 = vadd.f32 %v7020, 1.0
    %v7022 = vrcp.pop %v7021
    %v7023 = vmul.f32 %v7021, %v7022
    %v7024 = vsub.f32 1.0, %v7023
    %v7025 = vmul.f32 %v7022, %v7024
    %v7026 = vadd.f32 %v7022, %v7025
    %vm7027 = vweird.f32 %v7021
    %vm7028 = vweird.f32 %v7022
    %vm7029 = vmor %vm7027, %vm7028
    %v7030 = vsel %vm7029, %v7022, %v7026
    %v7031 = vand.u32 2147483647, %v7021
    %vm7032 = vcmp.eq.f32.partialorder %v7031, 8.507059e+37
    %v7033 = vand.u32 %v7021, 2147483648
    %v7034 = vor.u32 1.1754944e-38, %v7033
    %v7035 = vsel %vm7032, %v7034, %v7030
    %v7036 = vmul.f32 1.0, %v7035
    %v7037 = vmul.f32 %v7016, %v6561
    %v7038 = vmul.f32 %v6997, %v7017
    %v7039 = vadd.f32 %v7037, %v7038
    %v7040 = vtanh.pop %v7039
    %v7041 = vmul.f32 %v7036, %v7040
    %7042 = vmatpush.msra.mxu0 %v6244
    %7043 = vmatpush.msra.mxu0 %v6236
    %7044 = vmatpush.msra.mxu0 %v6228
    %7045 = vmatpush.msra.mxu0 %v6220
    %7046 = vmatpush.msra.mxu0 %v6212
    %7047 = vmatpush.msra.mxu0 %v6204
    %7048 = vmatpush.msra.mxu0 %v6196
    %7049 = vmatpush.msra.mxu0 %v6188
    %7050 = vmatpush.msra.mxu0 %v6180
    %7051 = vmatpush.msra.mxu0 %v6172
    %7052 = vmatpush.msra.mxu0 %v6164
    %7053 = vmatpush.msra.mxu0 %v6156
    %7054 = vmatpush.msra.mxu0 %v6148
    %7055 = vmatpush.msra.mxu0 %v6140
    %7056 = vmatpush.msra.mxu0 %v6132
    %7057 = vmatpush.msra.mxu0 %v6124
    %7058 = vmatmul.f32.gmra.mxu0 %v7041
    %v7059 = vpop.f32.mrf.mxu0
    %v7060 = vadd.f32 0.0, %v7059
    %7061 = vdwg.mxu0
    %7062 = vmatpush.msra.mxu0 %v6372
    %7063 = vmatpush.msra.mxu0 %v6364
    %7064 = vmatpush.msra.mxu0 %v6356
    %7065 = vmatpush.msra.mxu0 %v6348
    %7066 = vmatpush.msra.mxu0 %v6340
    %7067 = vmatpush.msra.mxu0 %v6332
    %7068 = vmatpush.msra.mxu0 %v6324
    %7069 = vmatpush.msra.mxu0 %v6316
    %7070 = vmatpush.msra.mxu0 %v6308
    %7071 = vmatpush.msra.mxu0 %v6300
    %7072 = vmatpush.msra.mxu0 %v6292
    %7073 = vmatpush.msra.mxu0 %v6284
    %7074 = vmatpush.msra.mxu0 %v6276
    %7075 = vmatpush.msra.mxu0 %v6268
    %7076 = vmatpush.msra.mxu0 %v6260
    %7077 = vmatpush.msra.mxu0 %v6252
    %7078 = vmatmul.f32.gmra.mxu0 %v6974
    %v7079 = vpop.f32.mrf.mxu0
    %v7080 = vadd.f32 %v7060, %v7079
    %7081 = vdwg.mxu0
    %7082 = vmatpush.msra.mxu0 %v6245
    %7083 = vmatpush.msra.mxu0 %v6237
    %7084 = vmatpush.msra.mxu0 %v6229
    %7085 = vmatpush.msra.mxu0 %v6221
    %7086 = vmatpush.msra.mxu0 %v6213
    %7087 = vmatpush.msra.mxu0 %v6205
    %7088 = vmatpush.msra.mxu0 %v6197
    %7089 = vmatpush.msra.mxu0 %v6189
    %7090 = vmatpush.msra.mxu0 %v6181
    %7091 = vmatpush.msra.mxu0 %v6173
    %7092 = vmatpush.msra.mxu0 %v6165
    %7093 = vmatpush.msra.mxu0 %v6157
    %7094 = vmatpush.msra.mxu0 %v6149
    %7095 = vmatpush.msra.mxu0 %v6141
    %7096 = vmatpush.msra.mxu0 %v6133
    %7097 = vmatpush.msra.mxu0 %v6125
    %7098 = vmatmul.f32.gmra.mxu0 %v7041
    %v7099 = vpop.f32.mrf.mxu0
    %v7100 = vadd.f32 0.0, %v7099
    %7101 = vdwg.mxu0
    %7102 = vmatpush.msra.mxu0 %v6373
    %7103 = vmatpush.msra.mxu0 %v6365
    %7104 = vmatpush.msra.mxu0 %v6357
    %7105 = vmatpush.msra.mxu0 %v6349
    %7106 = vmatpush.msra.mxu0 %v6341
    %7107 = vmatpush.msra.mxu0 %v6333
    %7108 = vmatpush.msra.mxu0 %v6325
    %7109 = vmatpush.msra.mxu0 %v6317
    %7110 = vmatpush.msra.mxu0 %v6309
    %7111 = vmatpush.msra.mxu0 %v6301
    %7112 = vmatpush.msra.mxu0 %v6293
    %7113 = vmatpush.msra.mxu0 %v6285
    %7114 = vmatpush.msra.mxu0 %v6277
    %7115 = vmatpush.msra.mxu0 %v6269
    %7116 = vmatpush.msra.mxu0 %v6261
    %7117 = vmatpush.msra.mxu0 %v6253
    %7118 = vmatmul.f32.gmra.mxu0 %v6974
    %v7119 = vpop.f32.mrf.mxu0
    %v7120 = vadd.f32 %v7100, %v7119
    %7121 = vdwg.mxu0
    %7122 = vmatpush.msra.mxu0 %v6246
    %7123 = vmatpush.msra.mxu0 %v6238
    %7124 = vmatpush.msra.mxu0 %v6230
    %7125 = vmatpush.msra.mxu0 %v6222
    %7126 = vmatpush.msra.mxu0 %v6214
    %7127 = vmatpush.msra.mxu0 %v6206
    %7128 = vmatpush.msra.mxu0 %v6198
    %7129 = vmatpush.msra.mxu0 %v6190
    %7130 = vmatpush.msra.mxu0 %v6182
    %7131 = vmatpush.msra.mxu0 %v6174
    %7132 = vmatpush.msra.mxu0 %v6166
    %7133 = vmatpush.msra.mxu0 %v6158
    %7134 = vmatpush.msra.mxu0 %v6150
    %7135 = vmatpush.msra.mxu0 %v6142
    %7136 = vmatpush.msra.mxu0 %v6134
    %7137 = vmatpush.msra.mxu0 %v6126
    %7138 = vmatmul.f32.gmra.mxu0 %v7041
    %v7139 = vpop.f32.mrf.mxu0
    %v7140 = vadd.f32 0.0, %v7139
    %7141 = vdwg.mxu0
    %7142 = vmatpush.msra.mxu0 %v6374
    %7143 = vmatpush.msra.mxu0 %v6366
    %7144 = vmatpush.msra.mxu0 %v6358
    %7145 = vmatpush.msra.mxu0 %v6350
    %7146 = vmatpush.msra.mxu0 %v6342
    %7147 = vmatpush.msra.mxu0 %v6334
    %7148 = vmatpush.msra.mxu0 %v6326
    %7149 = vmatpush.msra.mxu0 %v6318
    %7150 = vmatpush.msra.mxu0 %v6310
    %7151 = vmatpush.msra.mxu0 %v6302
    %7152 = vmatpush.msra.mxu0 %v6294
    %7153 = vmatpush.msra.mxu0 %v6286
    %7154 = vmatpush.msra.mxu0 %v6278
    %7155 = vmatpush.msra.mxu0 %v6270
    %7156 = vmatpush.msra.mxu0 %v6262
    %7157 = vmatpush.msra.mxu0 %v6254
    %7158 = vmatmul.f32.gmra.mxu0 %v6974
    %v7159 = vpop.f32.mrf.mxu0
    %v7160 = vadd.f32 %v7140, %v7159
    %7161 = vdwg.mxu0
    %7162 = vmatpush.msra.mxu0 %v6247
    %7163 = vmatpush.msra.mxu0 %v6239
    %7164 = vmatpush.msra.mxu0 %v6231
    %7165 = vmatpush.msra.mxu0 %v6223
    %7166 = vmatpush.msra.mxu0 %v6215
    %7167 = vmatpush.msra.mxu0 %v6207
    %7168 = vmatpush.msra.mxu0 %v6199
    %7169 = vmatpush.msra.mxu0 %v6191
    %7170 = vmatpush.msra.mxu0 %v6183
    %7171 = vmatpush.msra.mxu0 %v6175
    %7172 = vmatpush.msra.mxu0 %v6167
    %7173 = vmatpush.msra.mxu0 %v6159
    %7174 = vmatpush.msra.mxu0 %v6151
    %7175 = vmatpush.msra.mxu0 %v6143
    %7176 = vmatpush.msra.mxu0 %v6135
    %7177 = vmatpush.msra.mxu0 %v6127
    %7178 = vmatmul.f32.gmra.mxu0 %v7041
    %v7179 = vpop.f32.mrf.mxu0
    %v7180 = vadd.f32 0.0, %v7179
    %7181 = vdwg.mxu0
    %7182 = vmatpush.msra.mxu0 %v6375
    %7183 = vmatpush.msra.mxu0 %v6367
    %7184 = vmatpush.msra.mxu0 %v6359
    %7185 = vmatpush.msra.mxu0 %v6351
    %7186 = vmatpush.msra.mxu0 %v6343
    %7187 = vmatpush.msra.mxu0 %v6335
    %7188 = vmatpush.msra.mxu0 %v6327
    %7189 = vmatpush.msra.mxu0 %v6319
    %7190 = vmatpush.msra.mxu0 %v6311
    %7191 = vmatpush.msra.mxu0 %v6303
    %7192 = vmatpush.msra.mxu0 %v6295
    %7193 = vmatpush.msra.mxu0 %v6287
    %7194 = vmatpush.msra.mxu0 %v6279
    %7195 = vmatpush.msra.mxu0 %v6271
    %7196 = vmatpush.msra.mxu0 %v6263
    %7197 = vmatpush.msra.mxu0 %v6255
    %7198 = vmatmul.f32.gmra.mxu0 %v6974
    %v7199 = vpop.f32.mrf.mxu0
    %v7200 = vadd.f32 %v7180, %v7199
    %7201 = vdwg.mxu0
    %7202 = vmatpush.msra.mxu0 %v6248
    %7203 = vmatpush.msra.mxu0 %v6240
    %7204 = vmatpush.msra.mxu0 %v6232
    %7205 = vmatpush.msra.mxu0 %v6224
    %7206 = vmatpush.msra.mxu0 %v6216
    %7207 = vmatpush.msra.mxu0 %v6208
    %7208 = vmatpush.msra.mxu0 %v6200
    %7209 = vmatpush.msra.mxu0 %v6192
    %7210 = vmatpush.msra.mxu0 %v6184
    %7211 = vmatpush.msra.mxu0 %v6176
    %7212 = vmatpush.msra.mxu0 %v6168
    %7213 = vmatpush.msra.mxu0 %v6160
    %7214 = vmatpush.msra.mxu0 %v6152
    %7215 = vmatpush.msra.mxu0 %v6144
    %7216 = vmatpush.msra.mxu0 %v6136
    %7217 = vmatpush.msra.mxu0 %v6128
    %7218 = vmatmul.f32.gmra.mxu0 %v7041
    %v7219 = vpop.f32.mrf.mxu0
    %v7220 = vadd.f32 0.0, %v7219
    %7221 = vdwg.mxu0
    %7222 = vmatpush.msra.mxu0 %v6376
    %7223 = vmatpush.msra.mxu0 %v6368
    %7224 = vmatpush.msra.mxu0 %v6360
    %7225 = vmatpush.msra.mxu0 %v6352
    %7226 = vmatpush.msra.mxu0 %v6344
    %7227 = vmatpush.msra.mxu0 %v6336
    %7228 = vmatpush.msra.mxu0 %v6328
    %7229 = vmatpush.msra.mxu0 %v6320
    %7230 = vmatpush.msra.mxu0 %v6312
    %7231 = vmatpush.msra.mxu0 %v6304
    %7232 = vmatpush.msra.mxu0 %v6296
    %7233 = vmatpush.msra.mxu0 %v6288
    %7234 = vmatpush.msra.mxu0 %v6280
    %7235 = vmatpush.msra.mxu0 %v6272
    %7236 = vmatpush.msra.mxu0 %v6264
    %7237 = vmatpush.msra.mxu0 %v6256
    %7238 = vmatmul.f32.gmra.mxu0 %v6974
    %v7239 = vpop.f32.mrf.mxu0
    %v7240 = vadd.f32 %v7220, %v7239
    %7241 = vdwg.mxu0
    %7242 = vmatpush.msra.mxu0 %v6249
    %7243 = vmatpush.msra.mxu0 %v6241
    %7244 = vmatpush.msra.mxu0 %v6233
    %7245 = vmatpush.msra.mxu0 %v6225
    %7246 = vmatpush.msra.mxu0 %v6217
    %7247 = vmatpush.msra.mxu0 %v6209
    %7248 = vmatpush.msra.mxu0 %v6201
    %7249 = vmatpush.msra.mxu0 %v6193
    %7250 = vmatpush.msra.mxu0 %v6185
    %7251 = vmatpush.msra.mxu0 %v6177
    %7252 = vmatpush.msra.mxu0 %v6169
    %7253 = vmatpush.msra.mxu0 %v6161
    %7254 = vmatpush.msra.mxu0 %v6153
    %7255 = vmatpush.msra.mxu0 %v6145
    %7256 = vmatpush.msra.mxu0 %v6137
    %7257 = vmatpush.msra.mxu0 %v6129
    %7258 = vmatmul.f32.gmra.mxu0 %v7041
    %v7259 = vpop.f32.mrf.mxu0
    %v7260 = vadd.f32 0.0, %v7259
    %7261 = vdwg.mxu0
    %7262 = vmatpush.msra.mxu0 %v6377
    %7263 = vmatpush.msra.mxu0 %v6369
    %7264 = vmatpush.msra.mxu0 %v6361
    %7265 = vmatpush.msra.mxu0 %v6353
    %7266 = vmatpush.msra.mxu0 %v6345
    %7267 = vmatpush.msra.mxu0 %v6337
    %7268 = vmatpush.msra.mxu0 %v6329
    %7269 = vmatpush.msra.mxu0 %v6321
    %7270 = vmatpush.msra.mxu0 %v6313
    %7271 = vmatpush.msra.mxu0 %v6305
    %7272 = vmatpush.msra.mxu0 %v6297
    %7273 = vmatpush.msra.mxu0 %v6289
    %7274 = vmatpush.msra.mxu0 %v6281
    %7275 = vmatpush.msra.mxu0 %v6273
    %7276 = vmatpush.msra.mxu0 %v6265
    %7277 = vmatpush.msra.mxu0 %v6257
    %7278 = vmatmul.f32.gmra.mxu0 %v6974
    %v7279 = vpop.f32.mrf.mxu0
    %v7280 = vadd.f32 %v7260, %v7279
    %7281 = vdwg.mxu0
    %7282 = vmatpush.msra.mxu0 %v6250
    %7283 = vmatpush.msra.mxu0 %v6242
    %7284 = vmatpush.msra.mxu0 %v6234
    %7285 = vmatpush.msra.mxu0 %v6226
    %7286 = vmatpush.msra.mxu0 %v6218
    %7287 = vmatpush.msra.mxu0 %v6210
    %7288 = vmatpush.msra.mxu0 %v6202
    %7289 = vmatpush.msra.mxu0 %v6194
    %7290 = vmatpush.msra.mxu0 %v6186
    %7291 = vmatpush.msra.mxu0 %v6178
    %7292 = vmatpush.msra.mxu0 %v6170
    %7293 = vmatpush.msra.mxu0 %v6162
    %7294 = vmatpush.msra.mxu0 %v6154
    %7295 = vmatpush.msra.mxu0 %v6146
    %7296 = vmatpush.msra.mxu0 %v6138
    %7297 = vmatpush.msra.mxu0 %v6130
    %7298 = vmatmul.f32.gmra.mxu0 %v7041
    %v7299 = vpop.f32.mrf.mxu0
    %v7300 = vadd.f32 0.0, %v7299
    %7301 = vdwg.mxu0
    %7302 = vmatpush.msra.mxu0 %v6378
    %7303 = vmatpush.msra.mxu0 %v6370
    %7304 = vmatpush.msra.mxu0 %v6362
    %7305 = vmatpush.msra.mxu0 %v6354
    %7306 = vmatpush.msra.mxu0 %v6346
    %7307 = vmatpush.msra.mxu0 %v6338
    %7308 = vmatpush.msra.mxu0 %v6330
    %7309 = vmatpush.msra.mxu0 %v6322
    %7310 = vmatpush.msra.mxu0 %v6314
    %7311 = vmatpush.msra.mxu0 %v6306
    %7312 = vmatpush.msra.mxu0 %v6298
    %7313 = vmatpush.msra.mxu0 %v6290
    %7314 = vmatpush.msra.mxu0 %v6282
    %7315 = vmatpush.msra.mxu0 %v6274
    %7316 = vmatpush.msra.mxu0 %v6266
    %7317 = vmatpush.msra.mxu0 %v6258
    %7318 = vmatmul.f32.gmra.mxu0 %v6974
    %v7319 = vpop.f32.mrf.mxu0
    %v7320 = vadd.f32 %v7300, %v7319
    %7321 = vdwg.mxu0
    %7322 = vmatpush.msra.mxu0 %v6251
    %7323 = vmatpush.msra.mxu0 %v6243
    %7324 = vmatpush.msra.mxu0 %v6235
    %7325 = vmatpush.msra.mxu0 %v6227
    %7326 = vmatpush.msra.mxu0 %v6219
    %7327 = vmatpush.msra.mxu0 %v6211
    %7328 = vmatpush.msra.mxu0 %v6203
    %7329 = vmatpush.msra.mxu0 %v6195
    %7330 = vmatpush.msra.mxu0 %v6187
    %7331 = vmatpush.msra.mxu0 %v6179
    %7332 = vmatpush.msra.mxu0 %v6171
    %7333 = vmatpush.msra.mxu0 %v6163
    %7334 = vmatpush.msra.mxu0 %v6155
    %7335 = vmatpush.msra.mxu0 %v6147
    %7336 = vmatpush.msra.mxu0 %v6139
    %7337 = vmatpush.msra.mxu0 %v6131
    %7338 = vmatmul.f32.gmra.mxu0 %v7041
    %v7339 = vpop.f32.mrf.mxu0
    %v7340 = vadd.f32 0.0, %v7339
    %7341 = vdwg.mxu0
    %7342 = vmatpush.msra.mxu0 %v6379
    %7343 = vmatpush.msra.mxu0 %v6371
    %7344 = vmatpush.msra.mxu0 %v6363
    %7345 = vmatpush.msra.mxu0 %v6355
    %7346 = vmatpush.msra.mxu0 %v6347
    %7347 = vmatpush.msra.mxu0 %v6339
    %7348 = vmatpush.msra.mxu0 %v6331
    %7349 = vmatpush.msra.mxu0 %v6323
    %7350 = vmatpush.msra.mxu0 %v6315
    %7351 = vmatpush.msra.mxu0 %v6307
    %7352 = vmatpush.msra.mxu0 %v6299
    %7353 = vmatpush.msra.mxu0 %v6291
    %7354 = vmatpush.msra.mxu0 %v6283
    %7355 = vmatpush.msra.mxu0 %v6275
    %7356 = vmatpush.msra.mxu0 %v6267
    %7357 = vmatpush.msra.mxu0 %v6259
    %7358 = vmatmul.f32.gmra.mxu0 %v6974
    %v7359 = vpop.f32.mrf.mxu0
    %v7360 = vadd.f32 %v7340, %v7359
    %7361 = vdwg.mxu0
    %v7362 = vadd.f32 %v7240, %v6900
    %v7363 = vadd.f32 %v7280, %v6901
    %v7364 = vadd.f32 %v7320, %v6902
    %v7365 = vadd.f32 %v7360, %v6903
    %v7366 = vxor.u32 %v7362, 2147483648
    %v7367 = vmul.f32 %v7366, 1.442695
    %v7368 = vpow.pop %v7367
    %v7369 = vadd.f32 %v7368, 1.0
    %v7370 = vrcp.pop %v7369
    %v7371 = vmul.f32 %v7369, %v7370
    %v7372 = vsub.f32 1.0, %v7371
    %v7373 = vmul.f32 %v7370, %v7372
    %v7374 = vadd.f32 %v7370, %v7373
    %vm7375 = vweird.f32 %v7369
    %vm7376 = vweird.f32 %v7370
    %vm7377 = vmor %vm7375, %vm7376
    %v7378 = vsel %vm7377, %v7370, %v7374
    %v7379 = vand.u32 2147483647, %v7369
    %vm7380 = vcmp.eq.f32.partialorder %v7379, 8.507059e+37
    %v7381 = vand.u32 %v7369, 2147483648
    %v7382 = vor.u32 1.1754944e-38, %v7381
    %v7383 = vsel %vm7380, %v7382, %v7378
    %v7384 = vmul.f32 1.0, %v7383
    %v7385 = vxor.u32 %v7363, 2147483648
    %v7386 = vmul.f32 %v7385, 1.442695
    %v7387 = vpow.pop %v7386
    %v7388 = vadd.f32 %v7387, 1.0
    %v7389 = vrcp.pop %v7388
    %v7390 = vmul.f32 %v7388, %v7389
    %v7391 = vsub.f32 1.0, %v7390
    %v7392 = vmul.f32 %v7389, %v7391
    %v7393 = vadd.f32 %v7389, %v7392
    %vm7394 = vweird.f32 %v7388
    %vm7395 = vweird.f32 %v7389
    %vm7396 = vmor %vm7394, %vm7395
    %v7397 = vsel %vm7396, %v7389, %v7393
    %v7398 = vand.u32 2147483647, %v7388
    %vm7399 = vcmp.eq.f32.partialorder %v7398, 8.507059e+37
    %v7400 = vand.u32 %v7388, 2147483648
    %v7401 = vor.u32 1.1754944e-38, %v7400
    %v7402 = vsel %vm7399, %v7401, %v7397
    %v7403 = vmul.f32 1.0, %v7402
    %v7404 = vtanh.pop %v7364
    %v7405 = vxor.u32 %v7365, 2147483648
    %v7406 = vmul.f32 %v7405, 1.442695
    %v7407 = vpow.pop %v7406
    %v7408 = vadd.f32 %v7407, 1.0
    %v7409 = vrcp.pop %v7408
    %v7410 = vmul.f32 %v7408, %v7409
    %v7411 = vsub.f32 1.0, %v7410
    %v7412 = vmul.f32 %v7409, %v7411
    %v7413 = vadd.f32 %v7409, %v7412
    %vm7414 = vweird.f32 %v7408
    %vm7415 = vweird.f32 %v7409
    %vm7416 = vmor %vm7414, %vm7415
    %v7417 = vsel %vm7416, %v7409, %v7413
    %v7418 = vand.u32 2147483647, %v7408
    %vm7419 = vcmp.eq.f32.partialorder %v7418, 8.507059e+37
    %v7420 = vand.u32 %v7408, 2147483648
    %v7421 = vor.u32 1.1754944e-38, %v7420
    %v7422 = vsel %vm7419, %v7421, %v7417
    %v7423 = vmul.f32 1.0, %v7422
    %v7424 = vmul.f32 %v7403, %v6972
    %v7425 = vmul.f32 %v7384, %v7404
    %v7426 = vadd.f32 %v7424, %v7425
    %v7427 = vtanh.pop %v7426
    %v7428 = vmul.f32 %v7423, %v7427
    %v7433 = vrot.slane %v6571, 2
    %v7434 = vrot.slane %v6572, 2
    %v7435 = vrot.slane %v6573, 2
    %v7436 = vrot.slane %v6574, 2
    %v7441 = vadd.f32 %v7080, %v7433
    %v7442 = vadd.f32 %v7120, %v7434
    %v7443 = vadd.f32 %v7160, %v7435
    %v7444 = vadd.f32 %v7200, %v7436
    %v7445 = vxor.u32 %v7441, 2147483648
    %v7446 = vmul.f32 %v7445, 1.442695
    %v7447 = vpow.pop %v7446
    %v7448 = vadd.f32 %v7447, 1.0
    %v7449 = vrcp.pop %v7448
    %v7450 = vmul.f32 %v7448, %v7449
    %v7451 = vsub.f32 1.0, %v7450
    %v7452 = vmul.f32 %v7449, %v7451
    %v7453 = vadd.f32 %v7449, %v7452
    %vm7454 = vweird.f32 %v7448
    %vm7455 = vweird.f32 %v7449
    %vm7456 = vmor %vm7454, %vm7455
    %v7457 = vsel %vm7456, %v7449, %v7453
    %v7458 = vand.u32 2147483647, %v7448
    %vm7459 = vcmp.eq.f32.partialorder %v7458, 8.507059e+37
    %v7460 = vand.u32 %v7448, 2147483648
    %v7461 = vor.u32 1.1754944e-38, %v7460
    %v7462 = vsel %vm7459, %v7461, %v7457
    %v7463 = vmul.f32 1.0, %v7462
    %v7464 = vxor.u32 %v7442, 2147483648
    %v7465 = vmul.f32 %v7464, 1.442695
    %v7466 = vpow.pop %v7465
    %v7467 = vadd.f32 %v7466, 1.0
    %v7468 = vrcp.pop %v7467
    %v7469 = vmul.f32 %v7467, %v7468
    %v7470 = vsub.f32 1.0, %v7469
    %v7471 = vmul.f32 %v7468, %v7470
    %v7472 = vadd.f32 %v7468, %v7471
    %vm7473 = vweird.f32 %v7467
    %vm7474 = vweird.f32 %v7468
    %vm7475 = vmor %vm7473, %vm7474
    %v7476 = vsel %vm7475, %v7468, %v7472
    %v7477 = vand.u32 2147483647, %v7467
    %vm7478 = vcmp.eq.f32.partialorder %v7477, 8.507059e+37
    %v7479 = vand.u32 %v7467, 2147483648
    %v7480 = vor.u32 1.1754944e-38, %v7479
    %v7481 = vsel %vm7478, %v7480, %v7476
    %v7482 = vmul.f32 1.0, %v7481
    %v7483 = vtanh.pop %v7443
    %v7484 = vxor.u32 %v7444, 2147483648
    %v7485 = vmul.f32 %v7484, 1.442695
    %v7486 = vpow.pop %v7485
    %v7487 = vadd.f32 %v7486, 1.0
    %v7488 = vrcp.pop %v7487
    %v7489 = vmul.f32 %v7487, %v7488
    %v7490 = vsub.f32 1.0, %v7489
    %v7491 = vmul.f32 %v7488, %v7490
    %v7492 = vadd.f32 %v7488, %v7491
    %vm7493 = vweird.f32 %v7487
    %vm7494 = vweird.f32 %v7488
    %vm7495 = vmor %vm7493, %vm7494
    %v7496 = vsel %vm7495, %v7488, %v7492
    %v7497 = vand.u32 2147483647, %v7487
    %vm7498 = vcmp.eq.f32.partialorder %v7497, 8.507059e+37
    %v7499 = vand.u32 %v7487, 2147483648
    %v7500 = vor.u32 1.1754944e-38, %v7499
    %v7501 = vsel %vm7498, %v7500, %v7496
    %v7502 = vmul.f32 1.0, %v7501
    %v7503 = vmul.f32 %v7482, %v7039
    %v7504 = vmul.f32 %v7463, %v7483
    %v7505 = vadd.f32 %v7503, %v7504
    %v7506 = vtanh.pop %v7505
    %v7507 = vmul.f32 %v7502, %v7506
    %7508 = vmatpush.msra.mxu0 %v6244
    %7509 = vmatpush.msra.mxu0 %v6236
    %7510 = vmatpush.msra.mxu0 %v6228
    %7511 = vmatpush.msra.mxu0 %v6220
    %7512 = vmatpush.msra.mxu0 %v6212
    %7513 = vmatpush.msra.mxu0 %v6204
    %7514 = vmatpush.msra.mxu0 %v6196
    %7515 = vmatpush.msra.mxu0 %v6188
    %7516 = vmatpush.msra.mxu0 %v6180
    %7517 = vmatpush.msra.mxu0 %v6172
    %7518 = vmatpush.msra.mxu0 %v6164
    %7519 = vmatpush.msra.mxu0 %v6156
    %7520 = vmatpush.msra.mxu0 %v6148
    %7521 = vmatpush.msra.mxu0 %v6140
    %7522 = vmatpush.msra.mxu0 %v6132
    %7523 = vmatpush.msra.mxu0 %v6124
    %7524 = vmatmul.f32.gmra.mxu0 %v7507
    %v7525 = vpop.f32.mrf.mxu0
    %v7526 = vadd.f32 0.0, %v7525
    %7527 = vdwg.mxu0
    %7528 = vmatpush.msra.mxu0 %v6372
    %7529 = vmatpush.msra.mxu0 %v6364
    %7530 = vmatpush.msra.mxu0 %v6356
    %7531 = vmatpush.msra.mxu0 %v6348
    %7532 = vmatpush.msra.mxu0 %v6340
    %7533 = vmatpush.msra.mxu0 %v6332
    %7534 = vmatpush.msra.mxu0 %v6324
    %7535 = vmatpush.msra.mxu0 %v6316
    %7536 = vmatpush.msra.mxu0 %v6308
    %7537 = vmatpush.msra.mxu0 %v6300
    %7538 = vmatpush.msra.mxu0 %v6292
    %7539 = vmatpush.msra.mxu0 %v6284
    %7540 = vmatpush.msra.mxu0 %v6276
    %7541 = vmatpush.msra.mxu0 %v6268
    %7542 = vmatpush.msra.mxu0 %v6260
    %7543 = vmatpush.msra.mxu0 %v6252
    %7544 = vmatmul.f32.gmra.mxu0 %v7428
    %v7545 = vpop.f32.mrf.mxu0
    %v7546 = vadd.f32 %v7526, %v7545
    %7547 = vdwg.mxu0
    %7548 = vmatpush.msra.mxu0 %v6245
    %7549 = vmatpush.msra.mxu0 %v6237
    %7550 = vmatpush.msra.mxu0 %v6229
    %7551 = vmatpush.msra.mxu0 %v6221
    %7552 = vmatpush.msra.mxu0 %v6213
    %7553 = vmatpush.msra.mxu0 %v6205
    %7554 = vmatpush.msra.mxu0 %v6197
    %7555 = vmatpush.msra.mxu0 %v6189
    %7556 = vmatpush.msra.mxu0 %v6181
    %7557 = vmatpush.msra.mxu0 %v6173
    %7558 = vmatpush.msra.mxu0 %v6165
    %7559 = vmatpush.msra.mxu0 %v6157
    %7560 = vmatpush.msra.mxu0 %v6149
    %7561 = vmatpush.msra.mxu0 %v6141
    %7562 = vmatpush.msra.mxu0 %v6133
    %7563 = vmatpush.msra.mxu0 %v6125
    %7564 = vmatmul.f32.gmra.mxu0 %v7507
    %v7565 = vpop.f32.mrf.mxu0
    %v7566 = vadd.f32 0.0, %v7565
    %7567 = vdwg.mxu0
    %7568 = vmatpush.msra.mxu0 %v6373
    %7569 = vmatpush.msra.mxu0 %v6365
    %7570 = vmatpush.msra.mxu0 %v6357
    %7571 = vmatpush.msra.mxu0 %v6349
    %7572 = vmatpush.msra.mxu0 %v6341
    %7573 = vmatpush.msra.mxu0 %v6333
    %7574 = vmatpush.msra.mxu0 %v6325
    %7575 = vmatpush.msra.mxu0 %v6317
    %7576 = vmatpush.msra.mxu0 %v6309
    %7577 = vmatpush.msra.mxu0 %v6301
    %7578 = vmatpush.msra.mxu0 %v6293
    %7579 = vmatpush.msra.mxu0 %v6285
    %7580 = vmatpush.msra.mxu0 %v6277
    %7581 = vmatpush.msra.mxu0 %v6269
    %7582 = vmatpush.msra.mxu0 %v6261
    %7583 = vmatpush.msra.mxu0 %v6253
    %7584 = vmatmul.f32.gmra.mxu0 %v7428
    %v7585 = vpop.f32.mrf.mxu0
    %v7586 = vadd.f32 %v7566, %v7585
    %7587 = vdwg.mxu0
    %7588 = vmatpush.msra.mxu0 %v6246
    %7589 = vmatpush.msra.mxu0 %v6238
    %7590 = vmatpush.msra.mxu0 %v6230
    %7591 = vmatpush.msra.mxu0 %v6222
    %7592 = vmatpush.msra.mxu0 %v6214
    %7593 = vmatpush.msra.mxu0 %v6206
    %7594 = vmatpush.msra.mxu0 %v6198
    %7595 = vmatpush.msra.mxu0 %v6190
    %7596 = vmatpush.msra.mxu0 %v6182
    %7597 = vmatpush.msra.mxu0 %v6174
    %7598 = vmatpush.msra.mxu0 %v6166
    %7599 = vmatpush.msra.mxu0 %v6158
    %7600 = vmatpush.msra.mxu0 %v6150
    %7601 = vmatpush.msra.mxu0 %v6142
    %7602 = vmatpush.msra.mxu0 %v6134
    %7603 = vmatpush.msra.mxu0 %v6126
    %7604 = vmatmul.f32.gmra.mxu0 %v7507
    %v7605 = vpop.f32.mrf.mxu0
    %v7606 = vadd.f32 0.0, %v7605
    %7607 = vdwg.mxu0
    %7608 = vmatpush.msra.mxu0 %v6374
    %7609 = vmatpush.msra.mxu0 %v6366
    %7610 = vmatpush.msra.mxu0 %v6358
    %7611 = vmatpush.msra.mxu0 %v6350
    %7612 = vmatpush.msra.mxu0 %v6342
    %7613 = vmatpush.msra.mxu0 %v6334
    %7614 = vmatpush.msra.mxu0 %v6326
    %7615 = vmatpush.msra.mxu0 %v6318
    %7616 = vmatpush.msra.mxu0 %v6310
    %7617 = vmatpush.msra.mxu0 %v6302
    %7618 = vmatpush.msra.mxu0 %v6294
    %7619 = vmatpush.msra.mxu0 %v6286
    %7620 = vmatpush.msra.mxu0 %v6278
    %7621 = vmatpush.msra.mxu0 %v6270
    %7622 = vmatpush.msra.mxu0 %v6262
    %7623 = vmatpush.msra.mxu0 %v6254
    %7624 = vmatmul.f32.gmra.mxu0 %v7428
    %v7625 = vpop.f32.mrf.mxu0
    %v7626 = vadd.f32 %v7606, %v7625
    %7627 = vdwg.mxu0
    %7628 = vmatpush.msra.mxu0 %v6247
    %7629 = vmatpush.msra.mxu0 %v6239
    %7630 = vmatpush.msra.mxu0 %v6231
    %7631 = vmatpush.msra.mxu0 %v6223
    %7632 = vmatpush.msra.mxu0 %v6215
    %7633 = vmatpush.msra.mxu0 %v6207
    %7634 = vmatpush.msra.mxu0 %v6199
    %7635 = vmatpush.msra.mxu0 %v6191
    %7636 = vmatpush.msra.mxu0 %v6183
    %7637 = vmatpush.msra.mxu0 %v6175
    %7638 = vmatpush.msra.mxu0 %v6167
    %7639 = vmatpush.msra.mxu0 %v6159
    %7640 = vmatpush.msra.mxu0 %v6151
    %7641 = vmatpush.msra.mxu0 %v6143
    %7642 = vmatpush.msra.mxu0 %v6135
    %7643 = vmatpush.msra.mxu0 %v6127
    %7644 = vmatmul.f32.gmra.mxu0 %v7507
    %v7645 = vpop.f32.mrf.mxu0
    %v7646 = vadd.f32 0.0, %v7645
    %7647 = vdwg.mxu0
    %7648 = vmatpush.msra.mxu0 %v6375
    %7649 = vmatpush.msra.mxu0 %v6367
    %7650 = vmatpush.msra.mxu0 %v6359
    %7651 = vmatpush.msra.mxu0 %v6351
    %7652 = vmatpush.msra.mxu0 %v6343
    %7653 = vmatpush.msra.mxu0 %v6335
    %7654 = vmatpush.msra.mxu0 %v6327
    %7655 = vmatpush.msra.mxu0 %v6319
    %7656 = vmatpush.msra.mxu0 %v6311
    %7657 = vmatpush.msra.mxu0 %v6303
    %7658 = vmatpush.msra.mxu0 %v6295
    %7659 = vmatpush.msra.mxu0 %v6287
    %7660 = vmatpush.msra.mxu0 %v6279
    %7661 = vmatpush.msra.mxu0 %v6271
    %7662 = vmatpush.msra.mxu0 %v6263
    %7663 = vmatpush.msra.mxu0 %v6255
    %7664 = vmatmul.f32.gmra.mxu0 %v7428
    %v7665 = vpop.f32.mrf.mxu0
    %v7666 = vadd.f32 %v7646, %v7665
    %7667 = vdwg.mxu0
    %7668 = vmatpush.msra.mxu0 %v6248
    %7669 = vmatpush.msra.mxu0 %v6240
    %7670 = vmatpush.msra.mxu0 %v6232
    %7671 = vmatpush.msra.mxu0 %v6224
    %7672 = vmatpush.msra.mxu0 %v6216
    %7673 = vmatpush.msra.mxu0 %v6208
    %7674 = vmatpush.msra.mxu0 %v6200
    %7675 = vmatpush.msra.mxu0 %v6192
    %7676 = vmatpush.msra.mxu0 %v6184
    %7677 = vmatpush.msra.mxu0 %v6176
    %7678 = vmatpush.msra.mxu0 %v6168
    %7679 = vmatpush.msra.mxu0 %v6160
    %7680 = vmatpush.msra.mxu0 %v6152
    %7681 = vmatpush.msra.mxu0 %v6144
    %7682 = vmatpush.msra.mxu0 %v6136
    %7683 = vmatpush.msra.mxu0 %v6128
    %7684 = vmatmul.f32.gmra.mxu0 %v7507
    %v7685 = vpop.f32.mrf.mxu0
    %v7686 = vadd.f32 0.0, %v7685
    %7687 = vdwg.mxu0
    %7688 = vmatpush.msra.mxu0 %v6376
    %7689 = vmatpush.msra.mxu0 %v6368
    %7690 = vmatpush.msra.mxu0 %v6360
    %7691 = vmatpush.msra.mxu0 %v6352
    %7692 = vmatpush.msra.mxu0 %v6344
    %7693 = vmatpush.msra.mxu0 %v6336
    %7694 = vmatpush.msra.mxu0 %v6328
    %7695 = vmatpush.msra.mxu0 %v6320
    %7696 = vmatpush.msra.mxu0 %v6312
    %7697 = vmatpush.msra.mxu0 %v6304
    %7698 = vmatpush.msra.mxu0 %v6296
    %7699 = vmatpush.msra.mxu0 %v6288
    %7700 = vmatpush.msra.mxu0 %v6280
    %7701 = vmatpush.msra.mxu0 %v6272
    %7702 = vmatpush.msra.mxu0 %v6264
    %7703 = vmatpush.msra.mxu0 %v6256
    %7704 = vmatmul.f32.gmra.mxu0 %v7428
    %v7705 = vpop.f32.mrf.mxu0
    %v7706 = vadd.f32 %v7686, %v7705
    %7707 = vdwg.mxu0
    %7708 = vmatpush.msra.mxu0 %v6249
    %7709 = vmatpush.msra.mxu0 %v6241
    %7710 = vmatpush.msra.mxu0 %v6233
    %7711 = vmatpush.msra.mxu0 %v6225
    %7712 = vmatpush.msra.mxu0 %v6217
    %7713 = vmatpush.msra.mxu0 %v6209
    %7714 = vmatpush.msra.mxu0 %v6201
    %7715 = vmatpush.msra.mxu0 %v6193
    %7716 = vmatpush.msra.mxu0 %v6185
    %7717 = vmatpush.msra.mxu0 %v6177
    %7718 = vmatpush.msra.mxu0 %v6169
    %7719 = vmatpush.msra.mxu0 %v6161
    %7720 = vmatpush.msra.mxu0 %v6153
    %7721 = vmatpush.msra.mxu0 %v6145
    %7722 = vmatpush.msra.mxu0 %v6137
    %7723 = vmatpush.msra.mxu0 %v6129
    %7724 = vmatmul.f32.gmra.mxu0 %v7507
    %v7725 = vpop.f32.mrf.mxu0
    %v7726 = vadd.f32 0.0, %v7725
    %7727 = vdwg.mxu0
    %7728 = vmatpush.msra.mxu0 %v6377
    %7729 = vmatpush.msra.mxu0 %v6369
    %7730 = vmatpush.msra.mxu0 %v6361
    %7731 = vmatpush.msra.mxu0 %v6353
    %7732 = vmatpush.msra.mxu0 %v6345
    %7733 = vmatpush.msra.mxu0 %v6337
    %7734 = vmatpush.msra.mxu0 %v6329
    %7735 = vmatpush.msra.mxu0 %v6321
    %7736 = vmatpush.msra.mxu0 %v6313
    %7737 = vmatpush.msra.mxu0 %v6305
    %7738 = vmatpush.msra.mxu0 %v6297
    %7739 = vmatpush.msra.mxu0 %v6289
    %7740 = vmatpush.msra.mxu0 %v6281
    %7741 = vmatpush.msra.mxu0 %v6273
    %7742 = vmatpush.msra.mxu0 %v6265
    %7743 = vmatpush.msra.mxu0 %v6257
    %7744 = vmatmul.f32.gmra.mxu0 %v7428
    %v7745 = vpop.f32.mrf.mxu0
    %v7746 = vadd.f32 %v7726, %v7745
    %7747 = vdwg.mxu0
    %7748 = vmatpush.msra.mxu0 %v6250
    %7749 = vmatpush.msra.mxu0 %v6242
    %7750 = vmatpush.msra.mxu0 %v6234
    %7751 = vmatpush.msra.mxu0 %v6226
    %7752 = vmatpush.msra.mxu0 %v6218
    %7753 = vmatpush.msra.mxu0 %v6210
    %7754 = vmatpush.msra.mxu0 %v6202
    %7755 = vmatpush.msra.mxu0 %v6194
    %7756 = vmatpush.msra.mxu0 %v6186
    %7757 = vmatpush.msra.mxu0 %v6178
    %7758 = vmatpush.msra.mxu0 %v6170
    %7759 = vmatpush.msra.mxu0 %v6162
    %7760 = vmatpush.msra.mxu0 %v6154
    %7761 = vmatpush.msra.mxu0 %v6146
    %7762 = vmatpush.msra.mxu0 %v6138
    %7763 = vmatpush.msra.mxu0 %v6130
    %7764 = vmatmul.f32.gmra.mxu0 %v7507
    %v7765 = vpop.f32.mrf.mxu0
    %v7766 = vadd.f32 0.0, %v7765
    %7767 = vdwg.mxu0
    %7768 = vmatpush.msra.mxu0 %v6378
    %7769 = vmatpush.msra.mxu0 %v6370
    %7770 = vmatpush.msra.mxu0 %v6362
    %7771 = vmatpush.msra.mxu0 %v6354
    %7772 = vmatpush.msra.mxu0 %v6346
    %7773 = vmatpush.msra.mxu0 %v6338
    %7774 = vmatpush.msra.mxu0 %v6330
    %7775 = vmatpush.msra.mxu0 %v6322
    %7776 = vmatpush.msra.mxu0 %v6314
    %7777 = vmatpush.msra.mxu0 %v6306
    %7778 = vmatpush.msra.mxu0 %v6298
    %7779 = vmatpush.msra.mxu0 %v6290
    %7780 = vmatpush.msra.mxu0 %v6282
    %7781 = vmatpush.msra.mxu0 %v6274
    %7782 = vmatpush.msra.mxu0 %v6266
    %7783 = vmatpush.msra.mxu0 %v6258
    %7784 = vmatmul.f32.gmra.mxu0 %v7428
    %v7785 = vpop.f32.mrf.mxu0
    %v7786 = vadd.f32 %v7766, %v7785
    %7787 = vdwg.mxu0
    %7788 = vmatpush.msra.mxu0 %v6251
    %7789 = vmatpush.msra.mxu0 %v6243
    %7790 = vmatpush.msra.mxu0 %v6235
    %7791 = vmatpush.msra.mxu0 %v6227
    %7792 = vmatpush.msra.mxu0 %v6219
    %7793 = vmatpush.msra.mxu0 %v6211
    %7794 = vmatpush.msra.mxu0 %v6203
    %7795 = vmatpush.msra.mxu0 %v6195
    %7796 = vmatpush.msra.mxu0 %v6187
    %7797 = vmatpush.msra.mxu0 %v6179
    %7798 = vmatpush.msra.mxu0 %v6171
    %7799 = vmatpush.msra.mxu0 %v6163
    %7800 = vmatpush.msra.mxu0 %v6155
    %7801 = vmatpush.msra.mxu0 %v6147
    %7802 = vmatpush.msra.mxu0 %v6139
    %7803 = vmatpush.msra.mxu0 %v6131
    %7804 = vmatmul.f32.gmra.mxu0 %v7507
    %v7805 = vpop.f32.mrf.mxu0
    %v7806 = vadd.f32 0.0, %v7805
    %7807 = vdwg.mxu0
    %7808 = vmatpush.msra.mxu0 %v6379
    %7809 = vmatpush.msra.mxu0 %v6371
    %7810 = vmatpush.msra.mxu0 %v6363
    %7811 = vmatpush.msra.mxu0 %v6355
    %7812 = vmatpush.msra.mxu0 %v6347
    %7813 = vmatpush.msra.mxu0 %v6339
    %7814 = vmatpush.msra.mxu0 %v6331
    %7815 = vmatpush.msra.mxu0 %v6323
    %7816 = vmatpush.msra.mxu0 %v6315
    %7817 = vmatpush.msra.mxu0 %v6307
    %7818 = vmatpush.msra.mxu0 %v6299
    %7819 = vmatpush.msra.mxu0 %v6291
    %7820 = vmatpush.msra.mxu0 %v6283
    %7821 = vmatpush.msra.mxu0 %v6275
    %7822 = vmatpush.msra.mxu0 %v6267
    %7823 = vmatpush.msra.mxu0 %v6259
    %7824 = vmatmul.f32.gmra.mxu0 %v7428
    %v7825 = vpop.f32.mrf.mxu0
    %v7826 = vadd.f32 %v7806, %v7825
    %7827 = vdwg.mxu0
    %v7828 = vadd.f32 %v7706, %v6900
    %v7829 = vadd.f32 %v7746, %v6901
    %v7830 = vadd.f32 %v7786, %v6902
    %v7831 = vadd.f32 %v7826, %v6903
    %v7832 = vxor.u32 %v7828, 2147483648
    %v7833 = vmul.f32 %v7832, 1.442695
    %v7834 = vpow.pop %v7833
    %v7835 = vadd.f32 %v7834, 1.0
    %v7836 = vrcp.pop %v7835
    %v7837 = vmul.f32 %v7835, %v7836
    %v7838 = vsub.f32 1.0, %v7837
    %v7839 = vmul.f32 %v7836, %v7838
    %v7840 = vadd.f32 %v7836, %v7839
    %vm7841 = vweird.f32 %v7835
    %vm7842 = vweird.f32 %v7836
    %vm7843 = vmor %vm7841, %vm7842
    %v7844 = vsel %vm7843, %v7836, %v7840
    %v7845 = vand.u32 2147483647, %v7835
    %vm7846 = vcmp.eq.f32.partialorder %v7845, 8.507059e+37
    %v7847 = vand.u32 %v7835, 2147483648
    %v7848 = vor.u32 1.1754944e-38, %v7847
    %v7849 = vsel %vm7846, %v7848, %v7844
    %v7850 = vmul.f32 1.0, %v7849
    %v7851 = vxor.u32 %v7829, 2147483648
    %v7852 = vmul.f32 %v7851, 1.442695
    %v7853 = vpow.pop %v7852
    %v7854 = vadd.f32 %v7853, 1.0
    %v7855 = vrcp.pop %v7854
    %v7856 = vmul.f32 %v7854, %v7855
    %v7857 = vsub.f32 1.0, %v7856
    %v7858 = vmul.f32 %v7855, %v7857
    %v7859 = vadd.f32 %v7855, %v7858
    %vm7860 = vweird.f32 %v7854
    %vm7861 = vweird.f32 %v7855
    %vm7862 = vmor %vm7860, %vm7861
    %v7863 = vsel %vm7862, %v7855, %v7859
    %v7864 = vand.u32 2147483647, %v7854
    %vm7865 = vcmp.eq.f32.partialorder %v7864, 8.507059e+37
    %v7866 = vand.u32 %v7854, 2147483648
    %v7867 = vor.u32 1.1754944e-38, %v7866
    %v7868 = vsel %vm7865, %v7867, %v7863
    %v7869 = vmul.f32 1.0, %v7868
    %v7870 = vtanh.pop %v7830
    %v7871 = vxor.u32 %v7831, 2147483648
    %v7872 = vmul.f32 %v7871, 1.442695
    %v7873 = vpow.pop %v7872
    %v7874 = vadd.f32 %v7873, 1.0
    %v7875 = vrcp.pop %v7874
    %v7876 = vmul.f32 %v7874, %v7875
    %v7877 = vsub.f32 1.0, %v7876
    %v7878 = vmul.f32 %v7875, %v7877
    %v7879 = vadd.f32 %v7875, %v7878
    %vm7880 = vweird.f32 %v7874
    %vm7881 = vweird.f32 %v7875
    %vm7882 = vmor %vm7880, %vm7881
    %v7883 = vsel %vm7882, %v7875, %v7879
    %v7884 = vand.u32 2147483647, %v7874
    %vm7885 = vcmp.eq.f32.partialorder %v7884, 8.507059e+37
    %v7886 = vand.u32 %v7874, 2147483648
    %v7887 = vor.u32 1.1754944e-38, %v7886
    %v7888 = vsel %vm7885, %v7887, %v7883
    %v7889 = vmul.f32 1.0, %v7888
    %v7890 = vmul.f32 %v7869, %v7426
    %v7891 = vmul.f32 %v7850, %v7870
    %v7892 = vadd.f32 %v7890, %v7891
    %v7893 = vtanh.pop %v7892
    %v7894 = vmul.f32 %v7889, %v7893
    %v7895 = vrot.slane %v6571, 4
    %v7896 = vrot.slane %v6572, 4
    %v7897 = vrot.slane %v6573, 4
    %v7898 = vrot.slane %v6574, 4
    %v7903 = vadd.f32 %v7546, %v7895
    %v7904 = vadd.f32 %v7586, %v7896
    %v7905 = vadd.f32 %v7626, %v7897
    %v7906 = vadd.f32 %v7666, %v7898
    %v7907 = vxor.u32 %v7903, 2147483648
    %v7908 = vmul.f32 %v7907, 1.442695
    %v7909 = vpow.pop %v7908
    %v7910 = vadd.f32 %v7909, 1.0
    %v7911 = vrcp.pop %v7910
    %v7912 = vmul.f32 %v7910, %v7911
    %v7913 = vsub.f32 1.0, %v7912
    %v7914 = vmul.f32 %v7911, %v7913
    %v7915 = vadd.f32 %v7911, %v7914
    %vm7916 = vweird.f32 %v7910
    %vm7917 = vweird.f32 %v7911
    %vm7918 = vmor %vm7916, %vm7917
    %v7919 = vsel %vm7918, %v7911, %v7915
    %v7920 = vand.u32 2147483647, %v7910
    %vm7921 = vcmp.eq.f32.partialorder %v7920, 8.507059e+37
    %v7922 = vand.u32 %v7910, 2147483648
    %v7923 = vor.u32 1.1754944e-38, %v7922
    %v7924 = vsel %vm7921, %v7923, %v7919
    %v7925 = vmul.f32 1.0, %v7924
    %v7926 = vxor.u32 %v7904, 2147483648
    %v7927 = vmul.f32 %v7926, 1.442695
    %v7928 = vpow.pop %v7927
    %v7929 = vadd.f32 %v7928, 1.0
    %v7930 = vrcp.pop %v7929
    %v7931 = vmul.f32 %v7929, %v7930
    %v7932 = vsub.f32 1.0, %v7931
    %v7933 = vmul.f32 %v7930, %v7932
    %v7934 = vadd.f32 %v7930, %v7933
    %vm7935 = vweird.f32 %v7929
    %vm7936 = vweird.f32 %v7930
    %vm7937 = vmor %vm7935, %vm7936
    %v7938 = vsel %vm7937, %v7930, %v7934
    %v7939 = vand.u32 2147483647, %v7929
    %vm7940 = vcmp.eq.f32.partialorder %v7939, 8.507059e+37
    %v7941 = vand.u32 %v7929, 2147483648
    %v7942 = vor.u32 1.1754944e-38, %v7941
    %v7943 = vsel %vm7940, %v7942, %v7938
    %v7944 = vmul.f32 1.0, %v7943
    %v7945 = vtanh.pop %v7905
    %v7946 = vxor.u32 %v7906, 2147483648
    %v7947 = vmul.f32 %v7946, 1.442695
    %v7948 = vpow.pop %v7947
    %v7949 = vadd.f32 %v7948, 1.0
    %v7950 = vrcp.pop %v7949
    %v7951 = vmul.f32 %v7949, %v7950
    %v7952 = vsub.f32 1.0, %v7951
    %v7953 = vmul.f32 %v7950, %v7952
    %v7954 = vadd.f32 %v7950, %v7953
    %vm7955 = vweird.f32 %v7949
    %vm7956 = vweird.f32 %v7950
    %vm7957 = vmor %vm7955, %vm7956
    %v7958 = vsel %vm7957, %v7950, %v7954
    %v7959 = vand.u32 2147483647, %v7949
    %vm7960 = vcmp.eq.f32.partialorder %v7959, 8.507059e+37
    %v7961 = vand.u32 %v7949, 2147483648
    %v7962 = vor.u32 1.1754944e-38, %v7961
    %v7963 = vsel %vm7960, %v7962, %v7958
    %v7964 = vmul.f32 1.0, %v7963
    %v7965 = vmul.f32 %v7944, %v7505
    %v7966 = vmul.f32 %v7925, %v7945
    %v7967 = vadd.f32 %v7965, %v7966
    %v7968 = vtanh.pop %v7967
    %v7969 = vmul.f32 %v7964, %v7968
    %7970 = vmatpush.msra.mxu0 %v6244
    %7971 = vmatpush.msra.mxu0 %v6236
    %7972 = vmatpush.msra.mxu0 %v6228
    %7973 = vmatpush.msra.mxu0 %v6220
    %7974 = vmatpush.msra.mxu0 %v6212
    %7975 = vmatpush.msra.mxu0 %v6204
    %7976 = vmatpush.msra.mxu0 %v6196
    %7977 = vmatpush.msra.mxu0 %v6188
    %7978 = vmatpush.msra.mxu0 %v6180
    %7979 = vmatpush.msra.mxu0 %v6172
    %7980 = vmatpush.msra.mxu0 %v6164
    %7981 = vmatpush.msra.mxu0 %v6156
    %7982 = vmatpush.msra.mxu0 %v6148
    %7983 = vmatpush.msra.mxu0 %v6140
    %7984 = vmatpush.msra.mxu0 %v6132
    %7985 = vmatpush.msra.mxu0 %v6124
    %7986 = vmatmul.f32.gmra.mxu0 %v7969
    %v7987 = vpop.f32.mrf.mxu0
    %v7988 = vadd.f32 0.0, %v7987
    %7989 = vdwg.mxu0
    %7990 = vmatpush.msra.mxu0 %v6372
    %7991 = vmatpush.msra.mxu0 %v6364
    %7992 = vmatpush.msra.mxu0 %v6356
    %7993 = vmatpush.msra.mxu0 %v6348
    %7994 = vmatpush.msra.mxu0 %v6340
    %7995 = vmatpush.msra.mxu0 %v6332
    %7996 = vmatpush.msra.mxu0 %v6324
    %7997 = vmatpush.msra.mxu0 %v6316
    %7998 = vmatpush.msra.mxu0 %v6308
    %7999 = vmatpush.msra.mxu0 %v6300
    %8000 = vmatpush.msra.mxu0 %v6292
    %8001 = vmatpush.msra.mxu0 %v6284
    %8002 = vmatpush.msra.mxu0 %v6276
    %8003 = vmatpush.msra.mxu0 %v6268
    %8004 = vmatpush.msra.mxu0 %v6260
    %8005 = vmatpush.msra.mxu0 %v6252
    %8006 = vmatmul.f32.gmra.mxu0 %v7894
    %v8007 = vpop.f32.mrf.mxu0
    %v8008 = vadd.f32 %v7988, %v8007
    %8009 = vdwg.mxu0
    %8010 = vmatpush.msra.mxu0 %v6245
    %8011 = vmatpush.msra.mxu0 %v6237
    %8012 = vmatpush.msra.mxu0 %v6229
    %8013 = vmatpush.msra.mxu0 %v6221
    %8014 = vmatpush.msra.mxu0 %v6213
    %8015 = vmatpush.msra.mxu0 %v6205
    %8016 = vmatpush.msra.mxu0 %v6197
    %8017 = vmatpush.msra.mxu0 %v6189
    %8018 = vmatpush.msra.mxu0 %v6181
    %8019 = vmatpush.msra.mxu0 %v6173
    %8020 = vmatpush.msra.mxu0 %v6165
    %8021 = vmatpush.msra.mxu0 %v6157
    %8022 = vmatpush.msra.mxu0 %v6149
    %8023 = vmatpush.msra.mxu0 %v6141
    %8024 = vmatpush.msra.mxu0 %v6133
    %8025 = vmatpush.msra.mxu0 %v6125
    %8026 = vmatmul.f32.gmra.mxu0 %v7969
    %v8027 = vpop.f32.mrf.mxu0
    %v8028 = vadd.f32 0.0, %v8027
    %8029 = vdwg.mxu0
    %8030 = vmatpush.msra.mxu0 %v6373
    %8031 = vmatpush.msra.mxu0 %v6365
    %8032 = vmatpush.msra.mxu0 %v6357
    %8033 = vmatpush.msra.mxu0 %v6349
    %8034 = vmatpush.msra.mxu0 %v6341
    %8035 = vmatpush.msra.mxu0 %v6333
    %8036 = vmatpush.msra.mxu0 %v6325
    %8037 = vmatpush.msra.mxu0 %v6317
    %8038 = vmatpush.msra.mxu0 %v6309
    %8039 = vmatpush.msra.mxu0 %v6301
    %8040 = vmatpush.msra.mxu0 %v6293
    %8041 = vmatpush.msra.mxu0 %v6285
    %8042 = vmatpush.msra.mxu0 %v6277
    %8043 = vmatpush.msra.mxu0 %v6269
    %8044 = vmatpush.msra.mxu0 %v6261
    %8045 = vmatpush.msra.mxu0 %v6253
    %8046 = vmatmul.f32.gmra.mxu0 %v7894
    %v8047 = vpop.f32.mrf.mxu0
    %v8048 = vadd.f32 %v8028, %v8047
    %8049 = vdwg.mxu0
    %8050 = vmatpush.msra.mxu0 %v6246
    %8051 = vmatpush.msra.mxu0 %v6238
    %8052 = vmatpush.msra.mxu0 %v6230
    %8053 = vmatpush.msra.mxu0 %v6222
    %8054 = vmatpush.msra.mxu0 %v6214
    %8055 = vmatpush.msra.mxu0 %v6206
    %8056 = vmatpush.msra.mxu0 %v6198
    %8057 = vmatpush.msra.mxu0 %v6190
    %8058 = vmatpush.msra.mxu0 %v6182
    %8059 = vmatpush.msra.mxu0 %v6174
    %8060 = vmatpush.msra.mxu0 %v6166
    %8061 = vmatpush.msra.mxu0 %v6158
    %8062 = vmatpush.msra.mxu0 %v6150
    %8063 = vmatpush.msra.mxu0 %v6142
    %8064 = vmatpush.msra.mxu0 %v6134
    %8065 = vmatpush.msra.mxu0 %v6126
    %8066 = vmatmul.f32.gmra.mxu0 %v7969
    %v8067 = vpop.f32.mrf.mxu0
    %v8068 = vadd.f32 0.0, %v8067
    %8069 = vdwg.mxu0
    %8070 = vmatpush.msra.mxu0 %v6374
    %8071 = vmatpush.msra.mxu0 %v6366
    %8072 = vmatpush.msra.mxu0 %v6358
    %8073 = vmatpush.msra.mxu0 %v6350
    %8074 = vmatpush.msra.mxu0 %v6342
    %8075 = vmatpush.msra.mxu0 %v6334
    %8076 = vmatpush.msra.mxu0 %v6326
    %8077 = vmatpush.msra.mxu0 %v6318
    %8078 = vmatpush.msra.mxu0 %v6310
    %8079 = vmatpush.msra.mxu0 %v6302
    %8080 = vmatpush.msra.mxu0 %v6294
    %8081 = vmatpush.msra.mxu0 %v6286
    %8082 = vmatpush.msra.mxu0 %v6278
    %8083 = vmatpush.msra.mxu0 %v6270
    %8084 = vmatpush.msra.mxu0 %v6262
    %8085 = vmatpush.msra.mxu0 %v6254
    %8086 = vmatmul.f32.gmra.mxu0 %v7894
    %v8087 = vpop.f32.mrf.mxu0
    %v8088 = vadd.f32 %v8068, %v8087
    %8089 = vdwg.mxu0
    %8090 = vmatpush.msra.mxu0 %v6247
    %8091 = vmatpush.msra.mxu0 %v6239
    %8092 = vmatpush.msra.mxu0 %v6231
    %8093 = vmatpush.msra.mxu0 %v6223
    %8094 = vmatpush.msra.mxu0 %v6215
    %8095 = vmatpush.msra.mxu0 %v6207
    %8096 = vmatpush.msra.mxu0 %v6199
    %8097 = vmatpush.msra.mxu0 %v6191
    %8098 = vmatpush.msra.mxu0 %v6183
    %8099 = vmatpush.msra.mxu0 %v6175
    %8100 = vmatpush.msra.mxu0 %v6167
    %8101 = vmatpush.msra.mxu0 %v6159
    %8102 = vmatpush.msra.mxu0 %v6151
    %8103 = vmatpush.msra.mxu0 %v6143
    %8104 = vmatpush.msra.mxu0 %v6135
    %8105 = vmatpush.msra.mxu0 %v6127
    %8106 = vmatmul.f32.gmra.mxu0 %v7969
    %v8107 = vpop.f32.mrf.mxu0
    %v8108 = vadd.f32 0.0, %v8107
    %8109 = vdwg.mxu0
    %8110 = vmatpush.msra.mxu0 %v6375
    %8111 = vmatpush.msra.mxu0 %v6367
    %8112 = vmatpush.msra.mxu0 %v6359
    %8113 = vmatpush.msra.mxu0 %v6351
    %8114 = vmatpush.msra.mxu0 %v6343
    %8115 = vmatpush.msra.mxu0 %v6335
    %8116 = vmatpush.msra.mxu0 %v6327
    %8117 = vmatpush.msra.mxu0 %v6319
    %8118 = vmatpush.msra.mxu0 %v6311
    %8119 = vmatpush.msra.mxu0 %v6303
    %8120 = vmatpush.msra.mxu0 %v6295
    %8121 = vmatpush.msra.mxu0 %v6287
    %8122 = vmatpush.msra.mxu0 %v6279
    %8123 = vmatpush.msra.mxu0 %v6271
    %8124 = vmatpush.msra.mxu0 %v6263
    %8125 = vmatpush.msra.mxu0 %v6255
    %8126 = vmatmul.f32.gmra.mxu0 %v7894
    %v8127 = vpop.f32.mrf.mxu0
    %v8128 = vadd.f32 %v8108, %v8127
    %8129 = vdwg.mxu0
    %8130 = vmatpush.msra.mxu0 %v6248
    %8131 = vmatpush.msra.mxu0 %v6240
    %8132 = vmatpush.msra.mxu0 %v6232
    %8133 = vmatpush.msra.mxu0 %v6224
    %8134 = vmatpush.msra.mxu0 %v6216
    %8135 = vmatpush.msra.mxu0 %v6208
    %8136 = vmatpush.msra.mxu0 %v6200
    %8137 = vmatpush.msra.mxu0 %v6192
    %8138 = vmatpush.msra.mxu0 %v6184
    %8139 = vmatpush.msra.mxu0 %v6176
    %8140 = vmatpush.msra.mxu0 %v6168
    %8141 = vmatpush.msra.mxu0 %v6160
    %8142 = vmatpush.msra.mxu0 %v6152
    %8143 = vmatpush.msra.mxu0 %v6144
    %8144 = vmatpush.msra.mxu0 %v6136
    %8145 = vmatpush.msra.mxu0 %v6128
    %8146 = vmatmul.f32.gmra.mxu0 %v7969
    %v8147 = vpop.f32.mrf.mxu0
    %v8148 = vadd.f32 0.0, %v8147
    %8149 = vdwg.mxu0
    %8150 = vmatpush.msra.mxu0 %v6376
    %8151 = vmatpush.msra.mxu0 %v6368
    %8152 = vmatpush.msra.mxu0 %v6360
    %8153 = vmatpush.msra.mxu0 %v6352
    %8154 = vmatpush.msra.mxu0 %v6344
    %8155 = vmatpush.msra.mxu0 %v6336
    %8156 = vmatpush.msra.mxu0 %v6328
    %8157 = vmatpush.msra.mxu0 %v6320
    %8158 = vmatpush.msra.mxu0 %v6312
    %8159 = vmatpush.msra.mxu0 %v6304
    %8160 = vmatpush.msra.mxu0 %v6296
    %8161 = vmatpush.msra.mxu0 %v6288
    %8162 = vmatpush.msra.mxu0 %v6280
    %8163 = vmatpush.msra.mxu0 %v6272
    %8164 = vmatpush.msra.mxu0 %v6264
    %8165 = vmatpush.msra.mxu0 %v6256
    %8166 = vmatmul.f32.gmra.mxu0 %v7894
    %v8167 = vpop.f32.mrf.mxu0
    %v8168 = vadd.f32 %v8148, %v8167
    %8169 = vdwg.mxu0
    %8170 = vmatpush.msra.mxu0 %v6249
    %8171 = vmatpush.msra.mxu0 %v6241
    %8172 = vmatpush.msra.mxu0 %v6233
    %8173 = vmatpush.msra.mxu0 %v6225
    %8174 = vmatpush.msra.mxu0 %v6217
    %8175 = vmatpush.msra.mxu0 %v6209
    %8176 = vmatpush.msra.mxu0 %v6201
    %8177 = vmatpush.msra.mxu0 %v6193
    %8178 = vmatpush.msra.mxu0 %v6185
    %8179 = vmatpush.msra.mxu0 %v6177
    %8180 = vmatpush.msra.mxu0 %v6169
    %8181 = vmatpush.msra.mxu0 %v6161
    %8182 = vmatpush.msra.mxu0 %v6153
    %8183 = vmatpush.msra.mxu0 %v6145
    %8184 = vmatpush.msra.mxu0 %v6137
    %8185 = vmatpush.msra.mxu0 %v6129
    %8186 = vmatmul.f32.gmra.mxu0 %v7969
    %v8187 = vpop.f32.mrf.mxu0
    %v8188 = vadd.f32 0.0, %v8187
    %8189 = vdwg.mxu0
    %8190 = vmatpush.msra.mxu0 %v6377
    %8191 = vmatpush.msra.mxu0 %v6369
    %8192 = vmatpush.msra.mxu0 %v6361
    %8193 = vmatpush.msra.mxu0 %v6353
    %8194 = vmatpush.msra.mxu0 %v6345
    %8195 = vmatpush.msra.mxu0 %v6337
    %8196 = vmatpush.msra.mxu0 %v6329
    %8197 = vmatpush.msra.mxu0 %v6321
    %8198 = vmatpush.msra.mxu0 %v6313
    %8199 = vmatpush.msra.mxu0 %v6305
    %8200 = vmatpush.msra.mxu0 %v6297
    %8201 = vmatpush.msra.mxu0 %v6289
    %8202 = vmatpush.msra.mxu0 %v6281
    %8203 = vmatpush.msra.mxu0 %v6273
    %8204 = vmatpush.msra.mxu0 %v6265
    %8205 = vmatpush.msra.mxu0 %v6257
    %8206 = vmatmul.f32.gmra.mxu0 %v7894
    %v8207 = vpop.f32.mrf.mxu0
    %v8208 = vadd.f32 %v8188, %v8207
    %8209 = vdwg.mxu0
    %8210 = vmatpush.msra.mxu0 %v6250
    %8211 = vmatpush.msra.mxu0 %v6242
    %8212 = vmatpush.msra.mxu0 %v6234
    %8213 = vmatpush.msra.mxu0 %v6226
    %8214 = vmatpush.msra.mxu0 %v6218
    %8215 = vmatpush.msra.mxu0 %v6210
    %8216 = vmatpush.msra.mxu0 %v6202
    %8217 = vmatpush.msra.mxu0 %v6194
    %8218 = vmatpush.msra.mxu0 %v6186
    %8219 = vmatpush.msra.mxu0 %v6178
    %8220 = vmatpush.msra.mxu0 %v6170
    %8221 = vmatpush.msra.mxu0 %v6162
    %8222 = vmatpush.msra.mxu0 %v6154
    %8223 = vmatpush.msra.mxu0 %v6146
    %8224 = vmatpush.msra.mxu0 %v6138
    %8225 = vmatpush.msra.mxu0 %v6130
    %8226 = vmatmul.f32.gmra.mxu0 %v7969
    %v8227 = vpop.f32.mrf.mxu0
    %v8228 = vadd.f32 0.0, %v8227
    %8229 = vdwg.mxu0
    %8230 = vmatpush.msra.mxu0 %v6378
    %8231 = vmatpush.msra.mxu0 %v6370
    %8232 = vmatpush.msra.mxu0 %v6362
    %8233 = vmatpush.msra.mxu0 %v6354
    %8234 = vmatpush.msra.mxu0 %v6346
    %8235 = vmatpush.msra.mxu0 %v6338
    %8236 = vmatpush.msra.mxu0 %v6330
    %8237 = vmatpush.msra.mxu0 %v6322
    %8238 = vmatpush.msra.mxu0 %v6314
    %8239 = vmatpush.msra.mxu0 %v6306
    %8240 = vmatpush.msra.mxu0 %v6298
    %8241 = vmatpush.msra.mxu0 %v6290
    %8242 = vmatpush.msra.mxu0 %v6282
    %8243 = vmatpush.msra.mxu0 %v6274
    %8244 = vmatpush.msra.mxu0 %v6266
    %8245 = vmatpush.msra.mxu0 %v6258
    %8246 = vmatmul.f32.gmra.mxu0 %v7894
    %v8247 = vpop.f32.mrf.mxu0
    %v8248 = vadd.f32 %v8228, %v8247
    %8249 = vdwg.mxu0
    %8250 = vmatpush.msra.mxu0 %v6251
    %8251 = vmatpush.msra.mxu0 %v6243
    %8252 = vmatpush.msra.mxu0 %v6235
    %8253 = vmatpush.msra.mxu0 %v6227
    %8254 = vmatpush.msra.mxu0 %v6219
    %8255 = vmatpush.msra.mxu0 %v6211
    %8256 = vmatpush.msra.mxu0 %v6203
    %8257 = vmatpush.msra.mxu0 %v6195
    %8258 = vmatpush.msra.mxu0 %v6187
    %8259 = vmatpush.msra.mxu0 %v6179
    %8260 = vmatpush.msra.mxu0 %v6171
    %8261 = vmatpush.msra.mxu0 %v6163
    %8262 = vmatpush.msra.mxu0 %v6155
    %8263 = vmatpush.msra.mxu0 %v6147
    %8264 = vmatpush.msra.mxu0 %v6139
    %8265 = vmatpush.msra.mxu0 %v6131
    %8266 = vmatmul.f32.gmra.mxu0 %v7969
    %v8267 = vpop.f32.mrf.mxu0
    %v8268 = vadd.f32 0.0, %v8267
    %8269 = vdwg.mxu0
    %8270 = vmatpush.msra.mxu0 %v6379
    %8271 = vmatpush.msra.mxu0 %v6371
    %8272 = vmatpush.msra.mxu0 %v6363
    %8273 = vmatpush.msra.mxu0 %v6355
    %8274 = vmatpush.msra.mxu0 %v6347
    %8275 = vmatpush.msra.mxu0 %v6339
    %8276 = vmatpush.msra.mxu0 %v6331
    %8277 = vmatpush.msra.mxu0 %v6323
    %8278 = vmatpush.msra.mxu0 %v6315
    %8279 = vmatpush.msra.mxu0 %v6307
    %8280 = vmatpush.msra.mxu0 %v6299
    %8281 = vmatpush.msra.mxu0 %v6291
    %8282 = vmatpush.msra.mxu0 %v6283
    %8283 = vmatpush.msra.mxu0 %v6275
    %8284 = vmatpush.msra.mxu0 %v6267
    %8285 = vmatpush.msra.mxu0 %v6259
    %8286 = vmatmul.f32.gmra.mxu0 %v7894
    %v8287 = vpop.f32.mrf.mxu0
    %v8288 = vadd.f32 %v8268, %v8287
    %8289 = vdwg.mxu0
    %v8290 = vadd.f32 %v8168, %v6900
    %v8291 = vadd.f32 %v8208, %v6901
    %v8292 = vadd.f32 %v8248, %v6902
    %v8293 = vadd.f32 %v8288, %v6903
    %v8294 = vxor.u32 %v8290, 2147483648
    %v8295 = vmul.f32 %v8294, 1.442695
    %v8296 = vpow.pop %v8295
    %v8297 = vadd.f32 %v8296, 1.0
    %v8298 = vrcp.pop %v8297
    %v8299 = vmul.f32 %v8297, %v8298
    %v8300 = vsub.f32 1.0, %v8299
    %v8301 = vmul.f32 %v8298, %v8300
    %v8302 = vadd.f32 %v8298, %v8301
    %vm8303 = vweird.f32 %v8297
    %vm8304 = vweird.f32 %v8298
    %vm8305 = vmor %vm8303, %vm8304
    %v8306 = vsel %vm8305, %v8298, %v8302
    %v8307 = vand.u32 2147483647, %v8297
    %vm8308 = vcmp.eq.f32.partialorder %v8307, 8.507059e+37
    %v8309 = vand.u32 %v8297, 2147483648
    %v8310 = vor.u32 1.1754944e-38, %v8309
    %v8311 = vsel %vm8308, %v8310, %v8306
    %v8312 = vmul.f32 1.0, %v8311
    %v8313 = vxor.u32 %v8291, 2147483648
    %v8314 = vmul.f32 %v8313, 1.442695
    %v8315 = vpow.pop %v8314
    %v8316 = vadd.f32 %v8315, 1.0
    %v8317 = vrcp.pop %v8316
    %v8318 = vmul.f32 %v8316, %v8317
    %v8319 = vsub.f32 1.0, %v8318
    %v8320 = vmul.f32 %v8317, %v8319
    %v8321 = vadd.f32 %v8317, %v8320
    %vm8322 = vweird.f32 %v8316
    %vm8323 = vweird.f32 %v8317
    %vm8324 = vmor %vm8322, %vm8323
    %v8325 = vsel %vm8324, %v8317, %v8321
    %v8326 = vand.u32 2147483647, %v8316
    %vm8327 = vcmp.eq.f32.partialorder %v8326, 8.507059e+37
    %v8328 = vand.u32 %v8316, 2147483648
    %v8329 = vor.u32 1.1754944e-38, %v8328
    %v8330 = vsel %vm8327, %v8329, %v8325
    %v8331 = vmul.f32 1.0, %v8330
    %v8332 = vtanh.pop %v8292
    %v8333 = vxor.u32 %v8293, 2147483648
    %v8334 = vmul.f32 %v8333, 1.442695
    %v8335 = vpow.pop %v8334
    %v8336 = vadd.f32 %v8335, 1.0
    %v8337 = vrcp.pop %v8336
    %v8338 = vmul.f32 %v8336, %v8337
    %v8339 = vsub.f32 1.0, %v8338
    %v8340 = vmul.f32 %v8337, %v8339
    %v8341 = vadd.f32 %v8337, %v8340
    %vm8342 = vweird.f32 %v8336
    %vm8343 = vweird.f32 %v8337
    %vm8344 = vmor %vm8342, %vm8343
    %v8345 = vsel %vm8344, %v8337, %v8341
    %v8346 = vand.u32 2147483647, %v8336
    %vm8347 = vcmp.eq.f32.partialorder %v8346, 8.507059e+37
    %v8348 = vand.u32 %v8336, 2147483648
    %v8349 = vor.u32 1.1754944e-38, %v8348
    %v8350 = vsel %vm8347, %v8349, %v8345
    %v8351 = vmul.f32 1.0, %v8350
    %v8352 = vmul.f32 %v8331, %v7892
    %v8353 = vmul.f32 %v8312, %v8332
    %v8354 = vadd.f32 %v8352, %v8353
    %v8355 = vtanh.pop %v8354
    %v8356 = vmul.f32 %v8351, %v8355
    %v8357 = vrot.slane %v6571, 6
    %v8358 = vrot.slane %v6572, 6
    %v8359 = vrot.slane %v6573, 6
    %v8360 = vrot.slane %v6574, 6
    %v8365 = vadd.f32 %v8008, %v8357
    %v8366 = vadd.f32 %v8048, %v8358
    %v8367 = vadd.f32 %v8088, %v8359
    %v8368 = vadd.f32 %v8128, %v8360
    %v8369 = vxor.u32 %v8365, 2147483648
    %v8370 = vmul.f32 %v8369, 1.442695
    %v8371 = vpow.pop %v8370
    %v8372 = vadd.f32 %v8371, 1.0
    %v8373 = vrcp.pop %v8372
    %v8374 = vmul.f32 %v8372, %v8373
    %v8375 = vsub.f32 1.0, %v8374
    %v8376 = vmul.f32 %v8373, %v8375
    %v8377 = vadd.f32 %v8373, %v8376
    %vm8378 = vweird.f32 %v8372
    %vm8379 = vweird.f32 %v8373
    %vm8380 = vmor %vm8378, %vm8379
    %v8381 = vsel %vm8380, %v8373, %v8377
    %v8382 = vand.u32 2147483647, %v8372
    %vm8383 = vcmp.eq.f32.partialorder %v8382, 8.507059e+37
    %v8384 = vand.u32 %v8372, 2147483648
    %v8385 = vor.u32 1.1754944e-38, %v8384
    %v8386 = vsel %vm8383, %v8385, %v8381
    %v8387 = vmul.f32 1.0, %v8386
    %v8388 = vxor.u32 %v8366, 2147483648
    %v8389 = vmul.f32 %v8388, 1.442695
    %v8390 = vpow.pop %v8389
    %v8391 = vadd.f32 %v8390, 1.0
    %v8392 = vrcp.pop %v8391
    %v8393 = vmul.f32 %v8391, %v8392
    %v8394 = vsub.f32 1.0, %v8393
    %v8395 = vmul.f32 %v8392, %v8394
    %v8396 = vadd.f32 %v8392, %v8395
    %vm8397 = vweird.f32 %v8391
    %vm8398 = vweird.f32 %v8392
    %vm8399 = vmor %vm8397, %vm8398
    %v8400 = vsel %vm8399, %v8392, %v8396
    %v8401 = vand.u32 2147483647, %v8391
    %vm8402 = vcmp.eq.f32.partialorder %v8401, 8.507059e+37
    %v8403 = vand.u32 %v8391, 2147483648
    %v8404 = vor.u32 1.1754944e-38, %v8403
    %v8405 = vsel %vm8402, %v8404, %v8400
    %v8406 = vmul.f32 1.0, %v8405
    %v8407 = vtanh.pop %v8367
    %v8408 = vxor.u32 %v8368, 2147483648
    %v8409 = vmul.f32 %v8408, 1.442695
    %v8410 = vpow.pop %v8409
    %v8411 = vadd.f32 %v8410, 1.0
    %v8412 = vrcp.pop %v8411
    %v8413 = vmul.f32 %v8411, %v8412
    %v8414 = vsub.f32 1.0, %v8413
    %v8415 = vmul.f32 %v8412, %v8414
    %v8416 = vadd.f32 %v8412, %v8415
    %vm8417 = vweird.f32 %v8411
    %vm8418 = vweird.f32 %v8412
    %vm8419 = vmor %vm8417, %vm8418
    %v8420 = vsel %vm8419, %v8412, %v8416
    %v8421 = vand.u32 2147483647, %v8411
    %vm8422 = vcmp.eq.f32.partialorder %v8421, 8.507059e+37
    %v8423 = vand.u32 %v8411, 2147483648
    %v8424 = vor.u32 1.1754944e-38, %v8423
    %v8425 = vsel %vm8422, %v8424, %v8420
    %v8426 = vmul.f32 1.0, %v8425
    %v8427 = vmul.f32 %v8406, %v7967
    %v8428 = vmul.f32 %v8387, %v8407
    %v8429 = vadd.f32 %v8427, %v8428
    %v8430 = vtanh.pop %v8429
    %v8431 = vmul.f32 %v8426, %v8430
    %8432 = vmatpush.msra.mxu0 %v6244
    %8433 = vmatpush.msra.mxu0 %v6236
    %8434 = vmatpush.msra.mxu0 %v6228
    %8435 = vmatpush.msra.mxu0 %v6220
    %8436 = vmatpush.msra.mxu0 %v6212
    %8437 = vmatpush.msra.mxu0 %v6204
    %8438 = vmatpush.msra.mxu0 %v6196
    %8439 = vmatpush.msra.mxu0 %v6188
    %8440 = vmatpush.msra.mxu0 %v6180
    %8441 = vmatpush.msra.mxu0 %v6172
    %8442 = vmatpush.msra.mxu0 %v6164
    %8443 = vmatpush.msra.mxu0 %v6156
    %8444 = vmatpush.msra.mxu0 %v6148
    %8445 = vmatpush.msra.mxu0 %v6140
    %8446 = vmatpush.msra.mxu0 %v6132
    %8447 = vmatpush.msra.mxu0 %v6124
    %8448 = vmatmul.f32.gmra.mxu0 %v8431
    %v8449 = vpop.f32.mrf.mxu0
    %v8450 = vadd.f32 0.0, %v8449
    %8451 = vdwg.mxu0
    %8452 = vmatpush.msra.mxu0 %v6372
    %8453 = vmatpush.msra.mxu0 %v6364
    %8454 = vmatpush.msra.mxu0 %v6356
    %8455 = vmatpush.msra.mxu0 %v6348
    %8456 = vmatpush.msra.mxu0 %v6340
    %8457 = vmatpush.msra.mxu0 %v6332
    %8458 = vmatpush.msra.mxu0 %v6324
    %8459 = vmatpush.msra.mxu0 %v6316
    %8460 = vmatpush.msra.mxu0 %v6308
    %8461 = vmatpush.msra.mxu0 %v6300
    %8462 = vmatpush.msra.mxu0 %v6292
    %8463 = vmatpush.msra.mxu0 %v6284
    %8464 = vmatpush.msra.mxu0 %v6276
    %8465 = vmatpush.msra.mxu0 %v6268
    %8466 = vmatpush.msra.mxu0 %v6260
    %8467 = vmatpush.msra.mxu0 %v6252
    %8468 = vmatmul.f32.gmra.mxu0 %v8356
    %v8469 = vpop.f32.mrf.mxu0
    %v8470 = vadd.f32 %v8450, %v8469
    %8471 = vdwg.mxu0
    %8472 = vmatpush.msra.mxu0 %v6245
    %8473 = vmatpush.msra.mxu0 %v6237
    %8474 = vmatpush.msra.mxu0 %v6229
    %8475 = vmatpush.msra.mxu0 %v6221
    %8476 = vmatpush.msra.mxu0 %v6213
    %8477 = vmatpush.msra.mxu0 %v6205
    %8478 = vmatpush.msra.mxu0 %v6197
    %8479 = vmatpush.msra.mxu0 %v6189
    %8480 = vmatpush.msra.mxu0 %v6181
    %8481 = vmatpush.msra.mxu0 %v6173
    %8482 = vmatpush.msra.mxu0 %v6165
    %8483 = vmatpush.msra.mxu0 %v6157
    %8484 = vmatpush.msra.mxu0 %v6149
    %8485 = vmatpush.msra.mxu0 %v6141
    %8486 = vmatpush.msra.mxu0 %v6133
    %8487 = vmatpush.msra.mxu0 %v6125
    %8488 = vmatmul.f32.gmra.mxu0 %v8431
    %v8489 = vpop.f32.mrf.mxu0
    %v8490 = vadd.f32 0.0, %v8489
    %8491 = vdwg.mxu0
    %8492 = vmatpush.msra.mxu0 %v6373
    %8493 = vmatpush.msra.mxu0 %v6365
    %8494 = vmatpush.msra.mxu0 %v6357
    %8495 = vmatpush.msra.mxu0 %v6349
    %8496 = vmatpush.msra.mxu0 %v6341
    %8497 = vmatpush.msra.mxu0 %v6333
    %8498 = vmatpush.msra.mxu0 %v6325
    %8499 = vmatpush.msra.mxu0 %v6317
    %8500 = vmatpush.msra.mxu0 %v6309
    %8501 = vmatpush.msra.mxu0 %v6301
    %8502 = vmatpush.msra.mxu0 %v6293
    %8503 = vmatpush.msra.mxu0 %v6285
    %8504 = vmatpush.msra.mxu0 %v6277
    %8505 = vmatpush.msra.mxu0 %v6269
    %8506 = vmatpush.msra.mxu0 %v6261
    %8507 = vmatpush.msra.mxu0 %v6253
    %8508 = vmatmul.f32.gmra.mxu0 %v8356
    %v8509 = vpop.f32.mrf.mxu0
    %v8510 = vadd.f32 %v8490, %v8509
    %8511 = vdwg.mxu0
    %8512 = vmatpush.msra.mxu0 %v6246
    %8513 = vmatpush.msra.mxu0 %v6238
    %8514 = vmatpush.msra.mxu0 %v6230
    %8515 = vmatpush.msra.mxu0 %v6222
    %8516 = vmatpush.msra.mxu0 %v6214
    %8517 = vmatpush.msra.mxu0 %v6206
    %8518 = vmatpush.msra.mxu0 %v6198
    %8519 = vmatpush.msra.mxu0 %v6190
    %8520 = vmatpush.msra.mxu0 %v6182
    %8521 = vmatpush.msra.mxu0 %v6174
    %8522 = vmatpush.msra.mxu0 %v6166
    %8523 = vmatpush.msra.mxu0 %v6158
    %8524 = vmatpush.msra.mxu0 %v6150
    %8525 = vmatpush.msra.mxu0 %v6142
    %8526 = vmatpush.msra.mxu0 %v6134
    %8527 = vmatpush.msra.mxu0 %v6126
    %8528 = vmatmul.f32.gmra.mxu0 %v8431
    %v8529 = vpop.f32.mrf.mxu0
    %v8530 = vadd.f32 0.0, %v8529
    %8531 = vdwg.mxu0
    %8532 = vmatpush.msra.mxu0 %v6374
    %8533 = vmatpush.msra.mxu0 %v6366
    %8534 = vmatpush.msra.mxu0 %v6358
    %8535 = vmatpush.msra.mxu0 %v6350
    %8536 = vmatpush.msra.mxu0 %v6342
    %8537 = vmatpush.msra.mxu0 %v6334
    %8538 = vmatpush.msra.mxu0 %v6326
    %8539 = vmatpush.msra.mxu0 %v6318
    %8540 = vmatpush.msra.mxu0 %v6310
    %8541 = vmatpush.msra.mxu0 %v6302
    %8542 = vmatpush.msra.mxu0 %v6294
    %8543 = vmatpush.msra.mxu0 %v6286
    %8544 = vmatpush.msra.mxu0 %v6278
    %8545 = vmatpush.msra.mxu0 %v6270
    %8546 = vmatpush.msra.mxu0 %v6262
    %8547 = vmatpush.msra.mxu0 %v6254
    %8548 = vmatmul.f32.gmra.mxu0 %v8356
    %v8549 = vpop.f32.mrf.mxu0
    %v8550 = vadd.f32 %v8530, %v8549
    %8551 = vdwg.mxu0
    %8552 = vmatpush.msra.mxu0 %v6247
    %8553 = vmatpush.msra.mxu0 %v6239
    %8554 = vmatpush.msra.mxu0 %v6231
    %8555 = vmatpush.msra.mxu0 %v6223
    %8556 = vmatpush.msra.mxu0 %v6215
    %8557 = vmatpush.msra.mxu0 %v6207
    %8558 = vmatpush.msra.mxu0 %v6199
    %8559 = vmatpush.msra.mxu0 %v6191
    %8560 = vmatpush.msra.mxu0 %v6183
    %8561 = vmatpush.msra.mxu0 %v6175
    %8562 = vmatpush.msra.mxu0 %v6167
    %8563 = vmatpush.msra.mxu0 %v6159
    %8564 = vmatpush.msra.mxu0 %v6151
    %8565 = vmatpush.msra.mxu0 %v6143
    %8566 = vmatpush.msra.mxu0 %v6135
    %8567 = vmatpush.msra.mxu0 %v6127
    %8568 = vmatmul.f32.gmra.mxu0 %v8431
    %v8569 = vpop.f32.mrf.mxu0
    %v8570 = vadd.f32 0.0, %v8569
    %8571 = vdwg.mxu0
    %8572 = vmatpush.msra.mxu0 %v6375
    %8573 = vmatpush.msra.mxu0 %v6367
    %8574 = vmatpush.msra.mxu0 %v6359
    %8575 = vmatpush.msra.mxu0 %v6351
    %8576 = vmatpush.msra.mxu0 %v6343
    %8577 = vmatpush.msra.mxu0 %v6335
    %8578 = vmatpush.msra.mxu0 %v6327
    %8579 = vmatpush.msra.mxu0 %v6319
    %8580 = vmatpush.msra.mxu0 %v6311
    %8581 = vmatpush.msra.mxu0 %v6303
    %8582 = vmatpush.msra.mxu0 %v6295
    %8583 = vmatpush.msra.mxu0 %v6287
    %8584 = vmatpush.msra.mxu0 %v6279
    %8585 = vmatpush.msra.mxu0 %v6271
    %8586 = vmatpush.msra.mxu0 %v6263
    %8587 = vmatpush.msra.mxu0 %v6255
    %8588 = vmatmul.f32.gmra.mxu0 %v8356
    %v8589 = vpop.f32.mrf.mxu0
    %v8590 = vadd.f32 %v8570, %v8589
    %8591 = vdwg.mxu0
    %8592 = vmatpush.msra.mxu0 %v6248
    %8593 = vmatpush.msra.mxu0 %v6240
    %8594 = vmatpush.msra.mxu0 %v6232
    %8595 = vmatpush.msra.mxu0 %v6224
    %8596 = vmatpush.msra.mxu0 %v6216
    %8597 = vmatpush.msra.mxu0 %v6208
    %8598 = vmatpush.msra.mxu0 %v6200
    %8599 = vmatpush.msra.mxu0 %v6192
    %8600 = vmatpush.msra.mxu0 %v6184
    %8601 = vmatpush.msra.mxu0 %v6176
    %8602 = vmatpush.msra.mxu0 %v6168
    %8603 = vmatpush.msra.mxu0 %v6160
    %8604 = vmatpush.msra.mxu0 %v6152
    %8605 = vmatpush.msra.mxu0 %v6144
    %8606 = vmatpush.msra.mxu0 %v6136
    %8607 = vmatpush.msra.mxu0 %v6128
    %8608 = vmatmul.f32.gmra.mxu0 %v8431
    %v8609 = vpop.f32.mrf.mxu0
    %v8610 = vadd.f32 0.0, %v8609
    %8611 = vdwg.mxu0
    %8612 = vmatpush.msra.mxu0 %v6376
    %8613 = vmatpush.msra.mxu0 %v6368
    %8614 = vmatpush.msra.mxu0 %v6360
    %8615 = vmatpush.msra.mxu0 %v6352
    %8616 = vmatpush.msra.mxu0 %v6344
    %8617 = vmatpush.msra.mxu0 %v6336
    %8618 = vmatpush.msra.mxu0 %v6328
    %8619 = vmatpush.msra.mxu0 %v6320
    %8620 = vmatpush.msra.mxu0 %v6312
    %8621 = vmatpush.msra.mxu0 %v6304
    %8622 = vmatpush.msra.mxu0 %v6296
    %8623 = vmatpush.msra.mxu0 %v6288
    %8624 = vmatpush.msra.mxu0 %v6280
    %8625 = vmatpush.msra.mxu0 %v6272
    %8626 = vmatpush.msra.mxu0 %v6264
    %8627 = vmatpush.msra.mxu0 %v6256
    %8628 = vmatmul.f32.gmra.mxu0 %v8356
    %v8629 = vpop.f32.mrf.mxu0
    %v8630 = vadd.f32 %v8610, %v8629
    %8631 = vdwg.mxu0
    %8632 = vmatpush.msra.mxu0 %v6249
    %8633 = vmatpush.msra.mxu0 %v6241
    %8634 = vmatpush.msra.mxu0 %v6233
    %8635 = vmatpush.msra.mxu0 %v6225
    %8636 = vmatpush.msra.mxu0 %v6217
    %8637 = vmatpush.msra.mxu0 %v6209
    %8638 = vmatpush.msra.mxu0 %v6201
    %8639 = vmatpush.msra.mxu0 %v6193
    %8640 = vmatpush.msra.mxu0 %v6185
    %8641 = vmatpush.msra.mxu0 %v6177
    %8642 = vmatpush.msra.mxu0 %v6169
    %8643 = vmatpush.msra.mxu0 %v6161
    %8644 = vmatpush.msra.mxu0 %v6153
    %8645 = vmatpush.msra.mxu0 %v6145
    %8646 = vmatpush.msra.mxu0 %v6137
    %8647 = vmatpush.msra.mxu0 %v6129
    %8648 = vmatmul.f32.gmra.mxu0 %v8431
    %v8649 = vpop.f32.mrf.mxu0
    %v8650 = vadd.f32 0.0, %v8649
    %8651 = vdwg.mxu0
    %8652 = vmatpush.msra.mxu0 %v6377
    %8653 = vmatpush.msra.mxu0 %v6369
    %8654 = vmatpush.msra.mxu0 %v6361
    %8655 = vmatpush.msra.mxu0 %v6353
    %8656 = vmatpush.msra.mxu0 %v6345
    %8657 = vmatpush.msra.mxu0 %v6337
    %8658 = vmatpush.msra.mxu0 %v6329
    %8659 = vmatpush.msra.mxu0 %v6321
    %8660 = vmatpush.msra.mxu0 %v6313
    %8661 = vmatpush.msra.mxu0 %v6305
    %8662 = vmatpush.msra.mxu0 %v6297
    %8663 = vmatpush.msra.mxu0 %v6289
    %8664 = vmatpush.msra.mxu0 %v6281
    %8665 = vmatpush.msra.mxu0 %v6273
    %8666 = vmatpush.msra.mxu0 %v6265
    %8667 = vmatpush.msra.mxu0 %v6257
    %8668 = vmatmul.f32.gmra.mxu0 %v8356
    %v8669 = vpop.f32.mrf.mxu0
    %v8670 = vadd.f32 %v8650, %v8669
    %8671 = vdwg.mxu0
    %8672 = vmatpush.msra.mxu0 %v6250
    %8673 = vmatpush.msra.mxu0 %v6242
    %8674 = vmatpush.msra.mxu0 %v6234
    %8675 = vmatpush.msra.mxu0 %v6226
    %8676 = vmatpush.msra.mxu0 %v6218
    %8677 = vmatpush.msra.mxu0 %v6210
    %8678 = vmatpush.msra.mxu0 %v6202
    %8679 = vmatpush.msra.mxu0 %v6194
    %8680 = vmatpush.msra.mxu0 %v6186
    %8681 = vmatpush.msra.mxu0 %v6178
    %8682 = vmatpush.msra.mxu0 %v6170
    %8683 = vmatpush.msra.mxu0 %v6162
    %8684 = vmatpush.msra.mxu0 %v6154
    %8685 = vmatpush.msra.mxu0 %v6146
    %8686 = vmatpush.msra.mxu0 %v6138
    %8687 = vmatpush.msra.mxu0 %v6130
    %8688 = vmatmul.f32.gmra.mxu0 %v8431
    %v8689 = vpop.f32.mrf.mxu0
    %v8690 = vadd.f32 0.0, %v8689
    %8691 = vdwg.mxu0
    %8692 = vmatpush.msra.mxu0 %v6378
    %8693 = vmatpush.msra.mxu0 %v6370
    %8694 = vmatpush.msra.mxu0 %v6362
    %8695 = vmatpush.msra.mxu0 %v6354
    %8696 = vmatpush.msra.mxu0 %v6346
    %8697 = vmatpush.msra.mxu0 %v6338
    %8698 = vmatpush.msra.mxu0 %v6330
    %8699 = vmatpush.msra.mxu0 %v6322
    %8700 = vmatpush.msra.mxu0 %v6314
    %8701 = vmatpush.msra.mxu0 %v6306
    %8702 = vmatpush.msra.mxu0 %v6298
    %8703 = vmatpush.msra.mxu0 %v6290
    %8704 = vmatpush.msra.mxu0 %v6282
    %8705 = vmatpush.msra.mxu0 %v6274
    %8706 = vmatpush.msra.mxu0 %v6266
    %8707 = vmatpush.msra.mxu0 %v6258
    %8708 = vmatmul.f32.gmra.mxu0 %v8356
    %v8709 = vpop.f32.mrf.mxu0
    %v8710 = vadd.f32 %v8690, %v8709
    %8711 = vdwg.mxu0
    %8712 = vmatpush.msra.mxu0 %v6251
    %8713 = vmatpush.msra.mxu0 %v6243
    %8714 = vmatpush.msra.mxu0 %v6235
    %8715 = vmatpush.msra.mxu0 %v6227
    %8716 = vmatpush.msra.mxu0 %v6219
    %8717 = vmatpush.msra.mxu0 %v6211
    %8718 = vmatpush.msra.mxu0 %v6203
    %8719 = vmatpush.msra.mxu0 %v6195
    %8720 = vmatpush.msra.mxu0 %v6187
    %8721 = vmatpush.msra.mxu0 %v6179
    %8722 = vmatpush.msra.mxu0 %v6171
    %8723 = vmatpush.msra.mxu0 %v6163
    %8724 = vmatpush.msra.mxu0 %v6155
    %8725 = vmatpush.msra.mxu0 %v6147
    %8726 = vmatpush.msra.mxu0 %v6139
    %8727 = vmatpush.msra.mxu0 %v6131
    %8728 = vmatmul.f32.gmra.mxu0 %v8431
    %v8729 = vpop.f32.mrf.mxu0
    %v8730 = vadd.f32 0.0, %v8729
    %8731 = vdwg.mxu0
    %8732 = vmatpush.msra.mxu0 %v6379
    %8733 = vmatpush.msra.mxu0 %v6371
    %8734 = vmatpush.msra.mxu0 %v6363
    %8735 = vmatpush.msra.mxu0 %v6355
    %8736 = vmatpush.msra.mxu0 %v6347
    %8737 = vmatpush.msra.mxu0 %v6339
    %8738 = vmatpush.msra.mxu0 %v6331
    %8739 = vmatpush.msra.mxu0 %v6323
    %8740 = vmatpush.msra.mxu0 %v6315
    %8741 = vmatpush.msra.mxu0 %v6307
    %8742 = vmatpush.msra.mxu0 %v6299
    %8743 = vmatpush.msra.mxu0 %v6291
    %8744 = vmatpush.msra.mxu0 %v6283
    %8745 = vmatpush.msra.mxu0 %v6275
    %8746 = vmatpush.msra.mxu0 %v6267
    %8747 = vmatpush.msra.mxu0 %v6259
    %8748 = vmatmul.f32.gmra.mxu0 %v8356
    %v8749 = vpop.f32.mrf.mxu0
    %v8750 = vadd.f32 %v8730, %v8749
    %8751 = vdwg.mxu0
    %v8752 = vadd.f32 %v8630, %v6900
    %v8753 = vadd.f32 %v8670, %v6901
    %v8754 = vadd.f32 %v8710, %v6902
    %v8755 = vadd.f32 %v8750, %v6903
    %v8756 = vxor.u32 %v8752, 2147483648
    %v8757 = vmul.f32 %v8756, 1.442695
    %v8758 = vpow.pop %v8757
    %v8759 = vadd.f32 %v8758, 1.0
    %v8760 = vrcp.pop %v8759
    %v8761 = vmul.f32 %v8759, %v8760
    %v8762 = vsub.f32 1.0, %v8761
    %v8763 = vmul.f32 %v8760, %v8762
    %v8764 = vadd.f32 %v8760, %v8763
    %vm8765 = vweird.f32 %v8759
    %vm8766 = vweird.f32 %v8760
    %vm8767 = vmor %vm8765, %vm8766
    %v8768 = vsel %vm8767, %v8760, %v8764
    %v8769 = vand.u32 2147483647, %v8759
    %vm8770 = vcmp.eq.f32.partialorder %v8769, 8.507059e+37
    %v8771 = vand.u32 %v8759, 2147483648
    %v8772 = vor.u32 1.1754944e-38, %v8771
    %v8773 = vsel %vm8770, %v8772, %v8768
    %v8774 = vmul.f32 1.0, %v8773
    %v8775 = vxor.u32 %v8753, 2147483648
    %v8776 = vmul.f32 %v8775, 1.442695
    %v8777 = vpow.pop %v8776
    %v8778 = vadd.f32 %v8777, 1.0
    %v8779 = vrcp.pop %v8778
    %v8780 = vmul.f32 %v8778, %v8779
    %v8781 = vsub.f32 1.0, %v8780
    %v8782 = vmul.f32 %v8779, %v8781
    %v8783 = vadd.f32 %v8779, %v8782
    %vm8784 = vweird.f32 %v8778
    %vm8785 = vweird.f32 %v8779
    %vm8786 = vmor %vm8784, %vm8785
    %v8787 = vsel %vm8786, %v8779, %v8783
    %v8788 = vand.u32 2147483647, %v8778
    %vm8789 = vcmp.eq.f32.partialorder %v8788, 8.507059e+37
    %v8790 = vand.u32 %v8778, 2147483648
    %v8791 = vor.u32 1.1754944e-38, %v8790
    %v8792 = vsel %vm8789, %v8791, %v8787
    %v8793 = vmul.f32 1.0, %v8792
    %v8794 = vtanh.pop %v8754
    %v8795 = vxor.u32 %v8755, 2147483648
    %v8796 = vmul.f32 %v8795, 1.442695
    %v8797 = vpow.pop %v8796
    %v8798 = vadd.f32 %v8797, 1.0
    %v8799 = vrcp.pop %v8798
    %v8800 = vmul.f32 %v8798, %v8799
    %v8801 = vsub.f32 1.0, %v8800
    %v8802 = vmul.f32 %v8799, %v8801
    %v8803 = vadd.f32 %v8799, %v8802
    %vm8804 = vweird.f32 %v8798
    %vm8805 = vweird.f32 %v8799
    %vm8806 = vmor %vm8804, %vm8805
    %v8807 = vsel %vm8806, %v8799, %v8803
    %v8808 = vand.u32 2147483647, %v8798
    %vm8809 = vcmp.eq.f32.partialorder %v8808, 8.507059e+37
    %v8810 = vand.u32 %v8798, 2147483648
    %v8811 = vor.u32 1.1754944e-38, %v8810
    %v8812 = vsel %vm8809, %v8811, %v8807
    %v8813 = vmul.f32 1.0, %v8812
    %v8814 = vmul.f32 %v8793, %v8354
    %v8815 = vmul.f32 %v8774, %v8794
    %v8816 = vadd.f32 %v8814, %v8815
    %v8817 = vtanh.pop %v8816
    %v8818 = vmul.f32 %v8813, %v8817
    %v8819 = vadd.f32 %v8470, %v6575
    %v8820 = vadd.f32 %v8510, %v6576
    %v8821 = vadd.f32 %v8550, %v6577
    %v8822 = vadd.f32 %v8590, %v6578
    %v8823 = vxor.u32 %v8819, 2147483648
    %v8824 = vmul.f32 %v8823, 1.442695
    %v8825 = vpow.pop %v8824
    %v8826 = vadd.f32 %v8825, 1.0
    %v8827 = vrcp.pop %v8826
    %v8828 = vmul.f32 %v8826, %v8827
    %v8829 = vsub.f32 1.0, %v8828
    %v8830 = vmul.f32 %v8827, %v8829
    %v8831 = vadd.f32 %v8827, %v8830
    %vm8832 = vweird.f32 %v8826
    %vm8833 = vweird.f32 %v8827
    %vm8834 = vmor %vm8832, %vm8833
    %v8835 = vsel %vm8834, %v8827, %v8831
    %v8836 = vand.u32 2147483647, %v8826
    %vm8837 = vcmp.eq.f32.partialorder %v8836, 8.507059e+37
    %v8838 = vand.u32 %v8826, 2147483648
    %v8839 = vor.u32 1.1754944e-38, %v8838
    %v8840 = vsel %vm8837, %v8839, %v8835
    %v8841 = vmul.f32 1.0, %v8840
    %v8842 = vxor.u32 %v8820, 2147483648
    %v8843 = vmul.f32 %v8842, 1.442695
    %v8844 = vpow.pop %v8843
    %v8845 = vadd.f32 %v8844, 1.0
    %v8846 = vrcp.pop %v8845
    %v8847 = vmul.f32 %v8845, %v8846
    %v8848 = vsub.f32 1.0, %v8847
    %v8849 = vmul.f32 %v8846, %v8848
    %v8850 = vadd.f32 %v8846, %v8849
    %vm8851 = vweird.f32 %v8845
    %vm8852 = vweird.f32 %v8846
    %vm8853 = vmor %vm8851, %vm8852
    %v8854 = vsel %vm8853, %v8846, %v8850
    %v8855 = vand.u32 2147483647, %v8845
    %vm8856 = vcmp.eq.f32.partialorder %v8855, 8.507059e+37
    %v8857 = vand.u32 %v8845, 2147483648
    %v8858 = vor.u32 1.1754944e-38, %v8857
    %v8859 = vsel %vm8856, %v8858, %v8854
    %v8860 = vmul.f32 1.0, %v8859
    %v8861 = vtanh.pop %v8821
    %v8862 = vxor.u32 %v8822, 2147483648
    %v8863 = vmul.f32 %v8862, 1.442695
    %v8864 = vpow.pop %v8863
    %v8865 = vadd.f32 %v8864, 1.0
    %v8866 = vrcp.pop %v8865
    %v8867 = vmul.f32 %v8865, %v8866
    %v8868 = vsub.f32 1.0, %v8867
    %v8869 = vmul.f32 %v8866, %v8868
    %v8870 = vadd.f32 %v8866, %v8869
    %vm8871 = vweird.f32 %v8865
    %vm8872 = vweird.f32 %v8866
    %vm8873 = vmor %vm8871, %vm8872
    %v8874 = vsel %vm8873, %v8866, %v8870
    %v8875 = vand.u32 2147483647, %v8865
    %vm8876 = vcmp.eq.f32.partialorder %v8875, 8.507059e+37
    %v8877 = vand.u32 %v8865, 2147483648
    %v8878 = vor.u32 1.1754944e-38, %v8877
    %v8879 = vsel %vm8876, %v8878, %v8874
    %v8880 = vmul.f32 1.0, %v8879
    %v8881 = vmul.f32 %v8860, %v8429
    %v8882 = vmul.f32 %v8841, %v8861
    %v8883 = vadd.f32 %v8881, %v8882
    %v8884 = vtanh.pop %v8883
    %v8885 = vmul.f32 %v8880, %v8884
    %8886 = vmatpush.msra.mxu0 %v6244
    %8887 = vmatpush.msra.mxu0 %v6236
    %8888 = vmatpush.msra.mxu0 %v6228
    %8889 = vmatpush.msra.mxu0 %v6220
    %8890 = vmatpush.msra.mxu0 %v6212
    %8891 = vmatpush.msra.mxu0 %v6204
    %8892 = vmatpush.msra.mxu0 %v6196
    %8893 = vmatpush.msra.mxu0 %v6188
    %8894 = vmatpush.msra.mxu0 %v6180
    %8895 = vmatpush.msra.mxu0 %v6172
    %8896 = vmatpush.msra.mxu0 %v6164
    %8897 = vmatpush.msra.mxu0 %v6156
    %8898 = vmatpush.msra.mxu0 %v6148
    %8899 = vmatpush.msra.mxu0 %v6140
    %8900 = vmatpush.msra.mxu0 %v6132
    %8901 = vmatpush.msra.mxu0 %v6124
    %8902 = vmatmul.f32.gmra.mxu0 %v8885
    %v8903 = vpop.f32.mrf.mxu0
    %v8904 = vadd.f32 0.0, %v8903
    %8905 = vdwg.mxu0
    %8906 = vmatpush.msra.mxu0 %v6372
    %8907 = vmatpush.msra.mxu0 %v6364
    %8908 = vmatpush.msra.mxu0 %v6356
    %8909 = vmatpush.msra.mxu0 %v6348
    %8910 = vmatpush.msra.mxu0 %v6340
    %8911 = vmatpush.msra.mxu0 %v6332
    %8912 = vmatpush.msra.mxu0 %v6324
    %8913 = vmatpush.msra.mxu0 %v6316
    %8914 = vmatpush.msra.mxu0 %v6308
    %8915 = vmatpush.msra.mxu0 %v6300
    %8916 = vmatpush.msra.mxu0 %v6292
    %8917 = vmatpush.msra.mxu0 %v6284
    %8918 = vmatpush.msra.mxu0 %v6276
    %8919 = vmatpush.msra.mxu0 %v6268
    %8920 = vmatpush.msra.mxu0 %v6260
    %8921 = vmatpush.msra.mxu0 %v6252
    %8922 = vmatmul.f32.gmra.mxu0 %v8818
    %v8923 = vpop.f32.mrf.mxu0
    %v8924 = vadd.f32 %v8904, %v8923
    %8925 = vdwg.mxu0
    %8926 = vmatpush.msra.mxu0 %v6245
    %8927 = vmatpush.msra.mxu0 %v6237
    %8928 = vmatpush.msra.mxu0 %v6229
    %8929 = vmatpush.msra.mxu0 %v6221
    %8930 = vmatpush.msra.mxu0 %v6213
    %8931 = vmatpush.msra.mxu0 %v6205
    %8932 = vmatpush.msra.mxu0 %v6197
    %8933 = vmatpush.msra.mxu0 %v6189
    %8934 = vmatpush.msra.mxu0 %v6181
    %8935 = vmatpush.msra.mxu0 %v6173
    %8936 = vmatpush.msra.mxu0 %v6165
    %8937 = vmatpush.msra.mxu0 %v6157
    %8938 = vmatpush.msra.mxu0 %v6149
    %8939 = vmatpush.msra.mxu0 %v6141
    %8940 = vmatpush.msra.mxu0 %v6133
    %8941 = vmatpush.msra.mxu0 %v6125
    %8942 = vmatmul.f32.gmra.mxu0 %v8885
    %v8943 = vpop.f32.mrf.mxu0
    %v8944 = vadd.f32 0.0, %v8943
    %8945 = vdwg.mxu0
    %8946 = vmatpush.msra.mxu0 %v6373
    %8947 = vmatpush.msra.mxu0 %v6365
    %8948 = vmatpush.msra.mxu0 %v6357
    %8949 = vmatpush.msra.mxu0 %v6349
    %8950 = vmatpush.msra.mxu0 %v6341
    %8951 = vmatpush.msra.mxu0 %v6333
    %8952 = vmatpush.msra.mxu0 %v6325
    %8953 = vmatpush.msra.mxu0 %v6317
    %8954 = vmatpush.msra.mxu0 %v6309
    %8955 = vmatpush.msra.mxu0 %v6301
    %8956 = vmatpush.msra.mxu0 %v6293
    %8957 = vmatpush.msra.mxu0 %v6285
    %8958 = vmatpush.msra.mxu0 %v6277
    %8959 = vmatpush.msra.mxu0 %v6269
    %8960 = vmatpush.msra.mxu0 %v6261
    %8961 = vmatpush.msra.mxu0 %v6253
    %8962 = vmatmul.f32.gmra.mxu0 %v8818
    %v8963 = vpop.f32.mrf.mxu0
    %v8964 = vadd.f32 %v8944, %v8963
    %8965 = vdwg.mxu0
    %8966 = vmatpush.msra.mxu0 %v6246
    %8967 = vmatpush.msra.mxu0 %v6238
    %8968 = vmatpush.msra.mxu0 %v6230
    %8969 = vmatpush.msra.mxu0 %v6222
    %8970 = vmatpush.msra.mxu0 %v6214
    %8971 = vmatpush.msra.mxu0 %v6206
    %8972 = vmatpush.msra.mxu0 %v6198
    %8973 = vmatpush.msra.mxu0 %v6190
    %8974 = vmatpush.msra.mxu0 %v6182
    %8975 = vmatpush.msra.mxu0 %v6174
    %8976 = vmatpush.msra.mxu0 %v6166
    %8977 = vmatpush.msra.mxu0 %v6158
    %8978 = vmatpush.msra.mxu0 %v6150
    %8979 = vmatpush.msra.mxu0 %v6142
    %8980 = vmatpush.msra.mxu0 %v6134
    %8981 = vmatpush.msra.mxu0 %v6126
    %8982 = vmatmul.f32.gmra.mxu0 %v8885
    %v8983 = vpop.f32.mrf.mxu0
    %v8984 = vadd.f32 0.0, %v8983
    %8985 = vdwg.mxu0
    %8986 = vmatpush.msra.mxu0 %v6374
    %8987 = vmatpush.msra.mxu0 %v6366
    %8988 = vmatpush.msra.mxu0 %v6358
    %8989 = vmatpush.msra.mxu0 %v6350
    %8990 = vmatpush.msra.mxu0 %v6342
    %8991 = vmatpush.msra.mxu0 %v6334
    %8992 = vmatpush.msra.mxu0 %v6326
    %8993 = vmatpush.msra.mxu0 %v6318
    %8994 = vmatpush.msra.mxu0 %v6310
    %8995 = vmatpush.msra.mxu0 %v6302
    %8996 = vmatpush.msra.mxu0 %v6294
    %8997 = vmatpush.msra.mxu0 %v6286
    %8998 = vmatpush.msra.mxu0 %v6278
    %8999 = vmatpush.msra.mxu0 %v6270
    %9000 = vmatpush.msra.mxu0 %v6262
    %9001 = vmatpush.msra.mxu0 %v6254
    %9002 = vmatmul.f32.gmra.mxu0 %v8818
    %v9003 = vpop.f32.mrf.mxu0
    %v9004 = vadd.f32 %v8984, %v9003
    %9005 = vdwg.mxu0
    %9006 = vmatpush.msra.mxu0 %v6247
    %9007 = vmatpush.msra.mxu0 %v6239
    %9008 = vmatpush.msra.mxu0 %v6231
    %9009 = vmatpush.msra.mxu0 %v6223
    %9010 = vmatpush.msra.mxu0 %v6215
    %9011 = vmatpush.msra.mxu0 %v6207
    %9012 = vmatpush.msra.mxu0 %v6199
    %9013 = vmatpush.msra.mxu0 %v6191
    %9014 = vmatpush.msra.mxu0 %v6183
    %9015 = vmatpush.msra.mxu0 %v6175
    %9016 = vmatpush.msra.mxu0 %v6167
    %9017 = vmatpush.msra.mxu0 %v6159
    %9018 = vmatpush.msra.mxu0 %v6151
    %9019 = vmatpush.msra.mxu0 %v6143
    %9020 = vmatpush.msra.mxu0 %v6135
    %9021 = vmatpush.msra.mxu0 %v6127
    %9022 = vmatmul.f32.gmra.mxu0 %v8885
    %v9023 = vpop.f32.mrf.mxu0
    %v9024 = vadd.f32 0.0, %v9023
    %9025 = vdwg.mxu0
    %9026 = vmatpush.msra.mxu0 %v6375
    %9027 = vmatpush.msra.mxu0 %v6367
    %9028 = vmatpush.msra.mxu0 %v6359
    %9029 = vmatpush.msra.mxu0 %v6351
    %9030 = vmatpush.msra.mxu0 %v6343
    %9031 = vmatpush.msra.mxu0 %v6335
    %9032 = vmatpush.msra.mxu0 %v6327
    %9033 = vmatpush.msra.mxu0 %v6319
    %9034 = vmatpush.msra.mxu0 %v6311
    %9035 = vmatpush.msra.mxu0 %v6303
    %9036 = vmatpush.msra.mxu0 %v6295
    %9037 = vmatpush.msra.mxu0 %v6287
    %9038 = vmatpush.msra.mxu0 %v6279
    %9039 = vmatpush.msra.mxu0 %v6271
    %9040 = vmatpush.msra.mxu0 %v6263
    %9041 = vmatpush.msra.mxu0 %v6255
    %9042 = vmatmul.f32.gmra.mxu0 %v8818
    %v9043 = vpop.f32.mrf.mxu0
    %v9044 = vadd.f32 %v9024, %v9043
    %9045 = vdwg.mxu0
    %9046 = vmatpush.msra.mxu0 %v6248
    %9047 = vmatpush.msra.mxu0 %v6240
    %9048 = vmatpush.msra.mxu0 %v6232
    %9049 = vmatpush.msra.mxu0 %v6224
    %9050 = vmatpush.msra.mxu0 %v6216
    %9051 = vmatpush.msra.mxu0 %v6208
    %9052 = vmatpush.msra.mxu0 %v6200
    %9053 = vmatpush.msra.mxu0 %v6192
    %9054 = vmatpush.msra.mxu0 %v6184
    %9055 = vmatpush.msra.mxu0 %v6176
    %9056 = vmatpush.msra.mxu0 %v6168
    %9057 = vmatpush.msra.mxu0 %v6160
    %9058 = vmatpush.msra.mxu0 %v6152
    %9059 = vmatpush.msra.mxu0 %v6144
    %9060 = vmatpush.msra.mxu0 %v6136
    %9061 = vmatpush.msra.mxu0 %v6128
    %9062 = vmatmul.f32.gmra.mxu0 %v8885
    %v9063 = vpop.f32.mrf.mxu0
    %v9064 = vadd.f32 0.0, %v9063
    %9065 = vdwg.mxu0
    %9066 = vmatpush.msra.mxu0 %v6376
    %9067 = vmatpush.msra.mxu0 %v6368
    %9068 = vmatpush.msra.mxu0 %v6360
    %9069 = vmatpush.msra.mxu0 %v6352
    %9070 = vmatpush.msra.mxu0 %v6344
    %9071 = vmatpush.msra.mxu0 %v6336
    %9072 = vmatpush.msra.mxu0 %v6328
    %9073 = vmatpush.msra.mxu0 %v6320
    %9074 = vmatpush.msra.mxu0 %v6312
    %9075 = vmatpush.msra.mxu0 %v6304
    %9076 = vmatpush.msra.mxu0 %v6296
    %9077 = vmatpush.msra.mxu0 %v6288
    %9078 = vmatpush.msra.mxu0 %v6280
    %9079 = vmatpush.msra.mxu0 %v6272
    %9080 = vmatpush.msra.mxu0 %v6264
    %9081 = vmatpush.msra.mxu0 %v6256
    %9082 = vmatmul.f32.gmra.mxu0 %v8818
    %v9083 = vpop.f32.mrf.mxu0
    %v9084 = vadd.f32 %v9064, %v9083
    %9085 = vdwg.mxu0
    %9086 = vmatpush.msra.mxu0 %v6249
    %9087 = vmatpush.msra.mxu0 %v6241
    %9088 = vmatpush.msra.mxu0 %v6233
    %9089 = vmatpush.msra.mxu0 %v6225
    %9090 = vmatpush.msra.mxu0 %v6217
    %9091 = vmatpush.msra.mxu0 %v6209
    %9092 = vmatpush.msra.mxu0 %v6201
    %9093 = vmatpush.msra.mxu0 %v6193
    %9094 = vmatpush.msra.mxu0 %v6185
    %9095 = vmatpush.msra.mxu0 %v6177
    %9096 = vmatpush.msra.mxu0 %v6169
    %9097 = vmatpush.msra.mxu0 %v6161
    %9098 = vmatpush.msra.mxu0 %v6153
    %9099 = vmatpush.msra.mxu0 %v6145
    %9100 = vmatpush.msra.mxu0 %v6137
    %9101 = vmatpush.msra.mxu0 %v6129
    %9102 = vmatmul.f32.gmra.mxu0 %v8885
    %v9103 = vpop.f32.mrf.mxu0
    %v9104 = vadd.f32 0.0, %v9103
    %9105 = vdwg.mxu0
    %9106 = vmatpush.msra.mxu0 %v6377
    %9107 = vmatpush.msra.mxu0 %v6369
    %9108 = vmatpush.msra.mxu0 %v6361
    %9109 = vmatpush.msra.mxu0 %v6353
    %9110 = vmatpush.msra.mxu0 %v6345
    %9111 = vmatpush.msra.mxu0 %v6337
    %9112 = vmatpush.msra.mxu0 %v6329
    %9113 = vmatpush.msra.mxu0 %v6321
    %9114 = vmatpush.msra.mxu0 %v6313
    %9115 = vmatpush.msra.mxu0 %v6305
    %9116 = vmatpush.msra.mxu0 %v6297
    %9117 = vmatpush.msra.mxu0 %v6289
    %9118 = vmatpush.msra.mxu0 %v6281
    %9119 = vmatpush.msra.mxu0 %v6273
    %9120 = vmatpush.msra.mxu0 %v6265
    %9121 = vmatpush.msra.mxu0 %v6257
    %9122 = vmatmul.f32.gmra.mxu0 %v8818
    %v9123 = vpop.f32.mrf.mxu0
    %v9124 = vadd.f32 %v9104, %v9123
    %9125 = vdwg.mxu0
    %9126 = vmatpush.msra.mxu0 %v6250
    %9127 = vmatpush.msra.mxu0 %v6242
    %9128 = vmatpush.msra.mxu0 %v6234
    %9129 = vmatpush.msra.mxu0 %v6226
    %9130 = vmatpush.msra.mxu0 %v6218
    %9131 = vmatpush.msra.mxu0 %v6210
    %9132 = vmatpush.msra.mxu0 %v6202
    %9133 = vmatpush.msra.mxu0 %v6194
    %9134 = vmatpush.msra.mxu0 %v6186
    %9135 = vmatpush.msra.mxu0 %v6178
    %9136 = vmatpush.msra.mxu0 %v6170
    %9137 = vmatpush.msra.mxu0 %v6162
    %9138 = vmatpush.msra.mxu0 %v6154
    %9139 = vmatpush.msra.mxu0 %v6146
    %9140 = vmatpush.msra.mxu0 %v6138
    %9141 = vmatpush.msra.mxu0 %v6130
    %9142 = vmatmul.f32.gmra.mxu0 %v8885
    %v9143 = vpop.f32.mrf.mxu0
    %v9144 = vadd.f32 0.0, %v9143
    %9145 = vdwg.mxu0
    %9146 = vmatpush.msra.mxu0 %v6378
    %9147 = vmatpush.msra.mxu0 %v6370
    %9148 = vmatpush.msra.mxu0 %v6362
    %9149 = vmatpush.msra.mxu0 %v6354
    %9150 = vmatpush.msra.mxu0 %v6346
    %9151 = vmatpush.msra.mxu0 %v6338
    %9152 = vmatpush.msra.mxu0 %v6330
    %9153 = vmatpush.msra.mxu0 %v6322
    %9154 = vmatpush.msra.mxu0 %v6314
    %9155 = vmatpush.msra.mxu0 %v6306
    %9156 = vmatpush.msra.mxu0 %v6298
    %9157 = vmatpush.msra.mxu0 %v6290
    %9158 = vmatpush.msra.mxu0 %v6282
    %9159 = vmatpush.msra.mxu0 %v6274
    %9160 = vmatpush.msra.mxu0 %v6266
    %9161 = vmatpush.msra.mxu0 %v6258
    %9162 = vmatmul.f32.gmra.mxu0 %v8818
    %v9163 = vpop.f32.mrf.mxu0
    %v9164 = vadd.f32 %v9144, %v9163
    %9165 = vdwg.mxu0
    %9166 = vmatpush.msra.mxu0 %v6251
    %9167 = vmatpush.msra.mxu0 %v6243
    %9168 = vmatpush.msra.mxu0 %v6235
    %9169 = vmatpush.msra.mxu0 %v6227
    %9170 = vmatpush.msra.mxu0 %v6219
    %9171 = vmatpush.msra.mxu0 %v6211
    %9172 = vmatpush.msra.mxu0 %v6203
    %9173 = vmatpush.msra.mxu0 %v6195
    %9174 = vmatpush.msra.mxu0 %v6187
    %9175 = vmatpush.msra.mxu0 %v6179
    %9176 = vmatpush.msra.mxu0 %v6171
    %9177 = vmatpush.msra.mxu0 %v6163
    %9178 = vmatpush.msra.mxu0 %v6155
    %9179 = vmatpush.msra.mxu0 %v6147
    %9180 = vmatpush.msra.mxu0 %v6139
    %9181 = vmatpush.msra.mxu0 %v6131
    %9182 = vmatmul.f32.gmra.mxu0 %v8885
    %v9183 = vpop.f32.mrf.mxu0
    %v9184 = vadd.f32 0.0, %v9183
    %9185 = vdwg.mxu0
    %9186 = vmatpush.msra.mxu0 %v6379
    %9187 = vmatpush.msra.mxu0 %v6371
    %9188 = vmatpush.msra.mxu0 %v6363
    %9189 = vmatpush.msra.mxu0 %v6355
    %9190 = vmatpush.msra.mxu0 %v6347
    %9191 = vmatpush.msra.mxu0 %v6339
    %9192 = vmatpush.msra.mxu0 %v6331
    %9193 = vmatpush.msra.mxu0 %v6323
    %9194 = vmatpush.msra.mxu0 %v6315
    %9195 = vmatpush.msra.mxu0 %v6307
    %9196 = vmatpush.msra.mxu0 %v6299
    %9197 = vmatpush.msra.mxu0 %v6291
    %9198 = vmatpush.msra.mxu0 %v6283
    %9199 = vmatpush.msra.mxu0 %v6275
    %9200 = vmatpush.msra.mxu0 %v6267
    %9201 = vmatpush.msra.mxu0 %v6259
    %9202 = vmatmul.f32.gmra.mxu0 %v8818
    %v9203 = vpop.f32.mrf.mxu0
    %v9204 = vadd.f32 %v9184, %v9203
    %9205 = vdwg.mxu0
    %v9206 = vadd.f32 %v9084, %v6900
    %v9207 = vadd.f32 %v9124, %v6901
    %v9208 = vadd.f32 %v9164, %v6902
    %v9209 = vadd.f32 %v9204, %v6903
    %v9210 = vxor.u32 %v9206, 2147483648
    %v9211 = vmul.f32 %v9210, 1.442695
    %v9212 = vpow.pop %v9211
    %v9213 = vadd.f32 %v9212, 1.0
    %v9214 = vrcp.pop %v9213
    %v9215 = vmul.f32 %v9213, %v9214
    %v9216 = vsub.f32 1.0, %v9215
    %v9217 = vmul.f32 %v9214, %v9216
    %v9218 = vadd.f32 %v9214, %v9217
    %vm9219 = vweird.f32 %v9213
    %vm9220 = vweird.f32 %v9214
    %vm9221 = vmor %vm9219, %vm9220
    %v9222 = vsel %vm9221, %v9214, %v9218
    %v9223 = vand.u32 2147483647, %v9213
    %vm9224 = vcmp.eq.f32.partialorder %v9223, 8.507059e+37
    %v9225 = vand.u32 %v9213, 2147483648
    %v9226 = vor.u32 1.1754944e-38, %v9225
    %v9227 = vsel %vm9224, %v9226, %v9222
    %v9228 = vmul.f32 1.0, %v9227
    %v9229 = vxor.u32 %v9207, 2147483648
    %v9230 = vmul.f32 %v9229, 1.442695
    %v9231 = vpow.pop %v9230
    %v9232 = vadd.f32 %v9231, 1.0
    %v9233 = vrcp.pop %v9232
    %v9234 = vmul.f32 %v9232, %v9233
    %v9235 = vsub.f32 1.0, %v9234
    %v9236 = vmul.f32 %v9233, %v9235
    %v9237 = vadd.f32 %v9233, %v9236
    %vm9238 = vweird.f32 %v9232
    %vm9239 = vweird.f32 %v9233
    %vm9240 = vmor %vm9238, %vm9239
    %v9241 = vsel %vm9240, %v9233, %v9237
    %v9242 = vand.u32 2147483647, %v9232
    %vm9243 = vcmp.eq.f32.partialorder %v9242, 8.507059e+37
    %v9244 = vand.u32 %v9232, 2147483648
    %v9245 = vor.u32 1.1754944e-38, %v9244
    %v9246 = vsel %vm9243, %v9245, %v9241
    %v9247 = vmul.f32 1.0, %v9246
    %v9248 = vtanh.pop %v9208
    %v9249 = vxor.u32 %v9209, 2147483648
    %v9250 = vmul.f32 %v9249, 1.442695
    %v9251 = vpow.pop %v9250
    %v9252 = vadd.f32 %v9251, 1.0
    %v9253 = vrcp.pop %v9252
    %v9254 = vmul.f32 %v9252, %v9253
    %v9255 = vsub.f32 1.0, %v9254
    %v9256 = vmul.f32 %v9253, %v9255
    %v9257 = vadd.f32 %v9253, %v9256
    %vm9258 = vweird.f32 %v9252
    %vm9259 = vweird.f32 %v9253
    %vm9260 = vmor %vm9258, %vm9259
    %v9261 = vsel %vm9260, %v9253, %v9257
    %v9262 = vand.u32 2147483647, %v9252
    %vm9263 = vcmp.eq.f32.partialorder %v9262, 8.507059e+37
    %v9264 = vand.u32 %v9252, 2147483648
    %v9265 = vor.u32 1.1754944e-38, %v9264
    %v9266 = vsel %vm9263, %v9265, %v9261
    %v9267 = vmul.f32 1.0, %v9266
    %v9268 = vmul.f32 %v9247, %v8816
    %v9269 = vmul.f32 %v9228, %v9248
    %v9270 = vadd.f32 %v9268, %v9269
    %v9271 = vtanh.pop %v9270
    %v9272 = vmul.f32 %v9267, %v9271
    %v9277 = vrot.slane %v6575, 2
    %v9278 = vrot.slane %v6576, 2
    %v9279 = vrot.slane %v6577, 2
    %v9280 = vrot.slane %v6578, 2
    %v9285 = vadd.f32 %v8924, %v9277
    %v9286 = vadd.f32 %v8964, %v9278
    %v9287 = vadd.f32 %v9004, %v9279
    %v9288 = vadd.f32 %v9044, %v9280
    %v9289 = vxor.u32 %v9285, 2147483648
    %v9290 = vmul.f32 %v9289, 1.442695
    %v9291 = vpow.pop %v9290
    %v9292 = vadd.f32 %v9291, 1.0
    %v9293 = vrcp.pop %v9292
    %v9294 = vmul.f32 %v9292, %v9293
    %v9295 = vsub.f32 1.0, %v9294
    %v9296 = vmul.f32 %v9293, %v9295
    %v9297 = vadd.f32 %v9293, %v9296
    %vm9298 = vweird.f32 %v9292
    %vm9299 = vweird.f32 %v9293
    %vm9300 = vmor %vm9298, %vm9299
    %v9301 = vsel %vm9300, %v9293, %v9297
    %v9302 = vand.u32 2147483647, %v9292
    %vm9303 = vcmp.eq.f32.partialorder %v9302, 8.507059e+37
    %v9304 = vand.u32 %v9292, 2147483648
    %v9305 = vor.u32 1.1754944e-38, %v9304
    %v9306 = vsel %vm9303, %v9305, %v9301
    %v9307 = vmul.f32 1.0, %v9306
    %v9308 = vxor.u32 %v9286, 2147483648
    %v9309 = vmul.f32 %v9308, 1.442695
    %v9310 = vpow.pop %v9309
    %v9311 = vadd.f32 %v9310, 1.0
    %v9312 = vrcp.pop %v9311
    %v9313 = vmul.f32 %v9311, %v9312
    %v9314 = vsub.f32 1.0, %v9313
    %v9315 = vmul.f32 %v9312, %v9314
    %v9316 = vadd.f32 %v9312, %v9315
    %vm9317 = vweird.f32 %v9311
    %vm9318 = vweird.f32 %v9312
    %vm9319 = vmor %vm9317, %vm9318
    %v9320 = vsel %vm9319, %v9312, %v9316
    %v9321 = vand.u32 2147483647, %v9311
    %vm9322 = vcmp.eq.f32.partialorder %v9321, 8.507059e+37
    %v9323 = vand.u32 %v9311, 2147483648
    %v9324 = vor.u32 1.1754944e-38, %v9323
    %v9325 = vsel %vm9322, %v9324, %v9320
    %v9326 = vmul.f32 1.0, %v9325
    %v9327 = vtanh.pop %v9287
    %v9328 = vxor.u32 %v9288, 2147483648
    %v9329 = vmul.f32 %v9328, 1.442695
    %v9330 = vpow.pop %v9329
    %v9331 = vadd.f32 %v9330, 1.0
    %v9332 = vrcp.pop %v9331
    %v9333 = vmul.f32 %v9331, %v9332
    %v9334 = vsub.f32 1.0, %v9333
    %v9335 = vmul.f32 %v9332, %v9334
    %v9336 = vadd.f32 %v9332, %v9335
    %vm9337 = vweird.f32 %v9331
    %vm9338 = vweird.f32 %v9332
    %vm9339 = vmor %vm9337, %vm9338
    %v9340 = vsel %vm9339, %v9332, %v9336
    %v9341 = vand.u32 2147483647, %v9331
    %vm9342 = vcmp.eq.f32.partialorder %v9341, 8.507059e+37
    %v9343 = vand.u32 %v9331, 2147483648
    %v9344 = vor.u32 1.1754944e-38, %v9343
    %v9345 = vsel %vm9342, %v9344, %v9340
    %v9346 = vmul.f32 1.0, %v9345
    %v9347 = vmul.f32 %v9326, %v8883
    %v9348 = vmul.f32 %v9307, %v9327
    %v9349 = vadd.f32 %v9347, %v9348
    %v9350 = vtanh.pop %v9349
    %v9351 = vmul.f32 %v9346, %v9350
    %9352 = vmatpush.msra.mxu0 %v6244
    %9353 = vmatpush.msra.mxu0 %v6236
    %9354 = vmatpush.msra.mxu0 %v6228
    %9355 = vmatpush.msra.mxu0 %v6220
    %9356 = vmatpush.msra.mxu0 %v6212
    %9357 = vmatpush.msra.mxu0 %v6204
    %9358 = vmatpush.msra.mxu0 %v6196
    %9359 = vmatpush.msra.mxu0 %v6188
    %9360 = vmatpush.msra.mxu0 %v6180
    %9361 = vmatpush.msra.mxu0 %v6172
    %9362 = vmatpush.msra.mxu0 %v6164
    %9363 = vmatpush.msra.mxu0 %v6156
    %9364 = vmatpush.msra.mxu0 %v6148
    %9365 = vmatpush.msra.mxu0 %v6140
    %9366 = vmatpush.msra.mxu0 %v6132
    %9367 = vmatpush.msra.mxu0 %v6124
    %9368 = vmatmul.f32.gmra.mxu0 %v9351
    %v9369 = vpop.f32.mrf.mxu0
    %v9370 = vadd.f32 0.0, %v9369
    %9371 = vdwg.mxu0
    %9372 = vmatpush.msra.mxu0 %v6372
    %9373 = vmatpush.msra.mxu0 %v6364
    %9374 = vmatpush.msra.mxu0 %v6356
    %9375 = vmatpush.msra.mxu0 %v6348
    %9376 = vmatpush.msra.mxu0 %v6340
    %9377 = vmatpush.msra.mxu0 %v6332
    %9378 = vmatpush.msra.mxu0 %v6324
    %9379 = vmatpush.msra.mxu0 %v6316
    %9380 = vmatpush.msra.mxu0 %v6308
    %9381 = vmatpush.msra.mxu0 %v6300
    %9382 = vmatpush.msra.mxu0 %v6292
    %9383 = vmatpush.msra.mxu0 %v6284
    %9384 = vmatpush.msra.mxu0 %v6276
    %9385 = vmatpush.msra.mxu0 %v6268
    %9386 = vmatpush.msra.mxu0 %v6260
    %9387 = vmatpush.msra.mxu0 %v6252
    %9388 = vmatmul.f32.gmra.mxu0 %v9272
    %v9389 = vpop.f32.mrf.mxu0
    %v9390 = vadd.f32 %v9370, %v9389
    %9391 = vdwg.mxu0
    %9392 = vmatpush.msra.mxu0 %v6245
    %9393 = vmatpush.msra.mxu0 %v6237
    %9394 = vmatpush.msra.mxu0 %v6229
    %9395 = vmatpush.msra.mxu0 %v6221
    %9396 = vmatpush.msra.mxu0 %v6213
    %9397 = vmatpush.msra.mxu0 %v6205
    %9398 = vmatpush.msra.mxu0 %v6197
    %9399 = vmatpush.msra.mxu0 %v6189
    %9400 = vmatpush.msra.mxu0 %v6181
    %9401 = vmatpush.msra.mxu0 %v6173
    %9402 = vmatpush.msra.mxu0 %v6165
    %9403 = vmatpush.msra.mxu0 %v6157
    %9404 = vmatpush.msra.mxu0 %v6149
    %9405 = vmatpush.msra.mxu0 %v6141
    %9406 = vmatpush.msra.mxu0 %v6133
    %9407 = vmatpush.msra.mxu0 %v6125
    %9408 = vmatmul.f32.gmra.mxu0 %v9351
    %v9409 = vpop.f32.mrf.mxu0
    %v9410 = vadd.f32 0.0, %v9409
    %9411 = vdwg.mxu0
    %9412 = vmatpush.msra.mxu0 %v6373
    %9413 = vmatpush.msra.mxu0 %v6365
    %9414 = vmatpush.msra.mxu0 %v6357
    %9415 = vmatpush.msra.mxu0 %v6349
    %9416 = vmatpush.msra.mxu0 %v6341
    %9417 = vmatpush.msra.mxu0 %v6333
    %9418 = vmatpush.msra.mxu0 %v6325
    %9419 = vmatpush.msra.mxu0 %v6317
    %9420 = vmatpush.msra.mxu0 %v6309
    %9421 = vmatpush.msra.mxu0 %v6301
    %9422 = vmatpush.msra.mxu0 %v6293
    %9423 = vmatpush.msra.mxu0 %v6285
    %9424 = vmatpush.msra.mxu0 %v6277
    %9425 = vmatpush.msra.mxu0 %v6269
    %9426 = vmatpush.msra.mxu0 %v6261
    %9427 = vmatpush.msra.mxu0 %v6253
    %9428 = vmatmul.f32.gmra.mxu0 %v9272
    %v9429 = vpop.f32.mrf.mxu0
    %v9430 = vadd.f32 %v9410, %v9429
    %9431 = vdwg.mxu0
    %9432 = vmatpush.msra.mxu0 %v6246
    %9433 = vmatpush.msra.mxu0 %v6238
    %9434 = vmatpush.msra.mxu0 %v6230
    %9435 = vmatpush.msra.mxu0 %v6222
    %9436 = vmatpush.msra.mxu0 %v6214
    %9437 = vmatpush.msra.mxu0 %v6206
    %9438 = vmatpush.msra.mxu0 %v6198
    %9439 = vmatpush.msra.mxu0 %v6190
    %9440 = vmatpush.msra.mxu0 %v6182
    %9441 = vmatpush.msra.mxu0 %v6174
    %9442 = vmatpush.msra.mxu0 %v6166
    %9443 = vmatpush.msra.mxu0 %v6158
    %9444 = vmatpush.msra.mxu0 %v6150
    %9445 = vmatpush.msra.mxu0 %v6142
    %9446 = vmatpush.msra.mxu0 %v6134
    %9447 = vmatpush.msra.mxu0 %v6126
    %9448 = vmatmul.f32.gmra.mxu0 %v9351
    %v9449 = vpop.f32.mrf.mxu0
    %v9450 = vadd.f32 0.0, %v9449
    %9451 = vdwg.mxu0
    %9452 = vmatpush.msra.mxu0 %v6374
    %9453 = vmatpush.msra.mxu0 %v6366
    %9454 = vmatpush.msra.mxu0 %v6358
    %9455 = vmatpush.msra.mxu0 %v6350
    %9456 = vmatpush.msra.mxu0 %v6342
    %9457 = vmatpush.msra.mxu0 %v6334
    %9458 = vmatpush.msra.mxu0 %v6326
    %9459 = vmatpush.msra.mxu0 %v6318
    %9460 = vmatpush.msra.mxu0 %v6310
    %9461 = vmatpush.msra.mxu0 %v6302
    %9462 = vmatpush.msra.mxu0 %v6294
    %9463 = vmatpush.msra.mxu0 %v6286
    %9464 = vmatpush.msra.mxu0 %v6278
    %9465 = vmatpush.msra.mxu0 %v6270
    %9466 = vmatpush.msra.mxu0 %v6262
    %9467 = vmatpush.msra.mxu0 %v6254
    %9468 = vmatmul.f32.gmra.mxu0 %v9272
    %v9469 = vpop.f32.mrf.mxu0
    %v9470 = vadd.f32 %v9450, %v9469
    %9471 = vdwg.mxu0
    %9472 = vmatpush.msra.mxu0 %v6247
    %9473 = vmatpush.msra.mxu0 %v6239
    %9474 = vmatpush.msra.mxu0 %v6231
    %9475 = vmatpush.msra.mxu0 %v6223
    %9476 = vmatpush.msra.mxu0 %v6215
    %9477 = vmatpush.msra.mxu0 %v6207
    %9478 = vmatpush.msra.mxu0 %v6199
    %9479 = vmatpush.msra.mxu0 %v6191
    %9480 = vmatpush.msra.mxu0 %v6183
    %9481 = vmatpush.msra.mxu0 %v6175
    %9482 = vmatpush.msra.mxu0 %v6167
    %9483 = vmatpush.msra.mxu0 %v6159
    %9484 = vmatpush.msra.mxu0 %v6151
    %9485 = vmatpush.msra.mxu0 %v6143
    %9486 = vmatpush.msra.mxu0 %v6135
    %9487 = vmatpush.msra.mxu0 %v6127
    %9488 = vmatmul.f32.gmra.mxu0 %v9351
    %v9489 = vpop.f32.mrf.mxu0
    %v9490 = vadd.f32 0.0, %v9489
    %9491 = vdwg.mxu0
    %9492 = vmatpush.msra.mxu0 %v6375
    %9493 = vmatpush.msra.mxu0 %v6367
    %9494 = vmatpush.msra.mxu0 %v6359
    %9495 = vmatpush.msra.mxu0 %v6351
    %9496 = vmatpush.msra.mxu0 %v6343
    %9497 = vmatpush.msra.mxu0 %v6335
    %9498 = vmatpush.msra.mxu0 %v6327
    %9499 = vmatpush.msra.mxu0 %v6319
    %9500 = vmatpush.msra.mxu0 %v6311
    %9501 = vmatpush.msra.mxu0 %v6303
    %9502 = vmatpush.msra.mxu0 %v6295
    %9503 = vmatpush.msra.mxu0 %v6287
    %9504 = vmatpush.msra.mxu0 %v6279
    %9505 = vmatpush.msra.mxu0 %v6271
    %9506 = vmatpush.msra.mxu0 %v6263
    %9507 = vmatpush.msra.mxu0 %v6255
    %9508 = vmatmul.f32.gmra.mxu0 %v9272
    %v9509 = vpop.f32.mrf.mxu0
    %v9510 = vadd.f32 %v9490, %v9509
    %9511 = vdwg.mxu0
    %9512 = vmatpush.msra.mxu0 %v6248
    %9513 = vmatpush.msra.mxu0 %v6240
    %9514 = vmatpush.msra.mxu0 %v6232
    %9515 = vmatpush.msra.mxu0 %v6224
    %9516 = vmatpush.msra.mxu0 %v6216
    %9517 = vmatpush.msra.mxu0 %v6208
    %9518 = vmatpush.msra.mxu0 %v6200
    %9519 = vmatpush.msra.mxu0 %v6192
    %9520 = vmatpush.msra.mxu0 %v6184
    %9521 = vmatpush.msra.mxu0 %v6176
    %9522 = vmatpush.msra.mxu0 %v6168
    %9523 = vmatpush.msra.mxu0 %v6160
    %9524 = vmatpush.msra.mxu0 %v6152
    %9525 = vmatpush.msra.mxu0 %v6144
    %9526 = vmatpush.msra.mxu0 %v6136
    %9527 = vmatpush.msra.mxu0 %v6128
    %9528 = vmatmul.f32.gmra.mxu0 %v9351
    %v9529 = vpop.f32.mrf.mxu0
    %v9530 = vadd.f32 0.0, %v9529
    %9531 = vdwg.mxu0
    %9532 = vmatpush.msra.mxu0 %v6376
    %9533 = vmatpush.msra.mxu0 %v6368
    %9534 = vmatpush.msra.mxu0 %v6360
    %9535 = vmatpush.msra.mxu0 %v6352
    %9536 = vmatpush.msra.mxu0 %v6344
    %9537 = vmatpush.msra.mxu0 %v6336
    %9538 = vmatpush.msra.mxu0 %v6328
    %9539 = vmatpush.msra.mxu0 %v6320
    %9540 = vmatpush.msra.mxu0 %v6312
    %9541 = vmatpush.msra.mxu0 %v6304
    %9542 = vmatpush.msra.mxu0 %v6296
    %9543 = vmatpush.msra.mxu0 %v6288
    %9544 = vmatpush.msra.mxu0 %v6280
    %9545 = vmatpush.msra.mxu0 %v6272
    %9546 = vmatpush.msra.mxu0 %v6264
    %9547 = vmatpush.msra.mxu0 %v6256
    %9548 = vmatmul.f32.gmra.mxu0 %v9272
    %v9549 = vpop.f32.mrf.mxu0
    %v9550 = vadd.f32 %v9530, %v9549
    %9551 = vdwg.mxu0
    %9552 = vmatpush.msra.mxu0 %v6249
    %9553 = vmatpush.msra.mxu0 %v6241
    %9554 = vmatpush.msra.mxu0 %v6233
    %9555 = vmatpush.msra.mxu0 %v6225
    %9556 = vmatpush.msra.mxu0 %v6217
    %9557 = vmatpush.msra.mxu0 %v6209
    %9558 = vmatpush.msra.mxu0 %v6201
    %9559 = vmatpush.msra.mxu0 %v6193
    %9560 = vmatpush.msra.mxu0 %v6185
    %9561 = vmatpush.msra.mxu0 %v6177
    %9562 = vmatpush.msra.mxu0 %v6169
    %9563 = vmatpush.msra.mxu0 %v6161
    %9564 = vmatpush.msra.mxu0 %v6153
    %9565 = vmatpush.msra.mxu0 %v6145
    %9566 = vmatpush.msra.mxu0 %v6137
    %9567 = vmatpush.msra.mxu0 %v6129
    %9568 = vmatmul.f32.gmra.mxu0 %v9351
    %v9569 = vpop.f32.mrf.mxu0
    %v9570 = vadd.f32 0.0, %v9569
    %9571 = vdwg.mxu0
    %9572 = vmatpush.msra.mxu0 %v6377
    %9573 = vmatpush.msra.mxu0 %v6369
    %9574 = vmatpush.msra.mxu0 %v6361
    %9575 = vmatpush.msra.mxu0 %v6353
    %9576 = vmatpush.msra.mxu0 %v6345
    %9577 = vmatpush.msra.mxu0 %v6337
    %9578 = vmatpush.msra.mxu0 %v6329
    %9579 = vmatpush.msra.mxu0 %v6321
    %9580 = vmatpush.msra.mxu0 %v6313
    %9581 = vmatpush.msra.mxu0 %v6305
    %9582 = vmatpush.msra.mxu0 %v6297
    %9583 = vmatpush.msra.mxu0 %v6289
    %9584 = vmatpush.msra.mxu0 %v6281
    %9585 = vmatpush.msra.mxu0 %v6273
    %9586 = vmatpush.msra.mxu0 %v6265
    %9587 = vmatpush.msra.mxu0 %v6257
    %9588 = vmatmul.f32.gmra.mxu0 %v9272
    %v9589 = vpop.f32.mrf.mxu0
    %v9590 = vadd.f32 %v9570, %v9589
    %9591 = vdwg.mxu0
    %9592 = vmatpush.msra.mxu0 %v6250
    %9593 = vmatpush.msra.mxu0 %v6242
    %9594 = vmatpush.msra.mxu0 %v6234
    %9595 = vmatpush.msra.mxu0 %v6226
    %9596 = vmatpush.msra.mxu0 %v6218
    %9597 = vmatpush.msra.mxu0 %v6210
    %9598 = vmatpush.msra.mxu0 %v6202
    %9599 = vmatpush.msra.mxu0 %v6194
    %9600 = vmatpush.msra.mxu0 %v6186
    %9601 = vmatpush.msra.mxu0 %v6178
    %9602 = vmatpush.msra.mxu0 %v6170
    %9603 = vmatpush.msra.mxu0 %v6162
    %9604 = vmatpush.msra.mxu0 %v6154
    %9605 = vmatpush.msra.mxu0 %v6146
    %9606 = vmatpush.msra.mxu0 %v6138
    %9607 = vmatpush.msra.mxu0 %v6130
    %9608 = vmatmul.f32.gmra.mxu0 %v9351
    %v9609 = vpop.f32.mrf.mxu0
    %v9610 = vadd.f32 0.0, %v9609
    %9611 = vdwg.mxu0
    %9612 = vmatpush.msra.mxu0 %v6378
    %9613 = vmatpush.msra.mxu0 %v6370
    %9614 = vmatpush.msra.mxu0 %v6362
    %9615 = vmatpush.msra.mxu0 %v6354
    %9616 = vmatpush.msra.mxu0 %v6346
    %9617 = vmatpush.msra.mxu0 %v6338
    %9618 = vmatpush.msra.mxu0 %v6330
    %9619 = vmatpush.msra.mxu0 %v6322
    %9620 = vmatpush.msra.mxu0 %v6314
    %9621 = vmatpush.msra.mxu0 %v6306
    %9622 = vmatpush.msra.mxu0 %v6298
    %9623 = vmatpush.msra.mxu0 %v6290
    %9624 = vmatpush.msra.mxu0 %v6282
    %9625 = vmatpush.msra.mxu0 %v6274
    %9626 = vmatpush.msra.mxu0 %v6266
    %9627 = vmatpush.msra.mxu0 %v6258
    %9628 = vmatmul.f32.gmra.mxu0 %v9272
    %v9629 = vpop.f32.mrf.mxu0
    %v9630 = vadd.f32 %v9610, %v9629
    %9631 = vdwg.mxu0
    %9632 = vmatpush.msra.mxu0 %v6251
    %9633 = vmatpush.msra.mxu0 %v6243
    %9634 = vmatpush.msra.mxu0 %v6235
    %9635 = vmatpush.msra.mxu0 %v6227
    %9636 = vmatpush.msra.mxu0 %v6219
    %9637 = vmatpush.msra.mxu0 %v6211
    %9638 = vmatpush.msra.mxu0 %v6203
    %9639 = vmatpush.msra.mxu0 %v6195
    %9640 = vmatpush.msra.mxu0 %v6187
    %9641 = vmatpush.msra.mxu0 %v6179
    %9642 = vmatpush.msra.mxu0 %v6171
    %9643 = vmatpush.msra.mxu0 %v6163
    %9644 = vmatpush.msra.mxu0 %v6155
    %9645 = vmatpush.msra.mxu0 %v6147
    %9646 = vmatpush.msra.mxu0 %v6139
    %9647 = vmatpush.msra.mxu0 %v6131
    %9648 = vmatmul.f32.gmra.mxu0 %v9351
    %v9649 = vpop.f32.mrf.mxu0
    %v9650 = vadd.f32 0.0, %v9649
    %9651 = vdwg.mxu0
    %9652 = vmatpush.msra.mxu0 %v6379
    %9653 = vmatpush.msra.mxu0 %v6371
    %9654 = vmatpush.msra.mxu0 %v6363
    %9655 = vmatpush.msra.mxu0 %v6355
    %9656 = vmatpush.msra.mxu0 %v6347
    %9657 = vmatpush.msra.mxu0 %v6339
    %9658 = vmatpush.msra.mxu0 %v6331
    %9659 = vmatpush.msra.mxu0 %v6323
    %9660 = vmatpush.msra.mxu0 %v6315
    %9661 = vmatpush.msra.mxu0 %v6307
    %9662 = vmatpush.msra.mxu0 %v6299
    %9663 = vmatpush.msra.mxu0 %v6291
    %9664 = vmatpush.msra.mxu0 %v6283
    %9665 = vmatpush.msra.mxu0 %v6275
    %9666 = vmatpush.msra.mxu0 %v6267
    %9667 = vmatpush.msra.mxu0 %v6259
    %9668 = vmatmul.f32.gmra.mxu0 %v9272
    %v9669 = vpop.f32.mrf.mxu0
    %v9670 = vadd.f32 %v9650, %v9669
    %9671 = vdwg.mxu0
    %v9672 = vadd.f32 %v9550, %v6900
    %v9673 = vadd.f32 %v9590, %v6901
    %v9674 = vadd.f32 %v9630, %v6902
    %v9675 = vadd.f32 %v9670, %v6903
    %v9676 = vxor.u32 %v9672, 2147483648
    %v9677 = vmul.f32 %v9676, 1.442695
    %v9678 = vpow.pop %v9677
    %v9679 = vadd.f32 %v9678, 1.0
    %v9680 = vrcp.pop %v9679
    %v9681 = vmul.f32 %v9679, %v9680
    %v9682 = vsub.f32 1.0, %v9681
    %v9683 = vmul.f32 %v9680, %v9682
    %v9684 = vadd.f32 %v9680, %v9683
    %vm9685 = vweird.f32 %v9679
    %vm9686 = vweird.f32 %v9680
    %vm9687 = vmor %vm9685, %vm9686
    %v9688 = vsel %vm9687, %v9680, %v9684
    %v9689 = vand.u32 2147483647, %v9679
    %vm9690 = vcmp.eq.f32.partialorder %v9689, 8.507059e+37
    %v9691 = vand.u32 %v9679, 2147483648
    %v9692 = vor.u32 1.1754944e-38, %v9691
    %v9693 = vsel %vm9690, %v9692, %v9688
    %v9694 = vmul.f32 1.0, %v9693
    %v9695 = vxor.u32 %v9673, 2147483648
    %v9696 = vmul.f32 %v9695, 1.442695
    %v9697 = vpow.pop %v9696
    %v9698 = vadd.f32 %v9697, 1.0
    %v9699 = vrcp.pop %v9698
    %v9700 = vmul.f32 %v9698, %v9699
    %v9701 = vsub.f32 1.0, %v9700
    %v9702 = vmul.f32 %v9699, %v9701
    %v9703 = vadd.f32 %v9699, %v9702
    %vm9704 = vweird.f32 %v9698
    %vm9705 = vweird.f32 %v9699
    %vm9706 = vmor %vm9704, %vm9705
    %v9707 = vsel %vm9706, %v9699, %v9703
    %v9708 = vand.u32 2147483647, %v9698
    %vm9709 = vcmp.eq.f32.partialorder %v9708, 8.507059e+37
    %v9710 = vand.u32 %v9698, 2147483648
    %v9711 = vor.u32 1.1754944e-38, %v9710
    %v9712 = vsel %vm9709, %v9711, %v9707
    %v9713 = vmul.f32 1.0, %v9712
    %v9714 = vtanh.pop %v9674
    %v9715 = vxor.u32 %v9675, 2147483648
    %v9716 = vmul.f32 %v9715, 1.442695
    %v9717 = vpow.pop %v9716
    %v9718 = vadd.f32 %v9717, 1.0
    %v9719 = vrcp.pop %v9718
    %v9720 = vmul.f32 %v9718, %v9719
    %v9721 = vsub.f32 1.0, %v9720
    %v9722 = vmul.f32 %v9719, %v9721
    %v9723 = vadd.f32 %v9719, %v9722
    %vm9724 = vweird.f32 %v9718
    %vm9725 = vweird.f32 %v9719
    %vm9726 = vmor %vm9724, %vm9725
    %v9727 = vsel %vm9726, %v9719, %v9723
    %v9728 = vand.u32 2147483647, %v9718
    %vm9729 = vcmp.eq.f32.partialorder %v9728, 8.507059e+37
    %v9730 = vand.u32 %v9718, 2147483648
    %v9731 = vor.u32 1.1754944e-38, %v9730
    %v9732 = vsel %vm9729, %v9731, %v9727
    %v9733 = vmul.f32 1.0, %v9732
    %v9734 = vmul.f32 %v9713, %v9270
    %v9735 = vmul.f32 %v9694, %v9714
    %v9736 = vadd.f32 %v9734, %v9735
    %v9737 = vtanh.pop %v9736
    %v9738 = vmul.f32 %v9733, %v9737
    %v9739 = vrot.slane %v6575, 4
    %v9740 = vrot.slane %v6576, 4
    %v9741 = vrot.slane %v6577, 4
    %v9742 = vrot.slane %v6578, 4
    %v9747 = vadd.f32 %v9390, %v9739
    %v9748 = vadd.f32 %v9430, %v9740
    %v9749 = vadd.f32 %v9470, %v9741
    %v9750 = vadd.f32 %v9510, %v9742
    %v9751 = vxor.u32 %v9747, 2147483648
    %v9752 = vmul.f32 %v9751, 1.442695
    %v9753 = vpow.pop %v9752
    %v9754 = vadd.f32 %v9753, 1.0
    %v9755 = vrcp.pop %v9754
    %v9756 = vmul.f32 %v9754, %v9755
    %v9757 = vsub.f32 1.0, %v9756
    %v9758 = vmul.f32 %v9755, %v9757
    %v9759 = vadd.f32 %v9755, %v9758
    %vm9760 = vweird.f32 %v9754
    %vm9761 = vweird.f32 %v9755
    %vm9762 = vmor %vm9760, %vm9761
    %v9763 = vsel %vm9762, %v9755, %v9759
    %v9764 = vand.u32 2147483647, %v9754
    %vm9765 = vcmp.eq.f32.partialorder %v9764, 8.507059e+37
    %v9766 = vand.u32 %v9754, 2147483648
    %v9767 = vor.u32 1.1754944e-38, %v9766
    %v9768 = vsel %vm9765, %v9767, %v9763
    %v9769 = vmul.f32 1.0, %v9768
    %v9770 = vxor.u32 %v9748, 2147483648
    %v9771 = vmul.f32 %v9770, 1.442695
    %v9772 = vpow.pop %v9771
    %v9773 = vadd.f32 %v9772, 1.0
    %v9774 = vrcp.pop %v9773
    %v9775 = vmul.f32 %v9773, %v9774
    %v9776 = vsub.f32 1.0, %v9775
    %v9777 = vmul.f32 %v9774, %v9776
    %v9778 = vadd.f32 %v9774, %v9777
    %vm9779 = vweird.f32 %v9773
    %vm9780 = vweird.f32 %v9774
    %vm9781 = vmor %vm9779, %vm9780
    %v9782 = vsel %vm9781, %v9774, %v9778
    %v9783 = vand.u32 2147483647, %v9773
    %vm9784 = vcmp.eq.f32.partialorder %v9783, 8.507059e+37
    %v9785 = vand.u32 %v9773, 2147483648
    %v9786 = vor.u32 1.1754944e-38, %v9785
    %v9787 = vsel %vm9784, %v9786, %v9782
    %v9788 = vmul.f32 1.0, %v9787
    %v9789 = vtanh.pop %v9749
    %v9790 = vxor.u32 %v9750, 2147483648
    %v9791 = vmul.f32 %v9790, 1.442695
    %v9792 = vpow.pop %v9791
    %v9793 = vadd.f32 %v9792, 1.0
    %v9794 = vrcp.pop %v9793
    %v9795 = vmul.f32 %v9793, %v9794
    %v9796 = vsub.f32 1.0, %v9795
    %v9797 = vmul.f32 %v9794, %v9796
    %v9798 = vadd.f32 %v9794, %v9797
    %vm9799 = vweird.f32 %v9793
    %vm9800 = vweird.f32 %v9794
    %vm9801 = vmor %vm9799, %vm9800
    %v9802 = vsel %vm9801, %v9794, %v9798
    %v9803 = vand.u32 2147483647, %v9793
    %vm9804 = vcmp.eq.f32.partialorder %v9803, 8.507059e+37
    %v9805 = vand.u32 %v9793, 2147483648
    %v9806 = vor.u32 1.1754944e-38, %v9805
    %v9807 = vsel %vm9804, %v9806, %v9802
    %v9808 = vmul.f32 1.0, %v9807
    %v9809 = vmul.f32 %v9788, %v9349
    %v9810 = vmul.f32 %v9769, %v9789
    %v9811 = vadd.f32 %v9809, %v9810
    %v9812 = vtanh.pop %v9811
    %v9813 = vmul.f32 %v9808, %v9812
    %9814 = vmatpush.msra.mxu0 %v6244
    %9815 = vmatpush.msra.mxu0 %v6236
    %9816 = vmatpush.msra.mxu0 %v6228
    %9817 = vmatpush.msra.mxu0 %v6220
    %9818 = vmatpush.msra.mxu0 %v6212
    %9819 = vmatpush.msra.mxu0 %v6204
    %9820 = vmatpush.msra.mxu0 %v6196
    %9821 = vmatpush.msra.mxu0 %v6188
    %9822 = vmatpush.msra.mxu0 %v6180
    %9823 = vmatpush.msra.mxu0 %v6172
    %9824 = vmatpush.msra.mxu0 %v6164
    %9825 = vmatpush.msra.mxu0 %v6156
    %9826 = vmatpush.msra.mxu0 %v6148
    %9827 = vmatpush.msra.mxu0 %v6140
    %9828 = vmatpush.msra.mxu0 %v6132
    %9829 = vmatpush.msra.mxu0 %v6124
    %9830 = vmatmul.f32.gmra.mxu0 %v9813
    %v9831 = vpop.f32.mrf.mxu0
    %v9832 = vadd.f32 0.0, %v9831
    %9833 = vdwg.mxu0
    %9834 = vmatpush.msra.mxu0 %v6372
    %9835 = vmatpush.msra.mxu0 %v6364
    %9836 = vmatpush.msra.mxu0 %v6356
    %9837 = vmatpush.msra.mxu0 %v6348
    %9838 = vmatpush.msra.mxu0 %v6340
    %9839 = vmatpush.msra.mxu0 %v6332
    %9840 = vmatpush.msra.mxu0 %v6324
    %9841 = vmatpush.msra.mxu0 %v6316
    %9842 = vmatpush.msra.mxu0 %v6308
    %9843 = vmatpush.msra.mxu0 %v6300
    %9844 = vmatpush.msra.mxu0 %v6292
    %9845 = vmatpush.msra.mxu0 %v6284
    %9846 = vmatpush.msra.mxu0 %v6276
    %9847 = vmatpush.msra.mxu0 %v6268
    %9848 = vmatpush.msra.mxu0 %v6260
    %9849 = vmatpush.msra.mxu0 %v6252
    %9850 = vmatmul.f32.gmra.mxu0 %v9738
    %v9851 = vpop.f32.mrf.mxu0
    %v9852 = vadd.f32 %v9832, %v9851
    %9853 = vdwg.mxu0
    %9854 = vmatpush.msra.mxu0 %v6245
    %9855 = vmatpush.msra.mxu0 %v6237
    %9856 = vmatpush.msra.mxu0 %v6229
    %9857 = vmatpush.msra.mxu0 %v6221
    %9858 = vmatpush.msra.mxu0 %v6213
    %9859 = vmatpush.msra.mxu0 %v6205
    %9860 = vmatpush.msra.mxu0 %v6197
    %9861 = vmatpush.msra.mxu0 %v6189
    %9862 = vmatpush.msra.mxu0 %v6181
    %9863 = vmatpush.msra.mxu0 %v6173
    %9864 = vmatpush.msra.mxu0 %v6165
    %9865 = vmatpush.msra.mxu0 %v6157
    %9866 = vmatpush.msra.mxu0 %v6149
    %9867 = vmatpush.msra.mxu0 %v6141
    %9868 = vmatpush.msra.mxu0 %v6133
    %9869 = vmatpush.msra.mxu0 %v6125
    %9870 = vmatmul.f32.gmra.mxu0 %v9813
    %v9871 = vpop.f32.mrf.mxu0
    %v9872 = vadd.f32 0.0, %v9871
    %9873 = vdwg.mxu0
    %9874 = vmatpush.msra.mxu0 %v6373
    %9875 = vmatpush.msra.mxu0 %v6365
    %9876 = vmatpush.msra.mxu0 %v6357
    %9877 = vmatpush.msra.mxu0 %v6349
    %9878 = vmatpush.msra.mxu0 %v6341
    %9879 = vmatpush.msra.mxu0 %v6333
    %9880 = vmatpush.msra.mxu0 %v6325
    %9881 = vmatpush.msra.mxu0 %v6317
    %9882 = vmatpush.msra.mxu0 %v6309
    %9883 = vmatpush.msra.mxu0 %v6301
    %9884 = vmatpush.msra.mxu0 %v6293
    %9885 = vmatpush.msra.mxu0 %v6285
    %9886 = vmatpush.msra.mxu0 %v6277
    %9887 = vmatpush.msra.mxu0 %v6269
    %9888 = vmatpush.msra.mxu0 %v6261
    %9889 = vmatpush.msra.mxu0 %v6253
    %9890 = vmatmul.f32.gmra.mxu0 %v9738
    %v9891 = vpop.f32.mrf.mxu0
    %v9892 = vadd.f32 %v9872, %v9891
    %9893 = vdwg.mxu0
    %9894 = vmatpush.msra.mxu0 %v6246
    %9895 = vmatpush.msra.mxu0 %v6238
    %9896 = vmatpush.msra.mxu0 %v6230
    %9897 = vmatpush.msra.mxu0 %v6222
    %9898 = vmatpush.msra.mxu0 %v6214
    %9899 = vmatpush.msra.mxu0 %v6206
    %9900 = vmatpush.msra.mxu0 %v6198
    %9901 = vmatpush.msra.mxu0 %v6190
    %9902 = vmatpush.msra.mxu0 %v6182
    %9903 = vmatpush.msra.mxu0 %v6174
    %9904 = vmatpush.msra.mxu0 %v6166
    %9905 = vmatpush.msra.mxu0 %v6158
    %9906 = vmatpush.msra.mxu0 %v6150
    %9907 = vmatpush.msra.mxu0 %v6142
    %9908 = vmatpush.msra.mxu0 %v6134
    %9909 = vmatpush.msra.mxu0 %v6126
    %9910 = vmatmul.f32.gmra.mxu0 %v9813
    %v9911 = vpop.f32.mrf.mxu0
    %v9912 = vadd.f32 0.0, %v9911
    %9913 = vdwg.mxu0
    %9914 = vmatpush.msra.mxu0 %v6374
    %9915 = vmatpush.msra.mxu0 %v6366
    %9916 = vmatpush.msra.mxu0 %v6358
    %9917 = vmatpush.msra.mxu0 %v6350
    %9918 = vmatpush.msra.mxu0 %v6342
    %9919 = vmatpush.msra.mxu0 %v6334
    %9920 = vmatpush.msra.mxu0 %v6326
    %9921 = vmatpush.msra.mxu0 %v6318
    %9922 = vmatpush.msra.mxu0 %v6310
    %9923 = vmatpush.msra.mxu0 %v6302
    %9924 = vmatpush.msra.mxu0 %v6294
    %9925 = vmatpush.msra.mxu0 %v6286
    %9926 = vmatpush.msra.mxu0 %v6278
    %9927 = vmatpush.msra.mxu0 %v6270
    %9928 = vmatpush.msra.mxu0 %v6262
    %9929 = vmatpush.msra.mxu0 %v6254
    %9930 = vmatmul.f32.gmra.mxu0 %v9738
    %v9931 = vpop.f32.mrf.mxu0
    %v9932 = vadd.f32 %v9912, %v9931
    %9933 = vdwg.mxu0
    %9934 = vmatpush.msra.mxu0 %v6247
    %9935 = vmatpush.msra.mxu0 %v6239
    %9936 = vmatpush.msra.mxu0 %v6231
    %9937 = vmatpush.msra.mxu0 %v6223
    %9938 = vmatpush.msra.mxu0 %v6215
    %9939 = vmatpush.msra.mxu0 %v6207
    %9940 = vmatpush.msra.mxu0 %v6199
    %9941 = vmatpush.msra.mxu0 %v6191
    %9942 = vmatpush.msra.mxu0 %v6183
    %9943 = vmatpush.msra.mxu0 %v6175
    %9944 = vmatpush.msra.mxu0 %v6167
    %9945 = vmatpush.msra.mxu0 %v6159
    %9946 = vmatpush.msra.mxu0 %v6151
    %9947 = vmatpush.msra.mxu0 %v6143
    %9948 = vmatpush.msra.mxu0 %v6135
    %9949 = vmatpush.msra.mxu0 %v6127
    %9950 = vmatmul.f32.gmra.mxu0 %v9813
    %v9951 = vpop.f32.mrf.mxu0
    %v9952 = vadd.f32 0.0, %v9951
    %9953 = vdwg.mxu0
    %9954 = vmatpush.msra.mxu0 %v6375
    %9955 = vmatpush.msra.mxu0 %v6367
    %9956 = vmatpush.msra.mxu0 %v6359
    %9957 = vmatpush.msra.mxu0 %v6351
    %9958 = vmatpush.msra.mxu0 %v6343
    %9959 = vmatpush.msra.mxu0 %v6335
    %9960 = vmatpush.msra.mxu0 %v6327
    %9961 = vmatpush.msra.mxu0 %v6319
    %9962 = vmatpush.msra.mxu0 %v6311
    %9963 = vmatpush.msra.mxu0 %v6303
    %9964 = vmatpush.msra.mxu0 %v6295
    %9965 = vmatpush.msra.mxu0 %v6287
    %9966 = vmatpush.msra.mxu0 %v6279
    %9967 = vmatpush.msra.mxu0 %v6271
    %9968 = vmatpush.msra.mxu0 %v6263
    %9969 = vmatpush.msra.mxu0 %v6255
    %9970 = vmatmul.f32.gmra.mxu0 %v9738
    %v9971 = vpop.f32.mrf.mxu0
    %v9972 = vadd.f32 %v9952, %v9971
    %9973 = vdwg.mxu0
    %9974 = vmatpush.msra.mxu0 %v6248
    %9975 = vmatpush.msra.mxu0 %v6240
    %9976 = vmatpush.msra.mxu0 %v6232
    %9977 = vmatpush.msra.mxu0 %v6224
    %9978 = vmatpush.msra.mxu0 %v6216
    %9979 = vmatpush.msra.mxu0 %v6208
    %9980 = vmatpush.msra.mxu0 %v6200
    %9981 = vmatpush.msra.mxu0 %v6192
    %9982 = vmatpush.msra.mxu0 %v6184
    %9983 = vmatpush.msra.mxu0 %v6176
    %9984 = vmatpush.msra.mxu0 %v6168
    %9985 = vmatpush.msra.mxu0 %v6160
    %9986 = vmatpush.msra.mxu0 %v6152
    %9987 = vmatpush.msra.mxu0 %v6144
    %9988 = vmatpush.msra.mxu0 %v6136
    %9989 = vmatpush.msra.mxu0 %v6128
    %9990 = vmatmul.f32.gmra.mxu0 %v9813
    %v9991 = vpop.f32.mrf.mxu0
    %v9992 = vadd.f32 0.0, %v9991
    %9993 = vdwg.mxu0
    %9994 = vmatpush.msra.mxu0 %v6376
    %9995 = vmatpush.msra.mxu0 %v6368
    %9996 = vmatpush.msra.mxu0 %v6360
    %9997 = vmatpush.msra.mxu0 %v6352
    %9998 = vmatpush.msra.mxu0 %v6344
    %9999 = vmatpush.msra.mxu0 %v6336
    %10000 = vmatpush.msra.mxu0 %v6328
    %10001 = vmatpush.msra.mxu0 %v6320
    %10002 = vmatpush.msra.mxu0 %v6312
    %10003 = vmatpush.msra.mxu0 %v6304
    %10004 = vmatpush.msra.mxu0 %v6296
    %10005 = vmatpush.msra.mxu0 %v6288
    %10006 = vmatpush.msra.mxu0 %v6280
    %10007 = vmatpush.msra.mxu0 %v6272
    %10008 = vmatpush.msra.mxu0 %v6264
    %10009 = vmatpush.msra.mxu0 %v6256
    %10010 = vmatmul.f32.gmra.mxu0 %v9738
    %v10011 = vpop.f32.mrf.mxu0
    %v10012 = vadd.f32 %v9992, %v10011
    %10013 = vdwg.mxu0
    %10014 = vmatpush.msra.mxu0 %v6249
    %10015 = vmatpush.msra.mxu0 %v6241
    %10016 = vmatpush.msra.mxu0 %v6233
    %10017 = vmatpush.msra.mxu0 %v6225
    %10018 = vmatpush.msra.mxu0 %v6217
    %10019 = vmatpush.msra.mxu0 %v6209
    %10020 = vmatpush.msra.mxu0 %v6201
    %10021 = vmatpush.msra.mxu0 %v6193
    %10022 = vmatpush.msra.mxu0 %v6185
    %10023 = vmatpush.msra.mxu0 %v6177
    %10024 = vmatpush.msra.mxu0 %v6169
    %10025 = vmatpush.msra.mxu0 %v6161
    %10026 = vmatpush.msra.mxu0 %v6153
    %10027 = vmatpush.msra.mxu0 %v6145
    %10028 = vmatpush.msra.mxu0 %v6137
    %10029 = vmatpush.msra.mxu0 %v6129
    %10030 = vmatmul.f32.gmra.mxu0 %v9813
    %v10031 = vpop.f32.mrf.mxu0
    %v10032 = vadd.f32 0.0, %v10031
    %10033 = vdwg.mxu0
    %10034 = vmatpush.msra.mxu0 %v6377
    %10035 = vmatpush.msra.mxu0 %v6369
    %10036 = vmatpush.msra.mxu0 %v6361
    %10037 = vmatpush.msra.mxu0 %v6353
    %10038 = vmatpush.msra.mxu0 %v6345
    %10039 = vmatpush.msra.mxu0 %v6337
    %10040 = vmatpush.msra.mxu0 %v6329
    %10041 = vmatpush.msra.mxu0 %v6321
    %10042 = vmatpush.msra.mxu0 %v6313
    %10043 = vmatpush.msra.mxu0 %v6305
    %10044 = vmatpush.msra.mxu0 %v6297
    %10045 = vmatpush.msra.mxu0 %v6289
    %10046 = vmatpush.msra.mxu0 %v6281
    %10047 = vmatpush.msra.mxu0 %v6273
    %10048 = vmatpush.msra.mxu0 %v6265
    %10049 = vmatpush.msra.mxu0 %v6257
    %10050 = vmatmul.f32.gmra.mxu0 %v9738
    %v10051 = vpop.f32.mrf.mxu0
    %v10052 = vadd.f32 %v10032, %v10051
    %10053 = vdwg.mxu0
    %10054 = vmatpush.msra.mxu0 %v6250
    %10055 = vmatpush.msra.mxu0 %v6242
    %10056 = vmatpush.msra.mxu0 %v6234
    %10057 = vmatpush.msra.mxu0 %v6226
    %10058 = vmatpush.msra.mxu0 %v6218
    %10059 = vmatpush.msra.mxu0 %v6210
    %10060 = vmatpush.msra.mxu0 %v6202
    %10061 = vmatpush.msra.mxu0 %v6194
    %10062 = vmatpush.msra.mxu0 %v6186
    %10063 = vmatpush.msra.mxu0 %v6178
    %10064 = vmatpush.msra.mxu0 %v6170
    %10065 = vmatpush.msra.mxu0 %v6162
    %10066 = vmatpush.msra.mxu0 %v6154
    %10067 = vmatpush.msra.mxu0 %v6146
    %10068 = vmatpush.msra.mxu0 %v6138
    %10069 = vmatpush.msra.mxu0 %v6130
    %10070 = vmatmul.f32.gmra.mxu0 %v9813
    %v10071 = vpop.f32.mrf.mxu0
    %v10072 = vadd.f32 0.0, %v10071
    %10073 = vdwg.mxu0
    %10074 = vmatpush.msra.mxu0 %v6378
    %10075 = vmatpush.msra.mxu0 %v6370
    %10076 = vmatpush.msra.mxu0 %v6362
    %10077 = vmatpush.msra.mxu0 %v6354
    %10078 = vmatpush.msra.mxu0 %v6346
    %10079 = vmatpush.msra.mxu0 %v6338
    %10080 = vmatpush.msra.mxu0 %v6330
    %10081 = vmatpush.msra.mxu0 %v6322
    %10082 = vmatpush.msra.mxu0 %v6314
    %10083 = vmatpush.msra.mxu0 %v6306
    %10084 = vmatpush.msra.mxu0 %v6298
    %10085 = vmatpush.msra.mxu0 %v6290
    %10086 = vmatpush.msra.mxu0 %v6282
    %10087 = vmatpush.msra.mxu0 %v6274
    %10088 = vmatpush.msra.mxu0 %v6266
    %10089 = vmatpush.msra.mxu0 %v6258
    %10090 = vmatmul.f32.gmra.mxu0 %v9738
    %v10091 = vpop.f32.mrf.mxu0
    %v10092 = vadd.f32 %v10072, %v10091
    %10093 = vdwg.mxu0
    %10094 = vmatpush.msra.mxu0 %v6251
    %10095 = vmatpush.msra.mxu0 %v6243
    %10096 = vmatpush.msra.mxu0 %v6235
    %10097 = vmatpush.msra.mxu0 %v6227
    %10098 = vmatpush.msra.mxu0 %v6219
    %10099 = vmatpush.msra.mxu0 %v6211
    %10100 = vmatpush.msra.mxu0 %v6203
    %10101 = vmatpush.msra.mxu0 %v6195
    %10102 = vmatpush.msra.mxu0 %v6187
    %10103 = vmatpush.msra.mxu0 %v6179
    %10104 = vmatpush.msra.mxu0 %v6171
    %10105 = vmatpush.msra.mxu0 %v6163
    %10106 = vmatpush.msra.mxu0 %v6155
    %10107 = vmatpush.msra.mxu0 %v6147
    %10108 = vmatpush.msra.mxu0 %v6139
    %10109 = vmatpush.msra.mxu0 %v6131
    %10110 = vmatmul.f32.gmra.mxu0 %v9813
    %v10111 = vpop.f32.mrf.mxu0
    %v10112 = vadd.f32 0.0, %v10111
    %10113 = vdwg.mxu0
    %10114 = vmatpush.msra.mxu0 %v6379
    %10115 = vmatpush.msra.mxu0 %v6371
    %10116 = vmatpush.msra.mxu0 %v6363
    %10117 = vmatpush.msra.mxu0 %v6355
    %10118 = vmatpush.msra.mxu0 %v6347
    %10119 = vmatpush.msra.mxu0 %v6339
    %10120 = vmatpush.msra.mxu0 %v6331
    %10121 = vmatpush.msra.mxu0 %v6323
    %10122 = vmatpush.msra.mxu0 %v6315
    %10123 = vmatpush.msra.mxu0 %v6307
    %10124 = vmatpush.msra.mxu0 %v6299
    %10125 = vmatpush.msra.mxu0 %v6291
    %10126 = vmatpush.msra.mxu0 %v6283
    %10127 = vmatpush.msra.mxu0 %v6275
    %10128 = vmatpush.msra.mxu0 %v6267
    %10129 = vmatpush.msra.mxu0 %v6259
    %10130 = vmatmul.f32.gmra.mxu0 %v9738
    %v10131 = vpop.f32.mrf.mxu0
    %v10132 = vadd.f32 %v10112, %v10131
    %10133 = vdwg.mxu0
    %v10134 = vadd.f32 %v10012, %v6900
    %v10135 = vadd.f32 %v10052, %v6901
    %v10136 = vadd.f32 %v10092, %v6902
    %v10137 = vadd.f32 %v10132, %v6903
    %v10138 = vxor.u32 %v10134, 2147483648
    %v10139 = vmul.f32 %v10138, 1.442695
    %v10140 = vpow.pop %v10139
    %v10141 = vadd.f32 %v10140, 1.0
    %v10142 = vrcp.pop %v10141
    %v10143 = vmul.f32 %v10141, %v10142
    %v10144 = vsub.f32 1.0, %v10143
    %v10145 = vmul.f32 %v10142, %v10144
    %v10146 = vadd.f32 %v10142, %v10145
    %vm10147 = vweird.f32 %v10141
    %vm10148 = vweird.f32 %v10142
    %vm10149 = vmor %vm10147, %vm10148
    %v10150 = vsel %vm10149, %v10142, %v10146
    %v10151 = vand.u32 2147483647, %v10141
    %vm10152 = vcmp.eq.f32.partialorder %v10151, 8.507059e+37
    %v10153 = vand.u32 %v10141, 2147483648
    %v10154 = vor.u32 1.1754944e-38, %v10153
    %v10155 = vsel %vm10152, %v10154, %v10150
    %v10156 = vmul.f32 1.0, %v10155
    %v10157 = vxor.u32 %v10135, 2147483648
    %v10158 = vmul.f32 %v10157, 1.442695
    %v10159 = vpow.pop %v10158
    %v10160 = vadd.f32 %v10159, 1.0
    %v10161 = vrcp.pop %v10160
    %v10162 = vmul.f32 %v10160, %v10161
    %v10163 = vsub.f32 1.0, %v10162
    %v10164 = vmul.f32 %v10161, %v10163
    %v10165 = vadd.f32 %v10161, %v10164
    %vm10166 = vweird.f32 %v10160
    %vm10167 = vweird.f32 %v10161
    %vm10168 = vmor %vm10166, %vm10167
    %v10169 = vsel %vm10168, %v10161, %v10165
    %v10170 = vand.u32 2147483647, %v10160
    %vm10171 = vcmp.eq.f32.partialorder %v10170, 8.507059e+37
    %v10172 = vand.u32 %v10160, 2147483648
    %v10173 = vor.u32 1.1754944e-38, %v10172
    %v10174 = vsel %vm10171, %v10173, %v10169
    %v10175 = vmul.f32 1.0, %v10174
    %v10176 = vtanh.pop %v10136
    %v10177 = vxor.u32 %v10137, 2147483648
    %v10178 = vmul.f32 %v10177, 1.442695
    %v10179 = vpow.pop %v10178
    %v10180 = vadd.f32 %v10179, 1.0
    %v10181 = vrcp.pop %v10180
    %v10182 = vmul.f32 %v10180, %v10181
    %v10183 = vsub.f32 1.0, %v10182
    %v10184 = vmul.f32 %v10181, %v10183
    %v10185 = vadd.f32 %v10181, %v10184
    %vm10186 = vweird.f32 %v10180
    %vm10187 = vweird.f32 %v10181
    %vm10188 = vmor %vm10186, %vm10187
    %v10189 = vsel %vm10188, %v10181, %v10185
    %v10190 = vand.u32 2147483647, %v10180
    %vm10191 = vcmp.eq.f32.partialorder %v10190, 8.507059e+37
    %v10192 = vand.u32 %v10180, 2147483648
    %v10193 = vor.u32 1.1754944e-38, %v10192
    %v10194 = vsel %vm10191, %v10193, %v10189
    %v10195 = vmul.f32 1.0, %v10194
    %v10196 = vmul.f32 %v10175, %v9736
    %v10197 = vmul.f32 %v10156, %v10176
    %v10198 = vadd.f32 %v10196, %v10197
    %v10199 = vtanh.pop %v10198
    %v10200 = vmul.f32 %v10195, %v10199
    %v10201 = vrot.slane %v6575, 6
    %v10202 = vrot.slane %v6576, 6
    %v10203 = vrot.slane %v6577, 6
    %v10204 = vrot.slane %v6578, 6
    %v10209 = vadd.f32 %v9852, %v10201
    %v10210 = vadd.f32 %v9892, %v10202
    %v10211 = vadd.f32 %v9932, %v10203
    %v10212 = vadd.f32 %v9972, %v10204
    %v10213 = vxor.u32 %v10209, 2147483648
    %v10214 = vmul.f32 %v10213, 1.442695
    %v10215 = vpow.pop %v10214
    %v10216 = vadd.f32 %v10215, 1.0
    %v10217 = vrcp.pop %v10216
    %v10218 = vmul.f32 %v10216, %v10217
    %v10219 = vsub.f32 1.0, %v10218
    %v10220 = vmul.f32 %v10217, %v10219
    %v10221 = vadd.f32 %v10217, %v10220
    %vm10222 = vweird.f32 %v10216
    %vm10223 = vweird.f32 %v10217
    %vm10224 = vmor %vm10222, %vm10223
    %v10225 = vsel %vm10224, %v10217, %v10221
    %v10226 = vand.u32 2147483647, %v10216
    %vm10227 = vcmp.eq.f32.partialorder %v10226, 8.507059e+37
    %v10228 = vand.u32 %v10216, 2147483648
    %v10229 = vor.u32 1.1754944e-38, %v10228
    %v10230 = vsel %vm10227, %v10229, %v10225
    %v10231 = vmul.f32 1.0, %v10230
    %v10232 = vxor.u32 %v10210, 2147483648
    %v10233 = vmul.f32 %v10232, 1.442695
    %v10234 = vpow.pop %v10233
    %v10235 = vadd.f32 %v10234, 1.0
    %v10236 = vrcp.pop %v10235
    %v10237 = vmul.f32 %v10235, %v10236
    %v10238 = vsub.f32 1.0, %v10237
    %v10239 = vmul.f32 %v10236, %v10238
    %v10240 = vadd.f32 %v10236, %v10239
    %vm10241 = vweird.f32 %v10235
    %vm10242 = vweird.f32 %v10236
    %vm10243 = vmor %vm10241, %vm10242
    %v10244 = vsel %vm10243, %v10236, %v10240
    %v10245 = vand.u32 2147483647, %v10235
    %vm10246 = vcmp.eq.f32.partialorder %v10245, 8.507059e+37
    %v10247 = vand.u32 %v10235, 2147483648
    %v10248 = vor.u32 1.1754944e-38, %v10247
    %v10249 = vsel %vm10246, %v10248, %v10244
    %v10250 = vmul.f32 1.0, %v10249
    %v10251 = vtanh.pop %v10211
    %v10252 = vxor.u32 %v10212, 2147483648
    %v10253 = vmul.f32 %v10252, 1.442695
    %v10254 = vpow.pop %v10253
    %v10255 = vadd.f32 %v10254, 1.0
    %v10256 = vrcp.pop %v10255
    %v10257 = vmul.f32 %v10255, %v10256
    %v10258 = vsub.f32 1.0, %v10257
    %v10259 = vmul.f32 %v10256, %v10258
    %v10260 = vadd.f32 %v10256, %v10259
    %vm10261 = vweird.f32 %v10255
    %vm10262 = vweird.f32 %v10256
    %vm10263 = vmor %vm10261, %vm10262
    %v10264 = vsel %vm10263, %v10256, %v10260
    %v10265 = vand.u32 2147483647, %v10255
    %vm10266 = vcmp.eq.f32.partialorder %v10265, 8.507059e+37
    %v10267 = vand.u32 %v10255, 2147483648
    %v10268 = vor.u32 1.1754944e-38, %v10267
    %v10269 = vsel %vm10266, %v10268, %v10264
    %v10270 = vmul.f32 1.0, %v10269
    %v10271 = vmul.f32 %v10250, %v9811
    %v10272 = vmul.f32 %v10231, %v10251
    %v10273 = vadd.f32 %v10271, %v10272
    %v10274 = vtanh.pop %v10273
    %v10275 = vmul.f32 %v10270, %v10274
    %v10277 = vrot.slane %v7428, 7
    %v10280 = vrot.slane %v7894, 6
    %v10283 = vrot.slane %v8356, 5
    %v10286 = vrot.slane %v8818, 4
    %v10289 = vrot.slane %v9272, 3
    %v10292 = vrot.slane %v9738, 2
    %v10295 = vrot.slane %v10200, 1
    %vm10297 = vcmask 1040384
    %v10298 = vsel %vm10297, %v6974, %v10277
    %vm10299 = vcmask 1041408
    %v10300 = vsel %vm10299, %v10298, %v10280
    %vm10301 = vcmask 1042432
    %v10302 = vsel %vm10301, %v10300, %v10283
    %vm10303 = vcmask 1043456
    %v10304 = vsel %vm10303, %v10302, %v10286
    %vm10305 = vcmask 1044480
    %v10306 = vsel %vm10305, %v10304, %v10289
    %vm10307 = vcmask 1045504
    %v10308 = vsel %vm10307, %v10306, %v10292
    %vm10309 = vcmask 1046528
    %v10310 = vsel %vm10309, %v10308, %v10295
    %s10311 = scalar_lea.vmem [#allocation3], %s6565
    %10312 = vst [vmem:[%s10311] sm:$0xff] %v10310
    %v10314 = vrot.slane %v6974, 1
    %v10316 = vrot.slane %v7894, 7
    %v10318 = vrot.slane %v8356, 6
    %v10320 = vrot.slane %v8818, 5
    %v10322 = vrot.slane %v9272, 4
    %v10324 = vrot.slane %v9738, 3
    %v10326 = vrot.slane %v10200, 2
    %v10328 = vsel %vm10297, %v10314, %v7428
    %v10329 = vsel %vm10299, %v10328, %v10316
    %v10330 = vsel %vm10301, %v10329, %v10318
    %v10331 = vsel %vm10303, %v10330, %v10320
    %v10332 = vsel %vm10305, %v10331, %v10322
    %v10333 = vsel %vm10307, %v10332, %v10324
    %v10334 = vsel %vm10309, %v10333, %v10326
    %s10335 = sadd.s32 %s6565, 1200
    %s10336 = scalar_lea.vmem [#allocation3], %s10335
    %10337 = vst [vmem:[%s10336] sm:$0xff] %v10334
  $region38: #{lstm_forward.1} parent=0 // loop_footer
    %s6559 = sadd.s32 1, %s6555
  $region39: #{lstm_forward.1} parent=0 // loop_footer_branch
    %6554 = sbr.rel target = $region35
  $region40: #{lstm_forward.1} parent=0 // loop_exit
    _
  %v10338 = vld [vmem:[#allocation3] sm:$0xff]
  %v10339 = vld [vmem:[#allocation3 + $0x8] sm:$0xff]
  %v10340 = vld [vmem:[#allocation3 + $0x10] sm:$0xff]
  %v10341 = vld [vmem:[#allocation3 + $0x18] sm:$0xff]
  %v10342 = vld [vmem:[#allocation3 + $0x20] sm:$0xff]
  %v10343 = vld [vmem:[#allocation3 + $0x28] sm:$0xff]
  %v10344 = vld [vmem:[#allocation3 + $0x30] sm:$0xff]
  %v10345 = vld [vmem:[#allocation3 + $0x38] sm:$0xff]
  %v10346 = vld [vmem:[#allocation3 + $0x40] sm:$0xff]
  %v10347 = vld [vmem:[#allocation3 + $0x48] sm:$0xff]
  %v10348 = vld [vmem:[#allocation3 + $0x50] sm:$0xff]
  %v10349 = vld [vmem:[#allocation3 + $0x58] sm:$0xff]
  %v10350 = vld [vmem:[#allocation3 + $0x60] sm:$0xff]
  %v10351 = vld [vmem:[#allocation3 + $0x68] sm:$0xff]
  %v10352 = vld [vmem:[#allocation3 + $0x70] sm:$0xff]
  %v10353 = vld [vmem:[#allocation3 + $0x78] sm:$0xff]
  %v10354 = vld [vmem:[#allocation3 + $0x80] sm:$0xff]
  %v10355 = vld [vmem:[#allocation3 + $0x88] sm:$0xff]
  %v10356 = vld [vmem:[#allocation3 + $0x90] sm:$0xff]
  %v10357 = vld [vmem:[#allocation3 + $0x98] sm:$0xff]
  %v10358 = vld [vmem:[#allocation3 + $0xa0] sm:$0xff]
  %v10359 = vld [vmem:[#allocation3 + $0xa8] sm:$0xff]
  %v10360 = vld [vmem:[#allocation3 + $0xb0] sm:$0xff]
  %v10361 = vld [vmem:[#allocation3 + $0xb8] sm:$0xff]
  %v10362 = vld [vmem:[#allocation3 + $0xc0] sm:$0xff]
  %v10363 = vld [vmem:[#allocation3 + $0xc8] sm:$0xff]
  %v10364 = vld [vmem:[#allocation3 + $0xd0] sm:$0xff]
  %v10365 = vld [vmem:[#allocation3 + $0xd8] sm:$0xff]
  %v10366 = vld [vmem:[#allocation3 + $0xe0] sm:$0xff]
  %v10367 = vld [vmem:[#allocation3 + $0xe8] sm:$0xff]
  %v10368 = vld [vmem:[#allocation3 + $0xf0] sm:$0xff]
  %v10369 = vld [vmem:[#allocation3 + $0xf8] sm:$0xff]
  %v10370 = vld [vmem:[#allocation3 + $0x100] sm:$0xff]
  %v10371 = vld [vmem:[#allocation3 + $0x108] sm:$0xff]
  %v10372 = vld [vmem:[#allocation3 + $0x110] sm:$0xff]
  %v10373 = vld [vmem:[#allocation3 + $0x118] sm:$0xff]
  %v10374 = vld [vmem:[#allocation3 + $0x120] sm:$0xff]
  %v10375 = vld [vmem:[#allocation3 + $0x128] sm:$0xff]
  %v10376 = vld [vmem:[#allocation3 + $0x130] sm:$0xff]
  %v10377 = vld [vmem:[#allocation3 + $0x138] sm:$0xff]
  %v10378 = vld [vmem:[#allocation3 + $0x140] sm:$0xff]
  %v10379 = vld [vmem:[#allocation3 + $0x148] sm:$0xff]
  %v10380 = vld [vmem:[#allocation3 + $0x150] sm:$0xff]
  %v10381 = vld [vmem:[#allocation3 + $0x158] sm:$0xff]
  %v10382 = vld [vmem:[#allocation3 + $0x160] sm:$0xff]
  %v10383 = vld [vmem:[#allocation3 + $0x168] sm:$0xff]
  %v10384 = vld [vmem:[#allocation3 + $0x170] sm:$0xff]
  %v10385 = vld [vmem:[#allocation3 + $0x178] sm:$0xff]
  %v10386 = vld [vmem:[#allocation3 + $0x180] sm:$0xff]
  %v10387 = vld [vmem:[#allocation3 + $0x188] sm:$0xff]
  %v10388 = vld [vmem:[#allocation3 + $0x190] sm:$0xff]
  %v10389 = vld [vmem:[#allocation3 + $0x198] sm:$0xff]
  %v10390 = vld [vmem:[#allocation3 + $0x1a0] sm:$0xff]
  %v10391 = vld [vmem:[#allocation3 + $0x1a8] sm:$0xff]
  %v10392 = vld [vmem:[#allocation3 + $0x1b0] sm:$0xff]
  %v10393 = vld [vmem:[#allocation3 + $0x1b8] sm:$0xff]
  %v10394 = vld [vmem:[#allocation3 + $0x1c0] sm:$0xff]
  %v10395 = vld [vmem:[#allocation3 + $0x1c8] sm:$0xff]
  %v10396 = vld [vmem:[#allocation3 + $0x1d0] sm:$0xff]
  %v10397 = vld [vmem:[#allocation3 + $0x1d8] sm:$0xff]
  %v10398 = vld [vmem:[#allocation3 + $0x1e0] sm:$0xff]
  %v10399 = vld [vmem:[#allocation3 + $0x1e8] sm:$0xff]
  %v10400 = vld [vmem:[#allocation3 + $0x1f0] sm:$0xff]
  %v10401 = vld [vmem:[#allocation3 + $0x1f8] sm:$0xff]
  %v10402 = vld [vmem:[#allocation3 + $0x200] sm:$0xff]
  %v10403 = vld [vmem:[#allocation3 + $0x208] sm:$0xff]
  %v10404 = vld [vmem:[#allocation3 + $0x210] sm:$0xff]
  %v10405 = vld [vmem:[#allocation3 + $0x218] sm:$0xff]
  %v10406 = vld [vmem:[#allocation3 + $0x220] sm:$0xff]
  %v10407 = vld [vmem:[#allocation3 + $0x228] sm:$0xff]
  %v10408 = vld [vmem:[#allocation3 + $0x230] sm:$0xff]
  %v10409 = vld [vmem:[#allocation3 + $0x238] sm:$0xff]
  %v10410 = vld [vmem:[#allocation3 + $0x240] sm:$0xff]
  %v10411 = vld [vmem:[#allocation3 + $0x248] sm:$0xff]
  %v10412 = vld [vmem:[#allocation3 + $0x250] sm:$0xff]
  %v10413 = vld [vmem:[#allocation3 + $0x258] sm:$0xff]
  %v10414 = vld [vmem:[#allocation3 + $0x260] sm:$0xff]
  %v10415 = vld [vmem:[#allocation3 + $0x268] sm:$0xff]
  %v10416 = vld [vmem:[#allocation3 + $0x270] sm:$0xff]
  %v10417 = vld [vmem:[#allocation3 + $0x278] sm:$0xff]
  %v10418 = vld [vmem:[#allocation3 + $0x280] sm:$0xff]
  %v10419 = vld [vmem:[#allocation3 + $0x288] sm:$0xff]
  %v10420 = vld [vmem:[#allocation3 + $0x290] sm:$0xff]
  %v10421 = vld [vmem:[#allocation3 + $0x298] sm:$0xff]
  %v10422 = vld [vmem:[#allocation3 + $0x2a0] sm:$0xff]
  %v10423 = vld [vmem:[#allocation3 + $0x2a8] sm:$0xff]
  %v10424 = vld [vmem:[#allocation3 + $0x2b0] sm:$0xff]
  %v10425 = vld [vmem:[#allocation3 + $0x2b8] sm:$0xff]
  %v10426 = vld [vmem:[#allocation3 + $0x2c0] sm:$0xff]
  %v10427 = vld [vmem:[#allocation3 + $0x2c8] sm:$0xff]
  %v10428 = vld [vmem:[#allocation3 + $0x2d0] sm:$0xff]
  %v10429 = vld [vmem:[#allocation3 + $0x2d8] sm:$0xff]
  %v10430 = vld [vmem:[#allocation3 + $0x2e0] sm:$0xff]
  %v10431 = vld [vmem:[#allocation3 + $0x2e8] sm:$0xff]
  %v10432 = vld [vmem:[#allocation3 + $0x2f0] sm:$0xff]
  %v10433 = vld [vmem:[#allocation3 + $0x2f8] sm:$0xff]
  %v10434 = vld [vmem:[#allocation3 + $0x300] sm:$0xff]
  %v10435 = vld [vmem:[#allocation3 + $0x308] sm:$0xff]
  %v10436 = vld [vmem:[#allocation3 + $0x310] sm:$0xff]
  %v10437 = vld [vmem:[#allocation3 + $0x318] sm:$0xff]
  %v10438 = vld [vmem:[#allocation3 + $0x320] sm:$0xff]
  %v10439 = vld [vmem:[#allocation3 + $0x328] sm:$0xff]
  %v10440 = vld [vmem:[#allocation3 + $0x330] sm:$0xff]
  %v10441 = vld [vmem:[#allocation3 + $0x338] sm:$0xff]
  %v10442 = vld [vmem:[#allocation3 + $0x340] sm:$0xff]
  %v10443 = vld [vmem:[#allocation3 + $0x348] sm:$0xff]
  %v10444 = vld [vmem:[#allocation3 + $0x350] sm:$0xff]
  %v10445 = vld [vmem:[#allocation3 + $0x358] sm:$0xff]
  %v10446 = vld [vmem:[#allocation3 + $0x360] sm:$0xff]
  %v10447 = vld [vmem:[#allocation3 + $0x368] sm:$0xff]
  %v10448 = vld [vmem:[#allocation3 + $0x370] sm:$0xff]
  %v10449 = vld [vmem:[#allocation3 + $0x378] sm:$0xff]
  %v10450 = vld [vmem:[#allocation3 + $0x380] sm:$0xff]
  %v10451 = vld [vmem:[#allocation3 + $0x388] sm:$0xff]
  %v10452 = vld [vmem:[#allocation3 + $0x390] sm:$0xff]
  %v10453 = vld [vmem:[#allocation3 + $0x398] sm:$0xff]
  %v10454 = vld [vmem:[#allocation3 + $0x3a0] sm:$0xff]
  %v10455 = vld [vmem:[#allocation3 + $0x3a8] sm:$0xff]
  %v10456 = vld [vmem:[#allocation3 + $0x3b0] sm:$0xff]
  %v10457 = vld [vmem:[#allocation3 + $0x3b8] sm:$0xff]
  %v10458 = vld [vmem:[#allocation3 + $0x3c0] sm:$0xff]
  %v10459 = vld [vmem:[#allocation3 + $0x3c8] sm:$0xff]
  %v10460 = vld [vmem:[#allocation3 + $0x3d0] sm:$0xff]
  %v10461 = vld [vmem:[#allocation3 + $0x3d8] sm:$0xff]
  %v10462 = vld [vmem:[#allocation3 + $0x3e0] sm:$0xff]
  %v10463 = vld [vmem:[#allocation3 + $0x3e8] sm:$0xff]
  %v10464 = vld [vmem:[#allocation3 + $0x3f0] sm:$0xff]
  %v10465 = vld [vmem:[#allocation3 + $0x3f8] sm:$0xff]
  %v10466 = vld [vmem:[#allocation3 + $0x400] sm:$0xff]
  %v10467 = vld [vmem:[#allocation3 + $0x408] sm:$0xff]
  %v10468 = vld [vmem:[#allocation3 + $0x410] sm:$0xff]
  %v10469 = vld [vmem:[#allocation3 + $0x418] sm:$0xff]
  %v10470 = vld [vmem:[#allocation3 + $0x420] sm:$0xff]
  %v10471 = vld [vmem:[#allocation3 + $0x428] sm:$0xff]
  %v10472 = vld [vmem:[#allocation3 + $0x430] sm:$0xff]
  %v10473 = vld [vmem:[#allocation3 + $0x438] sm:$0xff]
  %v10474 = vld [vmem:[#allocation3 + $0x440] sm:$0xff]
  %v10475 = vld [vmem:[#allocation3 + $0x448] sm:$0xff]
  %v10476 = vld [vmem:[#allocation3 + $0x450] sm:$0xff]
  %v10477 = vld [vmem:[#allocation3 + $0x458] sm:$0xff]
  %v10478 = vld [vmem:[#allocation3 + $0x460] sm:$0xff]
  %v10479 = vld [vmem:[#allocation3 + $0x468] sm:$0xff]
  %v10480 = vld [vmem:[#allocation3 + $0x470] sm:$0xff]
  %v10481 = vld [vmem:[#allocation3 + $0x478] sm:$0xff]
  %v10482 = vld [vmem:[#allocation3 + $0x480] sm:$0xff]
  %v10483 = vld [vmem:[#allocation3 + $0x488] sm:$0xff]
  %v10484 = vld [vmem:[#allocation3 + $0x490] sm:$0xff]
  %v10485 = vld [vmem:[#allocation3 + $0x498] sm:$0xff]
  %v10486 = vld [vmem:[#allocation3 + $0x4a0] sm:$0xff]
  %v10487 = vld [vmem:[#allocation3 + $0x4a8] sm:$0xff]
  %v10488 = vld [vmem:[%s6] sm:$0xf]
  %v10489 = vld [vmem:[%s7] sm:$0xf]
  %10491 = vset.pattern.permute.xlu0 0
  %10492 = vperm.xlu0 %10491, %v10489
  %v10493 = vpop.permute.xlu0 %10492
  %10495 = vmatpush.xpose.msra.mxu0 %v10353
  %10496 = vmatpush.xpose.msra.mxu0 %v10352
  %10497 = vmatpush.xpose.msra.mxu0 %v10351
  %10498 = vmatpush.xpose.msra.mxu0 %v10350
  %10499 = vmatpush.xpose.msra.mxu0 %v10349
  %10500 = vmatpush.xpose.msra.mxu0 %v10348
  %10501 = vmatpush.xpose.msra.mxu0 %v10347
  %10502 = vmatpush.xpose.msra.mxu0 %v10346
  %10503 = vmatpush.xpose.msra.mxu0 %v10345
  %10504 = vmatpush.xpose.msra.mxu0 %v10344
  %10505 = vmatpush.xpose.msra.mxu0 %v10343
  %10506 = vmatpush.xpose.msra.mxu0 %v10342
  %10507 = vmatpush.xpose.msra.mxu0 %v10341
  %10508 = vmatpush.xpose.msra.mxu0 %v10340
  %10509 = vmatpush.xpose.msra.mxu0 %v10339
  %10510 = vmatpush.xpose.msra.mxu0 %v10338
  %10511 = vmatmul.f32.gmra.mxu0 %v10488
  %v10512 = vpop.f32.mrf.mxu0
  %v10513 = vadd.f32 %v10493, %v10512
  %10514 = vdwg.mxu0
  %10515 = vmatpush.xpose.msra.mxu0 %v10369
  %10516 = vmatpush.xpose.msra.mxu0 %v10368
  %10517 = vmatpush.xpose.msra.mxu0 %v10367
  %10518 = vmatpush.xpose.msra.mxu0 %v10366
  %10519 = vmatpush.xpose.msra.mxu0 %v10365
  %10520 = vmatpush.xpose.msra.mxu0 %v10364
  %10521 = vmatpush.xpose.msra.mxu0 %v10363
  %10522 = vmatpush.xpose.msra.mxu0 %v10362
  %10523 = vmatpush.xpose.msra.mxu0 %v10361
  %10524 = vmatpush.xpose.msra.mxu0 %v10360
  %10525 = vmatpush.xpose.msra.mxu0 %v10359
  %10526 = vmatpush.xpose.msra.mxu0 %v10358
  %10527 = vmatpush.xpose.msra.mxu0 %v10357
  %10528 = vmatpush.xpose.msra.mxu0 %v10356
  %10529 = vmatpush.xpose.msra.mxu0 %v10355
  %10530 = vmatpush.xpose.msra.mxu0 %v10354
  %10531 = vmatmul.f32.gmra.mxu0 %v10488
  %v10532 = vpop.f32.mrf.mxu0
  %v10533 = vadd.f32 %v10493, %v10532
  %10534 = vdwg.mxu0
  %10535 = vmatpush.xpose.msra.mxu0 %v10385
  %10536 = vmatpush.xpose.msra.mxu0 %v10384
  %10537 = vmatpush.xpose.msra.mxu0 %v10383
  %10538 = vmatpush.xpose.msra.mxu0 %v10382
  %10539 = vmatpush.xpose.msra.mxu0 %v10381
  %10540 = vmatpush.xpose.msra.mxu0 %v10380
  %10541 = vmatpush.xpose.msra.mxu0 %v10379
  %10542 = vmatpush.xpose.msra.mxu0 %v10378
  %10543 = vmatpush.xpose.msra.mxu0 %v10377
  %10544 = vmatpush.xpose.msra.mxu0 %v10376
  %10545 = vmatpush.xpose.msra.mxu0 %v10375
  %10546 = vmatpush.xpose.msra.mxu0 %v10374
  %10547 = vmatpush.xpose.msra.mxu0 %v10373
  %10548 = vmatpush.xpose.msra.mxu0 %v10372
  %10549 = vmatpush.xpose.msra.mxu0 %v10371
  %10550 = vmatpush.xpose.msra.mxu0 %v10370
  %10551 = vmatmul.f32.gmra.mxu0 %v10488
  %v10552 = vpop.f32.mrf.mxu0
  %v10553 = vadd.f32 %v10493, %v10552
  %10554 = vdwg.mxu0
  %10555 = vmatpush.xpose.msra.mxu0 %v10401
  %10556 = vmatpush.xpose.msra.mxu0 %v10400
  %10557 = vmatpush.xpose.msra.mxu0 %v10399
  %10558 = vmatpush.xpose.msra.mxu0 %v10398
  %10559 = vmatpush.xpose.msra.mxu0 %v10397
  %10560 = vmatpush.xpose.msra.mxu0 %v10396
  %10561 = vmatpush.xpose.msra.mxu0 %v10395
  %10562 = vmatpush.xpose.msra.mxu0 %v10394
  %10563 = vmatpush.xpose.msra.mxu0 %v10393
  %10564 = vmatpush.xpose.msra.mxu0 %v10392
  %10565 = vmatpush.xpose.msra.mxu0 %v10391
  %10566 = vmatpush.xpose.msra.mxu0 %v10390
  %10567 = vmatpush.xpose.msra.mxu0 %v10389
  %10568 = vmatpush.xpose.msra.mxu0 %v10388
  %10569 = vmatpush.xpose.msra.mxu0 %v10387
  %10570 = vmatpush.xpose.msra.mxu0 %v10386
  %10571 = vmatmul.f32.gmra.mxu0 %v10488
  %v10572 = vpop.f32.mrf.mxu0
  %v10573 = vadd.f32 %v10493, %v10572
  %10574 = vdwg.mxu0
  %10575 = vmatpush.xpose.msra.mxu0 %v10417
  %10576 = vmatpush.xpose.msra.mxu0 %v10416
  %10577 = vmatpush.xpose.msra.mxu0 %v10415
  %10578 = vmatpush.xpose.msra.mxu0 %v10414
  %10579 = vmatpush.xpose.msra.mxu0 %v10413
  %10580 = vmatpush.xpose.msra.mxu0 %v10412
  %10581 = vmatpush.xpose.msra.mxu0 %v10411
  %10582 = vmatpush.xpose.msra.mxu0 %v10410
  %10583 = vmatpush.xpose.msra.mxu0 %v10409
  %10584 = vmatpush.xpose.msra.mxu0 %v10408
  %10585 = vmatpush.xpose.msra.mxu0 %v10407
  %10586 = vmatpush.xpose.msra.mxu0 %v10406
  %10587 = vmatpush.xpose.msra.mxu0 %v10405
  %10588 = vmatpush.xpose.msra.mxu0 %v10404
  %10589 = vmatpush.xpose.msra.mxu0 %v10403
  %10590 = vmatpush.xpose.msra.mxu0 %v10402
  %10591 = vmatmul.f32.gmra.mxu0 %v10488
  %v10592 = vpop.f32.mrf.mxu0
  %v10593 = vadd.f32 %v10493, %v10592
  %10594 = vdwg.mxu0
  %10595 = vmatpush.xpose.msra.mxu0 %v10433
  %10596 = vmatpush.xpose.msra.mxu0 %v10432
  %10597 = vmatpush.xpose.msra.mxu0 %v10431
  %10598 = vmatpush.xpose.msra.mxu0 %v10430
  %10599 = vmatpush.xpose.msra.mxu0 %v10429
  %10600 = vmatpush.xpose.msra.mxu0 %v10428
  %10601 = vmatpush.xpose.msra.mxu0 %v10427
  %10602 = vmatpush.xpose.msra.mxu0 %v10426
  %10603 = vmatpush.xpose.msra.mxu0 %v10425
  %10604 = vmatpush.xpose.msra.mxu0 %v10424
  %10605 = vmatpush.xpose.msra.mxu0 %v10423
  %10606 = vmatpush.xpose.msra.mxu0 %v10422
  %10607 = vmatpush.xpose.msra.mxu0 %v10421
  %10608 = vmatpush.xpose.msra.mxu0 %v10420
  %10609 = vmatpush.xpose.msra.mxu0 %v10419
  %10610 = vmatpush.xpose.msra.mxu0 %v10418
  %10611 = vmatmul.f32.gmra.mxu0 %v10488
  %v10612 = vpop.f32.mrf.mxu0
  %v10613 = vadd.f32 %v10493, %v10612
  %10614 = vdwg.mxu0
  %10615 = vmatpush.xpose.msra.mxu0 %v10449
  %10616 = vmatpush.xpose.msra.mxu0 %v10448
  %10617 = vmatpush.xpose.msra.mxu0 %v10447
  %10618 = vmatpush.xpose.msra.mxu0 %v10446
  %10619 = vmatpush.xpose.msra.mxu0 %v10445
  %10620 = vmatpush.xpose.msra.mxu0 %v10444
  %10621 = vmatpush.xpose.msra.mxu0 %v10443
  %10622 = vmatpush.xpose.msra.mxu0 %v10442
  %10623 = vmatpush.xpose.msra.mxu0 %v10441
  %10624 = vmatpush.xpose.msra.mxu0 %v10440
  %10625 = vmatpush.xpose.msra.mxu0 %v10439
  %10626 = vmatpush.xpose.msra.mxu0 %v10438
  %10627 = vmatpush.xpose.msra.mxu0 %v10437
  %10628 = vmatpush.xpose.msra.mxu0 %v10436
  %10629 = vmatpush.xpose.msra.mxu0 %v10435
  %10630 = vmatpush.xpose.msra.mxu0 %v10434
  %10631 = vmatmul.f32.gmra.mxu0 %v10488
  %v10632 = vpop.f32.mrf.mxu0
  %v10633 = vadd.f32 %v10493, %v10632
  %10634 = vdwg.mxu0
  %10635 = vmatpush.xpose.msra.mxu0 %v10465
  %10636 = vmatpush.xpose.msra.mxu0 %v10464
  %10637 = vmatpush.xpose.msra.mxu0 %v10463
  %10638 = vmatpush.xpose.msra.mxu0 %v10462
  %10639 = vmatpush.xpose.msra.mxu0 %v10461
  %10640 = vmatpush.xpose.msra.mxu0 %v10460
  %10641 = vmatpush.xpose.msra.mxu0 %v10459
  %10642 = vmatpush.xpose.msra.mxu0 %v10458
  %10643 = vmatpush.xpose.msra.mxu0 %v10457
  %10644 = vmatpush.xpose.msra.mxu0 %v10456
  %10645 = vmatpush.xpose.msra.mxu0 %v10455
  %10646 = vmatpush.xpose.msra.mxu0 %v10454
  %10647 = vmatpush.xpose.msra.mxu0 %v10453
  %10648 = vmatpush.xpose.msra.mxu0 %v10452
  %10649 = vmatpush.xpose.msra.mxu0 %v10451
  %10650 = vmatpush.xpose.msra.mxu0 %v10450
  %10651 = vmatmul.f32.gmra.mxu0 %v10488
  %v10652 = vpop.f32.mrf.mxu0
  %v10653 = vadd.f32 %v10493, %v10652
  %10654 = vdwg.mxu0
  %10655 = vmatpush.xpose.msra.mxu0 %v10481
  %10656 = vmatpush.xpose.msra.mxu0 %v10480
  %10657 = vmatpush.xpose.msra.mxu0 %v10479
  %10658 = vmatpush.xpose.msra.mxu0 %v10478
  %10659 = vmatpush.xpose.msra.mxu0 %v10477
  %10660 = vmatpush.xpose.msra.mxu0 %v10476
  %10661 = vmatpush.xpose.msra.mxu0 %v10475
  %10662 = vmatpush.xpose.msra.mxu0 %v10474
  %10663 = vmatpush.xpose.msra.mxu0 %v10473
  %10664 = vmatpush.xpose.msra.mxu0 %v10472
  %10665 = vmatpush.xpose.msra.mxu0 %v10471
  %10666 = vmatpush.xpose.msra.mxu0 %v10470
  %10667 = vmatpush.xpose.msra.mxu0 %v10469
  %10668 = vmatpush.xpose.msra.mxu0 %v10468
  %10669 = vmatpush.xpose.msra.mxu0 %v10467
  %10670 = vmatpush.xpose.msra.mxu0 %v10466
  %10671 = vmatmul.f32.gmra.mxu0 %v10488
  %v10672 = vpop.f32.mrf.mxu0
  %v10673 = vadd.f32 %v10493, %v10672
  %10674 = vdwg.mxu0
  %10675 = vmatpush.xpose.msra.mxu0 0.0
  %10676 = vmatpush.xpose.msra.mxu0 0.0
  %10677 = vmatpush.xpose.msra.mxu0 0.0
  %10678 = vmatpush.xpose.msra.mxu0 0.0
  %10679 = vmatpush.xpose.msra.mxu0 0.0
  %10680 = vmatpush.xpose.msra.mxu0 0.0
  %10681 = vmatpush.xpose.msra.mxu0 0.0
  %10682 = vmatpush.xpose.msra.mxu0 0.0
  %10683 = vmatpush.xpose.msra.mxu0 0.0
  %10684 = vmatpush.xpose.msra.mxu0 0.0
  %10685 = vmatpush.xpose.msra.mxu0 %v10487
  %10686 = vmatpush.xpose.msra.mxu0 %v10486
  %10687 = vmatpush.xpose.msra.mxu0 %v10485
  %10688 = vmatpush.xpose.msra.mxu0 %v10484
  %10689 = vmatpush.xpose.msra.mxu0 %v10483
  %10690 = vmatpush.xpose.msra.mxu0 %v10482
  %10691 = vmatmul.f32.gmra.mxu0 %v10488
  %v10692 = vpop.f32.mrf.mxu0
  %v10693 = vadd.f32 %v10493, %v10692
  %10694 = vdwg.mxu0
  %v10695 = vld [vmem:[#allocation3 + $0x4b0] sm:$0xff]
  %v10696 = vld [vmem:[#allocation3 + $0x4b8] sm:$0xff]
  %v10697 = vld [vmem:[#allocation3 + $0x4c0] sm:$0xff]
  %v10698 = vld [vmem:[#allocation3 + $0x4c8] sm:$0xff]
  %v10699 = vld [vmem:[#allocation3 + $0x4d0] sm:$0xff]
  %v10700 = vld [vmem:[#allocation3 + $0x4d8] sm:$0xff]
  %v10701 = vld [vmem:[#allocation3 + $0x4e0] sm:$0xff]
  %v10702 = vld [vmem:[#allocation3 + $0x4e8] sm:$0xff]
  %v10703 = vld [vmem:[#allocation3 + $0x4f0] sm:$0xff]
  %v10704 = vld [vmem:[#allocation3 + $0x4f8] sm:$0xff]
  %v10705 = vld [vmem:[#allocation3 + $0x500] sm:$0xff]
  %v10706 = vld [vmem:[#allocation3 + $0x508] sm:$0xff]
  %v10707 = vld [vmem:[#allocation3 + $0x510] sm:$0xff]
  %v10708 = vld [vmem:[#allocation3 + $0x518] sm:$0xff]
  %v10709 = vld [vmem:[#allocation3 + $0x520] sm:$0xff]
  %v10710 = vld [vmem:[#allocation3 + $0x528] sm:$0xff]
  %v10711 = vld [vmem:[#allocation3 + $0x530] sm:$0xff]
  %v10712 = vld [vmem:[#allocation3 + $0x538] sm:$0xff]
  %v10713 = vld [vmem:[#allocation3 + $0x540] sm:$0xff]
  %v10714 = vld [vmem:[#allocation3 + $0x548] sm:$0xff]
  %v10715 = vld [vmem:[#allocation3 + $0x550] sm:$0xff]
  %v10716 = vld [vmem:[#allocation3 + $0x558] sm:$0xff]
  %v10717 = vld [vmem:[#allocation3 + $0x560] sm:$0xff]
  %v10718 = vld [vmem:[#allocation3 + $0x568] sm:$0xff]
  %v10719 = vld [vmem:[#allocation3 + $0x570] sm:$0xff]
  %v10720 = vld [vmem:[#allocation3 + $0x578] sm:$0xff]
  %v10721 = vld [vmem:[#allocation3 + $0x580] sm:$0xff]
  %v10722 = vld [vmem:[#allocation3 + $0x588] sm:$0xff]
  %v10723 = vld [vmem:[#allocation3 + $0x590] sm:$0xff]
  %v10724 = vld [vmem:[#allocation3 + $0x598] sm:$0xff]
  %v10725 = vld [vmem:[#allocation3 + $0x5a0] sm:$0xff]
  %v10726 = vld [vmem:[#allocation3 + $0x5a8] sm:$0xff]
  %v10727 = vld [vmem:[#allocation3 + $0x5b0] sm:$0xff]
  %v10728 = vld [vmem:[#allocation3 + $0x5b8] sm:$0xff]
  %v10729 = vld [vmem:[#allocation3 + $0x5c0] sm:$0xff]
  %v10730 = vld [vmem:[#allocation3 + $0x5c8] sm:$0xff]
  %v10731 = vld [vmem:[#allocation3 + $0x5d0] sm:$0xff]
  %v10732 = vld [vmem:[#allocation3 + $0x5d8] sm:$0xff]
  %v10733 = vld [vmem:[#allocation3 + $0x5e0] sm:$0xff]
  %v10734 = vld [vmem:[#allocation3 + $0x5e8] sm:$0xff]
  %v10735 = vld [vmem:[#allocation3 + $0x5f0] sm:$0xff]
  %v10736 = vld [vmem:[#allocation3 + $0x5f8] sm:$0xff]
  %v10737 = vld [vmem:[#allocation3 + $0x600] sm:$0xff]
  %v10738 = vld [vmem:[#allocation3 + $0x608] sm:$0xff]
  %v10739 = vld [vmem:[#allocation3 + $0x610] sm:$0xff]
  %v10740 = vld [vmem:[#allocation3 + $0x618] sm:$0xff]
  %v10741 = vld [vmem:[#allocation3 + $0x620] sm:$0xff]
  %v10742 = vld [vmem:[#allocation3 + $0x628] sm:$0xff]
  %v10743 = vld [vmem:[#allocation3 + $0x630] sm:$0xff]
  %v10744 = vld [vmem:[#allocation3 + $0x638] sm:$0xff]
  %v10745 = vld [vmem:[#allocation3 + $0x640] sm:$0xff]
  %v10746 = vld [vmem:[#allocation3 + $0x648] sm:$0xff]
  %v10747 = vld [vmem:[#allocation3 + $0x650] sm:$0xff]
  %v10748 = vld [vmem:[#allocation3 + $0x658] sm:$0xff]
  %v10749 = vld [vmem:[#allocation3 + $0x660] sm:$0xff]
  %v10750 = vld [vmem:[#allocation3 + $0x668] sm:$0xff]
  %v10751 = vld [vmem:[#allocation3 + $0x670] sm:$0xff]
  %v10752 = vld [vmem:[#allocation3 + $0x678] sm:$0xff]
  %v10753 = vld [vmem:[#allocation3 + $0x680] sm:$0xff]
  %v10754 = vld [vmem:[#allocation3 + $0x688] sm:$0xff]
  %v10755 = vld [vmem:[#allocation3 + $0x690] sm:$0xff]
  %v10756 = vld [vmem:[#allocation3 + $0x698] sm:$0xff]
  %v10757 = vld [vmem:[#allocation3 + $0x6a0] sm:$0xff]
  %v10758 = vld [vmem:[#allocation3 + $0x6a8] sm:$0xff]
  %v10759 = vld [vmem:[#allocation3 + $0x6b0] sm:$0xff]
  %v10760 = vld [vmem:[#allocation3 + $0x6b8] sm:$0xff]
  %v10761 = vld [vmem:[#allocation3 + $0x6c0] sm:$0xff]
  %v10762 = vld [vmem:[#allocation3 + $0x6c8] sm:$0xff]
  %v10763 = vld [vmem:[#allocation3 + $0x6d0] sm:$0xff]
  %v10764 = vld [vmem:[#allocation3 + $0x6d8] sm:$0xff]
  %v10765 = vld [vmem:[#allocation3 + $0x6e0] sm:$0xff]
  %v10766 = vld [vmem:[#allocation3 + $0x6e8] sm:$0xff]
  %v10767 = vld [vmem:[#allocation3 + $0x6f0] sm:$0xff]
  %v10768 = vld [vmem:[#allocation3 + $0x6f8] sm:$0xff]
  %v10769 = vld [vmem:[#allocation3 + $0x700] sm:$0xff]
  %v10770 = vld [vmem:[#allocation3 + $0x708] sm:$0xff]
  %v10771 = vld [vmem:[#allocation3 + $0x710] sm:$0xff]
  %v10772 = vld [vmem:[#allocation3 + $0x718] sm:$0xff]
  %v10773 = vld [vmem:[#allocation3 + $0x720] sm:$0xff]
  %v10774 = vld [vmem:[#allocation3 + $0x728] sm:$0xff]
  %v10775 = vld [vmem:[#allocation3 + $0x730] sm:$0xff]
  %v10776 = vld [vmem:[#allocation3 + $0x738] sm:$0xff]
  %v10777 = vld [vmem:[#allocation3 + $0x740] sm:$0xff]
  %v10778 = vld [vmem:[#allocation3 + $0x748] sm:$0xff]
  %v10779 = vld [vmem:[#allocation3 + $0x750] sm:$0xff]
  %v10780 = vld [vmem:[#allocation3 + $0x758] sm:$0xff]
  %v10781 = vld [vmem:[#allocation3 + $0x760] sm:$0xff]
  %v10782 = vld [vmem:[#allocation3 + $0x768] sm:$0xff]
  %v10783 = vld [vmem:[#allocation3 + $0x770] sm:$0xff]
  %v10784 = vld [vmem:[#allocation3 + $0x778] sm:$0xff]
  %v10785 = vld [vmem:[#allocation3 + $0x780] sm:$0xff]
  %v10786 = vld [vmem:[#allocation3 + $0x788] sm:$0xff]
  %v10787 = vld [vmem:[#allocation3 + $0x790] sm:$0xff]
  %v10788 = vld [vmem:[#allocation3 + $0x798] sm:$0xff]
  %v10789 = vld [vmem:[#allocation3 + $0x7a0] sm:$0xff]
  %v10790 = vld [vmem:[#allocation3 + $0x7a8] sm:$0xff]
  %v10791 = vld [vmem:[#allocation3 + $0x7b0] sm:$0xff]
  %v10792 = vld [vmem:[#allocation3 + $0x7b8] sm:$0xff]
  %v10793 = vld [vmem:[#allocation3 + $0x7c0] sm:$0xff]
  %v10794 = vld [vmem:[#allocation3 + $0x7c8] sm:$0xff]
  %v10795 = vld [vmem:[#allocation3 + $0x7d0] sm:$0xff]
  %v10796 = vld [vmem:[#allocation3 + $0x7d8] sm:$0xff]
  %v10797 = vld [vmem:[#allocation3 + $0x7e0] sm:$0xff]
  %v10798 = vld [vmem:[#allocation3 + $0x7e8] sm:$0xff]
  %v10799 = vld [vmem:[#allocation3 + $0x7f0] sm:$0xff]
  %v10800 = vld [vmem:[#allocation3 + $0x7f8] sm:$0xff]
  %v10801 = vld [vmem:[#allocation3 + $0x800] sm:$0xff]
  %v10802 = vld [vmem:[#allocation3 + $0x808] sm:$0xff]
  %v10803 = vld [vmem:[#allocation3 + $0x810] sm:$0xff]
  %v10804 = vld [vmem:[#allocation3 + $0x818] sm:$0xff]
  %v10805 = vld [vmem:[#allocation3 + $0x820] sm:$0xff]
  %v10806 = vld [vmem:[#allocation3 + $0x828] sm:$0xff]
  %v10807 = vld [vmem:[#allocation3 + $0x830] sm:$0xff]
  %v10808 = vld [vmem:[#allocation3 + $0x838] sm:$0xff]
  %v10809 = vld [vmem:[#allocation3 + $0x840] sm:$0xff]
  %v10810 = vld [vmem:[#allocation3 + $0x848] sm:$0xff]
  %v10811 = vld [vmem:[#allocation3 + $0x850] sm:$0xff]
  %v10812 = vld [vmem:[#allocation3 + $0x858] sm:$0xff]
  %v10813 = vld [vmem:[#allocation3 + $0x860] sm:$0xff]
  %v10814 = vld [vmem:[#allocation3 + $0x868] sm:$0xff]
  %v10815 = vld [vmem:[#allocation3 + $0x870] sm:$0xff]
  %v10816 = vld [vmem:[#allocation3 + $0x878] sm:$0xff]
  %v10817 = vld [vmem:[#allocation3 + $0x880] sm:$0xff]
  %v10818 = vld [vmem:[#allocation3 + $0x888] sm:$0xff]
  %v10819 = vld [vmem:[#allocation3 + $0x890] sm:$0xff]
  %v10820 = vld [vmem:[#allocation3 + $0x898] sm:$0xff]
  %v10821 = vld [vmem:[#allocation3 + $0x8a0] sm:$0xff]
  %v10822 = vld [vmem:[#allocation3 + $0x8a8] sm:$0xff]
  %v10823 = vld [vmem:[#allocation3 + $0x8b0] sm:$0xff]
  %v10824 = vld [vmem:[#allocation3 + $0x8b8] sm:$0xff]
  %v10825 = vld [vmem:[#allocation3 + $0x8c0] sm:$0xff]
  %v10826 = vld [vmem:[#allocation3 + $0x8c8] sm:$0xff]
  %v10827 = vld [vmem:[#allocation3 + $0x8d0] sm:$0xff]
  %v10828 = vld [vmem:[#allocation3 + $0x8d8] sm:$0xff]
  %v10829 = vld [vmem:[#allocation3 + $0x8e0] sm:$0xff]
  %v10830 = vld [vmem:[#allocation3 + $0x8e8] sm:$0xff]
  %v10831 = vld [vmem:[#allocation3 + $0x8f0] sm:$0xff]
  %v10832 = vld [vmem:[#allocation3 + $0x8f8] sm:$0xff]
  %v10833 = vld [vmem:[#allocation3 + $0x900] sm:$0xff]
  %v10834 = vld [vmem:[#allocation3 + $0x908] sm:$0xff]
  %v10835 = vld [vmem:[#allocation3 + $0x910] sm:$0xff]
  %v10836 = vld [vmem:[#allocation3 + $0x918] sm:$0xff]
  %v10837 = vld [vmem:[#allocation3 + $0x920] sm:$0xff]
  %v10838 = vld [vmem:[#allocation3 + $0x928] sm:$0xff]
  %v10839 = vld [vmem:[#allocation3 + $0x930] sm:$0xff]
  %v10840 = vld [vmem:[#allocation3 + $0x938] sm:$0xff]
  %v10841 = vld [vmem:[#allocation3 + $0x940] sm:$0xff]
  %v10842 = vld [vmem:[#allocation3 + $0x948] sm:$0xff]
  %v10843 = vld [vmem:[#allocation3 + $0x950] sm:$0xff]
  %v10844 = vld [vmem:[#allocation3 + $0x958] sm:$0xff]
  %10845 = vmatpush.xpose.msra.mxu0 %v10710
  %10846 = vmatpush.xpose.msra.mxu0 %v10709
  %10847 = vmatpush.xpose.msra.mxu0 %v10708
  %10848 = vmatpush.xpose.msra.mxu0 %v10707
  %10849 = vmatpush.xpose.msra.mxu0 %v10706
  %10850 = vmatpush.xpose.msra.mxu0 %v10705
  %10851 = vmatpush.xpose.msra.mxu0 %v10704
  %10852 = vmatpush.xpose.msra.mxu0 %v10703
  %10853 = vmatpush.xpose.msra.mxu0 %v10702
  %10854 = vmatpush.xpose.msra.mxu0 %v10701
  %10855 = vmatpush.xpose.msra.mxu0 %v10700
  %10856 = vmatpush.xpose.msra.mxu0 %v10699
  %10857 = vmatpush.xpose.msra.mxu0 %v10698
  %10858 = vmatpush.xpose.msra.mxu0 %v10697
  %10859 = vmatpush.xpose.msra.mxu0 %v10696
  %10860 = vmatpush.xpose.msra.mxu0 %v10695
  %10861 = vmatmul.f32.gmra.mxu0 %v10488
  %v10862 = vpop.f32.mrf.mxu0
  %v10863 = vadd.f32 %v10493, %v10862
  %10864 = vdwg.mxu0
  %10865 = vmatpush.xpose.msra.mxu0 %v10726
  %10866 = vmatpush.xpose.msra.mxu0 %v10725
  %10867 = vmatpush.xpose.msra.mxu0 %v10724
  %10868 = vmatpush.xpose.msra.mxu0 %v10723
  %10869 = vmatpush.xpose.msra.mxu0 %v10722
  %10870 = vmatpush.xpose.msra.mxu0 %v10721
  %10871 = vmatpush.xpose.msra.mxu0 %v10720
  %10872 = vmatpush.xpose.msra.mxu0 %v10719
  %10873 = vmatpush.xpose.msra.mxu0 %v10718
  %10874 = vmatpush.xpose.msra.mxu0 %v10717
  %10875 = vmatpush.xpose.msra.mxu0 %v10716
  %10876 = vmatpush.xpose.msra.mxu0 %v10715
  %10877 = vmatpush.xpose.msra.mxu0 %v10714
  %10878 = vmatpush.xpose.msra.mxu0 %v10713
  %10879 = vmatpush.xpose.msra.mxu0 %v10712
  %10880 = vmatpush.xpose.msra.mxu0 %v10711
  %10881 = vmatmul.f32.gmra.mxu0 %v10488
  %v10882 = vpop.f32.mrf.mxu0
  %v10883 = vadd.f32 %v10493, %v10882
  %10884 = vdwg.mxu0
  %10885 = vmatpush.xpose.msra.mxu0 %v10742
  %10886 = vmatpush.xpose.msra.mxu0 %v10741
  %10887 = vmatpush.xpose.msra.mxu0 %v10740
  %10888 = vmatpush.xpose.msra.mxu0 %v10739
  %10889 = vmatpush.xpose.msra.mxu0 %v10738
  %10890 = vmatpush.xpose.msra.mxu0 %v10737
  %10891 = vmatpush.xpose.msra.mxu0 %v10736
  %10892 = vmatpush.xpose.msra.mxu0 %v10735
  %10893 = vmatpush.xpose.msra.mxu0 %v10734
  %10894 = vmatpush.xpose.msra.mxu0 %v10733
  %10895 = vmatpush.xpose.msra.mxu0 %v10732
  %10896 = vmatpush.xpose.msra.mxu0 %v10731
  %10897 = vmatpush.xpose.msra.mxu0 %v10730
  %10898 = vmatpush.xpose.msra.mxu0 %v10729
  %10899 = vmatpush.xpose.msra.mxu0 %v10728
  %10900 = vmatpush.xpose.msra.mxu0 %v10727
  %10901 = vmatmul.f32.gmra.mxu0 %v10488
  %v10902 = vpop.f32.mrf.mxu0
  %v10903 = vadd.f32 %v10493, %v10902
  %10904 = vdwg.mxu0
  %10905 = vmatpush.xpose.msra.mxu0 %v10758
  %10906 = vmatpush.xpose.msra.mxu0 %v10757
  %10907 = vmatpush.xpose.msra.mxu0 %v10756
  %10908 = vmatpush.xpose.msra.mxu0 %v10755
  %10909 = vmatpush.xpose.msra.mxu0 %v10754
  %10910 = vmatpush.xpose.msra.mxu0 %v10753
  %10911 = vmatpush.xpose.msra.mxu0 %v10752
  %10912 = vmatpush.xpose.msra.mxu0 %v10751
  %10913 = vmatpush.xpose.msra.mxu0 %v10750
  %10914 = vmatpush.xpose.msra.mxu0 %v10749
  %10915 = vmatpush.xpose.msra.mxu0 %v10748
  %10916 = vmatpush.xpose.msra.mxu0 %v10747
  %10917 = vmatpush.xpose.msra.mxu0 %v10746
  %10918 = vmatpush.xpose.msra.mxu0 %v10745
  %10919 = vmatpush.xpose.msra.mxu0 %v10744
  %10920 = vmatpush.xpose.msra.mxu0 %v10743
  %10921 = vmatmul.f32.gmra.mxu0 %v10488
  %v10922 = vpop.f32.mrf.mxu0
  %v10923 = vadd.f32 %v10493, %v10922
  %10924 = vdwg.mxu0
  %10925 = vmatpush.xpose.msra.mxu0 %v10774
  %10926 = vmatpush.xpose.msra.mxu0 %v10773
  %10927 = vmatpush.xpose.msra.mxu0 %v10772
  %10928 = vmatpush.xpose.msra.mxu0 %v10771
  %10929 = vmatpush.xpose.msra.mxu0 %v10770
  %10930 = vmatpush.xpose.msra.mxu0 %v10769
  %10931 = vmatpush.xpose.msra.mxu0 %v10768
  %10932 = vmatpush.xpose.msra.mxu0 %v10767
  %10933 = vmatpush.xpose.msra.mxu0 %v10766
  %10934 = vmatpush.xpose.msra.mxu0 %v10765
  %10935 = vmatpush.xpose.msra.mxu0 %v10764
  %10936 = vmatpush.xpose.msra.mxu0 %v10763
  %10937 = vmatpush.xpose.msra.mxu0 %v10762
  %10938 = vmatpush.xpose.msra.mxu0 %v10761
  %10939 = vmatpush.xpose.msra.mxu0 %v10760
  %10940 = vmatpush.xpose.msra.mxu0 %v10759
  %10941 = vmatmul.f32.gmra.mxu0 %v10488
  %v10942 = vpop.f32.mrf.mxu0
  %v10943 = vadd.f32 %v10493, %v10942
  %10944 = vdwg.mxu0
  %10945 = vmatpush.xpose.msra.mxu0 %v10790
  %10946 = vmatpush.xpose.msra.mxu0 %v10789
  %10947 = vmatpush.xpose.msra.mxu0 %v10788
  %10948 = vmatpush.xpose.msra.mxu0 %v10787
  %10949 = vmatpush.xpose.msra.mxu0 %v10786
  %10950 = vmatpush.xpose.msra.mxu0 %v10785
  %10951 = vmatpush.xpose.msra.mxu0 %v10784
  %10952 = vmatpush.xpose.msra.mxu0 %v10783
  %10953 = vmatpush.xpose.msra.mxu0 %v10782
  %10954 = vmatpush.xpose.msra.mxu0 %v10781
  %10955 = vmatpush.xpose.msra.mxu0 %v10780
  %10956 = vmatpush.xpose.msra.mxu0 %v10779
  %10957 = vmatpush.xpose.msra.mxu0 %v10778
  %10958 = vmatpush.xpose.msra.mxu0 %v10777
  %10959 = vmatpush.xpose.msra.mxu0 %v10776
  %10960 = vmatpush.xpose.msra.mxu0 %v10775
  %10961 = vmatmul.f32.gmra.mxu0 %v10488
  %v10962 = vpop.f32.mrf.mxu0
  %v10963 = vadd.f32 %v10493, %v10962
  %10964 = vdwg.mxu0
  %10965 = vmatpush.xpose.msra.mxu0 %v10806
  %10966 = vmatpush.xpose.msra.mxu0 %v10805
  %10967 = vmatpush.xpose.msra.mxu0 %v10804
  %10968 = vmatpush.xpose.msra.mxu0 %v10803
  %10969 = vmatpush.xpose.msra.mxu0 %v10802
  %10970 = vmatpush.xpose.msra.mxu0 %v10801
  %10971 = vmatpush.xpose.msra.mxu0 %v10800
  %10972 = vmatpush.xpose.msra.mxu0 %v10799
  %10973 = vmatpush.xpose.msra.mxu0 %v10798
  %10974 = vmatpush.xpose.msra.mxu0 %v10797
  %10975 = vmatpush.xpose.msra.mxu0 %v10796
  %10976 = vmatpush.xpose.msra.mxu0 %v10795
  %10977 = vmatpush.xpose.msra.mxu0 %v10794
  %10978 = vmatpush.xpose.msra.mxu0 %v10793
  %10979 = vmatpush.xpose.msra.mxu0 %v10792
  %10980 = vmatpush.xpose.msra.mxu0 %v10791
  %10981 = vmatmul.f32.gmra.mxu0 %v10488
  %v10982 = vpop.f32.mrf.mxu0
  %v10983 = vadd.f32 %v10493, %v10982
  %10984 = vdwg.mxu0
  %10985 = vmatpush.xpose.msra.mxu0 %v10822
  %10986 = vmatpush.xpose.msra.mxu0 %v10821
  %10987 = vmatpush.xpose.msra.mxu0 %v10820
  %10988 = vmatpush.xpose.msra.mxu0 %v10819
  %10989 = vmatpush.xpose.msra.mxu0 %v10818
  %10990 = vmatpush.xpose.msra.mxu0 %v10817
  %10991 = vmatpush.xpose.msra.mxu0 %v10816
  %10992 = vmatpush.xpose.msra.mxu0 %v10815
  %10993 = vmatpush.xpose.msra.mxu0 %v10814
  %10994 = vmatpush.xpose.msra.mxu0 %v10813
  %10995 = vmatpush.xpose.msra.mxu0 %v10812
  %10996 = vmatpush.xpose.msra.mxu0 %v10811
  %10997 = vmatpush.xpose.msra.mxu0 %v10810
  %10998 = vmatpush.xpose.msra.mxu0 %v10809
  %10999 = vmatpush.xpose.msra.mxu0 %v10808
  %11000 = vmatpush.xpose.msra.mxu0 %v10807
  %11001 = vmatmul.f32.gmra.mxu0 %v10488
  %v11002 = vpop.f32.mrf.mxu0
  %v11003 = vadd.f32 %v10493, %v11002
  %11004 = vdwg.mxu0
  %11005 = vmatpush.xpose.msra.mxu0 %v10838
  %11006 = vmatpush.xpose.msra.mxu0 %v10837
  %11007 = vmatpush.xpose.msra.mxu0 %v10836
  %11008 = vmatpush.xpose.msra.mxu0 %v10835
  %11009 = vmatpush.xpose.msra.mxu0 %v10834
  %11010 = vmatpush.xpose.msra.mxu0 %v10833
  %11011 = vmatpush.xpose.msra.mxu0 %v10832
  %11012 = vmatpush.xpose.msra.mxu0 %v10831
  %11013 = vmatpush.xpose.msra.mxu0 %v10830
  %11014 = vmatpush.xpose.msra.mxu0 %v10829
  %11015 = vmatpush.xpose.msra.mxu0 %v10828
  %11016 = vmatpush.xpose.msra.mxu0 %v10827
  %11017 = vmatpush.xpose.msra.mxu0 %v10826
  %11018 = vmatpush.xpose.msra.mxu0 %v10825
  %11019 = vmatpush.xpose.msra.mxu0 %v10824
  %11020 = vmatpush.xpose.msra.mxu0 %v10823
  %11021 = vmatmul.f32.gmra.mxu0 %v10488
  %v11022 = vpop.f32.mrf.mxu0
  %v11023 = vadd.f32 %v10493, %v11022
  %11024 = vdwg.mxu0
  %11025 = vmatpush.xpose.msra.mxu0 0.0
  %11026 = vmatpush.xpose.msra.mxu0 0.0
  %11027 = vmatpush.xpose.msra.mxu0 0.0
  %11028 = vmatpush.xpose.msra.mxu0 0.0
  %11029 = vmatpush.xpose.msra.mxu0 0.0
  %11030 = vmatpush.xpose.msra.mxu0 0.0
  %11031 = vmatpush.xpose.msra.mxu0 0.0
  %11032 = vmatpush.xpose.msra.mxu0 0.0
  %11033 = vmatpush.xpose.msra.mxu0 0.0
  %11034 = vmatpush.xpose.msra.mxu0 0.0
  %11035 = vmatpush.xpose.msra.mxu0 %v10844
  %11036 = vmatpush.xpose.msra.mxu0 %v10843
  %11037 = vmatpush.xpose.msra.mxu0 %v10842
  %11038 = vmatpush.xpose.msra.mxu0 %v10841
  %11039 = vmatpush.xpose.msra.mxu0 %v10840
  %11040 = vmatpush.xpose.msra.mxu0 %v10839
  %11041 = vmatmul.f32.gmra.mxu0 %v10488
  %v11042 = vpop.f32.mrf.mxu0
  %v11043 = vadd.f32 %v10493, %v11042
  %11044 = vdwg.mxu0
  %v11055 = vrot.slane %v10863, 4
  %v11056 = vrot.slane %v10883, 4
  %v11057 = vrot.slane %v10903, 4
  %v11058 = vrot.slane %v10923, 4
  %v11059 = vrot.slane %v10943, 4
  %v11060 = vrot.slane %v10963, 4
  %v11061 = vrot.slane %v10983, 4
  %v11062 = vrot.slane %v11003, 4
  %v11063 = vrot.slane %v11023, 4
  %v11064 = vrot.slane %v11043, 4
  %vm11075 = vcmask 1043456
  %v11076 = vsel %vm11075, %v10513, %v11055
  %v11077 = vsel %vm11075, %v10533, %v11056
  %v11078 = vsel %vm11075, %v10553, %v11057
  %v11079 = vsel %vm11075, %v10573, %v11058
  %v11080 = vsel %vm11075, %v10593, %v11059
  %v11081 = vsel %vm11075, %v10613, %v11060
  %v11082 = vsel %vm11075, %v10633, %v11061
  %v11083 = vsel %vm11075, %v10653, %v11062
  %v11084 = vsel %vm11075, %v10673, %v11063
  %v11085 = vsel %vm11075, %v10693, %v11064
  %v11086 = vmax.f32 %v11076, %v11080
  %v11087 = vmax.f32 %v11077, %v11081
  %v11088 = vmax.f32 %v11078, %v11082
  %v11089 = vmax.f32 %v11079, %v11083
  %v11090 = vmax.f32 %v11086, %v11084
  %vm11091 = vcmask 392192
  %v11092 = vsel %vm11091, %v11085, -inf
  %v11093 = vmax.f32 %v11087, %v11092
  %v11094 = vmax.f32 %v11090, %v11093
  %v11095 = vmax.f32 %v11088, %v11089
  %v11096 = vmax.f32 %v11094, %v11095
  %11097 = vmax.xlane.f32.xlu0 %v11096
  %v11098 = vpop.xlane.xlu0 %11097
  %v11099 = vsub.f32 %v11076, %v11098
  %v11100 = vsub.f32 %v11077, %v11098
  %v11101 = vsub.f32 %v11078, %v11098
  %v11102 = vsub.f32 %v11079, %v11098
  %v11103 = vsub.f32 %v11080, %v11098
  %v11104 = vsub.f32 %v11081, %v11098
  %v11105 = vsub.f32 %v11082, %v11098
  %v11106 = vsub.f32 %v11083, %v11098
  %v11107 = vsub.f32 %v11084, %v11098
  %v11108 = vsub.f32 %v11085, %v11098
  %v11109 = vmul.f32 %v11099, 1.442695
  %v11110 = vpow.pop %v11109
  %v11111 = vmul.f32 %v11100, 1.442695
  %v11112 = vpow.pop %v11111
  %v11113 = vmul.f32 %v11101, 1.442695
  %v11114 = vpow.pop %v11113
  %v11115 = vmul.f32 %v11102, 1.442695
  %v11116 = vpow.pop %v11115
  %v11117 = vmul.f32 %v11103, 1.442695
  %v11118 = vpow.pop %v11117
  %v11119 = vmul.f32 %v11104, 1.442695
  %v11120 = vpow.pop %v11119
  %v11121 = vmul.f32 %v11105, 1.442695
  %v11122 = vpow.pop %v11121
  %v11123 = vmul.f32 %v11106, 1.442695
  %v11124 = vpow.pop %v11123
  %v11125 = vmul.f32 %v11107, 1.442695
  %v11126 = vpow.pop %v11125
  %v11127 = vmul.f32 %v11108, 1.442695
  %v11128 = vpow.pop %v11127
  %v11129 = vadd.f32 %v11110, %v11112
  %v11130 = vadd.f32 %v11129, %v11114
  %v11131 = vadd.f32 %v11130, %v11116
  %v11132 = vadd.f32 %v11131, %v11118
  %v11133 = vadd.f32 %v11132, %v11120
  %v11134 = vadd.f32 %v11133, %v11122
  %v11135 = vadd.f32 %v11134, %v11124
  %v11136 = vadd.f32 %v11135, %v11126
  %v11137 = vsel %vm11091, %v11128, 0.0
  %v11138 = vadd.f32 %v11136, %v11137
  %11139 = vadd.xlane.f32.xlu0 %v11138
  %v11140 = vpop.xlane.xlu0 %11139
  %v11141 = vrcp.pop %v11140
  %v11142 = vmul.f32 %v11140, %v11141
  %v11143 = vsub.f32 1.0, %v11142
  %v11144 = vmul.f32 %v11141, %v11143
  %v11145 = vadd.f32 %v11141, %v11144
  %vm11146 = vweird.f32 %v11140
  %vm11147 = vweird.f32 %v11141
  %vm11148 = vmor %vm11146, %vm11147
  %v11149 = vsel %vm11148, %v11141, %v11145
  %v11150 = vand.u32 2147483647, %v11140
  %vm11151 = vcmp.eq.f32.partialorder %v11150, 8.507059e+37
  %v11152 = vand.u32 %v11140, 2147483648
  %v11153 = vor.u32 1.1754944e-38, %v11152
  %v11154 = vsel %vm11151, %v11153, %v11149
  %v11155 = vmul.f32 %v11110, %v11154
  %v11156 = vmul.f32 %v11112, %v11154
  %v11157 = vmul.f32 %v11114, %v11154
  %v11158 = vmul.f32 %v11116, %v11154
  %v11159 = vmul.f32 %v11118, %v11154
  %v11160 = vmul.f32 %v11120, %v11154
  %v11161 = vmul.f32 %v11122, %v11154
  %v11162 = vmul.f32 %v11124, %v11154
  %v11163 = vmul.f32 %v11126, %v11154
  %v11164 = vmul.f32 %v11128, %v11154
  %11165 = vst [vmem:[%s8] sm:$0xff] %v11155
  %11166 = vst [vmem:[%s8 + $0x8] sm:$0xff] %v11156
  %11167 = vst [vmem:[%s8 + $0x10] sm:$0xff] %v11157
  %11168 = vst [vmem:[%s8 + $0x18] sm:$0xff] %v11158
  %11169 = vst [vmem:[%s8 + $0x20] sm:$0xff] %v11159
  %11170 = vst [vmem:[%s8 + $0x28] sm:$0xff] %v11160
  %11171 = vst [vmem:[%s8 + $0x30] sm:$0xff] %v11161
  %11172 = vst [vmem:[%s8 + $0x38] sm:$0xff] %v11162
  %11173 = vst [vmem:[%s8 + $0x40] sm:$0xff] %v11163
  %11174 = vst.msk [vmem:[%s8 + $0x48] sm:$0xff] %vm11091, %v11164
  // Predicated region
  $region41: #{lstm_forward.1} parent=0 // pred_check
    _
  $region42: #{lstm_forward.1} parent=0 // pred_check_branch
    %11176 = sbr.rel (0) target = $region44
  $region43: #{lstm_forward.1} parent=0 // pred_region
    _
  $region44: #{lstm_forward.1} parent=0 // pred_fallthru
    _
  // Predicated region
  $region45: #{lstm_forward.1} parent=0 // pred_check
    _
  $region46: #{lstm_forward.1} parent=0 // pred_check_branch
    %11178 = sbr.rel (0) target = $region48
  $region47: #{lstm_forward.1} parent=0 // pred_region
    _
  $region48: #{lstm_forward.1} parent=0 // pred_fallthru
    _

</llo_original>
